<compile_context>
chip_gen: v6e
topology: v6e:2x2x1
jax: 0.10.0
libtpu: 0.0.40
codegen_flags: <defaults>
</compile_context>

<pallas_src>
import functools
import math

import numpy as np

import jax
import jax.numpy as jnp
from jax.experimental import pallas as pl
from jax.experimental.pallas import tpu as pltpu


_LN_EPS = 1e-5
_BN_EPS = 1e-5
_BF = jnp.bfloat16
_PAR = pltpu.CompilerParams(dimension_semantics=("parallel",))


# --------------------------------------------------------------------------- #
# in-kernel helpers
# --------------------------------------------------------------------------- #
def _mm(a, b):
    """MXU matmul: bf16 operands, f32 accumulation."""
    return jnp.dot(a.astype(_BF), b.astype(_BF), preferred_element_type=jnp.float32)


def _mm_nt(a, b):
    """a @ b.T (contract last dims on the MXU), bf16 operands, f32 accumulation."""
    return jax.lax.dot_general(a.astype(_BF), b.astype(_BF),
                               (((1,), (1,)), ((), ())),
                               preferred_element_type=jnp.float32)


def _layer_norm(x, g, b):
    mu = jnp.mean(x, axis=-1, keepdims=True)
    var = jnp.mean((x - mu) * (x - mu), axis=-1, keepdims=True)
    return (x - mu) * jax.lax.rsqrt(var + _LN_EPS) * g + b


def _softmax_rows(s):
    m = jnp.max(s, axis=-1, keepdims=True)
    p = jnp.exp(s - m)
    return p * pl.reciprocal(jnp.sum(p, axis=-1, keepdims=True), approx=True)


def _ffn(x, w1, b1, w2, b2, act):
    h = _mm(x, w1) + b1
    if act == "relu":
        h = jnp.maximum(h, 0.0)
    else:
        # TODO(synk): tanh-approximate GELU (reference F.gelu is erf-exact).
        h = 0.5 * h * (1.0 + jnp.tanh(0.7978845608028654 * (h + 0.044715 * h * h * h)))
    return _mm(h, w2) + b2


def _prob_attention(x, cnt, wqkv, bqkv, wo, bo, *, H, Dh, u, causal):
    """ProbSparse attention core, fully in VMEM (scores never hit HBM).

    Fused QKV projection, per-head masked softmax@V, sampled sparsity measurement,
    top-u query selection (stable-rank == lax.top_k with lower-index tie break),
    initial-context fill (mean / inclusive cumsum of V) and a single dm-wide
    output projection over the concatenated heads.
    """
    L = x.shape[0]
    dm = H * Dh
    scale = 1.0 / math.sqrt(Dh)
    need_meas = u < L                         # u >= L_Q  =>  every query attends

    qkv = _mm(x, wqkv) + bqkv                 # (L, 3*dm) f32
    q, k, v = qkv[:, :dm], qkv[:, dm:2 * dm], qkv[:, 2 * dm:]

    tri = None
    if causal or need_meas:
        rows = jax.lax.broadcasted_iota(jnp.int32, (L, L), 0)
        cols = jax.lax.broadcasted_iota(jnp.int32, (L, L), 1)
    if causal:
        tri = rows >= cols
    init = None
    if need_meas:
        if causal:
            init = _mm(tri.astype(jnp.float32), v)        # inclusive cumsum of V (all heads)
        else:
            init = jnp.mean(v, axis=0, keepdims=True)     # mean of V, broadcast per row

    ctx = []
    for h in range(H):
        sl = slice(h * Dh, (h + 1) * Dh)
        s = _mm_nt(q[:, sl], k[:, sl])                    # (L, L) raw scores, f32
        st = s * scale
        if causal:
            st = jnp.where(tri, st, -jnp.inf)             # ProbMask: key pos > query pos
        att = _mm(_softmax_rows(st), v[:, sl])            # (L, Dh)
        if need_meas:
            # sparsity measurement over the sampled keys (cnt = per-(q,k) sample count)
            smax = jnp.max(jnp.where(cnt > 0.0, s, -jnp.inf), axis=-1, keepdims=True)
            ssum = jnp.sum(cnt * s, axis=-1, keepdims=True)
            meas = smax - ssum * (1.0 / L)                # (L, 1) f32 (selection kept in f32)
            meas_t = jnp.transpose(jnp.broadcast_to(meas, (L, L)))   # [i, j] = meas_j
            better = (meas_t > meas) | ((meas_t == meas) & (cols < rows))
            rank = jnp.sum(better.astype(jnp.float32), axis=-1, keepdims=True)
            ctx.append(jnp.where(rank < float(u), att, init[:, sl]))
        else:
            ctx.append(att)

    ctx = jnp.concatenate(ctx, axis=-1)                   # (L, dm)
    return _mm(ctx, wo) + bo                              # single dm-wide out-projection


def _full_attention(xq, xkv, wq, bq, wkv, bkv, wo, bo, *, H, Dh):
    """Full (cross) attention core: q/kv projections, softmax(QK^T/sqrt(Dh))V, wo."""
    dm = H * Dh
    scale = 1.0 / math.sqrt(Dh)
    q = _mm(xq, wq) + bq
    kv = _mm(xkv, wkv) + bkv
    ctx = []
    for h in range(H):
        sl = slice(h * Dh, (h + 1) * Dh)
        s = _mm_nt(q[:, sl], kv[:, sl]) * scale
        ctx.append(_mm(_softmax_rows(s), kv[:, dm + h * Dh:dm + (h + 1) * Dh]))
    ctx = jnp.concatenate(ctx, axis=-1)
    return _mm(ctx, wo) + bo


# --------------------------------------------------------------------------- #
# Pallas kernels
# --------------------------------------------------------------------------- #
def _embed_kernel(xp_ref, xm_ref, wtok_ref, wtime_ref, pe_ref, o_ref, *, L):
    """TokenEmbedding (Conv1d k=3 circular, no bias) + TimeFeatureEmbedding + PE."""
    xp = xp_ref[0]                                        # (L + 2, c_in) circular-padded
    taps = jnp.concatenate([xp[t:t + L, :] for t in range(3)], axis=-1)   # (L, 3*c_in)
    o_ref[0] = _mm(taps, wtok_ref[...]) + _mm(xm_ref[0], wtime_ref[...]) + pe_ref[...]


def _enc_layer_kernel(x_ref, cnt_ref, wqkv_ref, bqkv_ref, wo_ref, bo_ref,
                      n1g_ref, n1b_ref, w1_ref, b1_ref, w2_ref, b2_ref,
                      n2g_ref, n2b_ref, fg_ref, fb_ref, o_ref,
                      *, H, Dh, u, act, final_norm):
    """Encoder layer: ProbSparse self-attention + norm1 + FFN + norm2
    (+ the encoder's final LayerNorm when this is the last layer) — one kernel."""
    x = x_ref[0]
    attn = _prob_attention(x, cnt_ref[...], wqkv_ref[...], bqkv_ref[...],
                           wo_ref[...], bo_ref[...], H=H, Dh=Dh, u=u, causal=False)
    x1 = _layer_norm(x + attn, n1g_ref[...], n1b_ref[...])
    y = _ffn(x1, w1_ref[...], b1_ref[...], w2_ref[...], b2_ref[...], act)
    out = _layer_norm(x1 + y, n2g_ref[...], n2b_ref[...])
    if final_norm:
        out = _layer_norm(out, fg_ref[...], fb_ref[...])
    o_ref[0] = out


def _dec_layer_kernel(x_ref, cr_ref, cnt_ref,
                      wqkv_ref, bqkv_ref, wo1_ref, bo1_ref, n1g_ref, n1b_ref,
                      wq_ref, bq_ref, wkv_ref, bkv_ref, wo2_ref, bo2_ref,
                      n2g_ref, n2b_ref,
                      w1_ref, b1_ref, w2_ref, b2_ref, n3g_ref, n3b_ref,
                      o_ref, *, H, Dh, u, act):
    """Decoder layer: causal ProbSparse self-attn + norm1 + cross-attn + norm2
    + FFN + norm3 — one kernel."""
    x = x_ref[0]
    attn = _prob_attention(x, cnt_ref[...], wqkv_ref[...], bqkv_ref[...],
                           wo1_ref[...], bo1_ref[...], H=H, Dh=Dh, u=u, causal=True)
    x1 = _layer_norm(x + attn, n1g_ref[...], n1b_ref[...])
    cr = _full_attention(x1, cr_ref[0], wq_ref[...], bq_ref[...], wkv_ref[...],
                         bkv_ref[...], wo2_ref[...], bo2_ref[...], H=H, Dh=Dh)
    x2 = _layer_norm(x1 + cr, n2g_ref[...], n2b_ref[...])
    y = _ffn(x2, w1_ref[...], b1_ref[...], w2_ref[...], b2_ref[...], act)
    o_ref[0] = _layer_norm(x2 + y, n3g_ref[...], n3b_ref[...])


def _distil_kernel(xp_ref, w_ref, b_ref, g_ref, bt_ref, m_ref, v_ref, pick_ref, o_ref,
                   *, Lc):
    """ConvLayer: Conv1d(k=3, pad=2, circular) + BatchNorm1d(eval) + ELU + MaxPool1d(3,2,1)."""
    # TODO(synk): BatchNorm1d eval-mode running stats (train-mode batch stats not modeled).
    C = xp_ref.shape[-1]
    xp = xp_ref[0]                                        # (Lc + 2, C) circular-padded
    taps = jnp.concatenate([xp[t:t + Lc, :] for t in range(3)], axis=-1)  # (Lc, 3*C)
    y = _mm(taps, w_ref[...]) + b_ref[...]
    y = (y - m_ref[...]) * jax.lax.rsqrt(v_ref[...] + _BN_EPS) * g_ref[...] + bt_ref[...]
    y = jnp.where(y > 0.0, y, jnp.exp(jnp.minimum(y, 0.0)) - 1.0)         # ELU(alpha=1)
    # MaxPool1d(3, 2, padding=1): neighbours via -inf-padded shifts, stride-2 row pick
    neg = jnp.full((1, C), -jnp.inf, dtype=jnp.float32)
    yp = jnp.concatenate([neg, y, neg], axis=0)                           # (Lc + 2, C)
    mfull = jnp.maximum(jnp.maximum(yp[0:Lc, :], yp[1:Lc + 1, :]), yp[2:Lc + 2, :])
    o_ref[0] = jnp.dot(pick_ref[...], mfull, preferred_element_type=jnp.float32)


def _norm_proj_kernel(x_ref, g_ref, b_ref, w_ref, pb_ref, o_ref):
    xn = _layer_norm(x_ref[0], g_ref[...], b_ref[...])
    o_ref[0] = _mm(xn, w_ref[...]) + pb_ref[...]


# --------------------------------------------------------------------------- #
# BlockSpec helpers
# --------------------------------------------------------------------------- #
def _shared(shape):
    n = len(shape)
    return pl.BlockSpec(shape, lambda b, n=n: (0,) * n)


def _batched(shape):
    n = len(shape)
    return pl.BlockSpec(shape, lambda b, n=n: (b,) + (0,) * (n - 1))


# --------------------------------------------------------------------------- #
# pallas_call wrappers
# --------------------------------------------------------------------------- #
def data_embedding(p, x, x_mark, pe):
    B, L, c_in = x.shape
    F = x_mark.shape[-1]
    dm = p["time_w"].shape[1]
    xp = jnp.concatenate([x[:, -1:], x, x[:, :1]], axis=1)               # circular pad 1
    wtok = p["tok_w"].reshape(3 * c_in, dm).astype(_BF)
    return pl.pallas_call(
        functools.partial(_embed_kernel, L=L),
        out_shape=jax.ShapeDtypeStruct((B, L, dm), jnp.float32),
        grid=(B,),
        in_specs=[
            _batched((1, L + 2, c_in)),
            _batched((1, L, F)),
            _shared((3 * c_in, dm)),
            _shared((F, dm)),
            _shared((L, dm)),
        ],
        out_specs=_batched((1, L, dm)),
        compiler_params=_PAR,
    )(xp, x_mark, wtok, p["time_w"].astype(_BF), pe)


def _prob_samples(key, L_Q, L_K, factor):
    """Static u plus per-(query,key) sample-count matrix for the sparsity measurement."""
    U_part = min(factor * int(math.ceil(math.log(L_K))), L_K)
    u = min(factor * int(math.ceil(math.log(L_Q))), L_Q)
    if u >= L_Q:                                   # fast path: measurement never used
        return u, jnp.zeros((L_Q, L_K), jnp.float32)
    # TODO(synk): torch.randint RNG is not reproducible; deterministic jax PRNG used instead.
    idx = jax.random.randint(key, (L_Q, U_part), 0, L_K)
    cnt = jax.nn.one_hot(idx, L_K, dtype=jnp.float32).sum(axis=1)
    return u, cnt


def encoder_layer(p, x, cfg, key, final_norm_gb=None):
    B, L, dm = x.shape
    H = cfg["n_heads"]
    Dh = dm // H
    dff = p["conv1_w"].shape[1]
    u, cnt = _prob_samples(key, L, L, cfg["factor"])
    if final_norm_gb is None:
        fg, fb = jnp.ones((dm,), jnp.float32), jnp.zeros((dm,), jnp.float32)
    else:
        fg, fb = final_norm_gb
    a = p["attn"]
    return pl.pallas_call(
        functools.partial(_enc_layer_kernel, H=H, Dh=Dh, u=u, act=cfg["activation"],
                          final_norm=final_norm_gb is not None),
        out_shape=jax.ShapeDtypeStruct((B, L, dm), jnp.float32),
        grid=(B,),
        in_specs=[
            _batched((1, L, dm)),
            _shared((L, L)),
            _shared((dm, 3 * dm)), _shared((1, 3 * dm)),
            _shared((dm, dm)), _shared((1, dm)),
            _shared((1, dm)), _shared((1, dm)),
            _shared((dm, dff)), _shared((1, dff)),
            _shared((dff, dm)), _shared((1, dm)),
            _shared((1, dm)), _shared((1, dm)),
            _shared((1, dm)), _shared((1, dm)),
        ],
        out_specs=_batched((1, L, dm)),
        compiler_params=_PAR,
    )(x, cnt,
      a["wqkv"].astype(_BF), a["bqkv"].reshape(1, -1),
      a["wo"].astype(_BF), a["bo"].reshape(1, -1),
      p["norm1_g"].reshape(1, -1), p["norm1_b"].reshape(1, -1),
      p["conv1_w"].astype(_BF), p["conv1_b"].reshape(1, -1),
      p["conv2_w"].astype(_BF), p["conv2_b"].reshape(1, -1),
      p["norm2_g"].reshape(1, -1), p["norm2_b"].reshape(1, -1),
      fg.reshape(1, -1), fb.reshape(1, -1))


def decoder_layer(p, x, cross, cfg, key):
    B, L, dm = x.shape
    S = cross.shape[1]
    H = cfg["n_heads"]
    Dh = dm // H
    dff = p["conv1_w"].shape[1]
    u, cnt = _prob_samples(key, L, L, cfg["factor"])
    sa, ca = p["self_attn"], p["cross_attn"]
    return pl.pallas_call(
        functools.partial(_dec_layer_kernel, H=H, Dh=Dh, u=u, act=cfg["activation"]),
        out_shape=jax.ShapeDtypeStruct((B, L, dm), jnp.float32),
        grid=(B,),
        in_specs=[
            _batched((1, L, dm)),
            _batched((1, S, dm)),
            _shared((L, L)),
            _shared((dm, 3 * dm)), _shared((1, 3 * dm)),
            _shared((dm, dm)), _shared((1, dm)),
            _shared((1, dm)), _shared((1, dm)),
            _shared((dm, dm)), _shared((1, dm)),
            _shared((dm, 2 * dm)), _shared((1, 2 * dm)),
            _shared((dm, dm)), _shared((1, dm)),
            _shared((1, dm)), _shared((1, dm)),
            _shared((dm, dff)), _shared((1, dff)),
            _shared((dff, dm)), _shared((1, dm)),
            _shared((1, dm)), _shared((1, dm)),
        ],
        out_specs=_batched((1, L, dm)),
        compiler_params=_PAR,
    )(x, cross, cnt,
      sa["wqkv"].astype(_BF), sa["bqkv"].reshape(1, -1),
      sa["wo"].astype(_BF), sa["bo"].reshape(1, -1),
      p["norm1_g"].reshape(1, -1), p["norm1_b"].reshape(1, -1),
      ca["wq"].astype(_BF), ca["bq"].reshape(1, -1),
      ca["wkv"].astype(_BF), ca["bkv"].reshape(1, -1),
      ca["wo"].astype(_BF), ca["bo"].reshape(1, -1),
      p["norm2_g"].reshape(1, -1), p["norm2_b"].reshape(1, -1),
      p["conv1_w"].astype(_BF), p["conv1_b"].reshape(1, -1),
      p["conv2_w"].astype(_BF), p["conv2_b"].reshape(1, -1),
      p["norm3_g"].reshape(1, -1), p["norm3_b"].reshape(1, -1))


def conv_distil(p, x):
    B, L, C = x.shape
    Lc = L + 2                                    # Conv1d(k=3, pad=2, circular)
    Lp = (Lc - 1) // 2 + 1                        # MaxPool1d(3, 2, padding=1)
    xp = jnp.concatenate([x[:, -2:], x, x[:, :2]], axis=1)                # circular pad 2
    pick = np.zeros((Lp, Lc), np.float32)
    pick[np.arange(Lp), 2 * np.arange(Lp)] = 1.0                          # stride-2 rows
    return pl.pallas_call(
        functools.partial(_distil_kernel, Lc=Lc),
        out_shape=jax.ShapeDtypeStruct((B, Lp, C), jnp.float32),
        grid=(B,),
        in_specs=[
            _batched((1, L + 4, C)),
            _shared((3 * C, C)),
            _shared((1, C)), _shared((1, C)), _shared((1, C)),
            _shared((1, C)), _shared((1, C)),
            _shared((Lp, Lc)),
        ],
        out_specs=_batched((1, Lp, C)),
        compiler_params=_PAR,
    )(xp, p["w"].reshape(3 * C, C).astype(_BF), p["b"].reshape(1, -1),
      p["bn_g"].reshape(1, -1), p["bn_b"].reshape(1, -1),
      p["bn_m"].reshape(1, -1), p["bn_v"].reshape(1, -1), jnp.asarray(pick))


def norm_project(x, g, b, pw, pb):
    B, L, D = x.shape
    N = pw.shape[1]
    return pl.pallas_call(
        _norm_proj_kernel,
        out_shape=jax.ShapeDtypeStruct((B, L, N), jnp.float32),
        grid=(B,),
        in_specs=[
            _batched((1, L, D)),
            _shared((1, D)), _shared((1, D)),
            _shared((D, N)), _shared((1, N)),
        ],
        out_specs=_batched((1, L, N)),
        compiler_params=_PAR,
    )(x, g.reshape(1, -1), b.reshape(1, -1), pw.astype(_BF), pb.reshape(1, -1))


# --------------------------------------------------------------------------- #
# Embedding constants
# --------------------------------------------------------------------------- #
def positional_embedding(L, d_model):
    position = np.arange(L, dtype=np.float32)[:, None]
    div_term = np.exp(np.arange(0, d_model, 2, dtype=np.float32)
                      * -(math.log(10000.0) / d_model))
    pe = np.zeros((L, d_model), dtype=np.float32)
    pe[:, 0::2] = np.sin(position * div_term)
    pe[:, 1::2] = np.cos(position * div_term)
    return jnp.asarray(pe)


# --------------------------------------------------------------------------- #
# Full model forward
# --------------------------------------------------------------------------- #
def informer_forward(params, cfg, x_enc, x_mark_enc, x_dec, x_mark_dec):
    keys = jax.random.split(jax.random.PRNGKey(1234), cfg["e_layers"] + cfg["d_layers"])
    dm = cfg["d_model"]
    e = cfg["e_layers"]

    # ----- encoder -----
    x = data_embedding(params["enc_emb"], x_enc, x_mark_enc,
                       positional_embedding(x_enc.shape[1], dm))
    enc_final = (params["enc_norm_g"], params["enc_norm_b"])
    if cfg["distil"]:
        for i in range(e - 1):
            x = encoder_layer(params["enc_layers"][i], x, cfg, keys[i])
            x = conv_distil(params["enc_convs"][i], x)
        x = encoder_layer(params["enc_layers"][e - 1], x, cfg, keys[e - 1],
                          final_norm_gb=enc_final)
    else:
        for i in range(e):
            x = encoder_layer(params["enc_layers"][i], x, cfg, keys[i],
                              final_norm_gb=enc_final if i == e - 1 else None)
    enc_out = x

    # ----- decoder -----
    y = data_embedding(params["dec_emb"], x_dec, x_mark_dec,
                       positional_embedding(x_dec.shape[1], dm))
    for i in range(cfg["d_layers"]):
        y = decoder_layer(params["dec_layers"][i], y, enc_out, cfg, keys[e + i])
    out = norm_project(y, params["dec_norm_g"], params["dec_norm_b"],
                       params["proj_w"], params["proj_b"])
    return out[:, -cfg["pred_len"]:, :]


# --------------------------------------------------------------------------- #
# Deterministic parameter initialization (synthetic — shapes follow __init__)
# --------------------------------------------------------------------------- #
def init_params(key, cfg):
    dm, dff = cfg["d_model"], cfg["d_ff"]
    kit = iter(jax.random.split(key, 256))

    def dense(fi, fo, bias=True):
        w = jax.random.normal(next(kit), (fi, fo), jnp.float32) / math.sqrt(fi)
        b = (jax.random.normal(next(kit), (fo,), jnp.float32) * 0.02
             if bias else jnp.zeros((fo,), jnp.float32))
        return w, b

    def norm():
        return jnp.ones((dm,), jnp.float32), jnp.zeros((dm,), jnp.float32)

    def prob_attn_params():
        wq, bq = dense(dm, dm); wk, bk = dense(dm, dm)
        wv, bv = dense(dm, dm); wo, bo = dense(dm, dm)
        return dict(wqkv=jnp.concatenate([wq, wk, wv], axis=1),
                    bqkv=jnp.concatenate([bq, bk, bv], axis=0), wo=wo, bo=bo)

    def cross_attn_params():
        wq, bq = dense(dm, dm); wk, bk = dense(dm, dm)
        wv, bv = dense(dm, dm); wo, bo = dense(dm, dm)
        return dict(wq=wq, bq=bq, wkv=jnp.concatenate([wk, wv], axis=1),
                    bkv=jnp.concatenate([bk, bv], axis=0), wo=wo, bo=bo)

    def embed_params(c_in):
        # TODO(synk): PyTorch Conv1d weights are (out, in, k); permute to (k, in, out)
        #             before use here when loading real checkpoints.
        tok = jax.random.normal(next(kit), (3, c_in, dm), jnp.float32) / math.sqrt(3 * c_in)
        time_w, _ = dense(cfg["time_feats"], dm, bias=False)
        return dict(tok_w=tok, time_w=time_w)

    def enc_layer_params():
        c1w, c1b = dense(dm, dff); c2w, c2b = dense(dff, dm)
        n1g, n1b = norm(); n2g, n2b = norm()
        return dict(attn=prob_attn_params(), conv1_w=c1w, conv1_b=c1b,
                    conv2_w=c2w, conv2_b=c2b,
                    norm1_g=n1g, norm1_b=n1b, norm2_g=n2g, norm2_b=n2b)

    def conv_layer_params():
        w = jax.random.normal(next(kit), (3, dm, dm), jnp.float32) / math.sqrt(3 * dm)
        b = jax.random.normal(next(kit), (dm,), jnp.float32) * 0.02
        return dict(w=w, b=b,
                    bn_g=jnp.ones((dm,), jnp.float32), bn_b=jnp.zeros((dm,), jnp.float32),
                    bn_m=jnp.zeros((dm,), jnp.float32), bn_v=jnp.ones((dm,), jnp.float32))

    def dec_layer_params():
        c1w, c1b = dense(dm, dff); c2w, c2b = dense(dff, dm)
        n1g, n1b = norm(); n2g, n2b = norm(); n3g, n3b = norm()
        return dict(self_attn=prob_attn_params(), cross_attn=cross_attn_params(),
                    conv1_w=c1w, conv1_b=c1b, conv2_w=c2w, conv2_b=c2b,
                    norm1_g=n1g, norm1_b=n1b, norm2_g=n2g, norm2_b=n2b,
                    norm3_g=n3g, norm3_b=n3b)

    proj_w, proj_b = dense(dm, cfg["c_out"])
    enc_ng, enc_nb = norm(); dec_ng, dec_nb = norm()
    return dict(
        enc_emb=embed_params(cfg["enc_in"]),
        dec_emb=embed_params(cfg["dec_in"]),
        enc_layers=[enc_layer_params() for _ in range(cfg["e_layers"])],
        enc_convs=([conv_layer_params() for _ in range(cfg["e_layers"] - 1)]
                   if cfg["distil"] else None),
        enc_norm_g=enc_ng, enc_norm_b=enc_nb,
        dec_layers=[dec_layer_params() for _ in range(cfg["d_layers"])],
        dec_norm_g=dec_ng, dec_norm_b=dec_nb,
        proj_w=proj_w, proj_b=proj_b,
    )


# --------------------------------------------------------------------------- #
if __name__ == "__main__":
    cfg = dict(
        enc_in=4, dec_in=4, c_out=4,
        d_model=32, n_heads=4, d_ff=64,
        e_layers=2, d_layers=1,
        seq_len=16, label_len=8, pred_len=8,
        factor=5, distil=True, activation="relu",
        dropout=0.0, output_attention=False,
        time_feats=4,               # embed='timeF', freq='h'
    )

    key = jax.random.PRNGKey(0)
    kp, k1, k2, k3, k4 = jax.random.split(key, 5)
    params = init_params(kp, cfg)

    B = 2
    dec_len = cfg["label_len"] + cfg["pred_len"]
    x_enc = jax.random.normal(k1, (B, cfg["seq_len"], cfg["enc_in"]), jnp.float32)
    x_mark_enc = jax.random.normal(k2, (B, cfg["seq_len"], cfg["time_feats"]), jnp.float32)
    x_dec = jax.random.normal(k3, (B, dec_len, cfg["dec_in"]), jnp.float32)
    x_mark_dec = jax.random.normal(k4, (B, dec_len, cfg["time_feats"]), jnp.float32)

    fwd = jax.jit(lambda a, b, c, d: informer_forward(params, cfg, a, b, c, d))
    out = jax.block_until_ready(fwd(x_enc, x_mark_enc, x_dec, x_mark_dec))

    assert out.shape == (B, cfg["pred_len"], cfg["c_out"]), out.shape
    assert bool(jnp.all(jnp.isfinite(out)))
    print("KERNEL_OK")
</pallas_src>

<mosaic_0001>
module attributes {stable_mosaic.version = 11 : i64} {
  func.func @_embed_kernel(%arg0: i32, %arg1: memref<1x18x4xf32, #tpu.memory_space<vmem>>, %arg2: memref<1x16x4xf32, #tpu.memory_space<vmem>>, %arg3: memref<12x32xbf16, #tpu.memory_space<vmem>>, %arg4: memref<4x32xbf16, #tpu.memory_space<vmem>>, %arg5: memref<16x32xf32, #tpu.memory_space<vmem>>, %arg6: memref<1x16x32xf32, #tpu.memory_space<vmem>>) attributes {dimension_semantics = [#tpu.dimension_semantics<parallel>], iteration_bounds = array<i64: 2>, scalar_prefetch = 0 : i64, scratch_operands = 0 : i64, tpu.core_type = #tpu.core_type<tc>, window_params = [{transform_indices = @transform_0, window_bounds = array<i64: 1, 18, 4>}, {transform_indices = @transform_1, window_bounds = array<i64: 1, 16, 4>}, {pipeline_mode = #tpu.pipeline_mode<synchronous>, transform_indices = @transform_2, window_bounds = array<i64: 12, 32>}, {pipeline_mode = #tpu.pipeline_mode<synchronous>, transform_indices = @transform_3, window_bounds = array<i64: 4, 32>}, {pipeline_mode = #tpu.pipeline_mode<synchronous>, transform_indices = @transform_4, window_bounds = array<i64: 16, 32>}, {transform_indices = @transform_5, window_bounds = array<i64: 1, 16, 32>}]} {
    %c0 = arith.constant 0 : index
    %c0_0 = arith.constant 0 : index
    %c0_1 = arith.constant 0 : index
    %0 = vector.load %arg1[%c0, %c0_0, %c0_1] : memref<1x18x4xf32, #tpu.memory_space<vmem>>, vector<1x18x4xf32>
    %1 = vector.shape_cast %0 : vector<1x18x4xf32> to vector<18x4xf32>
    %2 = vector.extract_strided_slice %1 {offsets = [0, 0], sizes = [16, 4], strides = [1, 1]} : vector<18x4xf32> to vector<16x4xf32>
    %3 = vector.extract_strided_slice %1 {offsets = [1, 0], sizes = [16, 4], strides = [1, 1]} : vector<18x4xf32> to vector<16x4xf32>
    %4 = vector.extract_strided_slice %1 {offsets = [2, 0], sizes = [16, 4], strides = [1, 1]} : vector<18x4xf32> to vector<16x4xf32>
    %5 = tpu.concatenate %2, %3, %4 in 1 : vector<16x4xf32>, vector<16x4xf32>, vector<16x4xf32> -> vector<16x12xf32>
    %c0_2 = arith.constant 0 : index
    %c0_3 = arith.constant 0 : index
    %6 = vector.load %arg3[%c0_2, %c0_3] : memref<12x32xbf16, #tpu.memory_space<vmem>>, vector<12x32xbf16>
    %7 = arith.truncf %5 : vector<16x12xf32> to vector<16x12xbf16>
    %cst = arith.constant dense<0.000000e+00> : vector<16x32xf32>
    %8 = tpu.matmul %7, %6, %cst {dimension_numbers = #tpu.dot_dimension_numbers<[1], [0], [0], [1], [0, 0, 1, 1], [], []>} : vector<16x12xbf16>, vector<12x32xbf16>, vector<16x32xf32> -> vector<16x32xf32>
    %c0_4 = arith.constant 0 : index
    %c0_5 = arith.constant 0 : index
    %c0_6 = arith.constant 0 : index
    %9 = vector.load %arg2[%c0_4, %c0_5, %c0_6] : memref<1x16x4xf32, #tpu.memory_space<vmem>>, vector<1x16x4xf32>
    %10 = vector.shape_cast %9 : vector<1x16x4xf32> to vector<16x4xf32>
    %c0_7 = arith.constant 0 : index
    %c0_8 = arith.constant 0 : index
    %11 = vector.load %arg4[%c0_7, %c0_8] : memref<4x32xbf16, #tpu.memory_space<vmem>>, vector<4x32xbf16>
    %12 = arith.truncf %10 : vector<16x4xf32> to vector<16x4xbf16>
    %cst_9 = arith.constant dense<0.000000e+00> : vector<16x32xf32>
    %13 = tpu.matmul %12, %11, %cst_9 {dimension_numbers = #tpu.dot_dimension_numbers<[1], [0], [0], [1], [0, 0, 1, 1], [], []>} : vector<16x4xbf16>, vector<4x32xbf16>, vector<16x32xf32> -> vector<16x32xf32>
    %14 = arith.addf %8, %13 : vector<16x32xf32>
    %c0_10 = arith.constant 0 : index
    %c0_11 = arith.constant 0 : index
    %15 = vector.load %arg5[%c0_10, %c0_11] : memref<16x32xf32, #tpu.memory_space<vmem>>, vector<16x32xf32>
    %16 = arith.addf %14, %15 : vector<16x32xf32>
    %c0_12 = arith.constant 0 : index
    %c0_13 = arith.constant 0 : index
    %c0_14 = arith.constant 0 : index
    %17 = vector.load %arg6[%c0_12, %c0_13, %c0_14] : memref<1x16x32xf32, #tpu.memory_space<vmem>>, vector<1x16x32xf32>
    %18 = vector.shape_cast %17 : vector<1x16x32xf32> to vector<16x32xf32>
    %19 = vector.shape_cast %16 : vector<16x32xf32> to vector<1x16x32xf32>
    tpu.vector_store %arg6[%c0_12, %c0_13, %c0_14], %19 {strides = array<i32>} : memref<1x16x32xf32, #tpu.memory_space<vmem>>, vector<1x16x32xf32>,
    return
  }
  func.func @transform_0(%arg0: i32) -> (i32, i32, i32) {
    %c0_i32 = arith.constant 0 : i32
    %c0_i32_0 = arith.constant 0 : i32
    %c0_i32_1 = arith.constant 0 : i32
    return %arg0, %c0_i32, %c0_i32_0 : i32, i32, i32
  }
  func.func @transform_1(%arg0: i32) -> (i32, i32, i32) {
    %c0_i32 = arith.constant 0 : i32
    %c0_i32_0 = arith.constant 0 : i32
    %c0_i32_1 = arith.constant 0 : i32
    return %arg0, %c0_i32, %c0_i32_0 : i32, i32, i32
  }
  func.func @transform_2(%arg0: i32) -> (i32, i32) {
    %c0_i32 = arith.constant 0 : i32
    %c0_i32_0 = arith.constant 0 : i32
    %c0_i32_1 = arith.constant 0 : i32
    return %c0_i32, %c0_i32_0 : i32, i32
  }
  func.func @transform_3(%arg0: i32) -> (i32, i32) {
    %c0_i32 = arith.constant 0 : i32
    %c0_i32_0 = arith.constant 0 : i32
    %c0_i32_1 = arith.constant 0 : i32
    return %c0_i32, %c0_i32_0 : i32, i32
  }
  func.func @transform_4(%arg0: i32) -> (i32, i32) {
    %c0_i32 = arith.constant 0 : i32
    %c0_i32_0 = arith.constant 0 : i32
    %c0_i32_1 = arith.constant 0 : i32
    return %c0_i32, %c0_i32_0 : i32, i32
  }
  func.func @transform_5(%arg0: i32) -> (i32, i32, i32) {
    %c0_i32 = arith.constant 0 : i32
    %c0_i32_0 = arith.constant 0 : i32
    %c0_i32_1 = arith.constant 0 : i32
    return %arg0, %c0_i32, %c0_i32_0 : i32, i32, i32
  }
}

module attributes {stable_mosaic.version = 11 : i64} {
  func.func @_enc_layer_kernel(%arg0: i32, %arg1: memref<1x16x32xf32, #tpu.memory_space<vmem>>, %arg2: memref<16x16xf32, #tpu.memory_space<vmem>>, %arg3: memref<32x96xbf16, #tpu.memory_space<vmem>>, %arg4: memref<1x96xf32, #tpu.memory_space<vmem>>, %arg5: memref<32x32xbf16, #tpu.memory_space<vmem>>, %arg6: memref<1x32xf32, #tpu.memory_space<vmem>>, %arg7: memref<1x32xf32, #tpu.memory_space<vmem>>, %arg8: memref<1x32xf32, #tpu.memory_space<vmem>>, %arg9: memref<32x64xbf16, #tpu.memory_space<vmem>>, %arg10: memref<1x64xf32, #tpu.memory_space<vmem>>, %arg11: memref<64x32xbf16, #tpu.memory_space<vmem>>, %arg12: memref<1x32xf32, #tpu.memory_space<vmem>>, %arg13: memref<1x32xf32, #tpu.memory_space<vmem>>, %arg14: memref<1x32xf32, #tpu.memory_space<vmem>>, %arg15: memref<1x32xf32, #tpu.memory_space<vmem>>, %arg16: memref<1x32xf32, #tpu.memory_space<vmem>>, %arg17: memref<1x16x32xf32, #tpu.memory_space<vmem>>) attributes {dimension_semantics = [#tpu.dimension_semantics<parallel>], iteration_bounds = array<i64: 2>, scalar_prefetch = 0 : i64, scratch_operands = 0 : i64, tpu.core_type = #tpu.core_type<tc>, window_params = [{transform_indices = @transform_0, window_bounds = array<i64: 1, 16, 32>}, {pipeline_mode = #tpu.pipeline_mode<synchronous>, transform_indices = @transform_1, window_bounds = array<i64: 16, 16>}, {pipeline_mode = #tpu.pipeline_mode<synchronous>, transform_indices = @transform_2, window_bounds = array<i64: 32, 96>}, {pipeline_mode = #tpu.pipeline_mode<synchronous>, transform_indices = @transform_3, window_bounds = array<i64: 1, 96>}, {pipeline_mode = #tpu.pipeline_mode<synchronous>, transform_indices = @transform_4, window_bounds = array<i64: 32, 32>}, {pipeline_mode = #tpu.pipeline_mode<synchronous>, transform_indices = @transform_5, window_bounds = array<i64: 1, 32>}, {pipeline_mode = #tpu.pipeline_mode<synchronous>, transform_indices = @transform_6, window_bounds = array<i64: 1, 32>}, {pipeline_mode = #tpu.pipeline_mode<synchronous>, transform_indices = @transform_7, window_bounds = array<i64: 1, 32>}, {pipeline_mode = #tpu.pipeline_mode<synchronous>, transform_indices = @transform_8, window_bounds = array<i64: 32, 64>}, {pipeline_mode = #tpu.pipeline_mode<synchronous>, transform_indices = @transform_9, window_bounds = array<i64: 1, 64>}, {pipeline_mode = #tpu.pipeline_mode<synchronous>, transform_indices = @transform_10, window_bounds = array<i64: 64, 32>}, {pipeline_mode = #tpu.pipeline_mode<synchronous>, transform_indices = @transform_11, window_bounds = array<i64: 1, 32>}, {pipeline_mode = #tpu.pipeline_mode<synchronous>, transform_indices = @transform_12, window_bounds = array<i64: 1, 32>}, {pipeline_mode = #tpu.pipeline_mode<synchronous>, transform_indices = @transform_13, window_bounds = array<i64: 1, 32>}, {pipeline_mode = #tpu.pipeline_mode<synchronous>, transform_indices = @transform_14, window_bounds = array<i64: 1, 32>}, {pipeline_mode = #tpu.pipeline_mode<synchronous>, transform_indices = @transform_15, window_bounds = array<i64: 1, 32>}, {transform_indices = @transform_16, window_bounds = array<i64: 1, 16, 32>}]} {
    %c0 = arith.constant 0 : index
    %c0_0 = arith.constant 0 : index
    %c0_1 = arith.constant 0 : index
    %0 = vector.load %arg1[%c0, %c0_0, %c0_1] : memref<1x16x32xf32, #tpu.memory_space<vmem>>, vector<1x16x32xf32>
    %1 = vector.shape_cast %0 : vector<1x16x32xf32> to vector<16x32xf32>
    %c0_2 = arith.constant 0 : index
    %c0_3 = arith.constant 0 : index
    %2 = vector.load %arg2[%c0_2, %c0_3] : memref<16x16xf32, #tpu.memory_space<vmem>>, vector<16x16xf32>
    %c0_4 = arith.constant 0 : index
    %c0_5 = arith.constant 0 : index
    %3 = vector.load %arg3[%c0_4, %c0_5] : memref<32x96xbf16, #tpu.memory_space<vmem>>, vector<32x96xbf16>
    %c0_6 = arith.constant 0 : index
    %c0_7 = arith.constant 0 : index
    %4 = vector.load %arg4[%c0_6, %c0_7] : memref<1x96xf32, #tpu.memory_space<vmem>>, vector<1x96xf32>
    %c0_8 = arith.constant 0 : index
    %c0_9 = arith.constant 0 : index
    %5 = vector.load %arg5[%c0_8, %c0_9] : memref<32x32xbf16, #tpu.memory_space<vmem>>, vector<32x32xbf16>
    %c0_10 = arith.constant 0 : index
    %c0_11 = arith.constant 0 : index
    %6 = vector.load %arg6[%c0_10, %c0_11] : memref<1x32xf32, #tpu.memory_space<vmem>>, vector<1x32xf32>
    %7 = arith.truncf %1 : vector<16x32xf32> to vector<16x32xbf16>
    %cst = arith.constant dense<0.000000e+00> : vector<16x96xf32>
    %8 = tpu.matmul %7, %3, %cst {dimension_numbers = #tpu.dot_dimension_numbers<[1], [0], [0], [1], [0, 0, 1, 1], [], []>} : vector<16x32xbf16>, vector<32x96xbf16>, vector<16x96xf32> -> vector<16x96xf32>
    %9 = vector.broadcast %4 : vector<1x96xf32> to vector<16x96xf32>
    %10 = arith.addf %8, %9 : vector<16x96xf32>
    %11 = vector.extract_strided_slice %10 {offsets = [0, 0], sizes = [16, 32], strides = [1, 1]} : vector<16x96xf32> to vector<16x32xf32>
    %12 = vector.extract_strided_slice %10 {offsets = [0, 32], sizes = [16, 32], strides = [1, 1]} : vector<16x96xf32> to vector<16x32xf32>
    %13 = vector.extract_strided_slice %10 {offsets = [0, 64], sizes = [16, 32], strides = [1, 1]} : vector<16x96xf32> to vector<16x32xf32>
    %14 = tpu.iota {dimensions = array<i32: 0>} : vector<16x16xi32>
    %15 = tpu.iota {dimensions = array<i32: 1>} : vector<16x16xi32>
    %cst_12 = arith.constant dense<0.000000e+00> : vector<32xf32>
    %16 = vector.multi_reduction <add>, %13, %cst_12 [0] : vector<16x32xf32> to vector<32xf32>
    %17 = vector.shape_cast %16 : vector<32xf32> to vector<1x32xf32>
    %cst_13 = arith.constant 1.600000e+01 : f32
    %18 = vector.broadcast %cst_13 : f32 to vector<1x32xf32>
    %19 = arith.divf %17, %18 : vector<1x32xf32>
    %20 = vector.extract_strided_slice %11 {offsets = [0, 0], sizes = [16, 8], strides = [1, 1]} : vector<16x32xf32> to vector<16x8xf32>
    %21 = vector.extract_strided_slice %12 {offsets = [0, 0], sizes = [16, 8], strides = [1, 1]} : vector<16x32xf32> to vector<16x8xf32>
    %22 = arith.truncf %20 : vector<16x8xf32> to vector<16x8xbf16>
    %23 = arith.truncf %21 : vector<16x8xf32> to vector<16x8xbf16>
    %cst_14 = arith.constant dense<0.000000e+00> : vector<16x16xf32>
    %24 = tpu.matmul %22, %23, %cst_14 {dimension_numbers = #tpu.dot_dimension_numbers<[1], [1], [0], [0], [0, 0, 1, 0], [], []>} : vector<16x8xbf16>, vector<16x8xbf16>, vector<16x16xf32> -> vector<16x16xf32>
    %cst_15 = arith.constant 0.353553385 : f32
    %25 = vector.broadcast %cst_15 : f32 to vector<16x16xf32>
    %26 = arith.mulf %24, %25 : vector<16x16xf32>
    %cst_16 = arith.constant dense<0xFF800000> : vector<16xf32>
    %27 = vector.multi_reduction <maximumf>, %26, %cst_16 [1] : vector<16x16xf32> to vector<16xf32>
    %28 = vector.shape_cast %27 : vector<16xf32> to vector<16x1xf32>
    %29 = vector.broadcast %28 : vector<16x1xf32> to vector<16x16xf32>
    %30 = arith.subf %26, %29 : vector<16x16xf32>
    %31 = math.exp %30 : vector<16x16xf32>
    %cst_17 = arith.constant dense<0.000000e+00> : vector<16xf32>
    %32 = vector.multi_reduction <add>, %31, %cst_17 [1] : vector<16x16xf32> to vector<16xf32>
    %33 = vector.shape_cast %32 : vector<16xf32> to vector<16x1xf32>
    %34 = tpu.reciprocal %33 {approx = true} : vector<16x1xf32> -> vector<16x1xf32>
    %35 = vector.broadcast %34 : vector<16x1xf32> to vector<16x16xf32>
    %36 = arith.mulf %31, %35 : vector<16x16xf32>
    %37 = vector.extract_strided_slice %13 {offsets = [0, 0], sizes = [16, 8], strides = [1, 1]} : vector<16x32xf32> to vector<16x8xf32>
    %38 = arith.truncf %36 : vector<16x16xf32> to vector<16x16xbf16>
    %39 = arith.truncf %37 : vector<16x8xf32> to vector<16x8xbf16>
    %cst_18 = arith.constant dense<0.000000e+00> : vector<16x8xf32>
    %40 = tpu.matmul %38, %39, %cst_18 {dimension_numbers = #tpu.dot_dimension_numbers<[1], [0], [0], [1], [0, 0, 1, 1], [], []>} : vector<16x16xbf16>, vector<16x8xbf16>, vector<16x8xf32> -> vector<16x8xf32>
    %cst_19 = arith.constant 0.000000e+00 : f32
    %41 = vector.broadcast %cst_19 : f32 to vector<16x16xf32>
    %42 = arith.cmpf ogt, %2, %41 : vector<16x16xf32>
    %cst_20 = arith.constant 0xFF800000 : f32
    %43 = vector.broadcast %cst_20 : f32 to vector<16x16xf32>
    %44 = arith.select %42, %24, %43 : vector<16x16xi1>, vector<16x16xf32>
    %cst_21 = arith.constant dense<0xFF800000> : vector<16xf32>
    %45 = vector.multi_reduction <maximumf>, %44, %cst_21 [1] : vector<16x16xf32> to vector<16xf32>
    %46 = vector.shape_cast %45 : vector<16xf32> to vector<16x1xf32>
    %47 = arith.mulf %2, %24 : vector<16x16xf32>
    %cst_22 = arith.constant dense<0.000000e+00> : vector<16xf32>
    %48 = vector.multi_reduction <add>, %47, %cst_22 [1] : vector<16x16xf32> to vector<16xf32>
    %49 = vector.shape_cast %48 : vector<16xf32> to vector<16x1xf32>
    %cst_23 = arith.constant 6.250000e-02 : f32
    %50 = vector.broadcast %cst_23 : f32 to vector<16x1xf32>
    %51 = arith.mulf %49, %50 : vector<16x1xf32>
    %52 = arith.subf %46, %51 : vector<16x1xf32>
    %53 = vector.shape_cast %52 : vector<16x1xf32> to vector<16x1xf32>
    %54 = vector.broadcast %53 : vector<16x1xf32> to vector<16x16xf32>
    %55 = tpu.transpose %54, [1, 0] : vector<16x16xf32> -> vector<16x16xf32>
    %56 = vector.broadcast %52 : vector<16x1xf32> to vector<16x16xf32>
    %57 = arith.cmpf ogt, %55, %56 : vector<16x16xf32>
    %58 = vector.broadcast %52 : vector<16x1xf32> to vector<16x16xf32>
    %59 = arith.cmpf oeq, %55, %58 : vector<16x16xf32>
    %60 = arith.cmpi slt, %15, %14 : vector<16x16xi32>
    %61 = arith.andi %59, %60 : vector<16x16xi1>
    %62 = arith.ori %57, %61 : vector<16x16xi1>
    %63 = arith.extui %62 : vector<16x16xi1> to vector<16x16xi32>
    %64 = arith.sitofp %63 : vector<16x16xi32> to vector<16x16xf32>
    %cst_24 = arith.constant dense<0.000000e+00> : vector<16xf32>
    %65 = vector.multi_reduction <add>, %64, %cst_24 [1] : vector<16x16xf32> to vector<16xf32>
    %66 = vector.shape_cast %65 : vector<16xf32> to vector<16x1xf32>
    %cst_25 = arith.constant 1.500000e+01 : f32
    %67 = vector.broadcast %cst_25 : f32 to vector<16x1xf32>
    %68 = arith.cmpf olt, %66, %67 : vector<16x1xf32>
    %69 = vector.extract_strided_slice %19 {offsets = [0, 0], sizes = [1, 8], strides = [1, 1]} : vector<1x32xf32> to vector<1x8xf32>
    %70 = vector.shape_cast %68 : vector<16x1xi1> to vector<16x1xi1>
    %71 = vector.broadcast %70 : vector<16x1xi1> to vector<16x8xi1>
    %72 = vector.shape_cast %69 : vector<1x8xf32> to vector<1x8xf32>
    %73 = vector.broadcast %72 : vector<1x8xf32> to vector<16x8xf32>
    %74 = arith.select %71, %40, %73 : vector<16x8xi1>, vector<16x8xf32>
    %75 = vector.extract_strided_slice %11 {offsets = [0, 8], sizes = [16, 8], strides = [1, 1]} : vector<16x32xf32> to vector<16x8xf32>
    %76 = vector.extract_strided_slice %12 {offsets = [0, 8], sizes = [16, 8], strides = [1, 1]} : vector<16x32xf32> to vector<16x8xf32>
    %77 = arith.truncf %75 : vector<16x8xf32> to vector<16x8xbf16>
    %78 = arith.truncf %76 : vector<16x8xf32> to vector<16x8xbf16>
    %cst_26 = arith.constant dense<0.000000e+00> : vector<16x16xf32>
    %79 = tpu.matmul %77, %78, %cst_26 {dimension_numbers = #tpu.dot_dimension_numbers<[1], [1], [0], [0], [0, 0, 1, 0], [], []>} : vector<16x8xbf16>, vector<16x8xbf16>, vector<16x16xf32> -> vector<16x16xf32>
    %cst_27 = arith.constant 0.353553385 : f32
    %80 = vector.broadcast %cst_27 : f32 to vector<16x16xf32>
    %81 = arith.mulf %79, %80 : vector<16x16xf32>
    %cst_28 = arith.constant dense<0xFF800000> : vector<16xf32>
    %82 = vector.multi_reduction <maximumf>, %81, %cst_28 [1] : vector<16x16xf32> to vector<16xf32>
    %83 = vector.shape_cast %82 : vector<16xf32> to vector<16x1xf32>
    %84 = vector.broadcast %83 : vector<16x1xf32> to vector<16x16xf32>
    %85 = arith.subf %81, %84 : vector<16x16xf32>
    %86 = math.exp %85 : vector<16x16xf32>
    %cst_29 = arith.constant dense<0.000000e+00> : vector<16xf32>
    %87 = vector.multi_reduction <add>, %86, %cst_29 [1] : vector<16x16xf32> to vector<16xf32>
    %88 = vector.shape_cast %87 : vector<16xf32> to vector<16x1xf32>
    %89 = tpu.reciprocal %88 {approx = true} : vector<16x1xf32> -> vector<16x1xf32>
    %90 = vector.broadcast %89 : vector<16x1xf32> to vector<16x16xf32>
    %91 = arith.mulf %86, %90 : vector<16x16xf32>
    %92 = vector.extract_strided_slice %13 {offsets = [0, 8], sizes = [16, 8], strides = [1, 1]} : vector<16x32xf32> to vector<16x8xf32>
    %93 = arith.truncf %91 : vector<16x16xf32> to vector<16x16xbf16>
    %94 = arith.truncf %92 : vector<16x8xf32> to vector<16x8xbf16>
    %cst_30 = arith.constant dense<0.000000e+00> : vector<16x8xf32>
    %95 = tpu.matmul %93, %94, %cst_30 {dimension_numbers = #tpu.dot_dimension_numbers<[1], [0], [0], [1], [0, 0, 1, 1], [], []>} : vector<16x16xbf16>, vector<16x8xbf16>, vector<16x8xf32> -> vector<16x8xf32>
    %cst_31 = arith.constant 0.000000e+00 : f32
    %96 = vector.broadcast %cst_31 : f32 to vector<16x16xf32>
    %97 = arith.cmpf ogt, %2, %96 : vector<16x16xf32>
    %cst_32 = arith.constant 0xFF800000 : f32
    %98 = vector.broadcast %cst_32 : f32 to vector<16x16xf32>
    %99 = arith.select %97, %79, %98 : vector<16x16xi1>, vector<16x16xf32>
    %cst_33 = arith.constant dense<0xFF800000> : vector<16xf32>
    %100 = vector.multi_reduction <maximumf>, %99, %cst_33 [1] : vector<16x16xf32> to vector<16xf32>
    %101 = vector.shape_cast %100 : vector<16xf32> to vector<16x1xf32>
    %102 = arith.mulf %2, %79 : vector<16x16xf32>
    %cst_34 = arith.constant dense<0.000000e+00> : vector<16xf32>
    %103 = vector.multi_reduction <add>, %102, %cst_34 [1] : vector<16x16xf32> to vector<16xf32>
    %104 = vector.shape_cast %103 : vector<16xf32> to vector<16x1xf32>
    %cst_35 = arith.constant 6.250000e-02 : f32
    %105 = vector.broadcast %cst_35 : f32 to vector<16x1xf32>
    %106 = arith.mulf %104, %105 : vector<16x1xf32>
    %107 = arith.subf %101, %106 : vector<16x1xf32>
    %108 = vector.shape_cast %107 : vector<16x1xf32> to vector<16x1xf32>
    %109 = vector.broadcast %108 : vector<16x1xf32> to vector<16x16xf32>
    %110 = tpu.transpose %109, [1, 0] : vector<16x16xf32> -> vector<16x16xf32>
    %111 = vector.broadcast %107 : vector<16x1xf32> to vector<16x16xf32>
    %112 = arith.cmpf ogt, %110, %111 : vector<16x16xf32>
    %113 = vector.broadcast %107 : vector<16x1xf32> to vector<16x16xf32>
    %114 = arith.cmpf oeq, %110, %113 : vector<16x16xf32>
    %115 = arith.cmpi slt, %15, %14 : vector<16x16xi32>
    %116 = arith.andi %114, %115 : vector<16x16xi1>
    %117 = arith.ori %112, %116 : vector<16x16xi1>
    %118 = arith.extui %117 : vector<16x16xi1> to vector<16x16xi32>
    %119 = arith.sitofp %118 : vector<16x16xi32> to vector<16x16xf32>
    %cst_36 = arith.constant dense<0.000000e+00> : vector<16xf32>
    %120 = vector.multi_reduction <add>, %119, %cst_36 [1] : vector<16x16xf32> to vector<16xf32>
    %121 = vector.shape_cast %120 : vector<16xf32> to vector<16x1xf32>
    %cst_37 = arith.constant 1.500000e+01 : f32
    %122 = vector.broadcast %cst_37 : f32 to vector<16x1xf32>
    %123 = arith.cmpf olt, %121, %122 : vector<16x1xf32>
    %124 = vector.extract_strided_slice %19 {offsets = [0, 8], sizes = [1, 8], strides = [1, 1]} : vector<1x32xf32> to vector<1x8xf32>
    %125 = vector.shape_cast %123 : vector<16x1xi1> to vector<16x1xi1>
    %126 = vector.broadcast %125 : vector<16x1xi1> to vector<16x8xi1>
    %127 = vector.shape_cast %124 : vector<1x8xf32> to vector<1x8xf32>
    %128 = vector.broadcast %127 : vector<1x8xf32> to vector<16x8xf32>
    %129 = arith.select %126, %95, %128 : vector<16x8xi1>, vector<16x8xf32>
    %130 = vector.extract_strided_slice %11 {offsets = [0, 16], sizes = [16, 8], strides = [1, 1]} : vector<16x32xf32> to vector<16x8xf32>
    %131 = vector.extract_strided_slice %12 {offsets = [0, 16], sizes = [16, 8], strides = [1, 1]} : vector<16x32xf32> to vector<16x8xf32>
    %132 = arith.truncf %130 : vector<16x8xf32> to vector<16x8xbf16>
    %133 = arith.truncf %131 : vector<16x8xf32> to vector<16x8xbf16>
    %cst_38 = arith.constant dense<0.000000e+00> : vector<16x16xf32>
    %134 = tpu.matmul %132, %133, %cst_38 {dimension_numbers = #tpu.dot_dimension_numbers<[1], [1], [0], [0], [0, 0, 1, 0], [], []>} : vector<16x8xbf16>, vector<16x8xbf16>, vector<16x16xf32> -> vector<16x16xf32>
    %cst_39 = arith.constant 0.353553385 : f32
    %135 = vector.broadcast %cst_39 : f32 to vector<16x16xf32>
    %136 = arith.mulf %134, %135 : vector<16x16xf32>
    %cst_40 = arith.constant dense<0xFF800000> : vector<16xf32>
    %137 = vector.multi_reduction <maximumf>, %136, %cst_40 [1] : vector<16x16xf32> to vector<16xf32>
    %138 = vector.shape_cast %137 : vector<16xf32> to vector<16x1xf32>
    %139 = vector.broadcast %138 : vector<16x1xf32> to vector<16x16xf32>
    %140 = arith.subf %136, %139 : vector<16x16xf32>
    %141 = math.exp %140 : vector<16x16xf32>
    %cst_41 = arith.constant dense<0.000000e+00> : vector<16xf32>
    %142 = vector.multi_reduction <add>, %141, %cst_41 [1] : vector<16x16xf32> to vector<16xf32>
    %143 = vector.shape_cast %142 : vector<16xf32> to vector<16x1xf32>
    %144 = tpu.reciprocal %143 {approx = true} : vector<16x1xf32> -> vector<16x1xf32>
    %145 = vector.broadcast %144 : vector<16x1xf32> to vector<16x16xf32>
    %146 = arith.mulf %141, %145 : vector<16x16xf32>
    %147 = vector.extract_strided_slice %13 {offsets = [0, 16], sizes = [16, 8], strides = [1, 1]} : vector<16x32xf32> to vector<16x8xf32>
    %148 = arith.truncf %146 : vector<16x16xf32> to vector<16x16xbf16>
    %149 = arith.truncf %147 : vector<16x8xf32> to vector<16x8xbf16>
    %cst_42 = arith.constant dense<0.000000e+00> : vector<16x8xf32>
    %150 = tpu.matmul %148, %149, %cst_42 {dimension_numbers = #tpu.dot_dimension_numbers<[1], [0], [0], [1], [0, 0, 1, 1], [], []>} : vector<16x16xbf16>, vector<16x8xbf16>, vector<16x8xf32> -> vector<16x8xf32>
    %cst_43 = arith.constant 0.000000e+00 : f32
    %151 = vector.broadcast %cst_43 : f32 to vector<16x16xf32>
    %152 = arith.cmpf ogt, %2, %151 : vector<16x16xf32>
    %cst_44 = arith.constant 0xFF800000 : f32
    %153 = vector.broadcast %cst_44 : f32 to vector<16x16xf32>
    %154 = arith.select %152, %134, %153 : vector<16x16xi1>, vector<16x16xf32>
    %cst_45 = arith.constant dense<0xFF800000> : vector<16xf32>
    %155 = vector.multi_reduction <maximumf>, %154, %cst_45 [1] : vector<16x16xf32> to vector<16xf32>
    %156 = vector.shape_cast %155 : vector<16xf32> to vector<16x1xf32>
    %157 = arith.mulf %2, %134 : vector<16x16xf32>
    %cst_46 = arith.constant dense<0.000000e+00> : vector<16xf32>
    %158 = vector.multi_reduction <add>, %157, %cst_46 [1] : vector<16x16xf32> to vector<16xf32>
    %159 = vector.shape_cast %158 : vector<16xf32> to vector<16x1xf32>
    %cst_47 = arith.constant 6.250000e-02 : f32
    %160 = vector.broadcast %cst_47 : f32 to vector<16x1xf32>
    %161 = arith.mulf %159, %160 : vector<16x1xf32>
    %162 = arith.subf %156, %161 : vector<16x1xf32>
    %163 = vector.shape_cast %162 : vector<16x1xf32> to vector<16x1xf32>
    %164 = vector.broadcast %163 : vector<16x1xf32> to vector<16x16xf32>
    %165 = tpu.transpose %164, [1, 0] : vector<16x16xf32> -> vector<16x16xf32>
    %166 = vector.broadcast %162 : vector<16x1xf32> to vector<16x16xf32>
    %167 = arith.cmpf ogt, %165, %166 : vector<16x16xf32>
    %168 = vector.broadcast %162 : vector<16x1xf32> to vector<16x16xf32>
    %169 = arith.cmpf oeq, %165, %168 : vector<16x16xf32>
    %170 = arith.cmpi slt, %15, %14 : vector<16x16xi32>
    %171 = arith.andi %169, %170 : vector<16x16xi1>
    %172 = arith.ori %167, %171 : vector<16x16xi1>
    %173 = arith.extui %172 : vector<16x16xi1> to vector<16x16xi32>
    %174 = arith.sitofp %173 : vector<16x16xi32> to vector<16x16xf32>
    %cst_48 = arith.constant dense<0.000000e+00> : vector<16xf32>
    %175 = vector.multi_reduction <add>, %174, %cst_48 [1] : vector<16x16xf32> to vector<16xf32>
    %176 = vector.shape_cast %175 : vector<16xf32> to vector<16x1xf32>
    %cst_49 = arith.constant 1.500000e+01 : f32
    %177 = vector.broadcast %cst_49 : f32 to vector<16x1xf32>
    %178 = arith.cmpf olt, %176, %177 : vector<16x1xf32>
    %179 = vector.extract_strided_slice %19 {offsets = [0, 16], sizes = [1, 8], strides = [1, 1]} : vector<1x32xf32> to vector<1x8xf32>
    %180 = vector.shape_cast %178 : vector<16x1xi1> to vector<16x1xi1>
    %181 = vector.broadcast %180 : vector<16x1xi1> to vector<16x8xi1>
    %182 = vector.shape_cast %179 : vector<1x8xf32> to vector<1x8xf32>
    %183 = vector.broadcast %182 : vector<1x8xf32> to vector<16x8xf32>
    %184 = arith.select %181, %150, %183 : vector<16x8xi1>, vector<16x8xf32>
    %185 = vector.extract_strided_slice %11 {offsets = [0, 24], sizes = [16, 8], strides = [1, 1]} : vector<16x32xf32> to vector<16x8xf32>
    %186 = vector.extract_strided_slice %12 {offsets = [0, 24], sizes = [16, 8], strides = [1, 1]} : vector<16x32xf32> to vector<16x8xf32>
    %187 = arith.truncf %185 : vector<16x8xf32> to vector<16x8xbf16>
    %188 = arith.truncf %186 : vector<16x8xf32> to vector<16x8xbf16>
    %cst_50 = arith.constant dense<0.000000e+00> : vector<16x16xf32>
    %189 = tpu.matmul %187, %188, %cst_50 {dimension_numbers = #tpu.dot_dimension_numbers<[1], [1], [0], [0], [0, 0, 1, 0], [], []>} : vector<16x8xbf16>, vector<16x8xbf16>, vector<16x16xf32> -> vector<16x16xf32>
    %cst_51 = arith.constant 0.353553385 : f32
    %190 = vector.broadcast %cst_51 : f32 to vector<16x16xf32>
    %191 = arith.mulf %189, %190 : vector<16x16xf32>
    %cst_52 = arith.constant dense<0xFF800000> : vector<16xf32>
    %192 = vector.multi_reduction <maximumf>, %191, %cst_52 [1] : vector<16x16xf32> to vector<16xf32>
    %193 = vector.shape_cast %192 : vector<16xf32> to vector<16x1xf32>
    %194 = vector.broadcast %193 : vector<16x1xf32> to vector<16x16xf32>
    %195 = arith.subf %191, %194 : vector<16x16xf32>
    %196 = math.exp %195 : vector<16x16xf32>
    %cst_53 = arith.constant dense<0.000000e+00> : vector<16xf32>
    %197 = vector.multi_reduction <add>, %196, %cst_53 [1] : vector<16x16xf32> to vector<16xf32>
    %198 = vector.shape_cast %197 : vector<16xf32> to vector<16x1xf32>
    %199 = tpu.reciprocal %198 {approx = true} : vector<16x1xf32> -> vector<16x1xf32>
    %200 = vector.broadcast %199 : vector<16x1xf32> to vector<16x16xf32>
    %201 = arith.mulf %196, %200 : vector<16x16xf32>
    %202 = vector.extract_strided_slice %13 {offsets = [0, 24], sizes = [16, 8], strides = [1, 1]} : vector<16x32xf32> to vector<16x8xf32>
    %203 = arith.truncf %201 : vector<16x16xf32> to vector<16x16xbf16>
    %204 = arith.truncf %202 : vector<16x8xf32> to vector<16x8xbf16>
    %cst_54 = arith.constant dense<0.000000e+00> : vector<16x8xf32>
    %205 = tpu.matmul %203, %204, %cst_54 {dimension_numbers = #tpu.dot_dimension_numbers<[1], [0], [0], [1], [0, 0, 1, 1], [], []>} : vector<16x16xbf16>, vector<16x8xbf16>, vector<16x8xf32> -> vector<16x8xf32>
    %cst_55 = arith.constant 0.000000e+00 : f32
    %206 = vector.broadcast %cst_55 : f32 to vector<16x16xf32>
    %207 = arith.cmpf ogt, %2, %206 : vector<16x16xf32>
    %cst_56 = arith.constant 0xFF800000 : f32
    %208 = vector.broadcast %cst_56 : f32 to vector<16x16xf32>
    %209 = arith.select %207, %189, %208 : vector<16x16xi1>, vector<16x16xf32>
    %cst_57 = arith.constant dense<0xFF800000> : vector<16xf32>
    %210 = vector.multi_reduction <maximumf>, %209, %cst_57 [1] : vector<16x16xf32> to vector<16xf32>
    %211 = vector.shape_cast %210 : vector<16xf32> to vector<16x1xf32>
    %212 = arith.mulf %2, %189 : vector<16x16xf32>
    %cst_58 = arith.constant dense<0.000000e+00> : vector<16xf32>
    %213 = vector.multi_reduction <add>, %212, %cst_58 [1] : vector<16x16xf32> to vector<16xf32>
    %214 = vector.shape_cast %213 : vector<16xf32> to vector<16x1xf32>
    %cst_59 = arith.constant 6.250000e-02 : f32
    %215 = vector.broadcast %cst_59 : f32 to vector<16x1xf32>
    %216 = arith.mulf %214, %215 : vector<16x1xf32>
    %217 = arith.subf %211, %216 : vector<16x1xf32>
    %218 = vector.shape_cast %217 : vector<16x1xf32> to vector<16x1xf32>
    %219 = vector.broadcast %218 : vector<16x1xf32> to vector<16x16xf32>
    %220 = tpu.transpose %219, [1, 0] : vector<16x16xf32> -> vector<16x16xf32>
    %221 = vector.broadcast %217 : vector<16x1xf32> to vector<16x16xf32>
    %222 = arith.cmpf ogt, %220, %221 : vector<16x16xf32>
    %223 = vector.broadcast %217 : vector<16x1xf32> to vector<16x16xf32>
    %224 = arith.cmpf oeq, %220, %223 : vector<16x16xf32>
    %225 = arith.cmpi slt, %15, %14 : vector<16x16xi32>
    %226 = arith.andi %224, %225 : vector<16x16xi1>
    %227 = arith.ori %222, %226 : vector<16x16xi1>
    %228 = arith.extui %227 : vector<16x16xi1> to vector<16x16xi32>
    %229 = arith.sitofp %228 : vector<16x16xi32> to vector<16x16xf32>
    %cst_60 = arith.constant dense<0.000000e+00> : vector<16xf32>
    %230 = vector.multi_reduction <add>, %229, %cst_60 [1] : vector<16x16xf32> to vector<16xf32>
    %231 = vector.shape_cast %230 : vector<16xf32> to vector<16x1xf32>
    %cst_61 = arith.constant 1.500000e+01 : f32
    %232 = vector.broadcast %cst_61 : f32 to vector<16x1xf32>
    %233 = arith.cmpf olt, %231, %232 : vector<16x1xf32>
    %234 = vector.extract_strided_slice %19 {offsets = [0, 24], sizes = [1, 8], strides = [1, 1]} : vector<1x32xf32> to vector<1x8xf32>
    %235 = vector.shape_cast %233 : vector<16x1xi1> to vector<16x1xi1>
    %236 = vector.broadcast %235 : vector<16x1xi1> to vector<16x8xi1>
    %237 = vector.shape_cast %234 : vector<1x8xf32> to vector<1x8xf32>
    %238 = vector.broadcast %237 : vector<1x8xf32> to vector<16x8xf32>
    %239 = arith.select %236, %205, %238 : vector<16x8xi1>, vector<16x8xf32>
    %240 = tpu.concatenate %74, %129, %184, %239 in 1 : vector<16x8xf32>, vector<16x8xf32>, vector<16x8xf32>, vector<16x8xf32> -> vector<16x32xf32>
    %241 = arith.truncf %240 : vector<16x32xf32> to vector<16x32xbf16>
    %cst_62 = arith.constant dense<0.000000e+00> : vector<16x32xf32>
    %242 = tpu.matmul %241, %5, %cst_62 {dimension_numbers = #tpu.dot_dimension_numbers<[1], [0], [0], [1], [0, 0, 1, 1], [], []>} : vector<16x32xbf16>, vector<32x32xbf16>, vector<16x32xf32> -> vector<16x32xf32>
    %243 = vector.broadcast %6 : vector<1x32xf32> to vector<16x32xf32>
    %244 = arith.addf %242, %243 : vector<16x32xf32>
    %245 = arith.addf %1, %244 : vector<16x32xf32>
    %c0_63 = arith.constant 0 : index
    %c0_64 = arith.constant 0 : index
    %246 = vector.load %arg7[%c0_63, %c0_64] : memref<1x32xf32, #tpu.memory_space<vmem>>, vector<1x32xf32>
    %c0_65 = arith.constant 0 : index
    %c0_66 = arith.constant 0 : index
    %247 = vector.load %arg8[%c0_65, %c0_66] : memref<1x32xf32, #tpu.memory_space<vmem>>, vector<1x32xf32>
    %cst_67 = arith.constant dense<0.000000e+00> : vector<16xf32>
    %248 = vector.multi_reduction <add>, %245, %cst_67 [1] : vector<16x32xf32> to vector<16xf32>
    %249 = vector.shape_cast %248 : vector<16xf32> to vector<16x1xf32>
    %cst_68 = arith.constant 3.200000e+01 : f32
    %250 = vector.broadcast %cst_68 : f32 to vector<16x1xf32>
    %251 = arith.divf %249, %250 : vector<16x1xf32>
    %252 = vector.broadcast %251 : vector<16x1xf32> to vector<16x32xf32>
    %253 = arith.subf %245, %252 : vector<16x32xf32>
    %254 = vector.broadcast %251 : vector<16x1xf32> to vector<16x32xf32>
    %255 = arith.subf %245, %254 : vector<16x32xf32>
    %256 = arith.mulf %253, %255 : vector<16x32xf32>
    %cst_69 = arith.constant dense<0.000000e+00> : vector<16xf32>
    %257 = vector.multi_reduction <add>, %256, %cst_69 [1] : vector<16x32xf32> to vector<16xf32>
    %258 = vector.shape_cast %257 : vector<16xf32> to vector<16x1xf32>
    %cst_70 = arith.constant 3.200000e+01 : f32
    %259 = vector.broadcast %cst_70 : f32 to vector<16x1xf32>
    %260 = arith.divf %258, %259 : vector<16x1xf32>
    %261 = vector.broadcast %251 : vector<16x1xf32> to vector<16x32xf32>
    %262 = arith.subf %245, %261 : vector<16x32xf32>
    %cst_71 = arith.constant 9.99999974E-6 : f32
    %263 = vector.broadcast %cst_71 : f32 to vector<16x1xf32>
    %264 = arith.addf %260, %263 : vector<16x1xf32>
    %265 = math.rsqrt %264 : vector<16x1xf32>
    %266 = vector.broadcast %265 : vector<16x1xf32> to vector<16x32xf32>
    %267 = arith.mulf %262, %266 : vector<16x32xf32>
    %268 = vector.broadcast %246 : vector<1x32xf32> to vector<16x32xf32>
    %269 = arith.mulf %267, %268 : vector<16x32xf32>
    %270 = vector.broadcast %247 : vector<1x32xf32> to vector<16x32xf32>
    %271 = arith.addf %269, %270 : vector<16x32xf32>
    %c0_72 = arith.constant 0 : index
    %c0_73 = arith.constant 0 : index
    %272 = vector.load %arg9[%c0_72, %c0_73] : memref<32x64xbf16, #tpu.memory_space<vmem>>, vector<32x64xbf16>
    %c0_74 = arith.constant 0 : index
    %c0_75 = arith.constant 0 : index
    %273 = vector.load %arg10[%c0_74, %c0_75] : memref<1x64xf32, #tpu.memory_space<vmem>>, vector<1x64xf32>
    %c0_76 = arith.constant 0 : index
    %c0_77 = arith.constant 0 : index
    %274 = vector.load %arg11[%c0_76, %c0_77] : memref<64x32xbf16, #tpu.memory_space<vmem>>, vector<64x32xbf16>
    %c0_78 = arith.constant 0 : index
    %c0_79 = arith.constant 0 : index
    %275 = vector.load %arg12[%c0_78, %c0_79] : memref<1x32xf32, #tpu.memory_space<vmem>>, vector<1x32xf32>
    %276 = arith.truncf %271 : vector<16x32xf32> to vector<16x32xbf16>
    %cst_80 = arith.constant dense<0.000000e+00> : vector<16x64xf32>
    %277 = tpu.matmul %276, %272, %cst_80 {dimension_numbers = #tpu.dot_dimension_numbers<[1], [0], [0], [1], [0, 0, 1, 1], [], []>} : vector<16x32xbf16>, vector<32x64xbf16>, vector<16x64xf32> -> vector<16x64xf32>
    %278 = vector.broadcast %273 : vector<1x64xf32> to vector<16x64xf32>
    %279 = arith.addf %277, %278 : vector<16x64xf32>
    %cst_81 = arith.constant 0.000000e+00 : f32
    %280 = vector.broadcast %cst_81 : f32 to vector<16x64xf32>
    %281 = arith.maximumf %279, %280 : vector<16x64xf32>
    %282 = arith.truncf %281 : vector<16x64xf32> to vector<16x64xbf16>
    %cst_82 = arith.constant dense<0.000000e+00> : vector<16x32xf32>
    %283 = tpu.matmul %282, %274, %cst_82 {dimension_numbers = #tpu.dot_dimension_numbers<[1], [0], [0], [1], [0, 0, 1, 1], [], []>} : vector<16x64xbf16>, vector<64x32xbf16>, vector<16x32xf32> -> vector<16x32xf32>
    %284 = vector.broadcast %275 : vector<1x32xf32> to vector<16x32xf32>
    %285 = arith.addf %283, %284 : vector<16x32xf32>
    %286 = arith.addf %271, %285 : vector<16x32xf32>
    %c0_83 = arith.constant 0 : index
    %c0_84 = arith.constant 0 : index
    %287 = vector.load %arg13[%c0_83, %c0_84] : memref<1x32xf32, #tpu.memory_space<vmem>>, vector<1x32xf32>
    %c0_85 = arith.constant 0 : index
    %c0_86 = arith.constant 0 : index
    %288 = vector.load %arg14[%c0_85, %c0_86] : memref<1x32xf32, #tpu.memory_space<vmem>>, vector<1x32xf32>
    %cst_87 = arith.constant dense<0.000000e+00> : vector<16xf32>
    %289 = vector.multi_reduction <add>, %286, %cst_87 [1] : vector<16x32xf32> to vector<16xf32>
    %290 = vector.shape_cast %289 : vector<16xf32> to vector<16x1xf32>
    %cst_88 = arith.constant 3.200000e+01 : f32
    %291 = vector.broadcast %cst_88 : f32 to vector<16x1xf32>
    %292 = arith.divf %290, %291 : vector<16x1xf32>
    %293 = vector.broadcast %292 : vector<16x1xf32> to vector<16x32xf32>
    %294 = arith.subf %286, %293 : vector<16x32xf32>
    %295 = vector.broadcast %292 : vector<16x1xf32> to vector<16x32xf32>
    %296 = arith.subf %286, %295 : vector<16x32xf32>
    %297 = arith.mulf %294, %296 : vector<16x32xf32>
    %cst_89 = arith.constant dense<0.000000e+00> : vector<16xf32>
    %298 = vector.multi_reduction <add>, %297, %cst_89 [1] : vector<16x32xf32> to vector<16xf32>
    %299 = vector.shape_cast %298 : vector<16xf32> to vector<16x1xf32>
    %cst_90 = arith.constant 3.200000e+01 : f32
    %300 = vector.broadcast %cst_90 : f32 to vector<16x1xf32>
    %301 = arith.divf %299, %300 : vector<16x1xf32>
    %302 = vector.broadcast %292 : vector<16x1xf32> to vector<16x32xf32>
    %303 = arith.subf %286, %302 : vector<16x32xf32>
    %cst_91 = arith.constant 9.99999974E-6 : f32
    %304 = vector.broadcast %cst_91 : f32 to vector<16x1xf32>
    %305 = arith.addf %301, %304 : vector<16x1xf32>
    %306 = math.rsqrt %305 : vector<16x1xf32>
    %307 = vector.broadcast %306 : vector<16x1xf32> to vector<16x32xf32>
    %308 = arith.mulf %303, %307 : vector<16x32xf32>
    %309 = vector.broadcast %287 : vector<1x32xf32> to vector<16x32xf32>
    %310 = arith.mulf %308, %309 : vector<16x32xf32>
    %311 = vector.broadcast %288 : vector<1x32xf32> to vector<16x32xf32>
    %312 = arith.addf %310, %311 : vector<16x32xf32>
    %c0_92 = arith.constant 0 : index
    %c0_93 = arith.constant 0 : index
    %c0_94 = arith.constant 0 : index
    %313 = vector.load %arg17[%c0_92, %c0_93, %c0_94] : memref<1x16x32xf32, #tpu.memory_space<vmem>>, vector<1x16x32xf32>
    %314 = vector.shape_cast %313 : vector<1x16x32xf32> to vector<16x32xf32>
    %315 = vector.shape_cast %312 : vector<16x32xf32> to vector<1x16x32xf32>
    tpu.vector_store %arg17[%c0_92, %c0_93, %c0_94], %315 {strides = array<i32>} : memref<1x16x32xf32, #tpu.memory_space<vmem>>, vector<1x16x32xf32>,
    return
  }
  func.func @transform_0(%arg0: i32) -> (i32, i32, i32) {
    %c0_i32 = arith.constant 0 : i32
    %c0_i32_0 = arith.constant 0 : i32
    %c0_i32_1 = arith.constant 0 : i32
    return %arg0, %c0_i32, %c0_i32_0 : i32, i32, i32
  }
  func.func @transform_1(%arg0: i32) -> (i32, i32) {
    %c0_i32 = arith.constant 0 : i32
    %c0_i32_0 = arith.constant 0 : i32
    %c0_i32_1 = arith.constant 0 : i32
    return %c0_i32, %c0_i32_0 : i32, i32
  }
  func.func @transform_2(%arg0: i32) -> (i32, i32) {
    %c0_i32 = arith.constant 0 : i32
    %c0_i32_0 = arith.constant 0 : i32
    %c0_i32_1 = arith.constant 0 : i32
    return %c0_i32, %c0_i32_0 : i32, i32
  }
  func.func @transform_3(%arg0: i32) -> (i32, i32) {
    %c0_i32 = arith.constant 0 : i32
    %c0_i32_0 = arith.constant 0 : i32
    %c0_i32_1 = arith.constant 0 : i32
    return %c0_i32, %c0_i32_0 : i32, i32
  }
  func.func @transform_4(%arg0: i32) -> (i32, i32) {
    %c0_i32 = arith.constant 0 : i32
    %c0_i32_0 = arith.constant 0 : i32
    %c0_i32_1 = arith.constant 0 : i32
    return %c0_i32, %c0_i32_0 : i32, i32
  }
  func.func @transform_5(%arg0: i32) -> (i32, i32) {
    %c0_i32 = arith.constant 0 : i32
    %c0_i32_0 = arith.constant 0 : i32
    %c0_i32_1 = arith.constant 0 : i32
    return %c0_i32, %c0_i32_0 : i32, i32
  }
  func.func @transform_6(%arg0: i32) -> (i32, i32) {
    %c0_i32 = arith.constant 0 : i32
    %c0_i32_0 = arith.constant 0 : i32
    %c0_i32_1 = arith.constant 0 : i32
    return %c0_i32, %c0_i32_0 : i32, i32
  }
  func.func @transform_7(%arg0: i32) -> (i32, i32) {
    %c0_i32 = arith.constant 0 : i32
    %c0_i32_0 = arith.constant 0 : i32
    %c0_i32_1 = arith.constant 0 : i32
    return %c0_i32, %c0_i32_0 : i32, i32
  }
  func.func @transform_8(%arg0: i32) -> (i32, i32) {
    %c0_i32 = arith.constant 0 : i32
    %c0_i32_0 = arith.constant 0 : i32
    %c0_i32_1 = arith.constant 0 : i32
    return %c0_i32, %c0_i32_0 : i32, i32
  }
  func.func @transform_9(%arg0: i32) -> (i32, i32) {
    %c0_i32 = arith.constant 0 : i32
    %c0_i32_0 = arith.constant 0 : i32
    %c0_i32_1 = arith.constant 0 : i32
    return %c0_i32, %c0_i32_0 : i32, i32
  }
  func.func @transform_10(%arg0: i32) -> (i32, i32) {
    %c0_i32 = arith.constant 0 : i32
    %c0_i32_0 = arith.constant 0 : i32
    %c0_i32_1 = arith.constant 0 : i32
    return %c0_i32, %c0_i32_0 : i32, i32
  }
  func.func @transform_11(%arg0: i32) -> (i32, i32) {
    %c0_i32 = arith.constant 0 : i32
    %c0_i32_0 = arith.constant 0 : i32
    %c0_i32_1 = arith.constant 0 : i32
    return %c0_i32, %c0_i32_0 : i32, i32
  }
  func.func @transform_12(%arg0: i32) -> (i32, i32) {
    %c0_i32 = arith.constant 0 : i32
    %c0_i32_0 = arith.constant 0 : i32
    %c0_i32_1 = arith.constant 0 : i32
    return %c0_i32, %c0_i32_0 : i32, i32
  }
  func.func @transform_13(%arg0: i32) -> (i32, i32) {
    %c0_i32 = arith.constant 0 : i32
    %c0_i32_0 = arith.constant 0 : i32
    %c0_i32_1 = arith.constant 0 : i32
    return %c0_i32, %c0_i32_0 : i32, i32
  }
  func.func @transform_14(%arg0: i32) -> (i32, i32) {
    %c0_i32 = arith.constant 0 : i32
    %c0_i32_0 = arith.constant 0 : i32
    %c0_i32_1 = arith.constant 0 : i32
    return %c0_i32, %c0_i32_0 : i32, i32
  }
  func.func @transform_15(%arg0: i32) -> (i32, i32) {
    %c0_i32 = arith.constant 0 : i32
    %c0_i32_0 = arith.constant 0 : i32
    %c0_i32_1 = arith.constant 0 : i32
    return %c0_i32, %c0_i32_0 : i32, i32
  }
  func.func @transform_16(%arg0: i32) -> (i32, i32, i32) {
    %c0_i32 = arith.constant 0 : i32
    %c0_i32_0 = arith.constant 0 : i32
    %c0_i32_1 = arith.constant 0 : i32
    return %arg0, %c0_i32, %c0_i32_0 : i32, i32, i32
  }
}

module attributes {stable_mosaic.version = 11 : i64} {
  func.func @_distil_kernel(%arg0: i32, %arg1: memref<1x20x32xf32, #tpu.memory_space<vmem>>, %arg2: memref<96x32xbf16, #tpu.memory_space<vmem>>, %arg3: memref<1x32xf32, #tpu.memory_space<vmem>>, %arg4: memref<1x32xf32, #tpu.memory_space<vmem>>, %arg5: memref<1x32xf32, #tpu.memory_space<vmem>>, %arg6: memref<1x32xf32, #tpu.memory_space<vmem>>, %arg7: memref<1x32xf32, #tpu.memory_space<vmem>>, %arg8: memref<9x18xf32, #tpu.memory_space<vmem>>, %arg9: memref<1x9x32xf32, #tpu.memory_space<vmem>>) attributes {dimension_semantics = [#tpu.dimension_semantics<parallel>], iteration_bounds = array<i64: 2>, scalar_prefetch = 0 : i64, scratch_operands = 0 : i64, tpu.core_type = #tpu.core_type<tc>, window_params = [{transform_indices = @transform_0, window_bounds = array<i64: 1, 20, 32>}, {pipeline_mode = #tpu.pipeline_mode<synchronous>, transform_indices = @transform_1, window_bounds = array<i64: 96, 32>}, {pipeline_mode = #tpu.pipeline_mode<synchronous>, transform_indices = @transform_2, window_bounds = array<i64: 1, 32>}, {pipeline_mode = #tpu.pipeline_mode<synchronous>, transform_indices = @transform_3, window_bounds = array<i64: 1, 32>}, {pipeline_mode = #tpu.pipeline_mode<synchronous>, transform_indices = @transform_4, window_bounds = array<i64: 1, 32>}, {pipeline_mode = #tpu.pipeline_mode<synchronous>, transform_indices = @transform_5, window_bounds = array<i64: 1, 32>}, {pipeline_mode = #tpu.pipeline_mode<synchronous>, transform_indices = @transform_6, window_bounds = array<i64: 1, 32>}, {pipeline_mode = #tpu.pipeline_mode<synchronous>, transform_indices = @transform_7, window_bounds = array<i64: 9, 18>}, {transform_indices = @transform_8, window_bounds = array<i64: 1, 9, 32>}]} {
    %c0 = arith.constant 0 : index
    %c0_0 = arith.constant 0 : index
    %c0_1 = arith.constant 0 : index
    %0 = vector.load %arg1[%c0, %c0_0, %c0_1] : memref<1x20x32xf32, #tpu.memory_space<vmem>>, vector<1x20x32xf32>
    %1 = vector.shape_cast %0 : vector<1x20x32xf32> to vector<20x32xf32>
    %2 = vector.extract_strided_slice %1 {offsets = [0, 0], sizes = [18, 32], strides = [1, 1]} : vector<20x32xf32> to vector<18x32xf32>
    %3 = vector.extract_strided_slice %1 {offsets = [1, 0], sizes = [18, 32], strides = [1, 1]} : vector<20x32xf32> to vector<18x32xf32>
    %4 = vector.extract_strided_slice %1 {offsets = [2, 0], sizes = [18, 32], strides = [1, 1]} : vector<20x32xf32> to vector<18x32xf32>
    %5 = tpu.concatenate %2, %3, %4 in 1 : vector<18x32xf32>, vector<18x32xf32>, vector<18x32xf32> -> vector<18x96xf32>
    %c0_2 = arith.constant 0 : index
    %c0_3 = arith.constant 0 : index
    %6 = vector.load %arg2[%c0_2, %c0_3] : memref<96x32xbf16, #tpu.memory_space<vmem>>, vector<96x32xbf16>
    %7 = arith.truncf %5 : vector<18x96xf32> to vector<18x96xbf16>
    %cst = arith.constant dense<0.000000e+00> : vector<18x32xf32>
    %8 = tpu.matmul %7, %6, %cst {dimension_numbers = #tpu.dot_dimension_numbers<[1], [0], [0], [1], [0, 0, 1, 1], [], []>} : vector<18x96xbf16>, vector<96x32xbf16>, vector<18x32xf32> -> vector<18x32xf32>
    %c0_4 = arith.constant 0 : index
    %c0_5 = arith.constant 0 : index
    %9 = vector.load %arg3[%c0_4, %c0_5] : memref<1x32xf32, #tpu.memory_space<vmem>>, vector<1x32xf32>
    %10 = vector.broadcast %9 : vector<1x32xf32> to vector<18x32xf32>
    %11 = arith.addf %8, %10 : vector<18x32xf32>
    %c0_6 = arith.constant 0 : index
    %c0_7 = arith.constant 0 : index
    %12 = vector.load %arg6[%c0_6, %c0_7] : memref<1x32xf32, #tpu.memory_space<vmem>>, vector<1x32xf32>
    %13 = vector.broadcast %12 : vector<1x32xf32> to vector<18x32xf32>
    %14 = arith.subf %11, %13 : vector<18x32xf32>
    %c0_8 = arith.constant 0 : index
    %c0_9 = arith.constant 0 : index
    %15 = vector.load %arg7[%c0_8, %c0_9] : memref<1x32xf32, #tpu.memory_space<vmem>>, vector<1x32xf32>
    %cst_10 = arith.constant 9.99999974E-6 : f32
    %16 = vector.broadcast %cst_10 : f32 to vector<1x32xf32>
    %17 = arith.addf %15, %16 : vector<1x32xf32>
    %18 = math.rsqrt %17 : vector<1x32xf32>
    %19 = vector.broadcast %18 : vector<1x32xf32> to vector<18x32xf32>
    %20 = arith.mulf %14, %19 : vector<18x32xf32>
    %c0_11 = arith.constant 0 : index
    %c0_12 = arith.constant 0 : index
    %21 = vector.load %arg4[%c0_11, %c0_12] : memref<1x32xf32, #tpu.memory_space<vmem>>, vector<1x32xf32>
    %22 = vector.broadcast %21 : vector<1x32xf32> to vector<18x32xf32>
    %23 = arith.mulf %20, %22 : vector<18x32xf32>
    %c0_13 = arith.constant 0 : index
    %c0_14 = arith.constant 0 : index
    %24 = vector.load %arg5[%c0_13, %c0_14] : memref<1x32xf32, #tpu.memory_space<vmem>>, vector<1x32xf32>
    %25 = vector.broadcast %24 : vector<1x32xf32> to vector<18x32xf32>
    %26 = arith.addf %23, %25 : vector<18x32xf32>
    %cst_15 = arith.constant 0.000000e+00 : f32
    %27 = vector.broadcast %cst_15 : f32 to vector<18x32xf32>
    %28 = arith.cmpf ogt, %26, %27 : vector<18x32xf32>
    %cst_16 = arith.constant 0.000000e+00 : f32
    %29 = vector.broadcast %cst_16 : f32 to vector<18x32xf32>
    %30 = arith.minimumf %26, %29 : vector<18x32xf32>
    %31 = math.exp %30 : vector<18x32xf32>
    %cst_17 = arith.constant 1.000000e+00 : f32
    %32 = vector.broadcast %cst_17 : f32 to vector<18x32xf32>
    %33 = arith.subf %31, %32 : vector<18x32xf32>
    %34 = arith.select %28, %26, %33 : vector<18x32xi1>, vector<18x32xf32>
    %cst_18 = arith.constant 0xFF800000 : f32
    %35 = vector.broadcast %cst_18 : f32 to vector<1x32xf32>
    %36 = tpu.concatenate %35, %34, %35 in 0 : vector<1x32xf32>, vector<18x32xf32>, vector<1x32xf32> -> vector<20x32xf32>
    %37 = vector.extract_strided_slice %36 {offsets = [0, 0], sizes = [18, 32], strides = [1, 1]} : vector<20x32xf32> to vector<18x32xf32>
    %38 = vector.extract_strided_slice %36 {offsets = [1, 0], sizes = [18, 32], strides = [1, 1]} : vector<20x32xf32> to vector<18x32xf32>
    %39 = arith.maximumf %37, %38 : vector<18x32xf32>
    %40 = vector.extract_strided_slice %36 {offsets = [2, 0], sizes = [18, 32], strides = [1, 1]} : vector<20x32xf32> to vector<18x32xf32>
    %41 = arith.maximumf %39, %40 : vector<18x32xf32>
    %c0_19 = arith.constant 0 : index
    %c0_20 = arith.constant 0 : index
    %42 = vector.load %arg8[%c0_19, %c0_20] : memref<9x18xf32, #tpu.memory_space<vmem>>, vector<9x18xf32>
    %cst_21 = arith.constant dense<0.000000e+00> : vector<9x32xf32>
    %43 = tpu.matmul %42, %41, %cst_21 {dimension_numbers = #tpu.dot_dimension_numbers<[1], [0], [0], [1], [0, 0, 1, 1], [], []>} : vector<9x18xf32>, vector<18x32xf32>, vector<9x32xf32> -> vector<9x32xf32>
    %c0_22 = arith.constant 0 : index
    %c0_23 = arith.constant 0 : index
    %c0_24 = arith.constant 0 : index
    %44 = vector.load %arg9[%c0_22, %c0_23, %c0_24] : memref<1x9x32xf32, #tpu.memory_space<vmem>>, vector<1x9x32xf32>
    %45 = vector.shape_cast %44 : vector<1x9x32xf32> to vector<9x32xf32>
    %46 = vector.shape_cast %43 : vector<9x32xf32> to vector<1x9x32xf32>
    tpu.vector_store %arg9[%c0_22, %c0_23, %c0_24], %46 {strides = array<i32>} : memref<1x9x32xf32, #tpu.memory_space<vmem>>, vector<1x9x32xf32>,
    return
  }
  func.func @transform_0(%arg0: i32) -> (i32, i32, i32) {
    %c0_i32 = arith.constant 0 : i32
    %c0_i32_0 = arith.constant 0 : i32
    %c0_i32_1 = arith.constant 0 : i32
    return %arg0, %c0_i32, %c0_i32_0 : i32, i32, i32
  }
  func.func @transform_1(%arg0: i32) -> (i32, i32) {
    %c0_i32 = arith.constant 0 : i32
    %c0_i32_0 = arith.constant 0 : i32
    %c0_i32_1 = arith.constant 0 : i32
    return %c0_i32, %c0_i32_0 : i32, i32
  }
  func.func @transform_2(%arg0: i32) -> (i32, i32) {
    %c0_i32 = arith.constant 0 : i32
    %c0_i32_0 = arith.constant 0 : i32
    %c0_i32_1 = arith.constant 0 : i32
    return %c0_i32, %c0_i32_0 : i32, i32
  }
  func.func @transform_3(%arg0: i32) -> (i32, i32) {
    %c0_i32 = arith.constant 0 : i32
    %c0_i32_0 = arith.constant 0 : i32
    %c0_i32_1 = arith.constant 0 : i32
    return %c0_i32, %c0_i32_0 : i32, i32
  }
  func.func @transform_4(%arg0: i32) -> (i32, i32) {
    %c0_i32 = arith.constant 0 : i32
    %c0_i32_0 = arith.constant 0 : i32
    %c0_i32_1 = arith.constant 0 : i32
    return %c0_i32, %c0_i32_0 : i32, i32
  }
  func.func @transform_5(%arg0: i32) -> (i32, i32) {
    %c0_i32 = arith.constant 0 : i32
    %c0_i32_0 = arith.constant 0 : i32
    %c0_i32_1 = arith.constant 0 : i32
    return %c0_i32, %c0_i32_0 : i32, i32
  }
  func.func @transform_6(%arg0: i32) -> (i32, i32) {
    %c0_i32 = arith.constant 0 : i32
    %c0_i32_0 = arith.constant 0 : i32
    %c0_i32_1 = arith.constant 0 : i32
    return %c0_i32, %c0_i32_0 : i32, i32
  }
  func.func @transform_7(%arg0: i32) -> (i32, i32) {
    %c0_i32 = arith.constant 0 : i32
    %c0_i32_0 = arith.constant 0 : i32
    %c0_i32_1 = arith.constant 0 : i32
    return %c0_i32, %c0_i32_0 : i32, i32
  }
  func.func @transform_8(%arg0: i32) -> (i32, i32, i32) {
    %c0_i32 = arith.constant 0 : i32
    %c0_i32_0 = arith.constant 0 : i32
    %c0_i32_1 = arith.constant 0 : i32
    return %arg0, %c0_i32, %c0_i32_0 : i32, i32, i32
  }
}

module attributes {stable_mosaic.version = 11 : i64} {
  func.func @_enc_layer_kernel(%arg0: i32, %arg1: memref<1x9x32xf32, #tpu.memory_space<vmem>>, %arg2: memref<9x9xf32, #tpu.memory_space<vmem>>, %arg3: memref<32x96xbf16, #tpu.memory_space<vmem>>, %arg4: memref<1x96xf32, #tpu.memory_space<vmem>>, %arg5: memref<32x32xbf16, #tpu.memory_space<vmem>>, %arg6: memref<1x32xf32, #tpu.memory_space<vmem>>, %arg7: memref<1x32xf32, #tpu.memory_space<vmem>>, %arg8: memref<1x32xf32, #tpu.memory_space<vmem>>, %arg9: memref<32x64xbf16, #tpu.memory_space<vmem>>, %arg10: memref<1x64xf32, #tpu.memory_space<vmem>>, %arg11: memref<64x32xbf16, #tpu.memory_space<vmem>>, %arg12: memref<1x32xf32, #tpu.memory_space<vmem>>, %arg13: memref<1x32xf32, #tpu.memory_space<vmem>>, %arg14: memref<1x32xf32, #tpu.memory_space<vmem>>, %arg15: memref<1x32xf32, #tpu.memory_space<vmem>>, %arg16: memref<1x32xf32, #tpu.memory_space<vmem>>, %arg17: memref<1x9x32xf32, #tpu.memory_space<vmem>>) attributes {dimension_semantics = [#tpu.dimension_semantics<parallel>], iteration_bounds = array<i64: 2>, scalar_prefetch = 0 : i64, scratch_operands = 0 : i64, tpu.core_type = #tpu.core_type<tc>, window_params = [{transform_indices = @transform_0, window_bounds = array<i64: 1, 9, 32>}, {pipeline_mode = #tpu.pipeline_mode<synchronous>, transform_indices = @transform_1, window_bounds = array<i64: 9, 9>}, {pipeline_mode = #tpu.pipeline_mode<synchronous>, transform_indices = @transform_2, window_bounds = array<i64: 32, 96>}, {pipeline_mode = #tpu.pipeline_mode<synchronous>, transform_indices = @transform_3, window_bounds = array<i64: 1, 96>}, {pipeline_mode = #tpu.pipeline_mode<synchronous>, transform_indices = @transform_4, window_bounds = array<i64: 32, 32>}, {pipeline_mode = #tpu.pipeline_mode<synchronous>, transform_indices = @transform_5, window_bounds = array<i64: 1, 32>}, {pipeline_mode = #tpu.pipeline_mode<synchronous>, transform_indices = @transform_6, window_bounds = array<i64: 1, 32>}, {pipeline_mode = #tpu.pipeline_mode<synchronous>, transform_indices = @transform_7, window_bounds = array<i64: 1, 32>}, {pipeline_mode = #tpu.pipeline_mode<synchronous>, transform_indices = @transform_8, window_bounds = array<i64: 32, 64>}, {pipeline_mode = #tpu.pipeline_mode<synchronous>, transform_indices = @transform_9, window_bounds = array<i64: 1, 64>}, {pipeline_mode = #tpu.pipeline_mode<synchronous>, transform_indices = @transform_10, window_bounds = array<i64: 64, 32>}, {pipeline_mode = #tpu.pipeline_mode<synchronous>, transform_indices = @transform_11, window_bounds = array<i64: 1, 32>}, {pipeline_mode = #tpu.pipeline_mode<synchronous>, transform_indices = @transform_12, window_bounds = array<i64: 1, 32>}, {pipeline_mode = #tpu.pipeline_mode<synchronous>, transform_indices = @transform_13, window_bounds = array<i64: 1, 32>}, {pipeline_mode = #tpu.pipeline_mode<synchronous>, transform_indices = @transform_14, window_bounds = array<i64: 1, 32>}, {pipeline_mode = #tpu.pipeline_mode<synchronous>, transform_indices = @transform_15, window_bounds = array<i64: 1, 32>}, {transform_indices = @transform_16, window_bounds = array<i64: 1, 9, 32>}]} {
    %c0 = arith.constant 0 : index
    %c0_0 = arith.constant 0 : index
    %c0_1 = arith.constant 0 : index
    %0 = vector.load %arg1[%c0, %c0_0, %c0_1] : memref<1x9x32xf32, #tpu.memory_space<vmem>>, vector<1x9x32xf32>
    %1 = vector.shape_cast %0 : vector<1x9x32xf32> to vector<9x32xf32>
    %c0_2 = arith.constant 0 : index
    %c0_3 = arith.constant 0 : index
    %2 = vector.load %arg3[%c0_2, %c0_3] : memref<32x96xbf16, #tpu.memory_space<vmem>>, vector<32x96xbf16>
    %c0_4 = arith.constant 0 : index
    %c0_5 = arith.constant 0 : index
    %3 = vector.load %arg4[%c0_4, %c0_5] : memref<1x96xf32, #tpu.memory_space<vmem>>, vector<1x96xf32>
    %c0_6 = arith.constant 0 : index
    %c0_7 = arith.constant 0 : index
    %4 = vector.load %arg5[%c0_6, %c0_7] : memref<32x32xbf16, #tpu.memory_space<vmem>>, vector<32x32xbf16>
    %c0_8 = arith.constant 0 : index
    %c0_9 = arith.constant 0 : index
    %5 = vector.load %arg6[%c0_8, %c0_9] : memref<1x32xf32, #tpu.memory_space<vmem>>, vector<1x32xf32>
    %6 = arith.truncf %1 : vector<9x32xf32> to vector<9x32xbf16>
    %cst = arith.constant dense<0.000000e+00> : vector<9x96xf32>
    %7 = tpu.matmul %6, %2, %cst {dimension_numbers = #tpu.dot_dimension_numbers<[1], [0], [0], [1], [0, 0, 1, 1], [], []>} : vector<9x32xbf16>, vector<32x96xbf16>, vector<9x96xf32> -> vector<9x96xf32>
    %8 = vector.broadcast %3 : vector<1x96xf32> to vector<9x96xf32>
    %9 = arith.addf %7, %8 : vector<9x96xf32>
    %10 = vector.extract_strided_slice %9 {offsets = [0, 0], sizes = [9, 32], strides = [1, 1]} : vector<9x96xf32> to vector<9x32xf32>
    %11 = vector.extract_strided_slice %9 {offsets = [0, 32], sizes = [9, 32], strides = [1, 1]} : vector<9x96xf32> to vector<9x32xf32>
    %12 = vector.extract_strided_slice %9 {offsets = [0, 64], sizes = [9, 32], strides = [1, 1]} : vector<9x96xf32> to vector<9x32xf32>
    %13 = vector.extract_strided_slice %10 {offsets = [0, 0], sizes = [9, 8], strides = [1, 1]} : vector<9x32xf32> to vector<9x8xf32>
    %14 = vector.extract_strided_slice %11 {offsets = [0, 0], sizes = [9, 8], strides = [1, 1]} : vector<9x32xf32> to vector<9x8xf32>
    %15 = arith.truncf %13 : vector<9x8xf32> to vector<9x8xbf16>
    %16 = arith.truncf %14 : vector<9x8xf32> to vector<9x8xbf16>
    %cst_10 = arith.constant dense<0.000000e+00> : vector<9x9xf32>
    %17 = tpu.matmul %15, %16, %cst_10 {dimension_numbers = #tpu.dot_dimension_numbers<[1], [1], [0], [0], [0, 0, 1, 0], [], []>} : vector<9x8xbf16>, vector<9x8xbf16>, vector<9x9xf32> -> vector<9x9xf32>
    %cst_11 = arith.constant 0.353553385 : f32
    %18 = vector.broadcast %cst_11 : f32 to vector<9x9xf32>
    %19 = arith.mulf %17, %18 : vector<9x9xf32>
    %cst_12 = arith.constant dense<0xFF800000> : vector<9xf32>
    %20 = vector.multi_reduction <maximumf>, %19, %cst_12 [1] : vector<9x9xf32> to vector<9xf32>
    %21 = vector.shape_cast %20 : vector<9xf32> to vector<9x1xf32>
    %22 = vector.broadcast %21 : vector<9x1xf32> to vector<9x9xf32>
    %23 = arith.subf %19, %22 : vector<9x9xf32>
    %24 = math.exp %23 : vector<9x9xf32>
    %cst_13 = arith.constant dense<0.000000e+00> : vector<9xf32>
    %25 = vector.multi_reduction <add>, %24, %cst_13 [1] : vector<9x9xf32> to vector<9xf32>
    %26 = vector.shape_cast %25 : vector<9xf32> to vector<9x1xf32>
    %27 = tpu.reciprocal %26 {approx = true} : vector<9x1xf32> -> vector<9x1xf32>
    %28 = vector.broadcast %27 : vector<9x1xf32> to vector<9x9xf32>
    %29 = arith.mulf %24, %28 : vector<9x9xf32>
    %30 = vector.extract_strided_slice %12 {offsets = [0, 0], sizes = [9, 8], strides = [1, 1]} : vector<9x32xf32> to vector<9x8xf32>
    %31 = arith.truncf %29 : vector<9x9xf32> to vector<9x9xbf16>
    %32 = arith.truncf %30 : vector<9x8xf32> to vector<9x8xbf16>
    %cst_14 = arith.constant dense<0.000000e+00> : vector<9x8xf32>
    %33 = tpu.matmul %31, %32, %cst_14 {dimension_numbers = #tpu.dot_dimension_numbers<[1], [0], [0], [1], [0, 0, 1, 1], [], []>} : vector<9x9xbf16>, vector<9x8xbf16>, vector<9x8xf32> -> vector<9x8xf32>
    %34 = vector.extract_strided_slice %10 {offsets = [0, 8], sizes = [9, 8], strides = [1, 1]} : vector<9x32xf32> to vector<9x8xf32>
    %35 = vector.extract_strided_slice %11 {offsets = [0, 8], sizes = [9, 8], strides = [1, 1]} : vector<9x32xf32> to vector<9x8xf32>
    %36 = arith.truncf %34 : vector<9x8xf32> to vector<9x8xbf16>
    %37 = arith.truncf %35 : vector<9x8xf32> to vector<9x8xbf16>
    %cst_15 = arith.constant dense<0.000000e+00> : vector<9x9xf32>
    %38 = tpu.matmul %36, %37, %cst_15 {dimension_numbers = #tpu.dot_dimension_numbers<[1], [1], [0], [0], [0, 0, 1, 0], [], []>} : vector<9x8xbf16>, vector<9x8xbf16>, vector<9x9xf32> -> vector<9x9xf32>
    %cst_16 = arith.constant 0.353553385 : f32
    %39 = vector.broadcast %cst_16 : f32 to vector<9x9xf32>
    %40 = arith.mulf %38, %39 : vector<9x9xf32>
    %cst_17 = arith.constant dense<0xFF800000> : vector<9xf32>
    %41 = vector.multi_reduction <maximumf>, %40, %cst_17 [1] : vector<9x9xf32> to vector<9xf32>
    %42 = vector.shape_cast %41 : vector<9xf32> to vector<9x1xf32>
    %43 = vector.broadcast %42 : vector<9x1xf32> to vector<9x9xf32>
    %44 = arith.subf %40, %43 : vector<9x9xf32>
    %45 = math.exp %44 : vector<9x9xf32>
    %cst_18 = arith.constant dense<0.000000e+00> : vector<9xf32>
    %46 = vector.multi_reduction <add>, %45, %cst_18 [1] : vector<9x9xf32> to vector<9xf32>
    %47 = vector.shape_cast %46 : vector<9xf32> to vector<9x1xf32>
    %48 = tpu.reciprocal %47 {approx = true} : vector<9x1xf32> -> vector<9x1xf32>
    %49 = vector.broadcast %48 : vector<9x1xf32> to vector<9x9xf32>
    %50 = arith.mulf %45, %49 : vector<9x9xf32>
    %51 = vector.extract_strided_slice %12 {offsets = [0, 8], sizes = [9, 8], strides = [1, 1]} : vector<9x32xf32> to vector<9x8xf32>
    %52 = arith.truncf %50 : vector<9x9xf32> to vector<9x9xbf16>
    %53 = arith.truncf %51 : vector<9x8xf32> to vector<9x8xbf16>
    %cst_19 = arith.constant dense<0.000000e+00> : vector<9x8xf32>
    %54 = tpu.matmul %52, %53, %cst_19 {dimension_numbers = #tpu.dot_dimension_numbers<[1], [0], [0], [1], [0, 0, 1, 1], [], []>} : vector<9x9xbf16>, vector<9x8xbf16>, vector<9x8xf32> -> vector<9x8xf32>
    %55 = vector.extract_strided_slice %10 {offsets = [0, 16], sizes = [9, 8], strides = [1, 1]} : vector<9x32xf32> to vector<9x8xf32>
    %56 = vector.extract_strided_slice %11 {offsets = [0, 16], sizes = [9, 8], strides = [1, 1]} : vector<9x32xf32> to vector<9x8xf32>
    %57 = arith.truncf %55 : vector<9x8xf32> to vector<9x8xbf16>
    %58 = arith.truncf %56 : vector<9x8xf32> to vector<9x8xbf16>
    %cst_20 = arith.constant dense<0.000000e+00> : vector<9x9xf32>
    %59 = tpu.matmul %57, %58, %cst_20 {dimension_numbers = #tpu.dot_dimension_numbers<[1], [1], [0], [0], [0, 0, 1, 0], [], []>} : vector<9x8xbf16>, vector<9x8xbf16>, vector<9x9xf32> -> vector<9x9xf32>
    %cst_21 = arith.constant 0.353553385 : f32
    %60 = vector.broadcast %cst_21 : f32 to vector<9x9xf32>
    %61 = arith.mulf %59, %60 : vector<9x9xf32>
    %cst_22 = arith.constant dense<0xFF800000> : vector<9xf32>
    %62 = vector.multi_reduction <maximumf>, %61, %cst_22 [1] : vector<9x9xf32> to vector<9xf32>
    %63 = vector.shape_cast %62 : vector<9xf32> to vector<9x1xf32>
    %64 = vector.broadcast %63 : vector<9x1xf32> to vector<9x9xf32>
    %65 = arith.subf %61, %64 : vector<9x9xf32>
    %66 = math.exp %65 : vector<9x9xf32>
    %cst_23 = arith.constant dense<0.000000e+00> : vector<9xf32>
    %67 = vector.multi_reduction <add>, %66, %cst_23 [1] : vector<9x9xf32> to vector<9xf32>
    %68 = vector.shape_cast %67 : vector<9xf32> to vector<9x1xf32>
    %69 = tpu.reciprocal %68 {approx = true} : vector<9x1xf32> -> vector<9x1xf32>
    %70 = vector.broadcast %69 : vector<9x1xf32> to vector<9x9xf32>
    %71 = arith.mulf %66, %70 : vector<9x9xf32>
    %72 = vector.extract_strided_slice %12 {offsets = [0, 16], sizes = [9, 8], strides = [1, 1]} : vector<9x32xf32> to vector<9x8xf32>
    %73 = arith.truncf %71 : vector<9x9xf32> to vector<9x9xbf16>
    %74 = arith.truncf %72 : vector<9x8xf32> to vector<9x8xbf16>
    %cst_24 = arith.constant dense<0.000000e+00> : vector<9x8xf32>
    %75 = tpu.matmul %73, %74, %cst_24 {dimension_numbers = #tpu.dot_dimension_numbers<[1], [0], [0], [1], [0, 0, 1, 1], [], []>} : vector<9x9xbf16>, vector<9x8xbf16>, vector<9x8xf32> -> vector<9x8xf32>
    %76 = vector.extract_strided_slice %10 {offsets = [0, 24], sizes = [9, 8], strides = [1, 1]} : vector<9x32xf32> to vector<9x8xf32>
    %77 = vector.extract_strided_slice %11 {offsets = [0, 24], sizes = [9, 8], strides = [1, 1]} : vector<9x32xf32> to vector<9x8xf32>
    %78 = arith.truncf %76 : vector<9x8xf32> to vector<9x8xbf16>
    %79 = arith.truncf %77 : vector<9x8xf32> to vector<9x8xbf16>
    %cst_25 = arith.constant dense<0.000000e+00> : vector<9x9xf32>
    %80 = tpu.matmul %78, %79, %cst_25 {dimension_numbers = #tpu.dot_dimension_numbers<[1], [1], [0], [0], [0, 0, 1, 0], [], []>} : vector<9x8xbf16>, vector<9x8xbf16>, vector<9x9xf32> -> vector<9x9xf32>
    %cst_26 = arith.constant 0.353553385 : f32
    %81 = vector.broadcast %cst_26 : f32 to vector<9x9xf32>
    %82 = arith.mulf %80, %81 : vector<9x9xf32>
    %cst_27 = arith.constant dense<0xFF800000> : vector<9xf32>
    %83 = vector.multi_reduction <maximumf>, %82, %cst_27 [1] : vector<9x9xf32> to vector<9xf32>
    %84 = vector.shape_cast %83 : vector<9xf32> to vector<9x1xf32>
    %85 = vector.broadcast %84 : vector<9x1xf32> to vector<9x9xf32>
    %86 = arith.subf %82, %85 : vector<9x9xf32>
    %87 = math.exp %86 : vector<9x9xf32>
    %cst_28 = arith.constant dense<0.000000e+00> : vector<9xf32>
    %88 = vector.multi_reduction <add>, %87, %cst_28 [1] : vector<9x9xf32> to vector<9xf32>
    %89 = vector.shape_cast %88 : vector<9xf32> to vector<9x1xf32>
    %90 = tpu.reciprocal %89 {approx = true} : vector<9x1xf32> -> vector<9x1xf32>
    %91 = vector.broadcast %90 : vector<9x1xf32> to vector<9x9xf32>
    %92 = arith.mulf %87, %91 : vector<9x9xf32>
    %93 = vector.extract_strided_slice %12 {offsets = [0, 24], sizes = [9, 8], strides = [1, 1]} : vector<9x32xf32> to vector<9x8xf32>
    %94 = arith.truncf %92 : vector<9x9xf32> to vector<9x9xbf16>
    %95 = arith.truncf %93 : vector<9x8xf32> to vector<9x8xbf16>
    %cst_29 = arith.constant dense<0.000000e+00> : vector<9x8xf32>
    %96 = tpu.matmul %94, %95, %cst_29 {dimension_numbers = #tpu.dot_dimension_numbers<[1], [0], [0], [1], [0, 0, 1, 1], [], []>} : vector<9x9xbf16>, vector<9x8xbf16>, vector<9x8xf32> -> vector<9x8xf32>
    %97 = tpu.concatenate %33, %54, %75, %96 in 1 : vector<9x8xf32>, vector<9x8xf32>, vector<9x8xf32>, vector<9x8xf32> -> vector<9x32xf32>
    %98 = arith.truncf %97 : vector<9x32xf32> to vector<9x32xbf16>
    %cst_30 = arith.constant dense<0.000000e+00> : vector<9x32xf32>
    %99 = tpu.matmul %98, %4, %cst_30 {dimension_numbers = #tpu.dot_dimension_numbers<[1], [0], [0], [1], [0, 0, 1, 1], [], []>} : vector<9x32xbf16>, vector<32x32xbf16>, vector<9x32xf32> -> vector<9x32xf32>
    %100 = vector.broadcast %5 : vector<1x32xf32> to vector<9x32xf32>
    %101 = arith.addf %99, %100 : vector<9x32xf32>
    %102 = arith.addf %1, %101 : vector<9x32xf32>
    %c0_31 = arith.constant 0 : index
    %c0_32 = arith.constant 0 : index
    %103 = vector.load %arg7[%c0_31, %c0_32] : memref<1x32xf32, #tpu.memory_space<vmem>>, vector<1x32xf32>
    %c0_33 = arith.constant 0 : index
    %c0_34 = arith.constant 0 : index
    %104 = vector.load %arg8[%c0_33, %c0_34] : memref<1x32xf32, #tpu.memory_space<vmem>>, vector<1x32xf32>
    %cst_35 = arith.constant dense<0.000000e+00> : vector<9xf32>
    %105 = vector.multi_reduction <add>, %102, %cst_35 [1] : vector<9x32xf32> to vector<9xf32>
    %106 = vector.shape_cast %105 : vector<9xf32> to vector<9x1xf32>
    %cst_36 = arith.constant 3.200000e+01 : f32
    %107 = vector.broadcast %cst_36 : f32 to vector<9x1xf32>
    %108 = arith.divf %106, %107 : vector<9x1xf32>
    %109 = vector.broadcast %108 : vector<9x1xf32> to vector<9x32xf32>
    %110 = arith.subf %102, %109 : vector<9x32xf32>
    %111 = vector.broadcast %108 : vector<9x1xf32> to vector<9x32xf32>
    %112 = arith.subf %102, %111 : vector<9x32xf32>
    %113 = arith.mulf %110, %112 : vector<9x32xf32>
    %cst_37 = arith.constant dense<0.000000e+00> : vector<9xf32>
    %114 = vector.multi_reduction <add>, %113, %cst_37 [1] : vector<9x32xf32> to vector<9xf32>
    %115 = vector.shape_cast %114 : vector<9xf32> to vector<9x1xf32>
    %cst_38 = arith.constant 3.200000e+01 : f32
    %116 = vector.broadcast %cst_38 : f32 to vector<9x1xf32>
    %117 = arith.divf %115, %116 : vector<9x1xf32>
    %118 = vector.broadcast %108 : vector<9x1xf32> to vector<9x32xf32>
    %119 = arith.subf %102, %118 : vector<9x32xf32>
    %cst_39 = arith.constant 9.99999974E-6 : f32
    %120 = vector.broadcast %cst_39 : f32 to vector<9x1xf32>
    %121 = arith.addf %117, %120 : vector<9x1xf32>
    %122 = math.rsqrt %121 : vector<9x1xf32>
    %123 = vector.broadcast %122 : vector<9x1xf32> to vector<9x32xf32>
    %124 = arith.mulf %119, %123 : vector<9x32xf32>
    %125 = vector.broadcast %103 : vector<1x32xf32> to vector<9x32xf32>
    %126 = arith.mulf %124, %125 : vector<9x32xf32>
    %127 = vector.broadcast %104 : vector<1x32xf32> to vector<9x32xf32>
    %128 = arith.addf %126, %127 : vector<9x32xf32>
    %c0_40 = arith.constant 0 : index
    %c0_41 = arith.constant 0 : index
    %129 = vector.load %arg9[%c0_40, %c0_41] : memref<32x64xbf16, #tpu.memory_space<vmem>>, vector<32x64xbf16>
    %c0_42 = arith.constant 0 : index
    %c0_43 = arith.constant 0 : index
    %130 = vector.load %arg10[%c0_42, %c0_43] : memref<1x64xf32, #tpu.memory_space<vmem>>, vector<1x64xf32>
    %c0_44 = arith.constant 0 : index
    %c0_45 = arith.constant 0 : index
    %131 = vector.load %arg11[%c0_44, %c0_45] : memref<64x32xbf16, #tpu.memory_space<vmem>>, vector<64x32xbf16>
    %c0_46 = arith.constant 0 : index
    %c0_47 = arith.constant 0 : index
    %132 = vector.load %arg12[%c0_46, %c0_47] : memref<1x32xf32, #tpu.memory_space<vmem>>, vector<1x32xf32>
    %133 = arith.truncf %128 : vector<9x32xf32> to vector<9x32xbf16>
    %cst_48 = arith.constant dense<0.000000e+00> : vector<9x64xf32>
    %134 = tpu.matmul %133, %129, %cst_48 {dimension_numbers = #tpu.dot_dimension_numbers<[1], [0], [0], [1], [0, 0, 1, 1], [], []>} : vector<9x32xbf16>, vector<32x64xbf16>, vector<9x64xf32> -> vector<9x64xf32>
    %135 = vector.broadcast %130 : vector<1x64xf32> to vector<9x64xf32>
    %136 = arith.addf %134, %135 : vector<9x64xf32>
    %cst_49 = arith.constant 0.000000e+00 : f32
    %137 = vector.broadcast %cst_49 : f32 to vector<9x64xf32>
    %138 = arith.maximumf %136, %137 : vector<9x64xf32>
    %139 = arith.truncf %138 : vector<9x64xf32> to vector<9x64xbf16>
    %cst_50 = arith.constant dense<0.000000e+00> : vector<9x32xf32>
    %140 = tpu.matmul %139, %131, %cst_50 {dimension_numbers = #tpu.dot_dimension_numbers<[1], [0], [0], [1], [0, 0, 1, 1], [], []>} : vector<9x64xbf16>, vector<64x32xbf16>, vector<9x32xf32> -> vector<9x32xf32>
    %141 = vector.broadcast %132 : vector<1x32xf32> to vector<9x32xf32>
    %142 = arith.addf %140, %141 : vector<9x32xf32>
    %143 = arith.addf %128, %142 : vector<9x32xf32>
    %c0_51 = arith.constant 0 : index
    %c0_52 = arith.constant 0 : index
    %144 = vector.load %arg13[%c0_51, %c0_52] : memref<1x32xf32, #tpu.memory_space<vmem>>, vector<1x32xf32>
    %c0_53 = arith.constant 0 : index
    %c0_54 = arith.constant 0 : index
    %145 = vector.load %arg14[%c0_53, %c0_54] : memref<1x32xf32, #tpu.memory_space<vmem>>, vector<1x32xf32>
    %cst_55 = arith.constant dense<0.000000e+00> : vector<9xf32>
    %146 = vector.multi_reduction <add>, %143, %cst_55 [1] : vector<9x32xf32> to vector<9xf32>
    %147 = vector.shape_cast %146 : vector<9xf32> to vector<9x1xf32>
    %cst_56 = arith.constant 3.200000e+01 : f32
    %148 = vector.broadcast %cst_56 : f32 to vector<9x1xf32>
    %149 = arith.divf %147, %148 : vector<9x1xf32>
    %150 = vector.broadcast %149 : vector<9x1xf32> to vector<9x32xf32>
    %151 = arith.subf %143, %150 : vector<9x32xf32>
    %152 = vector.broadcast %149 : vector<9x1xf32> to vector<9x32xf32>
    %153 = arith.subf %143, %152 : vector<9x32xf32>
    %154 = arith.mulf %151, %153 : vector<9x32xf32>
    %cst_57 = arith.constant dense<0.000000e+00> : vector<9xf32>
    %155 = vector.multi_reduction <add>, %154, %cst_57 [1] : vector<9x32xf32> to vector<9xf32>
    %156 = vector.shape_cast %155 : vector<9xf32> to vector<9x1xf32>
    %cst_58 = arith.constant 3.200000e+01 : f32
    %157 = vector.broadcast %cst_58 : f32 to vector<9x1xf32>
    %158 = arith.divf %156, %157 : vector<9x1xf32>
    %159 = vector.broadcast %149 : vector<9x1xf32> to vector<9x32xf32>
    %160 = arith.subf %143, %159 : vector<9x32xf32>
    %cst_59 = arith.constant 9.99999974E-6 : f32
    %161 = vector.broadcast %cst_59 : f32 to vector<9x1xf32>
    %162 = arith.addf %158, %161 : vector<9x1xf32>
    %163 = math.rsqrt %162 : vector<9x1xf32>
    %164 = vector.broadcast %163 : vector<9x1xf32> to vector<9x32xf32>
    %165 = arith.mulf %160, %164 : vector<9x32xf32>
    %166 = vector.broadcast %144 : vector<1x32xf32> to vector<9x32xf32>
    %167 = arith.mulf %165, %166 : vector<9x32xf32>
    %168 = vector.broadcast %145 : vector<1x32xf32> to vector<9x32xf32>
    %169 = arith.addf %167, %168 : vector<9x32xf32>
    %c0_60 = arith.constant 0 : index
    %c0_61 = arith.constant 0 : index
    %170 = vector.load %arg15[%c0_60, %c0_61] : memref<1x32xf32, #tpu.memory_space<vmem>>, vector<1x32xf32>
    %c0_62 = arith.constant 0 : index
    %c0_63 = arith.constant 0 : index
    %171 = vector.load %arg16[%c0_62, %c0_63] : memref<1x32xf32, #tpu.memory_space<vmem>>, vector<1x32xf32>
    %cst_64 = arith.constant dense<0.000000e+00> : vector<9xf32>
    %172 = vector.multi_reduction <add>, %169, %cst_64 [1] : vector<9x32xf32> to vector<9xf32>
    %173 = vector.shape_cast %172 : vector<9xf32> to vector<9x1xf32>
    %cst_65 = arith.constant 3.200000e+01 : f32
    %174 = vector.broadcast %cst_65 : f32 to vector<9x1xf32>
    %175 = arith.divf %173, %174 : vector<9x1xf32>
    %176 = vector.broadcast %175 : vector<9x1xf32> to vector<9x32xf32>
    %177 = arith.subf %169, %176 : vector<9x32xf32>
    %178 = vector.broadcast %175 : vector<9x1xf32> to vector<9x32xf32>
    %179 = arith.subf %169, %178 : vector<9x32xf32>
    %180 = arith.mulf %177, %179 : vector<9x32xf32>
    %cst_66 = arith.constant dense<0.000000e+00> : vector<9xf32>
    %181 = vector.multi_reduction <add>, %180, %cst_66 [1] : vector<9x32xf32> to vector<9xf32>
    %182 = vector.shape_cast %181 : vector<9xf32> to vector<9x1xf32>
    %cst_67 = arith.constant 3.200000e+01 : f32
    %183 = vector.broadcast %cst_67 : f32 to vector<9x1xf32>
    %184 = arith.divf %182, %183 : vector<9x1xf32>
    %185 = vector.broadcast %175 : vector<9x1xf32> to vector<9x32xf32>
    %186 = arith.subf %169, %185 : vector<9x32xf32>
    %cst_68 = arith.constant 9.99999974E-6 : f32
    %187 = vector.broadcast %cst_68 : f32 to vector<9x1xf32>
    %188 = arith.addf %184, %187 : vector<9x1xf32>
    %189 = math.rsqrt %188 : vector<9x1xf32>
    %190 = vector.broadcast %189 : vector<9x1xf32> to vector<9x32xf32>
    %191 = arith.mulf %186, %190 : vector<9x32xf32>
    %192 = vector.broadcast %170 : vector<1x32xf32> to vector<9x32xf32>
    %193 = arith.mulf %191, %192 : vector<9x32xf32>
    %194 = vector.broadcast %171 : vector<1x32xf32> to vector<9x32xf32>
    %195 = arith.addf %193, %194 : vector<9x32xf32>
    %c0_69 = arith.constant 0 : index
    %c0_70 = arith.constant 0 : index
    %c0_71 = arith.constant 0 : index
    %196 = vector.load %arg17[%c0_69, %c0_70, %c0_71] : memref<1x9x32xf32, #tpu.memory_space<vmem>>, vector<1x9x32xf32>
    %197 = vector.shape_cast %196 : vector<1x9x32xf32> to vector<9x32xf32>
    %198 = vector.shape_cast %195 : vector<9x32xf32> to vector<1x9x32xf32>
    tpu.vector_store %arg17[%c0_69, %c0_70, %c0_71], %198 {strides = array<i32>} : memref<1x9x32xf32, #tpu.memory_space<vmem>>, vector<1x9x32xf32>,
    return
  }
  func.func @transform_0(%arg0: i32) -> (i32, i32, i32) {
    %c0_i32 = arith.constant 0 : i32
    %c0_i32_0 = arith.constant 0 : i32
    %c0_i32_1 = arith.constant 0 : i32
    return %arg0, %c0_i32, %c0_i32_0 : i32, i32, i32
  }
  func.func @transform_1(%arg0: i32) -> (i32, i32) {
    %c0_i32 = arith.constant 0 : i32
    %c0_i32_0 = arith.constant 0 : i32
    %c0_i32_1 = arith.constant 0 : i32
    return %c0_i32, %c0_i32_0 : i32, i32
  }
  func.func @transform_2(%arg0: i32) -> (i32, i32) {
    %c0_i32 = arith.constant 0 : i32
    %c0_i32_0 = arith.constant 0 : i32
    %c0_i32_1 = arith.constant 0 : i32
    return %c0_i32, %c0_i32_0 : i32, i32
  }
  func.func @transform_3(%arg0: i32) -> (i32, i32) {
    %c0_i32 = arith.constant 0 : i32
    %c0_i32_0 = arith.constant 0 : i32
    %c0_i32_1 = arith.constant 0 : i32
    return %c0_i32, %c0_i32_0 : i32, i32
  }
  func.func @transform_4(%arg0: i32) -> (i32, i32) {
    %c0_i32 = arith.constant 0 : i32
    %c0_i32_0 = arith.constant 0 : i32
    %c0_i32_1 = arith.constant 0 : i32
    return %c0_i32, %c0_i32_0 : i32, i32
  }
  func.func @transform_5(%arg0: i32) -> (i32, i32) {
    %c0_i32 = arith.constant 0 : i32
    %c0_i32_0 = arith.constant 0 : i32
    %c0_i32_1 = arith.constant 0 : i32
    return %c0_i32, %c0_i32_0 : i32, i32
  }
  func.func @transform_6(%arg0: i32) -> (i32, i32) {
    %c0_i32 = arith.constant 0 : i32
    %c0_i32_0 = arith.constant 0 : i32
    %c0_i32_1 = arith.constant 0 : i32
    return %c0_i32, %c0_i32_0 : i32, i32
  }
  func.func @transform_7(%arg0: i32) -> (i32, i32) {
    %c0_i32 = arith.constant 0 : i32
    %c0_i32_0 = arith.constant 0 : i32
    %c0_i32_1 = arith.constant 0 : i32
    return %c0_i32, %c0_i32_0 : i32, i32
  }
  func.func @transform_8(%arg0: i32) -> (i32, i32) {
    %c0_i32 = arith.constant 0 : i32
    %c0_i32_0 = arith.constant 0 : i32
    %c0_i32_1 = arith.constant 0 : i32
    return %c0_i32, %c0_i32_0 : i32, i32
  }
  func.func @transform_9(%arg0: i32) -> (i32, i32) {
    %c0_i32 = arith.constant 0 : i32
    %c0_i32_0 = arith.constant 0 : i32
    %c0_i32_1 = arith.constant 0 : i32
    return %c0_i32, %c0_i32_0 : i32, i32
  }
  func.func @transform_10(%arg0: i32) -> (i32, i32) {
    %c0_i32 = arith.constant 0 : i32
    %c0_i32_0 = arith.constant 0 : i32
    %c0_i32_1 = arith.constant 0 : i32
    return %c0_i32, %c0_i32_0 : i32, i32
  }
  func.func @transform_11(%arg0: i32) -> (i32, i32) {
    %c0_i32 = arith.constant 0 : i32
    %c0_i32_0 = arith.constant 0 : i32
    %c0_i32_1 = arith.constant 0 : i32
    return %c0_i32, %c0_i32_0 : i32, i32
  }
  func.func @transform_12(%arg0: i32) -> (i32, i32) {
    %c0_i32 = arith.constant 0 : i32
    %c0_i32_0 = arith.constant 0 : i32
    %c0_i32_1 = arith.constant 0 : i32
    return %c0_i32, %c0_i32_0 : i32, i32
  }
  func.func @transform_13(%arg0: i32) -> (i32, i32) {
    %c0_i32 = arith.constant 0 : i32
    %c0_i32_0 = arith.constant 0 : i32
    %c0_i32_1 = arith.constant 0 : i32
    return %c0_i32, %c0_i32_0 : i32, i32
  }
  func.func @transform_14(%arg0: i32) -> (i32, i32) {
    %c0_i32 = arith.constant 0 : i32
    %c0_i32_0 = arith.constant 0 : i32
    %c0_i32_1 = arith.constant 0 : i32
    return %c0_i32, %c0_i32_0 : i32, i32
  }
  func.func @transform_15(%arg0: i32) -> (i32, i32) {
    %c0_i32 = arith.constant 0 : i32
    %c0_i32_0 = arith.constant 0 : i32
    %c0_i32_1 = arith.constant 0 : i32
    return %c0_i32, %c0_i32_0 : i32, i32
  }
  func.func @transform_16(%arg0: i32) -> (i32, i32, i32) {
    %c0_i32 = arith.constant 0 : i32
    %c0_i32_0 = arith.constant 0 : i32
    %c0_i32_1 = arith.constant 0 : i32
    return %arg0, %c0_i32, %c0_i32_0 : i32, i32, i32
  }
}

module attributes {stable_mosaic.version = 11 : i64} {
  func.func @_dec_layer_kernel(%arg0: i32, %arg1: memref<1x16x32xf32, #tpu.memory_space<vmem>>, %arg2: memref<1x9x32xf32, #tpu.memory_space<vmem>>, %arg3: memref<16x16xf32, #tpu.memory_space<vmem>>, %arg4: memref<32x96xbf16, #tpu.memory_space<vmem>>, %arg5: memref<1x96xf32, #tpu.memory_space<vmem>>, %arg6: memref<32x32xbf16, #tpu.memory_space<vmem>>, %arg7: memref<1x32xf32, #tpu.memory_space<vmem>>, %arg8: memref<1x32xf32, #tpu.memory_space<vmem>>, %arg9: memref<1x32xf32, #tpu.memory_space<vmem>>, %arg10: memref<32x32xbf16, #tpu.memory_space<vmem>>, %arg11: memref<1x32xf32, #tpu.memory_space<vmem>>, %arg12: memref<32x64xbf16, #tpu.memory_space<vmem>>, %arg13: memref<1x64xf32, #tpu.memory_space<vmem>>, %arg14: memref<32x32xbf16, #tpu.memory_space<vmem>>, %arg15: memref<1x32xf32, #tpu.memory_space<vmem>>, %arg16: memref<1x32xf32, #tpu.memory_space<vmem>>, %arg17: memref<1x32xf32, #tpu.memory_space<vmem>>, %arg18: memref<32x64xbf16, #tpu.memory_space<vmem>>, %arg19: memref<1x64xf32, #tpu.memory_space<vmem>>, %arg20: memref<64x32xbf16, #tpu.memory_space<vmem>>, %arg21: memref<1x32xf32, #tpu.memory_space<vmem>>, %arg22: memref<1x32xf32, #tpu.memory_space<vmem>>, %arg23: memref<1x32xf32, #tpu.memory_space<vmem>>, %arg24: memref<1x16x32xf32, #tpu.memory_space<vmem>>) attributes {dimension_semantics = [#tpu.dimension_semantics<parallel>], iteration_bounds = array<i64: 2>, scalar_prefetch = 0 : i64, scratch_operands = 0 : i64, tpu.core_type = #tpu.core_type<tc>, window_params = [{transform_indices = @transform_0, window_bounds = array<i64: 1, 16, 32>}, {transform_indices = @transform_1, window_bounds = array<i64: 1, 9, 32>}, {pipeline_mode = #tpu.pipeline_mode<synchronous>, transform_indices = @transform_2, window_bounds = array<i64: 16, 16>}, {pipeline_mode = #tpu.pipeline_mode<synchronous>, transform_indices = @transform_3, window_bounds = array<i64: 32, 96>}, {pipeline_mode = #tpu.pipeline_mode<synchronous>, transform_indices = @transform_4, window_bounds = array<i64: 1, 96>}, {pipeline_mode = #tpu.pipeline_mode<synchronous>, transform_indices = @transform_5, window_bounds = array<i64: 32, 32>}, {pipeline_mode = #tpu.pipeline_mode<synchronous>, transform_indices = @transform_6, window_bounds = array<i64: 1, 32>}, {pipeline_mode = #tpu.pipeline_mode<synchronous>, transform_indices = @transform_7, window_bounds = array<i64: 1, 32>}, {pipeline_mode = #tpu.pipeline_mode<synchronous>, transform_indices = @transform_8, window_bounds = array<i64: 1, 32>}, {pipeline_mode = #tpu.pipeline_mode<synchronous>, transform_indices = @transform_9, window_bounds = array<i64: 32, 32>}, {pipeline_mode = #tpu.pipeline_mode<synchronous>, transform_indices = @transform_10, window_bounds = array<i64: 1, 32>}, {pipeline_mode = #tpu.pipeline_mode<synchronous>, transform_indices = @transform_11, window_bounds = array<i64: 32, 64>}, {pipeline_mode = #tpu.pipeline_mode<synchronous>, transform_indices = @transform_12, window_bounds = array<i64: 1, 64>}, {pipeline_mode = #tpu.pipeline_mode<synchronous>, transform_indices = @transform_13, window_bounds = array<i64: 32, 32>}, {pipeline_mode = #tpu.pipeline_mode<synchronous>, transform_indices = @transform_14, window_bounds = array<i64: 1, 32>}, {pipeline_mode = #tpu.pipeline_mode<synchronous>, transform_indices = @transform_15, window_bounds = array<i64: 1, 32>}, {pipeline_mode = #tpu.pipeline_mode<synchronous>, transform_indices = @transform_16, window_bounds = array<i64: 1, 32>}, {pipeline_mode = #tpu.pipeline_mode<synchronous>, transform_indices = @transform_17, window_bounds = array<i64: 32, 64>}, {pipeline_mode = #tpu.pipeline_mode<synchronous>, transform_indices = @transform_18, window_bounds = array<i64: 1, 64>}, {pipeline_mode = #tpu.pipeline_mode<synchronous>, transform_indices = @transform_19, window_bounds = array<i64: 64, 32>}, {pipeline_mode = #tpu.pipeline_mode<synchronous>, transform_indices = @transform_20, window_bounds = array<i64: 1, 32>}, {pipeline_mode = #tpu.pipeline_mode<synchronous>, transform_indices = @transform_21, window_bounds = array<i64: 1, 32>}, {pipeline_mode = #tpu.pipeline_mode<synchronous>, transform_indices = @transform_22, window_bounds = array<i64: 1, 32>}, {transform_indices = @transform_23, window_bounds = array<i64: 1, 16, 32>}]} {
    %c0 = arith.constant 0 : index
    %c0_0 = arith.constant 0 : index
    %c0_1 = arith.constant 0 : index
    %0 = vector.load %arg1[%c0, %c0_0, %c0_1] : memref<1x16x32xf32, #tpu.memory_space<vmem>>, vector<1x16x32xf32>
    %1 = vector.shape_cast %0 : vector<1x16x32xf32> to vector<16x32xf32>
    %c0_2 = arith.constant 0 : index
    %c0_3 = arith.constant 0 : index
    %2 = vector.load %arg3[%c0_2, %c0_3] : memref<16x16xf32, #tpu.memory_space<vmem>>, vector<16x16xf32>
    %c0_4 = arith.constant 0 : index
    %c0_5 = arith.constant 0 : index
    %3 = vector.load %arg4[%c0_4, %c0_5] : memref<32x96xbf16, #tpu.memory_space<vmem>>, vector<32x96xbf16>
    %c0_6 = arith.constant 0 : index
    %c0_7 = arith.constant 0 : index
    %4 = vector.load %arg5[%c0_6, %c0_7] : memref<1x96xf32, #tpu.memory_space<vmem>>, vector<1x96xf32>
    %c0_8 = arith.constant 0 : index
    %c0_9 = arith.constant 0 : index
    %5 = vector.load %arg6[%c0_8, %c0_9] : memref<32x32xbf16, #tpu.memory_space<vmem>>, vector<32x32xbf16>
    %c0_10 = arith.constant 0 : index
    %c0_11 = arith.constant 0 : index
    %6 = vector.load %arg7[%c0_10, %c0_11] : memref<1x32xf32, #tpu.memory_space<vmem>>, vector<1x32xf32>
    %7 = arith.truncf %1 : vector<16x32xf32> to vector<16x32xbf16>
    %cst = arith.constant dense<0.000000e+00> : vector<16x96xf32>
    %8 = tpu.matmul %7, %3, %cst {dimension_numbers = #tpu.dot_dimension_numbers<[1], [0], [0], [1], [0, 0, 1, 1], [], []>} : vector<16x32xbf16>, vector<32x96xbf16>, vector<16x96xf32> -> vector<16x96xf32>
    %9 = vector.broadcast %4 : vector<1x96xf32> to vector<16x96xf32>
    %10 = arith.addf %8, %9 : vector<16x96xf32>
    %11 = vector.extract_strided_slice %10 {offsets = [0, 0], sizes = [16, 32], strides = [1, 1]} : vector<16x96xf32> to vector<16x32xf32>
    %12 = vector.extract_strided_slice %10 {offsets = [0, 32], sizes = [16, 32], strides = [1, 1]} : vector<16x96xf32> to vector<16x32xf32>
    %13 = vector.extract_strided_slice %10 {offsets = [0, 64], sizes = [16, 32], strides = [1, 1]} : vector<16x96xf32> to vector<16x32xf32>
    %14 = tpu.iota {dimensions = array<i32: 0>} : vector<16x16xi32>
    %15 = tpu.iota {dimensions = array<i32: 1>} : vector<16x16xi32>
    %16 = arith.cmpi sge, %14, %15 : vector<16x16xi32>
    %17 = arith.extui %16 : vector<16x16xi1> to vector<16x16xi32>
    %18 = arith.sitofp %17 : vector<16x16xi32> to vector<16x16xf32>
    %19 = arith.truncf %18 : vector<16x16xf32> to vector<16x16xbf16>
    %20 = arith.truncf %13 : vector<16x32xf32> to vector<16x32xbf16>
    %cst_12 = arith.constant dense<0.000000e+00> : vector<16x32xf32>
    %21 = tpu.matmul %19, %20, %cst_12 {dimension_numbers = #tpu.dot_dimension_numbers<[1], [0], [0], [1], [0, 0, 1, 1], [], []>} : vector<16x16xbf16>, vector<16x32xbf16>, vector<16x32xf32> -> vector<16x32xf32>
    %22 = vector.extract_strided_slice %11 {offsets = [0, 0], sizes = [16, 8], strides = [1, 1]} : vector<16x32xf32> to vector<16x8xf32>
    %23 = vector.extract_strided_slice %12 {offsets = [0, 0], sizes = [16, 8], strides = [1, 1]} : vector<16x32xf32> to vector<16x8xf32>
    %24 = arith.truncf %22 : vector<16x8xf32> to vector<16x8xbf16>
    %25 = arith.truncf %23 : vector<16x8xf32> to vector<16x8xbf16>
    %cst_13 = arith.constant dense<0.000000e+00> : vector<16x16xf32>
    %26 = tpu.matmul %24, %25, %cst_13 {dimension_numbers = #tpu.dot_dimension_numbers<[1], [1], [0], [0], [0, 0, 1, 0], [], []>} : vector<16x8xbf16>, vector<16x8xbf16>, vector<16x16xf32> -> vector<16x16xf32>
    %cst_14 = arith.constant 0.353553385 : f32
    %27 = vector.broadcast %cst_14 : f32 to vector<16x16xf32>
    %28 = arith.mulf %26, %27 : vector<16x16xf32>
    %cst_15 = arith.constant 0xFF800000 : f32
    %29 = vector.broadcast %cst_15 : f32 to vector<16x16xf32>
    %30 = arith.select %16, %28, %29 : vector<16x16xi1>, vector<16x16xf32>
    %cst_16 = arith.constant dense<0xFF800000> : vector<16xf32>
    %31 = vector.multi_reduction <maximumf>, %30, %cst_16 [1] : vector<16x16xf32> to vector<16xf32>
    %32 = vector.shape_cast %31 : vector<16xf32> to vector<16x1xf32>
    %33 = vector.broadcast %32 : vector<16x1xf32> to vector<16x16xf32>
    %34 = arith.subf %30, %33 : vector<16x16xf32>
    %35 = math.exp %34 : vector<16x16xf32>
    %cst_17 = arith.constant dense<0.000000e+00> : vector<16xf32>
    %36 = vector.multi_reduction <add>, %35, %cst_17 [1] : vector<16x16xf32> to vector<16xf32>
    %37 = vector.shape_cast %36 : vector<16xf32> to vector<16x1xf32>
    %38 = tpu.reciprocal %37 {approx = true} : vector<16x1xf32> -> vector<16x1xf32>
    %39 = vector.broadcast %38 : vector<16x1xf32> to vector<16x16xf32>
    %40 = arith.mulf %35, %39 : vector<16x16xf32>
    %41 = vector.extract_strided_slice %13 {offsets = [0, 0], sizes = [16, 8], strides = [1, 1]} : vector<16x32xf32> to vector<16x8xf32>
    %42 = arith.truncf %40 : vector<16x16xf32> to vector<16x16xbf16>
    %43 = arith.truncf %41 : vector<16x8xf32> to vector<16x8xbf16>
    %cst_18 = arith.constant dense<0.000000e+00> : vector<16x8xf32>
    %44 = tpu.matmul %42, %43, %cst_18 {dimension_numbers = #tpu.dot_dimension_numbers<[1], [0], [0], [1], [0, 0, 1, 1], [], []>} : vector<16x16xbf16>, vector<16x8xbf16>, vector<16x8xf32> -> vector<16x8xf32>
    %cst_19 = arith.constant 0.000000e+00 : f32
    %45 = vector.broadcast %cst_19 : f32 to vector<16x16xf32>
    %46 = arith.cmpf ogt, %2, %45 : vector<16x16xf32>
    %cst_20 = arith.constant 0xFF800000 : f32
    %47 = vector.broadcast %cst_20 : f32 to vector<16x16xf32>
    %48 = arith.select %46, %26, %47 : vector<16x16xi1>, vector<16x16xf32>
    %cst_21 = arith.constant dense<0xFF800000> : vector<16xf32>
    %49 = vector.multi_reduction <maximumf>, %48, %cst_21 [1] : vector<16x16xf32> to vector<16xf32>
    %50 = vector.shape_cast %49 : vector<16xf32> to vector<16x1xf32>
    %51 = arith.mulf %2, %26 : vector<16x16xf32>
    %cst_22 = arith.constant dense<0.000000e+00> : vector<16xf32>
    %52 = vector.multi_reduction <add>, %51, %cst_22 [1] : vector<16x16xf32> to vector<16xf32>
    %53 = vector.shape_cast %52 : vector<16xf32> to vector<16x1xf32>
    %cst_23 = arith.constant 6.250000e-02 : f32
    %54 = vector.broadcast %cst_23 : f32 to vector<16x1xf32>
    %55 = arith.mulf %53, %54 : vector<16x1xf32>
    %56 = arith.subf %50, %55 : vector<16x1xf32>
    %57 = vector.shape_cast %56 : vector<16x1xf32> to vector<16x1xf32>
    %58 = vector.broadcast %57 : vector<16x1xf32> to vector<16x16xf32>
    %59 = tpu.transpose %58, [1, 0] : vector<16x16xf32> -> vector<16x16xf32>
    %60 = vector.broadcast %56 : vector<16x1xf32> to vector<16x16xf32>
    %61 = arith.cmpf ogt, %59, %60 : vector<16x16xf32>
    %62 = vector.broadcast %56 : vector<16x1xf32> to vector<16x16xf32>
    %63 = arith.cmpf oeq, %59, %62 : vector<16x16xf32>
    %64 = arith.cmpi slt, %15, %14 : vector<16x16xi32>
    %65 = arith.andi %63, %64 : vector<16x16xi1>
    %66 = arith.ori %61, %65 : vector<16x16xi1>
    %67 = arith.extui %66 : vector<16x16xi1> to vector<16x16xi32>
    %68 = arith.sitofp %67 : vector<16x16xi32> to vector<16x16xf32>
    %cst_24 = arith.constant dense<0.000000e+00> : vector<16xf32>
    %69 = vector.multi_reduction <add>, %68, %cst_24 [1] : vector<16x16xf32> to vector<16xf32>
    %70 = vector.shape_cast %69 : vector<16xf32> to vector<16x1xf32>
    %cst_25 = arith.constant 1.500000e+01 : f32
    %71 = vector.broadcast %cst_25 : f32 to vector<16x1xf32>
    %72 = arith.cmpf olt, %70, %71 : vector<16x1xf32>
    %73 = vector.extract_strided_slice %21 {offsets = [0, 0], sizes = [16, 8], strides = [1, 1]} : vector<16x32xf32> to vector<16x8xf32>
    %74 = vector.shape_cast %72 : vector<16x1xi1> to vector<16x1xi1>
    %75 = vector.broadcast %74 : vector<16x1xi1> to vector<16x8xi1>
    %76 = arith.select %75, %44, %73 : vector<16x8xi1>, vector<16x8xf32>
    %77 = vector.extract_strided_slice %11 {offsets = [0, 8], sizes = [16, 8], strides = [1, 1]} : vector<16x32xf32> to vector<16x8xf32>
    %78 = vector.extract_strided_slice %12 {offsets = [0, 8], sizes = [16, 8], strides = [1, 1]} : vector<16x32xf32> to vector<16x8xf32>
    %79 = arith.truncf %77 : vector<16x8xf32> to vector<16x8xbf16>
    %80 = arith.truncf %78 : vector<16x8xf32> to vector<16x8xbf16>
    %cst_26 = arith.constant dense<0.000000e+00> : vector<16x16xf32>
    %81 = tpu.matmul %79, %80, %cst_26 {dimension_numbers = #tpu.dot_dimension_numbers<[1], [1], [0], [0], [0, 0, 1, 0], [], []>} : vector<16x8xbf16>, vector<16x8xbf16>, vector<16x16xf32> -> vector<16x16xf32>
    %cst_27 = arith.constant 0.353553385 : f32
    %82 = vector.broadcast %cst_27 : f32 to vector<16x16xf32>
    %83 = arith.mulf %81, %82 : vector<16x16xf32>
    %cst_28 = arith.constant 0xFF800000 : f32
    %84 = vector.broadcast %cst_28 : f32 to vector<16x16xf32>
    %85 = arith.select %16, %83, %84 : vector<16x16xi1>, vector<16x16xf32>
    %cst_29 = arith.constant dense<0xFF800000> : vector<16xf32>
    %86 = vector.multi_reduction <maximumf>, %85, %cst_29 [1] : vector<16x16xf32> to vector<16xf32>
    %87 = vector.shape_cast %86 : vector<16xf32> to vector<16x1xf32>
    %88 = vector.broadcast %87 : vector<16x1xf32> to vector<16x16xf32>
    %89 = arith.subf %85, %88 : vector<16x16xf32>
    %90 = math.exp %89 : vector<16x16xf32>
    %cst_30 = arith.constant dense<0.000000e+00> : vector<16xf32>
    %91 = vector.multi_reduction <add>, %90, %cst_30 [1] : vector<16x16xf32> to vector<16xf32>
    %92 = vector.shape_cast %91 : vector<16xf32> to vector<16x1xf32>
    %93 = tpu.reciprocal %92 {approx = true} : vector<16x1xf32> -> vector<16x1xf32>
    %94 = vector.broadcast %93 : vector<16x1xf32> to vector<16x16xf32>
    %95 = arith.mulf %90, %94 : vector<16x16xf32>
    %96 = vector.extract_strided_slice %13 {offsets = [0, 8], sizes = [16, 8], strides = [1, 1]} : vector<16x32xf32> to vector<16x8xf32>
    %97 = arith.truncf %95 : vector<16x16xf32> to vector<16x16xbf16>
    %98 = arith.truncf %96 : vector<16x8xf32> to vector<16x8xbf16>
    %cst_31 = arith.constant dense<0.000000e+00> : vector<16x8xf32>
    %99 = tpu.matmul %97, %98, %cst_31 {dimension_numbers = #tpu.dot_dimension_numbers<[1], [0], [0], [1], [0, 0, 1, 1], [], []>} : vector<16x16xbf16>, vector<16x8xbf16>, vector<16x8xf32> -> vector<16x8xf32>
    %cst_32 = arith.constant 0.000000e+00 : f32
    %100 = vector.broadcast %cst_32 : f32 to vector<16x16xf32>
    %101 = arith.cmpf ogt, %2, %100 : vector<16x16xf32>
    %cst_33 = arith.constant 0xFF800000 : f32
    %102 = vector.broadcast %cst_33 : f32 to vector<16x16xf32>
    %103 = arith.select %101, %81, %102 : vector<16x16xi1>, vector<16x16xf32>
    %cst_34 = arith.constant dense<0xFF800000> : vector<16xf32>
    %104 = vector.multi_reduction <maximumf>, %103, %cst_34 [1] : vector<16x16xf32> to vector<16xf32>
    %105 = vector.shape_cast %104 : vector<16xf32> to vector<16x1xf32>
    %106 = arith.mulf %2, %81 : vector<16x16xf32>
    %cst_35 = arith.constant dense<0.000000e+00> : vector<16xf32>
    %107 = vector.multi_reduction <add>, %106, %cst_35 [1] : vector<16x16xf32> to vector<16xf32>
    %108 = vector.shape_cast %107 : vector<16xf32> to vector<16x1xf32>
    %cst_36 = arith.constant 6.250000e-02 : f32
    %109 = vector.broadcast %cst_36 : f32 to vector<16x1xf32>
    %110 = arith.mulf %108, %109 : vector<16x1xf32>
    %111 = arith.subf %105, %110 : vector<16x1xf32>
    %112 = vector.shape_cast %111 : vector<16x1xf32> to vector<16x1xf32>
    %113 = vector.broadcast %112 : vector<16x1xf32> to vector<16x16xf32>
    %114 = tpu.transpose %113, [1, 0] : vector<16x16xf32> -> vector<16x16xf32>
    %115 = vector.broadcast %111 : vector<16x1xf32> to vector<16x16xf32>
    %116 = arith.cmpf ogt, %114, %115 : vector<16x16xf32>
    %117 = vector.broadcast %111 : vector<16x1xf32> to vector<16x16xf32>
    %118 = arith.cmpf oeq, %114, %117 : vector<16x16xf32>
    %119 = arith.cmpi slt, %15, %14 : vector<16x16xi32>
    %120 = arith.andi %118, %119 : vector<16x16xi1>
    %121 = arith.ori %116, %120 : vector<16x16xi1>
    %122 = arith.extui %121 : vector<16x16xi1> to vector<16x16xi32>
    %123 = arith.sitofp %122 : vector<16x16xi32> to vector<16x16xf32>
    %cst_37 = arith.constant dense<0.000000e+00> : vector<16xf32>
    %124 = vector.multi_reduction <add>, %123, %cst_37 [1] : vector<16x16xf32> to vector<16xf32>
    %125 = vector.shape_cast %124 : vector<16xf32> to vector<16x1xf32>
    %cst_38 = arith.constant 1.500000e+01 : f32
    %126 = vector.broadcast %cst_38 : f32 to vector<16x1xf32>
    %127 = arith.cmpf olt, %125, %126 : vector<16x1xf32>
    %128 = vector.extract_strided_slice %21 {offsets = [0, 8], sizes = [16, 8], strides = [1, 1]} : vector<16x32xf32> to vector<16x8xf32>
    %129 = vector.shape_cast %127 : vector<16x1xi1> to vector<16x1xi1>
    %130 = vector.broadcast %129 : vector<16x1xi1> to vector<16x8xi1>
    %131 = arith.select %130, %99, %128 : vector<16x8xi1>, vector<16x8xf32>
    %132 = vector.extract_strided_slice %11 {offsets = [0, 16], sizes = [16, 8], strides = [1, 1]} : vector<16x32xf32> to vector<16x8xf32>
    %133 = vector.extract_strided_slice %12 {offsets = [0, 16], sizes = [16, 8], strides = [1, 1]} : vector<16x32xf32> to vector<16x8xf32>
    %134 = arith.truncf %132 : vector<16x8xf32> to vector<16x8xbf16>
    %135 = arith.truncf %133 : vector<16x8xf32> to vector<16x8xbf16>
    %cst_39 = arith.constant dense<0.000000e+00> : vector<16x16xf32>
    %136 = tpu.matmul %134, %135, %cst_39 {dimension_numbers = #tpu.dot_dimension_numbers<[1], [1], [0], [0], [0, 0, 1, 0], [], []>} : vector<16x8xbf16>, vector<16x8xbf16>, vector<16x16xf32> -> vector<16x16xf32>
    %cst_40 = arith.constant 0.353553385 : f32
    %137 = vector.broadcast %cst_40 : f32 to vector<16x16xf32>
    %138 = arith.mulf %136, %137 : vector<16x16xf32>
    %cst_41 = arith.constant 0xFF800000 : f32
    %139 = vector.broadcast %cst_41 : f32 to vector<16x16xf32>
    %140 = arith.select %16, %138, %139 : vector<16x16xi1>, vector<16x16xf32>
    %cst_42 = arith.constant dense<0xFF800000> : vector<16xf32>
    %141 = vector.multi_reduction <maximumf>, %140, %cst_42 [1] : vector<16x16xf32> to vector<16xf32>
    %142 = vector.shape_cast %141 : vector<16xf32> to vector<16x1xf32>
    %143 = vector.broadcast %142 : vector<16x1xf32> to vector<16x16xf32>
    %144 = arith.subf %140, %143 : vector<16x16xf32>
    %145 = math.exp %144 : vector<16x16xf32>
    %cst_43 = arith.constant dense<0.000000e+00> : vector<16xf32>
    %146 = vector.multi_reduction <add>, %145, %cst_43 [1] : vector<16x16xf32> to vector<16xf32>
    %147 = vector.shape_cast %146 : vector<16xf32> to vector<16x1xf32>
    %148 = tpu.reciprocal %147 {approx = true} : vector<16x1xf32> -> vector<16x1xf32>
    %149 = vector.broadcast %148 : vector<16x1xf32> to vector<16x16xf32>
    %150 = arith.mulf %145, %149 : vector<16x16xf32>
    %151 = vector.extract_strided_slice %13 {offsets = [0, 16], sizes = [16, 8], strides = [1, 1]} : vector<16x32xf32> to vector<16x8xf32>
    %152 = arith.truncf %150 : vector<16x16xf32> to vector<16x16xbf16>
    %153 = arith.truncf %151 : vector<16x8xf32> to vector<16x8xbf16>
    %cst_44 = arith.constant dense<0.000000e+00> : vector<16x8xf32>
    %154 = tpu.matmul %152, %153, %cst_44 {dimension_numbers = #tpu.dot_dimension_numbers<[1], [0], [0], [1], [0, 0, 1, 1], [], []>} : vector<16x16xbf16>, vector<16x8xbf16>, vector<16x8xf32> -> vector<16x8xf32>
    %cst_45 = arith.constant 0.000000e+00 : f32
    %155 = vector.broadcast %cst_45 : f32 to vector<16x16xf32>
    %156 = arith.cmpf ogt, %2, %155 : vector<16x16xf32>
    %cst_46 = arith.constant 0xFF800000 : f32
    %157 = vector.broadcast %cst_46 : f32 to vector<16x16xf32>
    %158 = arith.select %156, %136, %157 : vector<16x16xi1>, vector<16x16xf32>
    %cst_47 = arith.constant dense<0xFF800000> : vector<16xf32>
    %159 = vector.multi_reduction <maximumf>, %158, %cst_47 [1] : vector<16x16xf32> to vector<16xf32>
    %160 = vector.shape_cast %159 : vector<16xf32> to vector<16x1xf32>
    %161 = arith.mulf %2, %136 : vector<16x16xf32>
    %cst_48 = arith.constant dense<0.000000e+00> : vector<16xf32>
    %162 = vector.multi_reduction <add>, %161, %cst_48 [1] : vector<16x16xf32> to vector<16xf32>
    %163 = vector.shape_cast %162 : vector<16xf32> to vector<16x1xf32>
    %cst_49 = arith.constant 6.250000e-02 : f32
    %164 = vector.broadcast %cst_49 : f32 to vector<16x1xf32>
    %165 = arith.mulf %163, %164 : vector<16x1xf32>
    %166 = arith.subf %160, %165 : vector<16x1xf32>
    %167 = vector.shape_cast %166 : vector<16x1xf32> to vector<16x1xf32>
    %168 = vector.broadcast %167 : vector<16x1xf32> to vector<16x16xf32>
    %169 = tpu.transpose %168, [1, 0] : vector<16x16xf32> -> vector<16x16xf32>
    %170 = vector.broadcast %166 : vector<16x1xf32> to vector<16x16xf32>
    %171 = arith.cmpf ogt, %169, %170 : vector<16x16xf32>
    %172 = vector.broadcast %166 : vector<16x1xf32> to vector<16x16xf32>
    %173 = arith.cmpf oeq, %169, %172 : vector<16x16xf32>
    %174 = arith.cmpi slt, %15, %14 : vector<16x16xi32>
    %175 = arith.andi %173, %174 : vector<16x16xi1>
    %176 = arith.ori %171, %175 : vector<16x16xi1>
    %177 = arith.extui %176 : vector<16x16xi1> to vector<16x16xi32>
    %178 = arith.sitofp %177 : vector<16x16xi32> to vector<16x16xf32>
    %cst_50 = arith.constant dense<0.000000e+00> : vector<16xf32>
    %179 = vector.multi_reduction <add>, %178, %cst_50 [1] : vector<16x16xf32> to vector<16xf32>
    %180 = vector.shape_cast %179 : vector<16xf32> to vector<16x1xf32>
    %cst_51 = arith.constant 1.500000e+01 : f32
    %181 = vector.broadcast %cst_51 : f32 to vector<16x1xf32>
    %182 = arith.cmpf olt, %180, %181 : vector<16x1xf32>
    %183 = vector.extract_strided_slice %21 {offsets = [0, 16], sizes = [16, 8], strides = [1, 1]} : vector<16x32xf32> to vector<16x8xf32>
    %184 = vector.shape_cast %182 : vector<16x1xi1> to vector<16x1xi1>
    %185 = vector.broadcast %184 : vector<16x1xi1> to vector<16x8xi1>
    %186 = arith.select %185, %154, %183 : vector<16x8xi1>, vector<16x8xf32>
    %187 = vector.extract_strided_slice %11 {offsets = [0, 24], sizes = [16, 8], strides = [1, 1]} : vector<16x32xf32> to vector<16x8xf32>
    %188 = vector.extract_strided_slice %12 {offsets = [0, 24], sizes = [16, 8], strides = [1, 1]} : vector<16x32xf32> to vector<16x8xf32>
    %189 = arith.truncf %187 : vector<16x8xf32> to vector<16x8xbf16>
    %190 = arith.truncf %188 : vector<16x8xf32> to vector<16x8xbf16>
    %cst_52 = arith.constant dense<0.000000e+00> : vector<16x16xf32>
    %191 = tpu.matmul %189, %190, %cst_52 {dimension_numbers = #tpu.dot_dimension_numbers<[1], [1], [0], [0], [0, 0, 1, 0], [], []>} : vector<16x8xbf16>, vector<16x8xbf16>, vector<16x16xf32> -> vector<16x16xf32>
    %cst_53 = arith.constant 0.353553385 : f32
    %192 = vector.broadcast %cst_53 : f32 to vector<16x16xf32>
    %193 = arith.mulf %191, %192 : vector<16x16xf32>
    %cst_54 = arith.constant 0xFF800000 : f32
    %194 = vector.broadcast %cst_54 : f32 to vector<16x16xf32>
    %195 = arith.select %16, %193, %194 : vector<16x16xi1>, vector<16x16xf32>
    %cst_55 = arith.constant dense<0xFF800000> : vector<16xf32>
    %196 = vector.multi_reduction <maximumf>, %195, %cst_55 [1] : vector<16x16xf32> to vector<16xf32>
    %197 = vector.shape_cast %196 : vector<16xf32> to vector<16x1xf32>
    %198 = vector.broadcast %197 : vector<16x1xf32> to vector<16x16xf32>
    %199 = arith.subf %195, %198 : vector<16x16xf32>
    %200 = math.exp %199 : vector<16x16xf32>
    %cst_56 = arith.constant dense<0.000000e+00> : vector<16xf32>
    %201 = vector.multi_reduction <add>, %200, %cst_56 [1] : vector<16x16xf32> to vector<16xf32>
    %202 = vector.shape_cast %201 : vector<16xf32> to vector<16x1xf32>
    %203 = tpu.reciprocal %202 {approx = true} : vector<16x1xf32> -> vector<16x1xf32>
    %204 = vector.broadcast %203 : vector<16x1xf32> to vector<16x16xf32>
    %205 = arith.mulf %200, %204 : vector<16x16xf32>
    %206 = vector.extract_strided_slice %13 {offsets = [0, 24], sizes = [16, 8], strides = [1, 1]} : vector<16x32xf32> to vector<16x8xf32>
    %207 = arith.truncf %205 : vector<16x16xf32> to vector<16x16xbf16>
    %208 = arith.truncf %206 : vector<16x8xf32> to vector<16x8xbf16>
    %cst_57 = arith.constant dense<0.000000e+00> : vector<16x8xf32>
    %209 = tpu.matmul %207, %208, %cst_57 {dimension_numbers = #tpu.dot_dimension_numbers<[1], [0], [0], [1], [0, 0, 1, 1], [], []>} : vector<16x16xbf16>, vector<16x8xbf16>, vector<16x8xf32> -> vector<16x8xf32>
    %cst_58 = arith.constant 0.000000e+00 : f32
    %210 = vector.broadcast %cst_58 : f32 to vector<16x16xf32>
    %211 = arith.cmpf ogt, %2, %210 : vector<16x16xf32>
    %cst_59 = arith.constant 0xFF800000 : f32
    %212 = vector.broadcast %cst_59 : f32 to vector<16x16xf32>
    %213 = arith.select %211, %191, %212 : vector<16x16xi1>, vector<16x16xf32>
    %cst_60 = arith.constant dense<0xFF800000> : vector<16xf32>
    %214 = vector.multi_reduction <maximumf>, %213, %cst_60 [1] : vector<16x16xf32> to vector<16xf32>
    %215 = vector.shape_cast %214 : vector<16xf32> to vector<16x1xf32>
    %216 = arith.mulf %2, %191 : vector<16x16xf32>
    %cst_61 = arith.constant dense<0.000000e+00> : vector<16xf32>
    %217 = vector.multi_reduction <add>, %216, %cst_61 [1] : vector<16x16xf32> to vector<16xf32>
    %218 = vector.shape_cast %217 : vector<16xf32> to vector<16x1xf32>
    %cst_62 = arith.constant 6.250000e-02 : f32
    %219 = vector.broadcast %cst_62 : f32 to vector<16x1xf32>
    %220 = arith.mulf %218, %219 : vector<16x1xf32>
    %221 = arith.subf %215, %220 : vector<16x1xf32>
    %222 = vector.shape_cast %221 : vector<16x1xf32> to vector<16x1xf32>
    %223 = vector.broadcast %222 : vector<16x1xf32> to vector<16x16xf32>
    %224 = tpu.transpose %223, [1, 0] : vector<16x16xf32> -> vector<16x16xf32>
    %225 = vector.broadcast %221 : vector<16x1xf32> to vector<16x16xf32>
    %226 = arith.cmpf ogt, %224, %225 : vector<16x16xf32>
    %227 = vector.broadcast %221 : vector<16x1xf32> to vector<16x16xf32>
    %228 = arith.cmpf oeq, %224, %227 : vector<16x16xf32>
    %229 = arith.cmpi slt, %15, %14 : vector<16x16xi32>
    %230 = arith.andi %228, %229 : vector<16x16xi1>
    %231 = arith.ori %226, %230 : vector<16x16xi1>
    %232 = arith.extui %231 : vector<16x16xi1> to vector<16x16xi32>
    %233 = arith.sitofp %232 : vector<16x16xi32> to vector<16x16xf32>
    %cst_63 = arith.constant dense<0.000000e+00> : vector<16xf32>
    %234 = vector.multi_reduction <add>, %233, %cst_63 [1] : vector<16x16xf32> to vector<16xf32>
    %235 = vector.shape_cast %234 : vector<16xf32> to vector<16x1xf32>
    %cst_64 = arith.constant 1.500000e+01 : f32
    %236 = vector.broadcast %cst_64 : f32 to vector<16x1xf32>
    %237 = arith.cmpf olt, %235, %236 : vector<16x1xf32>
    %238 = vector.extract_strided_slice %21 {offsets = [0, 24], sizes = [16, 8], strides = [1, 1]} : vector<16x32xf32> to vector<16x8xf32>
    %239 = vector.shape_cast %237 : vector<16x1xi1> to vector<16x1xi1>
    %240 = vector.broadcast %239 : vector<16x1xi1> to vector<16x8xi1>
    %241 = arith.select %240, %209, %238 : vector<16x8xi1>, vector<16x8xf32>
    %242 = tpu.concatenate %76, %131, %186, %241 in 1 : vector<16x8xf32>, vector<16x8xf32>, vector<16x8xf32>, vector<16x8xf32> -> vector<16x32xf32>
    %243 = arith.truncf %242 : vector<16x32xf32> to vector<16x32xbf16>
    %cst_65 = arith.constant dense<0.000000e+00> : vector<16x32xf32>
    %244 = tpu.matmul %243, %5, %cst_65 {dimension_numbers = #tpu.dot_dimension_numbers<[1], [0], [0], [1], [0, 0, 1, 1], [], []>} : vector<16x32xbf16>, vector<32x32xbf16>, vector<16x32xf32> -> vector<16x32xf32>
    %245 = vector.broadcast %6 : vector<1x32xf32> to vector<16x32xf32>
    %246 = arith.addf %244, %245 : vector<16x32xf32>
    %247 = arith.addf %1, %246 : vector<16x32xf32>
    %c0_66 = arith.constant 0 : index
    %c0_67 = arith.constant 0 : index
    %248 = vector.load %arg8[%c0_66, %c0_67] : memref<1x32xf32, #tpu.memory_space<vmem>>, vector<1x32xf32>
    %c0_68 = arith.constant 0 : index
    %c0_69 = arith.constant 0 : index
    %249 = vector.load %arg9[%c0_68, %c0_69] : memref<1x32xf32, #tpu.memory_space<vmem>>, vector<1x32xf32>
    %cst_70 = arith.constant dense<0.000000e+00> : vector<16xf32>
    %250 = vector.multi_reduction <add>, %247, %cst_70 [1] : vector<16x32xf32> to vector<16xf32>
    %251 = vector.shape_cast %250 : vector<16xf32> to vector<16x1xf32>
    %cst_71 = arith.constant 3.200000e+01 : f32
    %252 = vector.broadcast %cst_71 : f32 to vector<16x1xf32>
    %253 = arith.divf %251, %252 : vector<16x1xf32>
    %254 = vector.broadcast %253 : vector<16x1xf32> to vector<16x32xf32>
    %255 = arith.subf %247, %254 : vector<16x32xf32>
    %256 = vector.broadcast %253 : vector<16x1xf32> to vector<16x32xf32>
    %257 = arith.subf %247, %256 : vector<16x32xf32>
    %258 = arith.mulf %255, %257 : vector<16x32xf32>
    %cst_72 = arith.constant dense<0.000000e+00> : vector<16xf32>
    %259 = vector.multi_reduction <add>, %258, %cst_72 [1] : vector<16x32xf32> to vector<16xf32>
    %260 = vector.shape_cast %259 : vector<16xf32> to vector<16x1xf32>
    %cst_73 = arith.constant 3.200000e+01 : f32
    %261 = vector.broadcast %cst_73 : f32 to vector<16x1xf32>
    %262 = arith.divf %260, %261 : vector<16x1xf32>
    %263 = vector.broadcast %253 : vector<16x1xf32> to vector<16x32xf32>
    %264 = arith.subf %247, %263 : vector<16x32xf32>
    %cst_74 = arith.constant 9.99999974E-6 : f32
    %265 = vector.broadcast %cst_74 : f32 to vector<16x1xf32>
    %266 = arith.addf %262, %265 : vector<16x1xf32>
    %267 = math.rsqrt %266 : vector<16x1xf32>
    %268 = vector.broadcast %267 : vector<16x1xf32> to vector<16x32xf32>
    %269 = arith.mulf %264, %268 : vector<16x32xf32>
    %270 = vector.broadcast %248 : vector<1x32xf32> to vector<16x32xf32>
    %271 = arith.mulf %269, %270 : vector<16x32xf32>
    %272 = vector.broadcast %249 : vector<1x32xf32> to vector<16x32xf32>
    %273 = arith.addf %271, %272 : vector<16x32xf32>
    %c0_75 = arith.constant 0 : index
    %c0_76 = arith.constant 0 : index
    %c0_77 = arith.constant 0 : index
    %274 = vector.load %arg2[%c0_75, %c0_76, %c0_77] : memref<1x9x32xf32, #tpu.memory_space<vmem>>, vector<1x9x32xf32>
    %275 = vector.shape_cast %274 : vector<1x9x32xf32> to vector<9x32xf32>
    %c0_78 = arith.constant 0 : index
    %c0_79 = arith.constant 0 : index
    %276 = vector.load %arg10[%c0_78, %c0_79] : memref<32x32xbf16, #tpu.memory_space<vmem>>, vector<32x32xbf16>
    %c0_80 = arith.constant 0 : index
    %c0_81 = arith.constant 0 : index
    %277 = vector.load %arg11[%c0_80, %c0_81] : memref<1x32xf32, #tpu.memory_space<vmem>>, vector<1x32xf32>
    %c0_82 = arith.constant 0 : index
    %c0_83 = arith.constant 0 : index
    %278 = vector.load %arg12[%c0_82, %c0_83] : memref<32x64xbf16, #tpu.memory_space<vmem>>, vector<32x64xbf16>
    %c0_84 = arith.constant 0 : index
    %c0_85 = arith.constant 0 : index
    %279 = vector.load %arg13[%c0_84, %c0_85] : memref<1x64xf32, #tpu.memory_space<vmem>>, vector<1x64xf32>
    %c0_86 = arith.constant 0 : index
    %c0_87 = arith.constant 0 : index
    %280 = vector.load %arg14[%c0_86, %c0_87] : memref<32x32xbf16, #tpu.memory_space<vmem>>, vector<32x32xbf16>
    %c0_88 = arith.constant 0 : index
    %c0_89 = arith.constant 0 : index
    %281 = vector.load %arg15[%c0_88, %c0_89] : memref<1x32xf32, #tpu.memory_space<vmem>>, vector<1x32xf32>
    %282 = arith.truncf %273 : vector<16x32xf32> to vector<16x32xbf16>
    %cst_90 = arith.constant dense<0.000000e+00> : vector<16x32xf32>
    %283 = tpu.matmul %282, %276, %cst_90 {dimension_numbers = #tpu.dot_dimension_numbers<[1], [0], [0], [1], [0, 0, 1, 1], [], []>} : vector<16x32xbf16>, vector<32x32xbf16>, vector<16x32xf32> -> vector<16x32xf32>
    %284 = vector.broadcast %277 : vector<1x32xf32> to vector<16x32xf32>
    %285 = arith.addf %283, %284 : vector<16x32xf32>
    %286 = arith.truncf %275 : vector<9x32xf32> to vector<9x32xbf16>
    %cst_91 = arith.constant dense<0.000000e+00> : vector<9x64xf32>
    %287 = tpu.matmul %286, %278, %cst_91 {dimension_numbers = #tpu.dot_dimension_numbers<[1], [0], [0], [1], [0, 0, 1, 1], [], []>} : vector<9x32xbf16>, vector<32x64xbf16>, vector<9x64xf32> -> vector<9x64xf32>
    %288 = vector.broadcast %279 : vector<1x64xf32> to vector<9x64xf32>
    %289 = arith.addf %287, %288 : vector<9x64xf32>
    %290 = vector.extract_strided_slice %285 {offsets = [0, 0], sizes = [16, 8], strides = [1, 1]} : vector<16x32xf32> to vector<16x8xf32>
    %291 = vector.extract_strided_slice %289 {offsets = [0, 0], sizes = [9, 8], strides = [1, 1]} : vector<9x64xf32> to vector<9x8xf32>
    %292 = arith.truncf %290 : vector<16x8xf32> to vector<16x8xbf16>
    %293 = arith.truncf %291 : vector<9x8xf32> to vector<9x8xbf16>
    %cst_92 = arith.constant dense<0.000000e+00> : vector<16x9xf32>
    %294 = tpu.matmul %292, %293, %cst_92 {dimension_numbers = #tpu.dot_dimension_numbers<[1], [1], [0], [0], [0, 0, 1, 0], [], []>} : vector<16x8xbf16>, vector<9x8xbf16>, vector<16x9xf32> -> vector<16x9xf32>
    %cst_93 = arith.constant 0.353553385 : f32
    %295 = vector.broadcast %cst_93 : f32 to vector<16x9xf32>
    %296 = arith.mulf %294, %295 : vector<16x9xf32>
    %cst_94 = arith.constant dense<0xFF800000> : vector<16xf32>
    %297 = vector.multi_reduction <maximumf>, %296, %cst_94 [1] : vector<16x9xf32> to vector<16xf32>
    %298 = vector.shape_cast %297 : vector<16xf32> to vector<16x1xf32>
    %299 = vector.broadcast %298 : vector<16x1xf32> to vector<16x9xf32>
    %300 = arith.subf %296, %299 : vector<16x9xf32>
    %301 = math.exp %300 : vector<16x9xf32>
    %cst_95 = arith.constant dense<0.000000e+00> : vector<16xf32>
    %302 = vector.multi_reduction <add>, %301, %cst_95 [1] : vector<16x9xf32> to vector<16xf32>
    %303 = vector.shape_cast %302 : vector<16xf32> to vector<16x1xf32>
    %304 = tpu.reciprocal %303 {approx = true} : vector<16x1xf32> -> vector<16x1xf32>
    %305 = vector.broadcast %304 : vector<16x1xf32> to vector<16x9xf32>
    %306 = arith.mulf %301, %305 : vector<16x9xf32>
    %307 = vector.extract_strided_slice %289 {offsets = [0, 32], sizes = [9, 8], strides = [1, 1]} : vector<9x64xf32> to vector<9x8xf32>
    %308 = arith.truncf %306 : vector<16x9xf32> to vector<16x9xbf16>
    %309 = arith.truncf %307 : vector<9x8xf32> to vector<9x8xbf16>
    %cst_96 = arith.constant dense<0.000000e+00> : vector<16x8xf32>
    %310 = tpu.matmul %308, %309, %cst_96 {dimension_numbers = #tpu.dot_dimension_numbers<[1], [0], [0], [1], [0, 0, 1, 1], [], []>} : vector<16x9xbf16>, vector<9x8xbf16>, vector<16x8xf32> -> vector<16x8xf32>
    %311 = vector.extract_strided_slice %285 {offsets = [0, 8], sizes = [16, 8], strides = [1, 1]} : vector<16x32xf32> to vector<16x8xf32>
    %312 = vector.extract_strided_slice %289 {offsets = [0, 8], sizes = [9, 8], strides = [1, 1]} : vector<9x64xf32> to vector<9x8xf32>
    %313 = arith.truncf %311 : vector<16x8xf32> to vector<16x8xbf16>
    %314 = arith.truncf %312 : vector<9x8xf32> to vector<9x8xbf16>
    %cst_97 = arith.constant dense<0.000000e+00> : vector<16x9xf32>
    %315 = tpu.matmul %313, %314, %cst_97 {dimension_numbers = #tpu.dot_dimension_numbers<[1], [1], [0], [0], [0, 0, 1, 0], [], []>} : vector<16x8xbf16>, vector<9x8xbf16>, vector<16x9xf32> -> vector<16x9xf32>
    %cst_98 = arith.constant 0.353553385 : f32
    %316 = vector.broadcast %cst_98 : f32 to vector<16x9xf32>
    %317 = arith.mulf %315, %316 : vector<16x9xf32>
    %cst_99 = arith.constant dense<0xFF800000> : vector<16xf32>
    %318 = vector.multi_reduction <maximumf>, %317, %cst_99 [1] : vector<16x9xf32> to vector<16xf32>
    %319 = vector.shape_cast %318 : vector<16xf32> to vector<16x1xf32>
    %320 = vector.broadcast %319 : vector<16x1xf32> to vector<16x9xf32>
    %321 = arith.subf %317, %320 : vector<16x9xf32>
    %322 = math.exp %321 : vector<16x9xf32>
    %cst_100 = arith.constant dense<0.000000e+00> : vector<16xf32>
    %323 = vector.multi_reduction <add>, %322, %cst_100 [1] : vector<16x9xf32> to vector<16xf32>
    %324 = vector.shape_cast %323 : vector<16xf32> to vector<16x1xf32>
    %325 = tpu.reciprocal %324 {approx = true} : vector<16x1xf32> -> vector<16x1xf32>
    %326 = vector.broadcast %325 : vector<16x1xf32> to vector<16x9xf32>
    %327 = arith.mulf %322, %326 : vector<16x9xf32>
    %328 = vector.extract_strided_slice %289 {offsets = [0, 40], sizes = [9, 8], strides = [1, 1]} : vector<9x64xf32> to vector<9x8xf32>
    %329 = arith.truncf %327 : vector<16x9xf32> to vector<16x9xbf16>
    %330 = arith.truncf %328 : vector<9x8xf32> to vector<9x8xbf16>
    %cst_101 = arith.constant dense<0.000000e+00> : vector<16x8xf32>
    %331 = tpu.matmul %329, %330, %cst_101 {dimension_numbers = #tpu.dot_dimension_numbers<[1], [0], [0], [1], [0, 0, 1, 1], [], []>} : vector<16x9xbf16>, vector<9x8xbf16>, vector<16x8xf32> -> vector<16x8xf32>
    %332 = vector.extract_strided_slice %285 {offsets = [0, 16], sizes = [16, 8], strides = [1, 1]} : vector<16x32xf32> to vector<16x8xf32>
    %333 = vector.extract_strided_slice %289 {offsets = [0, 16], sizes = [9, 8], strides = [1, 1]} : vector<9x64xf32> to vector<9x8xf32>
    %334 = arith.truncf %332 : vector<16x8xf32> to vector<16x8xbf16>
    %335 = arith.truncf %333 : vector<9x8xf32> to vector<9x8xbf16>
    %cst_102 = arith.constant dense<0.000000e+00> : vector<16x9xf32>
    %336 = tpu.matmul %334, %335, %cst_102 {dimension_numbers = #tpu.dot_dimension_numbers<[1], [1], [0], [0], [0, 0, 1, 0], [], []>} : vector<16x8xbf16>, vector<9x8xbf16>, vector<16x9xf32> -> vector<16x9xf32>
    %cst_103 = arith.constant 0.353553385 : f32
    %337 = vector.broadcast %cst_103 : f32 to vector<16x9xf32>
    %338 = arith.mulf %336, %337 : vector<16x9xf32>
    %cst_104 = arith.constant dense<0xFF800000> : vector<16xf32>
    %339 = vector.multi_reduction <maximumf>, %338, %cst_104 [1] : vector<16x9xf32> to vector<16xf32>
    %340 = vector.shape_cast %339 : vector<16xf32> to vector<16x1xf32>
    %341 = vector.broadcast %340 : vector<16x1xf32> to vector<16x9xf32>
    %342 = arith.subf %338, %341 : vector<16x9xf32>
    %343 = math.exp %342 : vector<16x9xf32>
    %cst_105 = arith.constant dense<0.000000e+00> : vector<16xf32>
    %344 = vector.multi_reduction <add>, %343, %cst_105 [1] : vector<16x9xf32> to vector<16xf32>
    %345 = vector.shape_cast %344 : vector<16xf32> to vector<16x1xf32>
    %346 = tpu.reciprocal %345 {approx = true} : vector<16x1xf32> -> vector<16x1xf32>
    %347 = vector.broadcast %346 : vector<16x1xf32> to vector<16x9xf32>
    %348 = arith.mulf %343, %347 : vector<16x9xf32>
    %349 = vector.extract_strided_slice %289 {offsets = [0, 48], sizes = [9, 8], strides = [1, 1]} : vector<9x64xf32> to vector<9x8xf32>
    %350 = arith.truncf %348 : vector<16x9xf32> to vector<16x9xbf16>
    %351 = arith.truncf %349 : vector<9x8xf32> to vector<9x8xbf16>
    %cst_106 = arith.constant dense<0.000000e+00> : vector<16x8xf32>
    %352 = tpu.matmul %350, %351, %cst_106 {dimension_numbers = #tpu.dot_dimension_numbers<[1], [0], [0], [1], [0, 0, 1, 1], [], []>} : vector<16x9xbf16>, vector<9x8xbf16>, vector<16x8xf32> -> vector<16x8xf32>
    %353 = vector.extract_strided_slice %285 {offsets = [0, 24], sizes = [16, 8], strides = [1, 1]} : vector<16x32xf32> to vector<16x8xf32>
    %354 = vector.extract_strided_slice %289 {offsets = [0, 24], sizes = [9, 8], strides = [1, 1]} : vector<9x64xf32> to vector<9x8xf32>
    %355 = arith.truncf %353 : vector<16x8xf32> to vector<16x8xbf16>
    %356 = arith.truncf %354 : vector<9x8xf32> to vector<9x8xbf16>
    %cst_107 = arith.constant dense<0.000000e+00> : vector<16x9xf32>
    %357 = tpu.matmul %355, %356, %cst_107 {dimension_numbers = #tpu.dot_dimension_numbers<[1], [1], [0], [0], [0, 0, 1, 0], [], []>} : vector<16x8xbf16>, vector<9x8xbf16>, vector<16x9xf32> -> vector<16x9xf32>
    %cst_108 = arith.constant 0.353553385 : f32
    %358 = vector.broadcast %cst_108 : f32 to vector<16x9xf32>
    %359 = arith.mulf %357, %358 : vector<16x9xf32>
    %cst_109 = arith.constant dense<0xFF800000> : vector<16xf32>
    %360 = vector.multi_reduction <maximumf>, %359, %cst_109 [1] : vector<16x9xf32> to vector<16xf32>
    %361 = vector.shape_cast %360 : vector<16xf32> to vector<16x1xf32>
    %362 = vector.broadcast %361 : vector<16x1xf32> to vector<16x9xf32>
    %363 = arith.subf %359, %362 : vector<16x9xf32>
    %364 = math.exp %363 : vector<16x9xf32>
    %cst_110 = arith.constant dense<0.000000e+00> : vector<16xf32>
    %365 = vector.multi_reduction <add>, %364, %cst_110 [1] : vector<16x9xf32> to vector<16xf32>
    %366 = vector.shape_cast %365 : vector<16xf32> to vector<16x1xf32>
    %367 = tpu.reciprocal %366 {approx = true} : vector<16x1xf32> -> vector<16x1xf32>
    %368 = vector.broadcast %367 : vector<16x1xf32> to vector<16x9xf32>
    %369 = arith.mulf %364, %368 : vector<16x9xf32>
    %370 = vector.extract_strided_slice %289 {offsets = [0, 56], sizes = [9, 8], strides = [1, 1]} : vector<9x64xf32> to vector<9x8xf32>
    %371 = arith.truncf %369 : vector<16x9xf32> to vector<16x9xbf16>
    %372 = arith.truncf %370 : vector<9x8xf32> to vector<9x8xbf16>
    %cst_111 = arith.constant dense<0.000000e+00> : vector<16x8xf32>
    %373 = tpu.matmul %371, %372, %cst_111 {dimension_numbers = #tpu.dot_dimension_numbers<[1], [0], [0], [1], [0, 0, 1, 1], [], []>} : vector<16x9xbf16>, vector<9x8xbf16>, vector<16x8xf32> -> vector<16x8xf32>
    %374 = tpu.concatenate %310, %331, %352, %373 in 1 : vector<16x8xf32>, vector<16x8xf32>, vector<16x8xf32>, vector<16x8xf32> -> vector<16x32xf32>
    %375 = arith.truncf %374 : vector<16x32xf32> to vector<16x32xbf16>
    %cst_112 = arith.constant dense<0.000000e+00> : vector<16x32xf32>
    %376 = tpu.matmul %375, %280, %cst_112 {dimension_numbers = #tpu.dot_dimension_numbers<[1], [0], [0], [1], [0, 0, 1, 1], [], []>} : vector<16x32xbf16>, vector<32x32xbf16>, vector<16x32xf32> -> vector<16x32xf32>
    %377 = vector.broadcast %281 : vector<1x32xf32> to vector<16x32xf32>
    %378 = arith.addf %376, %377 : vector<16x32xf32>
    %379 = arith.addf %273, %378 : vector<16x32xf32>
    %c0_113 = arith.constant 0 : index
    %c0_114 = arith.constant 0 : index
    %380 = vector.load %arg16[%c0_113, %c0_114] : memref<1x32xf32, #tpu.memory_space<vmem>>, vector<1x32xf32>
    %c0_115 = arith.constant 0 : index
    %c0_116 = arith.constant 0 : index
    %381 = vector.load %arg17[%c0_115, %c0_116] : memref<1x32xf32, #tpu.memory_space<vmem>>, vector<1x32xf32>
    %cst_117 = arith.constant dense<0.000000e+00> : vector<16xf32>
    %382 = vector.multi_reduction <add>, %379, %cst_117 [1] : vector<16x32xf32> to vector<16xf32>
    %383 = vector.shape_cast %382 : vector<16xf32> to vector<16x1xf32>
    %cst_118 = arith.constant 3.200000e+01 : f32
    %384 = vector.broadcast %cst_118 : f32 to vector<16x1xf32>
    %385 = arith.divf %383, %384 : vector<16x1xf32>
    %386 = vector.broadcast %385 : vector<16x1xf32> to vector<16x32xf32>
    %387 = arith.subf %379, %386 : vector<16x32xf32>
    %388 = vector.broadcast %385 : vector<16x1xf32> to vector<16x32xf32>
    %389 = arith.subf %379, %388 : vector<16x32xf32>
    %390 = arith.mulf %387, %389 : vector<16x32xf32>
    %cst_119 = arith.constant dense<0.000000e+00> : vector<16xf32>
    %391 = vector.multi_reduction <add>, %390, %cst_119 [1] : vector<16x32xf32> to vector<16xf32>
    %392 = vector.shape_cast %391 : vector<16xf32> to vector<16x1xf32>
    %cst_120 = arith.constant 3.200000e+01 : f32
    %393 = vector.broadcast %cst_120 : f32 to vector<16x1xf32>
    %394 = arith.divf %392, %393 : vector<16x1xf32>
    %395 = vector.broadcast %385 : vector<16x1xf32> to vector<16x32xf32>
    %396 = arith.subf %379, %395 : vector<16x32xf32>
    %cst_121 = arith.constant 9.99999974E-6 : f32
    %397 = vector.broadcast %cst_121 : f32 to vector<16x1xf32>
    %398 = arith.addf %394, %397 : vector<16x1xf32>
    %399 = math.rsqrt %398 : vector<16x1xf32>
    %400 = vector.broadcast %399 : vector<16x1xf32> to vector<16x32xf32>
    %401 = arith.mulf %396, %400 : vector<16x32xf32>
    %402 = vector.broadcast %380 : vector<1x32xf32> to vector<16x32xf32>
    %403 = arith.mulf %401, %402 : vector<16x32xf32>
    %404 = vector.broadcast %381 : vector<1x32xf32> to vector<16x32xf32>
    %405 = arith.addf %403, %404 : vector<16x32xf32>
    %c0_122 = arith.constant 0 : index
    %c0_123 = arith.constant 0 : index
    %406 = vector.load %arg18[%c0_122, %c0_123] : memref<32x64xbf16, #tpu.memory_space<vmem>>, vector<32x64xbf16>
    %c0_124 = arith.constant 0 : index
    %c0_125 = arith.constant 0 : index
    %407 = vector.load %arg19[%c0_124, %c0_125] : memref<1x64xf32, #tpu.memory_space<vmem>>, vector<1x64xf32>
    %c0_126 = arith.constant 0 : index
    %c0_127 = arith.constant 0 : index
    %408 = vector.load %arg20[%c0_126, %c0_127] : memref<64x32xbf16, #tpu.memory_space<vmem>>, vector<64x32xbf16>
    %c0_128 = arith.constant 0 : index
    %c0_129 = arith.constant 0 : index
    %409 = vector.load %arg21[%c0_128, %c0_129] : memref<1x32xf32, #tpu.memory_space<vmem>>, vector<1x32xf32>
    %410 = arith.truncf %405 : vector<16x32xf32> to vector<16x32xbf16>
    %cst_130 = arith.constant dense<0.000000e+00> : vector<16x64xf32>
    %411 = tpu.matmul %410, %406, %cst_130 {dimension_numbers = #tpu.dot_dimension_numbers<[1], [0], [0], [1], [0, 0, 1, 1], [], []>} : vector<16x32xbf16>, vector<32x64xbf16>, vector<16x64xf32> -> vector<16x64xf32>
    %412 = vector.broadcast %407 : vector<1x64xf32> to vector<16x64xf32>
    %413 = arith.addf %411, %412 : vector<16x64xf32>
    %cst_131 = arith.constant 0.000000e+00 : f32
    %414 = vector.broadcast %cst_131 : f32 to vector<16x64xf32>
    %415 = arith.maximumf %413, %414 : vector<16x64xf32>
    %416 = arith.truncf %415 : vector<16x64xf32> to vector<16x64xbf16>
    %cst_132 = arith.constant dense<0.000000e+00> : vector<16x32xf32>
    %417 = tpu.matmul %416, %408, %cst_132 {dimension_numbers = #tpu.dot_dimension_numbers<[1], [0], [0], [1], [0, 0, 1, 1], [], []>} : vector<16x64xbf16>, vector<64x32xbf16>, vector<16x32xf32> -> vector<16x32xf32>
    %418 = vector.broadcast %409 : vector<1x32xf32> to vector<16x32xf32>
    %419 = arith.addf %417, %418 : vector<16x32xf32>
    %420 = arith.addf %405, %419 : vector<16x32xf32>
    %c0_133 = arith.constant 0 : index
    %c0_134 = arith.constant 0 : index
    %421 = vector.load %arg22[%c0_133, %c0_134] : memref<1x32xf32, #tpu.memory_space<vmem>>, vector<1x32xf32>
    %c0_135 = arith.constant 0 : index
    %c0_136 = arith.constant 0 : index
    %422 = vector.load %arg23[%c0_135, %c0_136] : memref<1x32xf32, #tpu.memory_space<vmem>>, vector<1x32xf32>
    %cst_137 = arith.constant dense<0.000000e+00> : vector<16xf32>
    %423 = vector.multi_reduction <add>, %420, %cst_137 [1] : vector<16x32xf32> to vector<16xf32>
    %424 = vector.shape_cast %423 : vector<16xf32> to vector<16x1xf32>
    %cst_138 = arith.constant 3.200000e+01 : f32
    %425 = vector.broadcast %cst_138 : f32 to vector<16x1xf32>
    %426 = arith.divf %424, %425 : vector<16x1xf32>
    %427 = vector.broadcast %426 : vector<16x1xf32> to vector<16x32xf32>
    %428 = arith.subf %420, %427 : vector<16x32xf32>
    %429 = vector.broadcast %426 : vector<16x1xf32> to vector<16x32xf32>
    %430 = arith.subf %420, %429 : vector<16x32xf32>
    %431 = arith.mulf %428, %430 : vector<16x32xf32>
    %cst_139 = arith.constant dense<0.000000e+00> : vector<16xf32>
    %432 = vector.multi_reduction <add>, %431, %cst_139 [1] : vector<16x32xf32> to vector<16xf32>
    %433 = vector.shape_cast %432 : vector<16xf32> to vector<16x1xf32>
    %cst_140 = arith.constant 3.200000e+01 : f32
    %434 = vector.broadcast %cst_140 : f32 to vector<16x1xf32>
    %435 = arith.divf %433, %434 : vector<16x1xf32>
    %436 = vector.broadcast %426 : vector<16x1xf32> to vector<16x32xf32>
    %437 = arith.subf %420, %436 : vector<16x32xf32>
    %cst_141 = arith.constant 9.99999974E-6 : f32
    %438 = vector.broadcast %cst_141 : f32 to vector<16x1xf32>
    %439 = arith.addf %435, %438 : vector<16x1xf32>
    %440 = math.rsqrt %439 : vector<16x1xf32>
    %441 = vector.broadcast %440 : vector<16x1xf32> to vector<16x32xf32>
    %442 = arith.mulf %437, %441 : vector<16x32xf32>
    %443 = vector.broadcast %421 : vector<1x32xf32> to vector<16x32xf32>
    %444 = arith.mulf %442, %443 : vector<16x32xf32>
    %445 = vector.broadcast %422 : vector<1x32xf32> to vector<16x32xf32>
    %446 = arith.addf %444, %445 : vector<16x32xf32>
    %c0_142 = arith.constant 0 : index
    %c0_143 = arith.constant 0 : index
    %c0_144 = arith.constant 0 : index
    %447 = vector.load %arg24[%c0_142, %c0_143, %c0_144] : memref<1x16x32xf32, #tpu.memory_space<vmem>>, vector<1x16x32xf32>
    %448 = vector.shape_cast %447 : vector<1x16x32xf32> to vector<16x32xf32>
    %449 = vector.shape_cast %446 : vector<16x32xf32> to vector<1x16x32xf32>
    tpu.vector_store %arg24[%c0_142, %c0_143, %c0_144], %449 {strides = array<i32>} : memref<1x16x32xf32, #tpu.memory_space<vmem>>, vector<1x16x32xf32>,
    return
  }
  func.func @transform_0(%arg0: i32) -> (i32, i32, i32) {
    %c0_i32 = arith.constant 0 : i32
    %c0_i32_0 = arith.constant 0 : i32
    %c0_i32_1 = arith.constant 0 : i32
    return %arg0, %c0_i32, %c0_i32_0 : i32, i32, i32
  }
  func.func @transform_1(%arg0: i32) -> (i32, i32, i32) {
    %c0_i32 = arith.constant 0 : i32
    %c0_i32_0 = arith.constant 0 : i32
    %c0_i32_1 = arith.constant 0 : i32
    return %arg0, %c0_i32, %c0_i32_0 : i32, i32, i32
  }
  func.func @transform_2(%arg0: i32) -> (i32, i32) {
    %c0_i32 = arith.constant 0 : i32
    %c0_i32_0 = arith.constant 0 : i32
    %c0_i32_1 = arith.constant 0 : i32
    return %c0_i32, %c0_i32_0 : i32, i32
  }
  func.func @transform_3(%arg0: i32) -> (i32, i32) {
    %c0_i32 = arith.constant 0 : i32
    %c0_i32_0 = arith.constant 0 : i32
    %c0_i32_1 = arith.constant 0 : i32
    return %c0_i32, %c0_i32_0 : i32, i32
  }
  func.func @transform_4(%arg0: i32) -> (i32, i32) {
    %c0_i32 = arith.constant 0 : i32
    %c0_i32_0 = arith.constant 0 : i32
    %c0_i32_1 = arith.constant 0 : i32
    return %c0_i32, %c0_i32_0 : i32, i32
  }
  func.func @transform_5(%arg0: i32) -> (i32, i32) {
    %c0_i32 = arith.constant 0 : i32
    %c0_i32_0 = arith.constant 0 : i32
    %c0_i32_1 = arith.constant 0 : i32
    return %c0_i32, %c0_i32_0 : i32, i32
  }
  func.func @transform_6(%arg0: i32) -> (i32, i32) {
    %c0_i32 = arith.constant 0 : i32
    %c0_i32_0 = arith.constant 0 : i32
    %c0_i32_1 = arith.constant 0 : i32
    return %c0_i32, %c0_i32_0 : i32, i32
  }
  func.func @transform_7(%arg0: i32) -> (i32, i32) {
    %c0_i32 = arith.constant 0 : i32
    %c0_i32_0 = arith.constant 0 : i32
    %c0_i32_1 = arith.constant 0 : i32
    return %c0_i32, %c0_i32_0 : i32, i32
  }
  func.func @transform_8(%arg0: i32) -> (i32, i32) {
    %c0_i32 = arith.constant 0 : i32
    %c0_i32_0 = arith.constant 0 : i32
    %c0_i32_1 = arith.constant 0 : i32
    return %c0_i32, %c0_i32_0 : i32, i32
  }
  func.func @transform_9(%arg0: i32) -> (i32, i32) {
    %c0_i32 = arith.constant 0 : i32
    %c0_i32_0 = arith.constant 0 : i32
    %c0_i32_1 = arith.constant 0 : i32
    return %c0_i32, %c0_i32_0 : i32, i32
  }
  func.func @transform_10(%arg0: i32) -> (i32, i32) {
    %c0_i32 = arith.constant 0 : i32
    %c0_i32_0 = arith.constant 0 : i32
    %c0_i32_1 = arith.constant 0 : i32
    return %c0_i32, %c0_i32_0 : i32, i32
  }
  func.func @transform_11(%arg0: i32) -> (i32, i32) {
    %c0_i32 = arith.constant 0 : i32
    %c0_i32_0 = arith.constant 0 : i32
    %c0_i32_1 = arith.constant 0 : i32
    return %c0_i32, %c0_i32_0 : i32, i32
  }
  func.func @transform_12(%arg0: i32) -> (i32, i32) {
    %c0_i32 = arith.constant 0 : i32
    %c0_i32_0 = arith.constant 0 : i32
    %c0_i32_1 = arith.constant 0 : i32
    return %c0_i32, %c0_i32_0 : i32, i32
  }
  func.func @transform_13(%arg0: i32) -> (i32, i32) {
    %c0_i32 = arith.constant 0 : i32
    %c0_i32_0 = arith.constant 0 : i32
    %c0_i32_1 = arith.constant 0 : i32
    return %c0_i32, %c0_i32_0 : i32, i32
  }
  func.func @transform_14(%arg0: i32) -> (i32, i32) {
    %c0_i32 = arith.constant 0 : i32
    %c0_i32_0 = arith.constant 0 : i32
    %c0_i32_1 = arith.constant 0 : i32
    return %c0_i32, %c0_i32_0 : i32, i32
  }
  func.func @transform_15(%arg0: i32) -> (i32, i32) {
    %c0_i32 = arith.constant 0 : i32
    %c0_i32_0 = arith.constant 0 : i32
    %c0_i32_1 = arith.constant 0 : i32
    return %c0_i32, %c0_i32_0 : i32, i32
  }
  func.func @transform_16(%arg0: i32) -> (i32, i32) {
    %c0_i32 = arith.constant 0 : i32
    %c0_i32_0 = arith.constant 0 : i32
    %c0_i32_1 = arith.constant 0 : i32
    return %c0_i32, %c0_i32_0 : i32, i32
  }
  func.func @transform_17(%arg0: i32) -> (i32, i32) {
    %c0_i32 = arith.constant 0 : i32
    %c0_i32_0 = arith.constant 0 : i32
    %c0_i32_1 = arith.constant 0 : i32
    return %c0_i32, %c0_i32_0 : i32, i32
  }
  func.func @transform_18(%arg0: i32) -> (i32, i32) {
    %c0_i32 = arith.constant 0 : i32
    %c0_i32_0 = arith.constant 0 : i32
    %c0_i32_1 = arith.constant 0 : i32
    return %c0_i32, %c0_i32_0 : i32, i32
  }
  func.func @transform_19(%arg0: i32) -> (i32, i32) {
    %c0_i32 = arith.constant 0 : i32
    %c0_i32_0 = arith.constant 0 : i32
    %c0_i32_1 = arith.constant 0 : i32
    return %c0_i32, %c0_i32_0 : i32, i32
  }
  func.func @transform_20(%arg0: i32) -> (i32, i32) {
    %c0_i32 = arith.constant 0 : i32
    %c0_i32_0 = arith.constant 0 : i32
    %c0_i32_1 = arith.constant 0 : i32
    return %c0_i32, %c0_i32_0 : i32, i32
  }
  func.func @transform_21(%arg0: i32) -> (i32, i32) {
    %c0_i32 = arith.constant 0 : i32
    %c0_i32_0 = arith.constant 0 : i32
    %c0_i32_1 = arith.constant 0 : i32
    return %c0_i32, %c0_i32_0 : i32, i32
  }
  func.func @transform_22(%arg0: i32) -> (i32, i32) {
    %c0_i32 = arith.constant 0 : i32
    %c0_i32_0 = arith.constant 0 : i32
    %c0_i32_1 = arith.constant 0 : i32
    return %c0_i32, %c0_i32_0 : i32, i32
  }
  func.func @transform_23(%arg0: i32) -> (i32, i32, i32) {
    %c0_i32 = arith.constant 0 : i32
    %c0_i32_0 = arith.constant 0 : i32
    %c0_i32_1 = arith.constant 0 : i32
    return %arg0, %c0_i32, %c0_i32_0 : i32, i32, i32
  }
}

module attributes {stable_mosaic.version = 11 : i64} {
  func.func @_norm_proj_kernel(%arg0: i32, %arg1: memref<1x16x32xf32, #tpu.memory_space<vmem>>, %arg2: memref<1x32xf32, #tpu.memory_space<vmem>>, %arg3: memref<1x32xf32, #tpu.memory_space<vmem>>, %arg4: memref<32x4xbf16, #tpu.memory_space<vmem>>, %arg5: memref<1x4xf32, #tpu.memory_space<vmem>>, %arg6: memref<1x16x4xf32, #tpu.memory_space<vmem>>) attributes {dimension_semantics = [#tpu.dimension_semantics<parallel>], iteration_bounds = array<i64: 2>, scalar_prefetch = 0 : i64, scratch_operands = 0 : i64, tpu.core_type = #tpu.core_type<tc>, window_params = [{transform_indices = @transform_0, window_bounds = array<i64: 1, 16, 32>}, {pipeline_mode = #tpu.pipeline_mode<synchronous>, transform_indices = @transform_1, window_bounds = array<i64: 1, 32>}, {pipeline_mode = #tpu.pipeline_mode<synchronous>, transform_indices = @transform_2, window_bounds = array<i64: 1, 32>}, {pipeline_mode = #tpu.pipeline_mode<synchronous>, transform_indices = @transform_3, window_bounds = array<i64: 32, 4>}, {pipeline_mode = #tpu.pipeline_mode<synchronous>, transform_indices = @transform_4, window_bounds = array<i64: 1, 4>}, {transform_indices = @transform_5, window_bounds = array<i64: 1, 16, 4>}]} {
    %c0 = arith.constant 0 : index
    %c0_0 = arith.constant 0 : index
    %c0_1 = arith.constant 0 : index
    %0 = vector.load %arg1[%c0, %c0_0, %c0_1] : memref<1x16x32xf32, #tpu.memory_space<vmem>>, vector<1x16x32xf32>
    %1 = vector.shape_cast %0 : vector<1x16x32xf32> to vector<16x32xf32>
    %c0_2 = arith.constant 0 : index
    %c0_3 = arith.constant 0 : index
    %2 = vector.load %arg2[%c0_2, %c0_3] : memref<1x32xf32, #tpu.memory_space<vmem>>, vector<1x32xf32>
    %c0_4 = arith.constant 0 : index
    %c0_5 = arith.constant 0 : index
    %3 = vector.load %arg3[%c0_4, %c0_5] : memref<1x32xf32, #tpu.memory_space<vmem>>, vector<1x32xf32>
    %cst = arith.constant dense<0.000000e+00> : vector<16xf32>
    %4 = vector.multi_reduction <add>, %1, %cst [1] : vector<16x32xf32> to vector<16xf32>
    %5 = vector.shape_cast %4 : vector<16xf32> to vector<16x1xf32>
    %cst_6 = arith.constant 3.200000e+01 : f32
    %6 = vector.broadcast %cst_6 : f32 to vector<16x1xf32>
    %7 = arith.divf %5, %6 : vector<16x1xf32>
    %8 = vector.broadcast %7 : vector<16x1xf32> to vector<16x32xf32>
    %9 = arith.subf %1, %8 : vector<16x32xf32>
    %10 = vector.broadcast %7 : vector<16x1xf32> to vector<16x32xf32>
    %11 = arith.subf %1, %10 : vector<16x32xf32>
    %12 = arith.mulf %9, %11 : vector<16x32xf32>
    %cst_7 = arith.constant dense<0.000000e+00> : vector<16xf32>
    %13 = vector.multi_reduction <add>, %12, %cst_7 [1] : vector<16x32xf32> to vector<16xf32>
    %14 = vector.shape_cast %13 : vector<16xf32> to vector<16x1xf32>
    %cst_8 = arith.constant 3.200000e+01 : f32
    %15 = vector.broadcast %cst_8 : f32 to vector<16x1xf32>
    %16 = arith.divf %14, %15 : vector<16x1xf32>
    %17 = vector.broadcast %7 : vector<16x1xf32> to vector<16x32xf32>
    %18 = arith.subf %1, %17 : vector<16x32xf32>
    %cst_9 = arith.constant 9.99999974E-6 : f32
    %19 = vector.broadcast %cst_9 : f32 to vector<16x1xf32>
    %20 = arith.addf %16, %19 : vector<16x1xf32>
    %21 = math.rsqrt %20 : vector<16x1xf32>
    %22 = vector.broadcast %21 : vector<16x1xf32> to vector<16x32xf32>
    %23 = arith.mulf %18, %22 : vector<16x32xf32>
    %24 = vector.broadcast %2 : vector<1x32xf32> to vector<16x32xf32>
    %25 = arith.mulf %23, %24 : vector<16x32xf32>
    %26 = vector.broadcast %3 : vector<1x32xf32> to vector<16x32xf32>
    %27 = arith.addf %25, %26 : vector<16x32xf32>
    %c0_10 = arith.constant 0 : index
    %c0_11 = arith.constant 0 : index
    %28 = vector.load %arg4[%c0_10, %c0_11] : memref<32x4xbf16, #tpu.memory_space<vmem>>, vector<32x4xbf16>
    %29 = arith.truncf %27 : vector<16x32xf32> to vector<16x32xbf16>
    %cst_12 = arith.constant dense<0.000000e+00> : vector<16x4xf32>
    %30 = tpu.matmul %29, %28, %cst_12 {dimension_numbers = #tpu.dot_dimension_numbers<[1], [0], [0], [1], [0, 0, 1, 1], [], []>} : vector<16x32xbf16>, vector<32x4xbf16>, vector<16x4xf32> -> vector<16x4xf32>
    %c0_13 = arith.constant 0 : index
    %c0_14 = arith.constant 0 : index
    %31 = vector.load %arg5[%c0_13, %c0_14] : memref<1x4xf32, #tpu.memory_space<vmem>>, vector<1x4xf32>
    %32 = vector.broadcast %31 : vector<1x4xf32> to vector<16x4xf32>
    %33 = arith.addf %30, %32 : vector<16x4xf32>
    %c0_15 = arith.constant 0 : index
    %c0_16 = arith.constant 0 : index
    %c0_17 = arith.constant 0 : index
    %34 = vector.load %arg6[%c0_15, %c0_16, %c0_17] : memref<1x16x4xf32, #tpu.memory_space<vmem>>, vector<1x16x4xf32>
    %35 = vector.shape_cast %34 : vector<1x16x4xf32> to vector<16x4xf32>
    %36 = vector.shape_cast %33 : vector<16x4xf32> to vector<1x16x4xf32>
    tpu.vector_store %arg6[%c0_15, %c0_16, %c0_17], %36 {strides = array<i32>} : memref<1x16x4xf32, #tpu.memory_space<vmem>>, vector<1x16x4xf32>,
    return
  }
  func.func @transform_0(%arg0: i32) -> (i32, i32, i32) {
    %c0_i32 = arith.constant 0 : i32
    %c0_i32_0 = arith.constant 0 : i32
    %c0_i32_1 = arith.constant 0 : i32
    return %arg0, %c0_i32, %c0_i32_0 : i32, i32, i32
  }
  func.func @transform_1(%arg0: i32) -> (i32, i32) {
    %c0_i32 = arith.constant 0 : i32
    %c0_i32_0 = arith.constant 0 : i32
    %c0_i32_1 = arith.constant 0 : i32
    return %c0_i32, %c0_i32_0 : i32, i32
  }
  func.func @transform_2(%arg0: i32) -> (i32, i32) {
    %c0_i32 = arith.constant 0 : i32
    %c0_i32_0 = arith.constant 0 : i32
    %c0_i32_1 = arith.constant 0 : i32
    return %c0_i32, %c0_i32_0 : i32, i32
  }
  func.func @transform_3(%arg0: i32) -> (i32, i32) {
    %c0_i32 = arith.constant 0 : i32
    %c0_i32_0 = arith.constant 0 : i32
    %c0_i32_1 = arith.constant 0 : i32
    return %c0_i32, %c0_i32_0 : i32, i32
  }
  func.func @transform_4(%arg0: i32) -> (i32, i32) {
    %c0_i32 = arith.constant 0 : i32
    %c0_i32_0 = arith.constant 0 : i32
    %c0_i32_1 = arith.constant 0 : i32
    return %c0_i32, %c0_i32_0 : i32, i32
  }
  func.func @transform_5(%arg0: i32) -> (i32, i32, i32) {
    %c0_i32 = arith.constant 0 : i32
    %c0_i32_0 = arith.constant 0 : i32
    %c0_i32_1 = arith.constant 0 : i32
    return %arg0, %c0_i32, %c0_i32_0 : i32, i32, i32
  }
}

</mosaic_0001>

<llo_original>
// kernel: _lambda_.7
$region0: #{_lambda_.7}
  #allocation0 [shape = 'u32[]', space=smem, size = 0x4, offset = 0x4, fixed_abs, tag = 'smem constant byte address 0x4 - core index']
  #allocation1 [shape = 'u32[144,128]{1,0:T(1,128)}', space=vmem, size = 0x12000, scoped, tag = 'internal scratch']
  %s0 = inlined_call_operand.vmem [shape: f32[2,18,4], index: 0, kind: input, shape index: {}]
  %s1 = inlined_call_operand.vmem [shape: f32[2,16,4], index: 1, kind: input, shape index: {}]
  %s2 = inlined_call_operand.vmem [shape: bf16[12,32], index: 2, kind: input, shape index: {}]
  %s3 = inlined_call_operand.vmem [shape: bf16[4,32], index: 3, kind: input, shape index: {}]
  %s4 = inlined_call_operand.vmem [shape: f32[16,32], index: 4, kind: input, shape index: {}]
  %s5 = inlined_call_operand.vmem [shape: f32[2,16,32], index: 5, kind: output, shape index: {}]
  %s6 = sld [smem:[#allocation0]]
  $region53: #{_lambda_.7} parent=0
    _
  %s8 = ssub.s32 1, %s6
  %s9 = scalar_select 0, %s8, %s6
  loop: start=0, step=1, limit=4
  $region2: #{_lambda_.7} parent=0 // loop_pre_header
    _
  $region3: #{_lambda_.7} parent=0 // loop_header
    %s11 = sphi 0, %s15
    %p12 = scmp.ge.s32.totalorder %s11, 4
    %s21 = sphi 0, %s23
    %s24 = sphi 0, %s21
    %s25 = sphi 0, %s24
    %s41 = sphi 0, %s25
    %s47 = sphi 0, %s49
    %s50 = sphi 0, %s47
    %s51 = sphi 0, %s50
    %s67 = sphi 0, %s51
    %s71 = sphi 0, %s71
    %s73 = sphi 0, %s71
    %s74 = sphi 0, %s73
    %s88 = sphi 0, %s74
    %s92 = sphi 0, %s92
    %s94 = sphi 0, %s92
    %s95 = sphi 0, %s94
    %s109 = sphi 0, %s95
    %s113 = sphi 0, %s113
    %s115 = sphi 0, %s113
    %s116 = sphi 0, %s115
    %s130 = sphi 0, %s116
    %s136 = sphi 0, %s138
    %s139 = sphi 0, %s136
    %s140 = sphi 0, %s139
    %s156 = sphi 0, %s140
  $region4: #{_lambda_.7} parent=0 // loop_header_branch
    %14 = sbr.rel (%p12) target = $region8
  $region5: #{_lambda_.7} parent=0 // loop_body
    %s16 = ssub.s32 %s11, 1
    %s17 = ssub.s32 %s11, 2
    %s18 = sadd.s32 %s11, 1
    %s19 = ssub.s32 %s11, %s18
    %p20 = scmp.eq.s32.totalorder %s19, 0
    %s22 = sadd.s32 %s21, 1
    %s23 = scalar_select %p20, %s21, %s22
    %p26 = pneg %p20
    %p27 = scmp.eq.s32.totalorder %s11, 1
    %p28 = por %p26, %p27
    %p29 = scmp.ne.s32.totalorder %s21, %s24
    %p30 = scmp.eq.s32.totalorder %s11, 0
    %p31 = por %p29, %p30
    %p32 = scmp.ne.s32.totalorder %s21, %s24
    %p33 = scmp.eq.s32.totalorder %s16, 1
    %p34 = por %p32, %p33
    %p35 = scmp.ne.s32.totalorder %s24, %s25
    %p36 = scmp.eq.s32.totalorder %s16, 0
    %p37 = por %p35, %p36
    %p38 = scmp.ne.s32.totalorder %s24, %s25
    %p39 = scmp.eq.s32.totalorder %s17, 1
    %p40 = por %p38, %p39
    %p42 = scmp.ne.s32.totalorder %s25, %s41
    %p43 = scmp.eq.s32.totalorder %s17, 0
    %p44 = por %p42, %p43
    %s45 = ssub.s32 %s11, %s18
    %p46 = scmp.eq.s32.totalorder %s45, 0
    %s48 = sadd.s32 %s47, 1
    %s49 = scalar_select %p46, %s47, %s48
    %p52 = pneg %p46
    %p53 = scmp.eq.s32.totalorder %s11, 1
    %p54 = por %p52, %p53
    %p55 = scmp.ne.s32.totalorder %s47, %s50
    %p56 = scmp.eq.s32.totalorder %s11, 0
    %p57 = por %p55, %p56
    %p58 = scmp.ne.s32.totalorder %s47, %s50
    %p59 = scmp.eq.s32.totalorder %s16, 1
    %p60 = por %p58, %p59
    %p61 = scmp.ne.s32.totalorder %s50, %s51
    %p62 = scmp.eq.s32.totalorder %s16, 0
    %p63 = por %p61, %p62
    %p64 = scmp.ne.s32.totalorder %s50, %s51
    %p65 = scmp.eq.s32.totalorder %s17, 1
    %p66 = por %p64, %p65
    %p68 = scmp.ne.s32.totalorder %s51, %s67
    %p69 = scmp.eq.s32.totalorder %s17, 0
    %p70 = por %p68, %p69
    %s72 = sadd.s32 %s71, 1
    %p75 = scmp.eq.s32.totalorder %s11, 1
    %p76 = scmp.ne.s32.totalorder %s71, %s73
    %p77 = scmp.eq.s32.totalorder %s11, 0
    %p78 = por %p76, %p77
    %p79 = scmp.ne.s32.totalorder %s71, %s73
    %p80 = scmp.eq.s32.totalorder %s16, 1
    %p81 = por %p79, %p80
    %p82 = scmp.ne.s32.totalorder %s73, %s74
    %p83 = scmp.eq.s32.totalorder %s16, 0
    %p84 = por %p82, %p83
    %p85 = scmp.ne.s32.totalorder %s73, %s74
    %p86 = scmp.eq.s32.totalorder %s17, 1
    %p87 = por %p85, %p86
    %p89 = scmp.ne.s32.totalorder %s74, %s88
    %p90 = scmp.eq.s32.totalorder %s17, 0
    %p91 = por %p89, %p90
    %s93 = sadd.s32 %s92, 1
    %p96 = scmp.eq.s32.totalorder %s11, 1
    %p97 = scmp.ne.s32.totalorder %s92, %s94
    %p98 = scmp.eq.s32.totalorder %s11, 0
    %p99 = por %p97, %p98
    %p100 = scmp.ne.s32.totalorder %s92, %s94
    %p101 = scmp.eq.s32.totalorder %s16, 1
    %p102 = por %p100, %p101
    %p103 = scmp.ne.s32.totalorder %s94, %s95
    %p104 = scmp.eq.s32.totalorder %s16, 0
    %p105 = por %p103, %p104
    %p106 = scmp.ne.s32.totalorder %s94, %s95
    %p107 = scmp.eq.s32.totalorder %s17, 1
    %p108 = por %p106, %p107
    %p110 = scmp.ne.s32.totalorder %s95, %s109
    %p111 = scmp.eq.s32.totalorder %s17, 0
    %p112 = por %p110, %p111
    %s114 = sadd.s32 %s113, 1
    %p117 = scmp.eq.s32.totalorder %s11, 1
    %p118 = scmp.ne.s32.totalorder %s113, %s115
    %p119 = scmp.eq.s32.totalorder %s11, 0
    %p120 = por %p118, %p119
    %p121 = scmp.ne.s32.totalorder %s113, %s115
    %p122 = scmp.eq.s32.totalorder %s16, 1
    %p123 = por %p121, %p122
    %p124 = scmp.ne.s32.totalorder %s115, %s116
    %p125 = scmp.eq.s32.totalorder %s16, 0
    %p126 = por %p124, %p125
    %p127 = scmp.ne.s32.totalorder %s115, %s116
    %p128 = scmp.eq.s32.totalorder %s17, 1
    %p129 = por %p127, %p128
    %p131 = scmp.ne.s32.totalorder %s116, %s130
    %p132 = scmp.eq.s32.totalorder %s17, 0
    %p133 = por %p131, %p132
    %s134 = ssub.s32 %s11, %s18
    %p135 = scmp.eq.s32.totalorder %s134, 0
    %s137 = sadd.s32 %s136, 1
    %s138 = scalar_select %p135, %s136, %s137
    %p141 = pneg %p135
    %p142 = scmp.eq.s32.totalorder %s11, 1
    %p143 = por %p141, %p142
    %p144 = scmp.ne.s32.totalorder %s136, %s139
    %p145 = scmp.eq.s32.totalorder %s11, 0
    %p146 = por %p144, %p145
    %p147 = scmp.ne.s32.totalorder %s136, %s139
    %p148 = scmp.eq.s32.totalorder %s16, 1
    %p149 = por %p147, %p148
    %p150 = scmp.ne.s32.totalorder %s139, %s140
    %p151 = scmp.eq.s32.totalorder %s16, 0
    %p152 = por %p150, %p151
    %p153 = scmp.ne.s32.totalorder %s139, %s140
    %p154 = scmp.eq.s32.totalorder %s17, 1
    %p155 = por %p153, %p154
    %p157 = scmp.ne.s32.totalorder %s140, %s156
    %p158 = scmp.eq.s32.totalorder %s17, 0
    %p159 = por %p157, %p158
    %p160 = scmp.le.s32.totalorder 1, %s11
    %p161 = scmp.lt.s32.totalorder %s11, 3
    %p162 = pnand %p160, %p161
    %p163 = pneg %p162
    // Predicated region
    $region9: #{_lambda_.7} parent=5 // pred_check
      _
    $region10: #{_lambda_.7} parent=5 // pred_check_branch
      %165 = sbr.rel (%p162) target = $region12
    $region11: #{_lambda_.7} parent=5 // pred_region
      %s166 = ssub.s32 %s11, 1
      // Predicated region
      $region13: #{_lambda_.7} parent=11 // pred_check
        %p167 = pneg %p84
      $region14: #{_lambda_.7} parent=11 // pred_check_branch
        %169 = sbr.rel (%p167) target = $region16
      $region15: #{_lambda_.7} parent=11 // pred_region
        _
      $region16: #{_lambda_.7} parent=11 // pred_fallthru
        _
      // Predicated region
      $region17: #{_lambda_.7} parent=11 // pred_check
        %p170 = pneg %p105
      $region18: #{_lambda_.7} parent=11 // pred_check_branch
        %172 = sbr.rel (%p170) target = $region20
      $region19: #{_lambda_.7} parent=11 // pred_region
        _
      $region20: #{_lambda_.7} parent=11 // pred_fallthru
        _
      // Predicated region
      $region21: #{_lambda_.7} parent=11 // pred_check
        %p173 = pneg %p126
      $region22: #{_lambda_.7} parent=11 // pred_check_branch
        %175 = sbr.rel (%p173) target = $region24
      $region23: #{_lambda_.7} parent=11 // pred_region
        _
      $region24: #{_lambda_.7} parent=11 // pred_fallthru
        _
    $region12: #{_lambda_.7} parent=5 // pred_fallthru
      _
    %p176 = scmp.lt.s32.totalorder %s11, 2
    // Predicated region
    $region25: #{_lambda_.7} parent=5 // pred_check
      %p177 = pneg %p176
    $region26: #{_lambda_.7} parent=5 // pred_check_branch
      %179 = sbr.rel (%p177) target = $region28
    $region27: #{_lambda_.7} parent=5 // pred_region
      // Predicated region
      $region29: #{_lambda_.7} parent=27 // pred_check
        %p180 = pneg %p31
      $region30: #{_lambda_.7} parent=27 // pred_check_branch
        %182 = sbr.rel (%p180) target = $region32
      $region31: #{_lambda_.7} parent=27 // pred_region
        %p183 = scmp.lt.s32.totalorder %s11, 1
        %s184 = scalar_select %p183, %s11, 1
        %s185 = smul.addr %s184, 3
        %s186 = smul.addr %s185, 8
        %s187 = scalar_lea.vmem %s0, %s186
      $region32: #{_lambda_.7} parent=27 // pred_fallthru
        _
      // Predicated region
      $region33: #{_lambda_.7} parent=27 // pred_check
        %p188 = pneg %p57
      $region34: #{_lambda_.7} parent=27 // pred_check_branch
        %190 = sbr.rel (%p188) target = $region36
      $region35: #{_lambda_.7} parent=27 // pred_region
        %p191 = scmp.lt.s32.totalorder %s11, 1
        %s192 = scalar_select %p191, %s11, 1
        %s193 = smul.addr %s192, 2
        %s194 = smul.addr %s193, 8
        %s195 = scalar_lea.vmem %s1, %s194
      $region36: #{_lambda_.7} parent=27 // pred_fallthru
        _
    $region28: #{_lambda_.7} parent=5 // pred_fallthru
      _
    %p196 = scmp.le.s32.totalorder 1, %s11
    %p197 = scmp.lt.s32.totalorder %s11, 3
    %p198 = pnand %p196, %p197
    %p199 = pneg %p198
    // Predicated region
    $region37: #{_lambda_.7} parent=5 // pred_check
      _
    $region38: #{_lambda_.7} parent=5 // pred_check_branch
      %201 = sbr.rel (%p198) target = $region40
    $region39: #{_lambda_.7} parent=5 // pred_region
      %s202 = ssub.s32 %s11, 1
      %p203 = scmp.lt.s32.totalorder %s16, 1
      %s204 = scalar_select %p203, %s16, 1
      %s205 = smul.addr %s204, 3
      %s206 = smul.addr %s205, 8
      %s207 = scalar_lea.vmem %s0, %s206
      %p208 = pneg %p37
      %p209 = pneg %p34
      %p210 = scmp.lt.s32.totalorder %s16, 1
      %s211 = scalar_select %p210, %s16, 1
      %s212 = smul.addr %s211, 2
      %s213 = smul.addr %s212, 8
      %s214 = scalar_lea.vmem %s1, %s213
      %p215 = pneg %p63
      %p216 = pneg %p60
      %p217 = pneg %p84
      %p218 = pneg %p81
      %p219 = pneg %p105
      %p220 = pneg %p102
      %p221 = pneg %p126
      %p222 = pneg %p123
      %p223 = pneg %p152
      %p224 = pneg %p149
      %p225 = scmp.lt.s32.totalorder %s16, 1
      %s226 = scalar_select %p225, %s16, 1
      %s227 = smul.addr %s226, 2
      %s228 = smul.addr %s227, 8
      %s229 = scalar_lea.vmem %s5, %s228
      %p230 = scmp.lt.s32.totalorder %s16, 1
      %s231 = scalar_select %p230, %s16, 1
      %s232 = smul.addr %s231, 3
      %s233 = smul.addr %s232, 8
      %s234 = scalar_lea.vmem %s0, %s233
      %p235 = scmp.lt.s32.totalorder %s16, 1
      %s236 = scalar_select %p235, %s16, 1
      %s237 = smul.addr %s236, 2
      %s238 = smul.addr %s237, 8
      %s239 = scalar_lea.vmem %s1, %s238
      %p240 = scmp.lt.s32.totalorder %s16, 1
      %s241 = scalar_select %p240, %s16, 1
      %s242 = smul.addr %s241, 2
      %s243 = smul.addr %s242, 8
      %s244 = scalar_lea.vmem %s5, %s243
      %v246 = vld [vmem:[%s234] sm:$0xff]
      %v247 = vld [vmem:[%s234 + $0x8] sm:$0xff]
      %v248 = vld [vmem:[%s234 + $0x10] sm:$0x3]
      %vm252 = vcmask 1046528
      %v253 = vrot.slane %v246, 1
      %v254 = vrot.slane %v247, 1
      %v255 = vsel %vm252, %v253, %v254
      %v256 = vrot.slane %v248, 1
      %v257 = vsel %vm252, %v254, %v256
      %258 = vrot.lane.b32.xlu0 %v255, 4
      %v259 = vpop.permute.xlu0 %258
      %260 = vrot.lane.b32.xlu0 %v257, 4
      %v261 = vpop.permute.xlu0 %260
      %vm264 = vcmask 1045504
      %v265 = vrot.slane %v246, 2
      %v266 = vrot.slane %v247, 2
      %v267 = vsel %vm264, %v265, %v266
      %v268 = vrot.slane %v248, 2
      %v269 = vsel %vm264, %v266, %v268
      %270 = vrot.lane.b32.xlu0 %v267, 8
      %v271 = vpop.permute.xlu0 %270
      %272 = vrot.lane.b32.xlu0 %v269, 8
      %v273 = vpop.permute.xlu0 %272
      %vm276 = vcmask 31744
      %v277 = vsel %vm276, %v246, %v259
      %v278 = vsel %vm276, %v247, %v261
      %vm279 = vcmask 64512
      %v280 = vsel %vm279, %v277, %v271
      %v281 = vsel %vm279, %v278, %v273
      %v282 = vld [vmem:[%s2] sm:$0xf]
      %v283 = vld [vmem:[%s2 + $0x4] sm:$0x3]
      %v284 = vpack.c.bf16 %v281, %v280
      %v285 = vld [vmem:[%s239] sm:$0xff]
      %v286 = vld [vmem:[%s239 + $0x8] sm:$0xff]
      %v287 = vld [vmem:[%s3] sm:$0x3]
      %v288 = vpack.c.bf16 %v286, %v285
      %v290 = vsel %vm276, %v288, 0
      %vm292 = vcmask 1041408
      %v294 = vsel %vm292, %v287, 0
      %296 = vmatprep.subr.bf16.mxu0 0
      %297 = vmatpush1.bf16.msra.mxu0 0
      %298 = vmatprep.subr.bf16.mxu0 0
      %299 = vmatpush1.bf16.msra.mxu0 0
      %300 = vmatprep.subr.bf16.mxu0 0
      %301 = vmatpush1.bf16.msra.mxu0 0
      %302 = vmatprep.subr.bf16.mxu0 0
      %303 = vmatpush1.bf16.msra.mxu0 0
      %304 = vmatprep.subr.bf16.mxu0 0
      %305 = vmatpush1.bf16.msra.mxu0 0
      %306 = vmatprep.subr.bf16.mxu0 0
      %307 = vmatpush1.bf16.msra.mxu0 0
      %308 = vmatprep.subr.bf16.mxu0 0
      %309 = vmatpush1.bf16.msra.mxu0 0
      %310 = vmatprep.subr.bf16.mxu0 0
      %311 = vmatpush1.bf16.msra.mxu0 %v294
      %312 = vmatprep.subr.bf16.mxu0 0
      %313 = vmatpush2.bf16.msra.mxu0 0
      %314 = vmatprep.subr.bf16.mxu0 0
      %315 = vmatpush2.bf16.msra.mxu0 0
      %316 = vmatprep.subr.bf16.mxu0 0
      %317 = vmatpush2.bf16.msra.mxu0 0
      %318 = vmatprep.subr.bf16.mxu0 0
      %319 = vmatpush2.bf16.msra.mxu0 0
      %320 = vmatprep.subr.bf16.mxu0 0
      %321 = vmatpush2.bf16.msra.mxu0 0
      %322 = vmatprep.subr.bf16.mxu0 0
      %323 = vmatpush2.bf16.msra.mxu0 0
      %324 = vmatprep.subr.bf16.mxu0 0
      %325 = vmatpush2.bf16.msra.mxu0 0
      %326 = vmatprep.subr.bf16.mxu0 0
      %327 = vmatpush2.bf16.msra.mxu0 0
      %328 = vmatprep.mubr.bf16.mxu0 0
      %329 = vmatmul.mubr.bf16.gmra.mxu0 %v290
      %v330 = vpop.f32.mrf.mxu0
      %v331 = vadd.f32 0.0, %v330
      %v332 = vpop.f32.mrf.mxu0
      %v333 = vpop.f32.mrf.mxu0
      %v334 = vadd.f32 0.0, %v333
      %v335 = vpop.f32.mrf.mxu0
      %336 = vdwg.mxu0
      %v339 = vunpack.c.l.b16 %v282
      %v340 = vunpack.c.l.b16 %v283
      %v341 = vpack.c.b16 %v340, %v339
      %vm342 = vcmask 97280
      %v344 = vsel %vm342, %v284, 0
      %v347 = vsel %vm264, %v341, 0
      %349 = vmatprep.subr.bf16.mxu0 0
      %350 = vmatpush1.bf16.msra.mxu0 0
      %351 = vmatprep.subr.bf16.mxu0 0
      %352 = vmatpush1.bf16.msra.mxu0 0
      %353 = vmatprep.subr.bf16.mxu0 0
      %354 = vmatpush1.bf16.msra.mxu0 0
      %355 = vmatprep.subr.bf16.mxu0 0
      %356 = vmatpush1.bf16.msra.mxu0 0
      %357 = vmatprep.subr.bf16.mxu0 0
      %358 = vmatpush1.bf16.msra.mxu0 0
      %359 = vmatprep.subr.bf16.mxu0 0
      %360 = vmatpush1.bf16.msra.mxu0 0
      %361 = vmatprep.subr.bf16.mxu0 0
      %362 = vmatpush1.bf16.msra.mxu0 0
      %363 = vmatprep.subr.bf16.mxu0 0
      %364 = vmatpush1.bf16.msra.mxu0 %v347
      %365 = vmatprep.subr.bf16.mxu0 0
      %366 = vmatpush2.bf16.msra.mxu0 0
      %367 = vmatprep.subr.bf16.mxu0 0
      %368 = vmatpush2.bf16.msra.mxu0 0
      %369 = vmatprep.subr.bf16.mxu0 0
      %370 = vmatpush2.bf16.msra.mxu0 0
      %371 = vmatprep.subr.bf16.mxu0 0
      %372 = vmatpush2.bf16.msra.mxu0 0
      %373 = vmatprep.subr.bf16.mxu0 0
      %374 = vmatpush2.bf16.msra.mxu0 0
      %375 = vmatprep.subr.bf16.mxu0 0
      %376 = vmatpush2.bf16.msra.mxu0 0
      %377 = vmatprep.subr.bf16.mxu0 0
      %378 = vmatpush2.bf16.msra.mxu0 0
      %379 = vmatprep.subr.bf16.mxu0 0
      %380 = vmatpush2.bf16.msra.mxu0 0
      %381 = vmatprep.mubr.bf16.mxu0 0
      %382 = vmatmul.mubr.bf16.gmra.mxu0 %v344
      %v383 = vpop.f32.mrf.mxu0
      %v384 = vadd.f32 %v331, %v383
      %v385 = vpop.f32.mrf.mxu0
      %v386 = vpop.f32.mrf.mxu0
      %v387 = vadd.f32 %v334, %v386
      %v388 = vpop.f32.mrf.mxu0
      %389 = vdwg.mxu0
      %v390 = vld [vmem:[%s4] sm:$0xff]
      %v391 = vld [vmem:[%s4 + $0x8] sm:$0xff]
      %v392 = vadd.f32 %v384, %v390
      %v393 = vadd.f32 %v387, %v391
      %vm394 = vcmask 261120
      %395 = vst.msk [vmem:[%s244] sm:$0xff] %vm394, %v392
      %396 = vst.msk [vmem:[%s244 + $0x8] sm:$0xff] %vm394, %v393
      %p397 = scmp.lt.s32.totalorder %s16, 1
      %s398 = scalar_select %p397, %s16, 1
      %s399 = smul.addr %s398, 2
      %s400 = smul.addr %s399, 8
      %s401 = scalar_lea.vmem %s5, %s400
      // Predicated region
      $region41: #{_lambda_.7} parent=39 // pred_check
        %p402 = pneg %p149
      $region42: #{_lambda_.7} parent=39 // pred_check_branch
        %404 = sbr.rel (%p402) target = $region44
      $region43: #{_lambda_.7} parent=39 // pred_region
        _
      $region44: #{_lambda_.7} parent=39 // pred_fallthru
        _
    $region40: #{_lambda_.7} parent=5 // pred_fallthru
      _
    %p405 = scmp.le.s32.totalorder 2, %s11
    // Predicated region
    $region45: #{_lambda_.7} parent=5 // pred_check
      %p406 = pneg %p405
    $region46: #{_lambda_.7} parent=5 // pred_check_branch
      %408 = sbr.rel (%p406) target = $region48
    $region47: #{_lambda_.7} parent=5 // pred_region
      %s409 = ssub.s32 %s11, 2
      // Predicated region
      $region49: #{_lambda_.7} parent=47 // pred_check
        %p410 = pneg %p155
      $region50: #{_lambda_.7} parent=47 // pred_check_branch
        %412 = sbr.rel (%p410) target = $region52
      $region51: #{_lambda_.7} parent=47 // pred_region
        %p413 = scmp.lt.s32.totalorder %s17, 1
        %s414 = scalar_select %p413, %s17, 1
        %s415 = smul.addr %s414, 2
        %s416 = smul.addr %s415, 8
        %s417 = scalar_lea.vmem %s5, %s416
      $region52: #{_lambda_.7} parent=47 // pred_fallthru
        _
    $region48: #{_lambda_.7} parent=5 // pred_fallthru
      _
  $region6: #{_lambda_.7} parent=0 // loop_footer
    %s15 = sadd.s32 1, %s11
  $region7: #{_lambda_.7} parent=0 // loop_footer_branch
    %10 = sbr.rel target = $region3
  $region8: #{_lambda_.7} parent=0 // loop_exit
    _

// kernel: _lambda_.10
$region0: #{_lambda_.10}
  #allocation0 [shape = 'u32[]', space=smem, size = 0x4, offset = 0x4, fixed_abs, tag = 'smem constant byte address 0x4 - core index']
  #allocation1 [shape = 'u32[144,128]{1,0:T(1,128)}', space=vmem, size = 0x12000, scoped, tag = 'internal scratch']
  %s0 = inlined_call_operand.vmem [shape: f32[2,20,32], index: 0, kind: input, shape index: {}]
  %s1 = inlined_call_operand.vmem [shape: bf16[96,32], index: 1, kind: input, shape index: {}]
  %s2 = inlined_call_operand.vmem [shape: f32[1,32], index: 2, kind: input, shape index: {}]
  %s3 = inlined_call_operand.vmem [shape: f32[1,32], index: 3, kind: input, shape index: {}, may-alias: {3,6}]
  %s4 = inlined_call_operand.vmem [shape: f32[1,32], index: 4, kind: input, shape index: {}, may-alias: {4,5}]
  %s5 = inlined_call_operand.vmem [shape: f32[1,32], index: 5, kind: input, shape index: {}, may-alias: {4,5}]
  %s6 = inlined_call_operand.vmem [shape: f32[1,32], index: 6, kind: input, shape index: {}, may-alias: {3,6}]
  %s7 = inlined_call_operand.vmem [shape: f32[9,18], index: 7, kind: input, shape index: {}]
  %s8 = inlined_call_operand.vmem [shape: f32[2,9,32], index: 8, kind: output, shape index: {}]
  %s9 = sld [smem:[#allocation0]]
  $region65: #{_lambda_.10} parent=0
    _
  %s11 = ssub.s32 1, %s9
  %s12 = scalar_select 0, %s11, %s9
  loop: start=0, step=1, limit=4
  $region2: #{_lambda_.10} parent=0 // loop_pre_header
    _
  $region3: #{_lambda_.10} parent=0 // loop_header
    %s14 = sphi 0, %s18
    %p15 = scmp.ge.s32.totalorder %s14, 4
    %s24 = sphi 0, %s26
    %s27 = sphi 0, %s24
    %s28 = sphi 0, %s27
    %s44 = sphi 0, %s28
    %s48 = sphi 0, %s48
    %s50 = sphi 0, %s48
    %s51 = sphi 0, %s50
    %s65 = sphi 0, %s51
    %s69 = sphi 0, %s69
    %s71 = sphi 0, %s69
    %s72 = sphi 0, %s71
    %s86 = sphi 0, %s72
    %s90 = sphi 0, %s90
    %s92 = sphi 0, %s90
    %s93 = sphi 0, %s92
    %s107 = sphi 0, %s93
    %s111 = sphi 0, %s111
    %s113 = sphi 0, %s111
    %s114 = sphi 0, %s113
    %s128 = sphi 0, %s114
    %s132 = sphi 0, %s132
    %s134 = sphi 0, %s132
    %s135 = sphi 0, %s134
    %s149 = sphi 0, %s135
    %s153 = sphi 0, %s153
    %s155 = sphi 0, %s153
    %s156 = sphi 0, %s155
    %s170 = sphi 0, %s156
    %s174 = sphi 0, %s174
    %s176 = sphi 0, %s174
    %s177 = sphi 0, %s176
    %s191 = sphi 0, %s177
    %s197 = sphi 0, %s199
    %s200 = sphi 0, %s197
    %s201 = sphi 0, %s200
    %s217 = sphi 0, %s201
  $region4: #{_lambda_.10} parent=0 // loop_header_branch
    %17 = sbr.rel (%p15) target = $region8
  $region5: #{_lambda_.10} parent=0 // loop_body
    %s19 = ssub.s32 %s14, 1
    %s20 = ssub.s32 %s14, 2
    %s21 = sadd.s32 %s14, 1
    %s22 = ssub.s32 %s14, %s21
    %p23 = scmp.eq.s32.totalorder %s22, 0
    %s25 = sadd.s32 %s24, 1
    %s26 = scalar_select %p23, %s24, %s25
    %p29 = pneg %p23
    %p30 = scmp.eq.s32.totalorder %s14, 1
    %p31 = por %p29, %p30
    %p32 = scmp.ne.s32.totalorder %s24, %s27
    %p33 = scmp.eq.s32.totalorder %s14, 0
    %p34 = por %p32, %p33
    %p35 = scmp.ne.s32.totalorder %s24, %s27
    %p36 = scmp.eq.s32.totalorder %s19, 1
    %p37 = por %p35, %p36
    %p38 = scmp.ne.s32.totalorder %s27, %s28
    %p39 = scmp.eq.s32.totalorder %s19, 0
    %p40 = por %p38, %p39
    %p41 = scmp.ne.s32.totalorder %s27, %s28
    %p42 = scmp.eq.s32.totalorder %s20, 1
    %p43 = por %p41, %p42
    %p45 = scmp.ne.s32.totalorder %s28, %s44
    %p46 = scmp.eq.s32.totalorder %s20, 0
    %p47 = por %p45, %p46
    %s49 = sadd.s32 %s48, 1
    %p52 = scmp.eq.s32.totalorder %s14, 1
    %p53 = scmp.ne.s32.totalorder %s48, %s50
    %p54 = scmp.eq.s32.totalorder %s14, 0
    %p55 = por %p53, %p54
    %p56 = scmp.ne.s32.totalorder %s48, %s50
    %p57 = scmp.eq.s32.totalorder %s19, 1
    %p58 = por %p56, %p57
    %p59 = scmp.ne.s32.totalorder %s50, %s51
    %p60 = scmp.eq.s32.totalorder %s19, 0
    %p61 = por %p59, %p60
    %p62 = scmp.ne.s32.totalorder %s50, %s51
    %p63 = scmp.eq.s32.totalorder %s20, 1
    %p64 = por %p62, %p63
    %p66 = scmp.ne.s32.totalorder %s51, %s65
    %p67 = scmp.eq.s32.totalorder %s20, 0
    %p68 = por %p66, %p67
    %s70 = sadd.s32 %s69, 1
    %p73 = scmp.eq.s32.totalorder %s14, 1
    %p74 = scmp.ne.s32.totalorder %s69, %s71
    %p75 = scmp.eq.s32.totalorder %s14, 0
    %p76 = por %p74, %p75
    %p77 = scmp.ne.s32.totalorder %s69, %s71
    %p78 = scmp.eq.s32.totalorder %s19, 1
    %p79 = por %p77, %p78
    %p80 = scmp.ne.s32.totalorder %s71, %s72
    %p81 = scmp.eq.s32.totalorder %s19, 0
    %p82 = por %p80, %p81
    %p83 = scmp.ne.s32.totalorder %s71, %s72
    %p84 = scmp.eq.s32.totalorder %s20, 1
    %p85 = por %p83, %p84
    %p87 = scmp.ne.s32.totalorder %s72, %s86
    %p88 = scmp.eq.s32.totalorder %s20, 0
    %p89 = por %p87, %p88
    %s91 = sadd.s32 %s90, 1
    %p94 = scmp.eq.s32.totalorder %s14, 1
    %p95 = scmp.ne.s32.totalorder %s90, %s92
    %p96 = scmp.eq.s32.totalorder %s14, 0
    %p97 = por %p95, %p96
    %p98 = scmp.ne.s32.totalorder %s90, %s92
    %p99 = scmp.eq.s32.totalorder %s19, 1
    %p100 = por %p98, %p99
    %p101 = scmp.ne.s32.totalorder %s92, %s93
    %p102 = scmp.eq.s32.totalorder %s19, 0
    %p103 = por %p101, %p102
    %p104 = scmp.ne.s32.totalorder %s92, %s93
    %p105 = scmp.eq.s32.totalorder %s20, 1
    %p106 = por %p104, %p105
    %p108 = scmp.ne.s32.totalorder %s93, %s107
    %p109 = scmp.eq.s32.totalorder %s20, 0
    %p110 = por %p108, %p109
    %s112 = sadd.s32 %s111, 1
    %p115 = scmp.eq.s32.totalorder %s14, 1
    %p116 = scmp.ne.s32.totalorder %s111, %s113
    %p117 = scmp.eq.s32.totalorder %s14, 0
    %p118 = por %p116, %p117
    %p119 = scmp.ne.s32.totalorder %s111, %s113
    %p120 = scmp.eq.s32.totalorder %s19, 1
    %p121 = por %p119, %p120
    %p122 = scmp.ne.s32.totalorder %s113, %s114
    %p123 = scmp.eq.s32.totalorder %s19, 0
    %p124 = por %p122, %p123
    %p125 = scmp.ne.s32.totalorder %s113, %s114
    %p126 = scmp.eq.s32.totalorder %s20, 1
    %p127 = por %p125, %p126
    %p129 = scmp.ne.s32.totalorder %s114, %s128
    %p130 = scmp.eq.s32.totalorder %s20, 0
    %p131 = por %p129, %p130
    %s133 = sadd.s32 %s132, 1
    %p136 = scmp.eq.s32.totalorder %s14, 1
    %p137 = scmp.ne.s32.totalorder %s132, %s134
    %p138 = scmp.eq.s32.totalorder %s14, 0
    %p139 = por %p137, %p138
    %p140 = scmp.ne.s32.totalorder %s132, %s134
    %p141 = scmp.eq.s32.totalorder %s19, 1
    %p142 = por %p140, %p141
    %p143 = scmp.ne.s32.totalorder %s134, %s135
    %p144 = scmp.eq.s32.totalorder %s19, 0
    %p145 = por %p143, %p144
    %p146 = scmp.ne.s32.totalorder %s134, %s135
    %p147 = scmp.eq.s32.totalorder %s20, 1
    %p148 = por %p146, %p147
    %p150 = scmp.ne.s32.totalorder %s135, %s149
    %p151 = scmp.eq.s32.totalorder %s20, 0
    %p152 = por %p150, %p151
    %s154 = sadd.s32 %s153, 1
    %p157 = scmp.eq.s32.totalorder %s14, 1
    %p158 = scmp.ne.s32.totalorder %s153, %s155
    %p159 = scmp.eq.s32.totalorder %s14, 0
    %p160 = por %p158, %p159
    %p161 = scmp.ne.s32.totalorder %s153, %s155
    %p162 = scmp.eq.s32.totalorder %s19, 1
    %p163 = por %p161, %p162
    %p164 = scmp.ne.s32.totalorder %s155, %s156
    %p165 = scmp.eq.s32.totalorder %s19, 0
    %p166 = por %p164, %p165
    %p167 = scmp.ne.s32.totalorder %s155, %s156
    %p168 = scmp.eq.s32.totalorder %s20, 1
    %p169 = por %p167, %p168
    %p171 = scmp.ne.s32.totalorder %s156, %s170
    %p172 = scmp.eq.s32.totalorder %s20, 0
    %p173 = por %p171, %p172
    %s175 = sadd.s32 %s174, 1
    %p178 = scmp.eq.s32.totalorder %s14, 1
    %p179 = scmp.ne.s32.totalorder %s174, %s176
    %p180 = scmp.eq.s32.totalorder %s14, 0
    %p181 = por %p179, %p180
    %p182 = scmp.ne.s32.totalorder %s174, %s176
    %p183 = scmp.eq.s32.totalorder %s19, 1
    %p184 = por %p182, %p183
    %p185 = scmp.ne.s32.totalorder %s176, %s177
    %p186 = scmp.eq.s32.totalorder %s19, 0
    %p187 = por %p185, %p186
    %p188 = scmp.ne.s32.totalorder %s176, %s177
    %p189 = scmp.eq.s32.totalorder %s20, 1
    %p190 = por %p188, %p189
    %p192 = scmp.ne.s32.totalorder %s177, %s191
    %p193 = scmp.eq.s32.totalorder %s20, 0
    %p194 = por %p192, %p193
    %s195 = ssub.s32 %s14, %s21
    %p196 = scmp.eq.s32.totalorder %s195, 0
    %s198 = sadd.s32 %s197, 1
    %s199 = scalar_select %p196, %s197, %s198
    %p202 = pneg %p196
    %p203 = scmp.eq.s32.totalorder %s14, 1
    %p204 = por %p202, %p203
    %p205 = scmp.ne.s32.totalorder %s197, %s200
    %p206 = scmp.eq.s32.totalorder %s14, 0
    %p207 = por %p205, %p206
    %p208 = scmp.ne.s32.totalorder %s197, %s200
    %p209 = scmp.eq.s32.totalorder %s19, 1
    %p210 = por %p208, %p209
    %p211 = scmp.ne.s32.totalorder %s200, %s201
    %p212 = scmp.eq.s32.totalorder %s19, 0
    %p213 = por %p211, %p212
    %p214 = scmp.ne.s32.totalorder %s200, %s201
    %p215 = scmp.eq.s32.totalorder %s20, 1
    %p216 = por %p214, %p215
    %p218 = scmp.ne.s32.totalorder %s201, %s217
    %p219 = scmp.eq.s32.totalorder %s20, 0
    %p220 = por %p218, %p219
    %p221 = scmp.le.s32.totalorder 1, %s14
    %p222 = scmp.lt.s32.totalorder %s14, 3
    %p223 = pnand %p221, %p222
    %p224 = pneg %p223
    // Predicated region
    $region9: #{_lambda_.10} parent=5 // pred_check
      _
    $region10: #{_lambda_.10} parent=5 // pred_check_branch
      %226 = sbr.rel (%p223) target = $region12
    $region11: #{_lambda_.10} parent=5 // pred_region
      %s227 = ssub.s32 %s14, 1
      // Predicated region
      $region13: #{_lambda_.10} parent=11 // pred_check
        %p228 = pneg %p61
      $region14: #{_lambda_.10} parent=11 // pred_check_branch
        %230 = sbr.rel (%p228) target = $region16
      $region15: #{_lambda_.10} parent=11 // pred_region
        _
      $region16: #{_lambda_.10} parent=11 // pred_fallthru
        _
      // Predicated region
      $region17: #{_lambda_.10} parent=11 // pred_check
        %p231 = pneg %p82
      $region18: #{_lambda_.10} parent=11 // pred_check_branch
        %233 = sbr.rel (%p231) target = $region20
      $region19: #{_lambda_.10} parent=11 // pred_region
        _
      $region20: #{_lambda_.10} parent=11 // pred_fallthru
        _
      // Predicated region
      $region21: #{_lambda_.10} parent=11 // pred_check
        %p234 = pneg %p103
      $region22: #{_lambda_.10} parent=11 // pred_check_branch
        %236 = sbr.rel (%p234) target = $region24
      $region23: #{_lambda_.10} parent=11 // pred_region
        _
      $region24: #{_lambda_.10} parent=11 // pred_fallthru
        _
      // Predicated region
      $region25: #{_lambda_.10} parent=11 // pred_check
        %p237 = pneg %p124
      $region26: #{_lambda_.10} parent=11 // pred_check_branch
        %239 = sbr.rel (%p237) target = $region28
      $region27: #{_lambda_.10} parent=11 // pred_region
        _
      $region28: #{_lambda_.10} parent=11 // pred_fallthru
        _
      // Predicated region
      $region29: #{_lambda_.10} parent=11 // pred_check
        %p240 = pneg %p145
      $region30: #{_lambda_.10} parent=11 // pred_check_branch
        %242 = sbr.rel (%p240) target = $region32
      $region31: #{_lambda_.10} parent=11 // pred_region
        _
      $region32: #{_lambda_.10} parent=11 // pred_fallthru
        _
      // Predicated region
      $region33: #{_lambda_.10} parent=11 // pred_check
        %p243 = pneg %p166
      $region34: #{_lambda_.10} parent=11 // pred_check_branch
        %245 = sbr.rel (%p243) target = $region36
      $region35: #{_lambda_.10} parent=11 // pred_region
        _
      $region36: #{_lambda_.10} parent=11 // pred_fallthru
        _
      // Predicated region
      $region37: #{_lambda_.10} parent=11 // pred_check
        %p246 = pneg %p187
      $region38: #{_lambda_.10} parent=11 // pred_check_branch
        %248 = sbr.rel (%p246) target = $region40
      $region39: #{_lambda_.10} parent=11 // pred_region
        _
      $region40: #{_lambda_.10} parent=11 // pred_fallthru
        _
    $region12: #{_lambda_.10} parent=5 // pred_fallthru
      _
    %p249 = scmp.lt.s32.totalorder %s14, 2
    // Predicated region
    $region41: #{_lambda_.10} parent=5 // pred_check
      %p250 = pneg %p249
    $region42: #{_lambda_.10} parent=5 // pred_check_branch
      %252 = sbr.rel (%p250) target = $region44
    $region43: #{_lambda_.10} parent=5 // pred_region
      // Predicated region
      $region45: #{_lambda_.10} parent=43 // pred_check
        %p253 = pneg %p34
      $region46: #{_lambda_.10} parent=43 // pred_check_branch
        %255 = sbr.rel (%p253) target = $region48
      $region47: #{_lambda_.10} parent=43 // pred_region
        %p256 = scmp.lt.s32.totalorder %s14, 1
        %s257 = scalar_select %p256, %s14, 1
        %s258 = smul.addr %s257, 3
        %s259 = smul.addr %s258, 8
        %s260 = scalar_lea.vmem %s0, %s259
      $region48: #{_lambda_.10} parent=43 // pred_fallthru
        _
    $region44: #{_lambda_.10} parent=5 // pred_fallthru
      _
    %p261 = scmp.le.s32.totalorder 1, %s14
    %p262 = scmp.lt.s32.totalorder %s14, 3
    %p263 = pnand %p261, %p262
    %p264 = pneg %p263
    // Predicated region
    $region49: #{_lambda_.10} parent=5 // pred_check
      _
    $region50: #{_lambda_.10} parent=5 // pred_check_branch
      %266 = sbr.rel (%p263) target = $region52
    $region51: #{_lambda_.10} parent=5 // pred_region
      %s267 = ssub.s32 %s14, 1
      %p268 = scmp.lt.s32.totalorder %s19, 1
      %s269 = scalar_select %p268, %s19, 1
      %s270 = smul.addr %s269, 3
      %s271 = smul.addr %s270, 8
      %s272 = scalar_lea.vmem %s0, %s271
      %p273 = pneg %p40
      %p274 = pneg %p37
      %p275 = pneg %p61
      %p276 = pneg %p58
      %p277 = pneg %p82
      %p278 = pneg %p79
      %p279 = pneg %p103
      %p280 = pneg %p100
      %p281 = pneg %p124
      %p282 = pneg %p121
      %p283 = pneg %p145
      %p284 = pneg %p142
      %p285 = pneg %p166
      %p286 = pneg %p163
      %p287 = pneg %p187
      %p288 = pneg %p184
      %p289 = pneg %p213
      %p290 = pneg %p210
      %p291 = scmp.lt.s32.totalorder %s19, 1
      %s292 = scalar_select %p291, %s19, 1
      %s293 = smul.addr %s292, 2
      %s294 = smul.addr %s293, 8
      %s295 = scalar_lea.vmem %s8, %s294
      %p296 = scmp.lt.s32.totalorder %s19, 1
      %s297 = scalar_select %p296, %s19, 1
      %s298 = smul.addr %s297, 3
      %s299 = smul.addr %s298, 8
      %s300 = scalar_lea.vmem %s0, %s299
      %p301 = scmp.lt.s32.totalorder %s19, 1
      %s302 = scalar_select %p301, %s19, 1
      %s303 = smul.addr %s302, 2
      %s304 = smul.addr %s303, 8
      %s305 = scalar_lea.vmem %s8, %s304
      %v307 = vld [vmem:[%s300] sm:$0xff]
      %v308 = vld [vmem:[%s300 + $0x8] sm:$0xff]
      %v309 = vld [vmem:[%s300 + $0x10] sm:$0xf]
      %vm313 = vcmask 1046528
      %v314 = vrot.slane %v307, 1
      %v315 = vrot.slane %v308, 1
      %v316 = vsel %vm313, %v314, %v315
      %v317 = vrot.slane %v309, 1
      %v318 = vsel %vm313, %v315, %v317
      %319 = vrot.lane.b32.xlu0 %v316, 32
      %v320 = vpop.permute.xlu0 %319
      %321 = vrot.lane.b32.xlu0 %v318, 32
      %v322 = vpop.permute.xlu0 %321
      %323 = vrot.lane.b32.xlu0 %v317, 32
      %v324 = vpop.permute.xlu0 %323
      %vm328 = vcmask 1045504
      %v329 = vrot.slane %v307, 2
      %v330 = vrot.slane %v308, 2
      %v331 = vsel %vm328, %v329, %v330
      %v332 = vrot.slane %v309, 2
      %v333 = vsel %vm328, %v330, %v332
      %334 = vrot.lane.b32.xlu0 %v331, 64
      %v335 = vpop.permute.xlu0 %334
      %336 = vrot.lane.b32.xlu0 %v333, 64
      %v337 = vpop.permute.xlu0 %336
      %338 = vrot.lane.b32.xlu0 %v332, 64
      %v339 = vpop.permute.xlu0 %338
      %vm343 = vcmask 261120
      %v344 = vsel %vm343, %v307, %v320
      %v345 = vsel %vm343, %v308, %v322
      %v346 = vsel %vm343, %v309, %v324
      %vm347 = vcmask 523264
      %v348 = vsel %vm347, %v344, %v335
      %v349 = vsel %vm347, %v345, %v337
      %v350 = vsel %vm347, %v346, %v339
      %v351 = vld [vmem:[%s1] sm:$0xf]
      %v352 = vld [vmem:[%s1 + $0x4] sm:$0xf]
      %v353 = vld [vmem:[%s1 + $0x8] sm:$0xf]
      %v354 = vld [vmem:[%s1 + $0xc] sm:$0xf]
      %v355 = vld [vmem:[%s1 + $0x10] sm:$0xf]
      %v356 = vld [vmem:[%s1 + $0x14] sm:$0xf]
      %v357 = vld [vmem:[%s1 + $0x18] sm:$0xf]
      %v358 = vld [vmem:[%s1 + $0x1c] sm:$0xf]
      %v359 = vld [vmem:[%s1 + $0x20] sm:$0xf]
      %v360 = vld [vmem:[%s1 + $0x24] sm:$0xf]
      %v361 = vld [vmem:[%s1 + $0x28] sm:$0xf]
      %v362 = vld [vmem:[%s1 + $0x2c] sm:$0xf]
      %v363 = vpack.c.bf16 %v349, %v348
      %v364 = vpack.c.bf16 %v350, %v350
      %v365 = vld [vmem:[%s2] sm:$0x1]
      %v367 = vlaneseq
      %v368 = vshrl.u32 %v367, 7
      %v369 = vsub.s32 0, %v368
      %v370 = vrot.slane %v365, %v369
      %v384 = vunpack.c.l.b16 %v351
      %v385 = vunpack.c.l.b16 %v352
      %v386 = vunpack.c.l.b16 %v353
      %v387 = vunpack.c.l.b16 %v354
      %v388 = vunpack.c.l.b16 %v355
      %v389 = vunpack.c.l.b16 %v356
      %v390 = vunpack.c.l.b16 %v357
      %v391 = vunpack.c.l.b16 %v358
      %v392 = vunpack.c.l.b16 %v359
      %v393 = vunpack.c.l.b16 %v360
      %v394 = vunpack.c.l.b16 %v361
      %v395 = vunpack.c.l.b16 %v362
      %v396 = vpack.c.b16 %v385, %v384
      %v397 = vpack.c.b16 %v387, %v386
      %v398 = vpack.c.b16 %v389, %v388
      %v399 = vpack.c.b16 %v391, %v390
      %v400 = vpack.c.b16 %v393, %v392
      %v401 = vpack.c.b16 %v395, %v394
      %vm408 = vcmask 785408
      %v410 = vsel %vm408, %v363, 0
      %v413 = vsel %vm408, %v364, 0
      %415 = vmatprep.subr.bf16.mxu0 0
      %416 = vmatpush1.bf16.msra.mxu0 0
      %417 = vmatprep.subr.bf16.mxu0 0
      %418 = vmatpush1.bf16.msra.mxu0 0
      %419 = vmatprep.subr.bf16.mxu0 0
      %420 = vmatpush1.bf16.msra.mxu0 %v401
      %421 = vmatprep.subr.bf16.mxu0 0
      %422 = vmatpush1.bf16.msra.mxu0 %v400
      %423 = vmatprep.subr.bf16.mxu0 0
      %424 = vmatpush1.bf16.msra.mxu0 %v399
      %425 = vmatprep.subr.bf16.mxu0 0
      %426 = vmatpush1.bf16.msra.mxu0 %v398
      %427 = vmatprep.subr.bf16.mxu0 0
      %428 = vmatpush1.bf16.msra.mxu0 %v397
      %429 = vmatprep.subr.bf16.mxu0 0
      %430 = vmatpush1.bf16.msra.mxu0 %v396
      %431 = vmatprep.subr.bf16.mxu0 0
      %432 = vmatpush2.bf16.msra.mxu0 0
      %433 = vmatprep.subr.bf16.mxu0 0
      %434 = vmatpush2.bf16.msra.mxu0 0
      %435 = vmatprep.subr.bf16.mxu0 0
      %436 = vmatpush2.bf16.msra.mxu0 0
      %437 = vmatprep.subr.bf16.mxu0 0
      %438 = vmatpush2.bf16.msra.mxu0 0
      %439 = vmatprep.subr.bf16.mxu0 0
      %440 = vmatpush2.bf16.msra.mxu0 0
      %441 = vmatprep.subr.bf16.mxu0 0
      %442 = vmatpush2.bf16.msra.mxu0 0
      %443 = vmatprep.subr.bf16.mxu0 0
      %444 = vmatpush2.bf16.msra.mxu0 0
      %445 = vmatprep.subr.bf16.mxu0 0
      %446 = vmatpush2.bf16.msra.mxu0 0
      %447 = vmatprep.mubr.bf16.mxu0 0
      %448 = vmatmul.mubr.bf16.gmra.mxu0 %v410
      %v449 = vpop.f32.mrf.mxu0
      %v450 = vadd.f32 %v370, %v449
      %v451 = vpop.f32.mrf.mxu0
      %v452 = vpop.f32.mrf.mxu0
      %v453 = vadd.f32 %v370, %v452
      %v454 = vpop.f32.mrf.mxu0
      %455 = vmatprep.mubr.bf16.mxu0 0
      %456 = vmatmul.mubr.bf16.gmra.mxu0 %v413
      %v457 = vpop.f32.mrf.mxu0
      %v458 = vadd.f32 %v370, %v457
      %v459 = vpop.f32.mrf.mxu0
      %v460 = vpop.f32.mrf.mxu0
      %v461 = vpop.f32.mrf.mxu0
      %462 = vdwg.mxu0
      %v463 = vld [vmem:[%s5] sm:$0x1]
      %v465 = vlaneseq
      %v466 = vshrl.u32 %v465, 7
      %v467 = vsub.s32 0, %v466
      %v468 = vrot.slane %v463, %v467
      %v470 = vsub.f32 %v450, %v468
      %v471 = vsub.f32 %v453, %v468
      %v472 = vsub.f32 %v458, %v468
      %v473 = vld [vmem:[%s6] sm:$0x1]
      %v474 = vadd.f32 %v473, 1e-05
      %v475 = vrsqrt.pop %v474
      %v477 = vlaneseq
      %v478 = vshrl.u32 %v477, 7
      %v479 = vsub.s32 0, %v478
      %v480 = vrot.slane %v475, %v479
      %v482 = vmul.f32 %v470, %v480
      %v483 = vmul.f32 %v471, %v480
      %v484 = vmul.f32 %v472, %v480
      %v485 = vld [vmem:[%s3] sm:$0x1]
      %v487 = vlaneseq
      %v488 = vshrl.u32 %v487, 7
      %v489 = vsub.s32 0, %v488
      %v490 = vrot.slane %v485, %v489
      %v492 = vmul.f32 %v482, %v490
      %v493 = vmul.f32 %v483, %v490
      %v494 = vmul.f32 %v484, %v490
      %v495 = vld [vmem:[%s4] sm:$0x1]
      %v497 = vlaneseq
      %v498 = vshrl.u32 %v497, 7
      %v499 = vsub.s32 0, %v498
      %v500 = vrot.slane %v495, %v499
      %v502 = vadd.f32 %v492, %v500
      %v503 = vadd.f32 %v493, %v500
      %v504 = vadd.f32 %v494, %v500
      %vm505 = vcmp.gt.f32.partialorder %v502, 0.0
      %vm506 = vcmp.gt.f32.partialorder %v503, 0.0
      %vm507 = vcmp.gt.f32.partialorder %v504, 0.0
      %v508 = vmin.f32 %v502, 0.0
      %v509 = vmin.f32 %v503, 0.0
      %v510 = vmin.f32 %v504, 0.0
      %v511 = vmul.f32 %v508, 1.442695
      %v512 = vpow.pop %v511
      %v513 = vmul.f32 %v509, 1.442695
      %v514 = vpow.pop %v513
      %v515 = vmul.f32 %v510, 1.442695
      %v516 = vpow.pop %v515
      %v517 = vsub.f32 %v512, 1.0
      %v518 = vsub.f32 %v514, 1.0
      %v519 = vsub.f32 %v516, 1.0
      %v520 = vsel %vm505, %v502, %v517
      %v521 = vsel %vm506, %v503, %v518
      %v522 = vsel %vm507, %v504, %v519
      %vm526 = vcmask 1040384
      %v527 = vrot.slane %v520, 7
      %v528 = vrot.slane %v521, 7
      %v529 = vsel %vm526, %v527, %v528
      %v530 = vrot.slane %v522, 7
      %v531 = vsel %vm526, %v528, %v530
      %v535 = vsel %vm526, -inf, %v527
      %vm536 = vcmask 1042432
      %v537 = vsel %vm536, %v531, -inf
      %v540 = vrot.slane %v535, 1
      %v541 = vrot.slane %v529, 1
      %v542 = vsel %vm313, %v540, %v541
      %v543 = vrot.slane %v537, 1
      %v544 = vsel %vm313, %v541, %v543
      %v548 = vmax.f32 %v535, %v542
      %v549 = vmax.f32 %v529, %v544
      %v550 = vmax.f32 %v537, %v543
      %v551 = vrot.slane %v535, 2
      %v552 = vrot.slane %v529, 2
      %v553 = vsel %vm328, %v551, %v552
      %v554 = vrot.slane %v537, 2
      %v555 = vsel %vm328, %v552, %v554
      %v559 = vmax.f32 %v548, %v553
      %v560 = vmax.f32 %v549, %v555
      %v561 = vmax.f32 %v550, %v554
      %v562 = vld [vmem:[%s7] sm:$0xff]
      %v563 = vld [vmem:[%s7 + $0x8] sm:$0x1]
      %vm564 = vcmask 146432
      %v566 = vsel %vm564, %v562, 0
      %v569 = vsel %vm564, %v563, 0
      %vm571 = vcmask 1041408
      %v573 = vsel %vm571, %v561, 0
      %575 = vmatprep.subr.mxu0 0.0
      %576 = vmatpush1.msra.mxu0 0.0
      %577 = vmatprep.subr.mxu0 0.0
      %578 = vmatpush1.msra.mxu0 0.0
      %579 = vmatprep.subr.mxu0 0.0
      %580 = vmatpush1.msra.mxu0 0.0
      %581 = vmatprep.subr.mxu0 0.0
      %582 = vmatpush1.msra.mxu0 0.0
      %583 = vmatprep.subr.mxu0 0.0
      %584 = vmatpush1.msra.mxu0 0.0
      %585 = vmatprep.subr.mxu0 0.0
      %586 = vmatpush1.msra.mxu0 0.0
      %587 = vmatprep.subr.mxu0 0.0
      %588 = vmatpush1.msra.mxu0 0.0
      %589 = vmatprep.subr.mxu0 0.0
      %590 = vmatpush1.msra.mxu0 0.0
      %591 = vmatprep.subr.mxu0 0.0
      %592 = vmatpush1.msra.mxu0 0.0
      %593 = vmatprep.subr.mxu0 0.0
      %594 = vmatpush1.msra.mxu0 0.0
      %595 = vmatprep.subr.mxu0 0.0
      %596 = vmatpush1.msra.mxu0 0.0
      %597 = vmatprep.subr.mxu0 0.0
      %598 = vmatpush1.msra.mxu0 0.0
      %599 = vmatprep.subr.mxu0 0.0
      %600 = vmatpush1.msra.mxu0 0.0
      %601 = vmatprep.subr.mxu0 0.0
      %602 = vmatpush1.msra.mxu0 %v573
      %603 = vmatprep.subr.mxu0 0.0
      %604 = vmatpush1.msra.mxu0 %v560
      %605 = vmatprep.subr.mxu0 0.0
      %606 = vmatpush1.msra.mxu0 %v559
      %607 = vmatprep.subr.mxu0 0.0
      %608 = vmatpush2.msra.mxu0 0.0
      %609 = vmatprep.subr.mxu0 0.0
      %610 = vmatpush2.msra.mxu0 0.0
      %611 = vmatprep.subr.mxu0 0.0
      %612 = vmatpush2.msra.mxu0 0.0
      %613 = vmatprep.subr.mxu0 0.0
      %614 = vmatpush2.msra.mxu0 0.0
      %615 = vmatprep.subr.mxu0 0.0
      %616 = vmatpush2.msra.mxu0 0.0
      %617 = vmatprep.subr.mxu0 0.0
      %618 = vmatpush2.msra.mxu0 0.0
      %619 = vmatprep.subr.mxu0 0.0
      %620 = vmatpush2.msra.mxu0 0.0
      %621 = vmatprep.subr.mxu0 0.0
      %622 = vmatpush2.msra.mxu0 0.0
      %623 = vmatprep.subr.mxu0 0.0
      %624 = vmatpush2.msra.mxu0 0.0
      %625 = vmatprep.subr.mxu0 0.0
      %626 = vmatpush2.msra.mxu0 0.0
      %627 = vmatprep.subr.mxu0 0.0
      %628 = vmatpush2.msra.mxu0 0.0
      %629 = vmatprep.subr.mxu0 0.0
      %630 = vmatpush2.msra.mxu0 0.0
      %631 = vmatprep.subr.mxu0 0.0
      %632 = vmatpush2.msra.mxu0 0.0
      %633 = vmatprep.subr.mxu0 0.0
      %634 = vmatpush2.msra.mxu0 0.0
      %635 = vmatprep.subr.mxu0 0.0
      %636 = vmatpush2.msra.mxu0 0.0
      %637 = vmatprep.subr.mxu0 0.0
      %638 = vmatpush2.msra.mxu0 0.0
      %639 = vmatprep.mubr.f32.mxu0 0.0
      %640 = vmatmul.mubr.f32.gmra.mxu0 %v566
      %v641 = vpop.f32.mrf.mxu0
      %v642 = vadd.f32 0.0, %v641
      %v643 = vpop.f32.mrf.mxu0
      %644 = vmatprep.mubr.f32.mxu0 0.0
      %645 = vmatmul.mubr.f32.gmra.mxu0 %v569
      %v646 = vpop.f32.mrf.mxu0
      %v647 = vadd.f32 0.0, %v646
      %v648 = vpop.f32.mrf.mxu0
      %649 = vdwg.mxu0
      %650 = vst.msk [vmem:[%s305] sm:$0xff] %vm343, %v642
      %vm651 = vcmask 253952
      %652 = vst.msk [vmem:[%s305 + $0x8] sm:$0x1] %vm651, %v647
      %p653 = scmp.lt.s32.totalorder %s19, 1
      %s654 = scalar_select %p653, %s19, 1
      %s655 = smul.addr %s654, 2
      %s656 = smul.addr %s655, 8
      %s657 = scalar_lea.vmem %s8, %s656
      // Predicated region
      $region53: #{_lambda_.10} parent=51 // pred_check
        %p658 = pneg %p210
      $region54: #{_lambda_.10} parent=51 // pred_check_branch
        %660 = sbr.rel (%p658) target = $region56
      $region55: #{_lambda_.10} parent=51 // pred_region
        _
      $region56: #{_lambda_.10} parent=51 // pred_fallthru
        _
    $region52: #{_lambda_.10} parent=5 // pred_fallthru
      _
    %p661 = scmp.le.s32.totalorder 2, %s14
    // Predicated region
    $region57: #{_lambda_.10} parent=5 // pred_check
      %p662 = pneg %p661
    $region58: #{_lambda_.10} parent=5 // pred_check_branch
      %664 = sbr.rel (%p662) target = $region60
    $region59: #{_lambda_.10} parent=5 // pred_region
      %s665 = ssub.s32 %s14, 2
      // Predicated region
      $region61: #{_lambda_.10} parent=59 // pred_check
        %p666 = pneg %p216
      $region62: #{_lambda_.10} parent=59 // pred_check_branch
        %668 = sbr.rel (%p666) target = $region64
      $region63: #{_lambda_.10} parent=59 // pred_region
        %p669 = scmp.lt.s32.totalorder %s20, 1
        %s670 = scalar_select %p669, %s20, 1
        %s671 = smul.addr %s670, 2
        %s672 = smul.addr %s671, 8
        %s673 = scalar_lea.vmem %s8, %s672
      $region64: #{_lambda_.10} parent=59 // pred_fallthru
        _
    $region60: #{_lambda_.10} parent=5 // pred_fallthru
      _
  $region6: #{_lambda_.10} parent=0 // loop_footer
    %s18 = sadd.s32 1, %s14
  $region7: #{_lambda_.10} parent=0 // loop_footer_branch
    %13 = sbr.rel target = $region3
  $region8: #{_lambda_.10} parent=0 // loop_exit
    _

// kernel: _lambda_.11
$region0: #{_lambda_.11}
  #allocation0 [shape = 'u32[]', space=smem, size = 0x4, offset = 0x4, fixed_abs, tag = 'smem constant byte address 0x4 - core index']
  #allocation1 [shape = 'u32[144,128]{1,0:T(1,128)}', space=vmem, size = 0x12000, scoped, tag = 'internal scratch']
  %s0 = inlined_call_operand.vmem [shape: f32[2,9,32], index: 0, kind: input, shape index: {}]
  %s1 = inlined_call_operand.vmem [shape: f32[9,9], index: 1, kind: input, shape index: {}]
  %s2 = inlined_call_operand.vmem [shape: bf16[32,96], index: 2, kind: input, shape index: {}]
  %s3 = inlined_call_operand.vmem [shape: f32[1,96], index: 3, kind: input, shape index: {}]
  %s4 = inlined_call_operand.vmem [shape: bf16[32,32], index: 4, kind: input, shape index: {}]
  %s5 = inlined_call_operand.vmem [shape: f32[1,32], index: 5, kind: input, shape index: {}]
  %s6 = inlined_call_operand.vmem [shape: f32[1,32], index: 6, kind: input, shape index: {}, may-alias: {6,12,14}]
  %s7 = inlined_call_operand.vmem [shape: f32[1,32], index: 7, kind: input, shape index: {}, may-alias: {7,13,15}]
  %s8 = inlined_call_operand.vmem [shape: bf16[32,64], index: 8, kind: input, shape index: {}]
  %s9 = inlined_call_operand.vmem [shape: f32[1,64], index: 9, kind: input, shape index: {}]
  %s10 = inlined_call_operand.vmem [shape: bf16[64,32], index: 10, kind: input, shape index: {}]
  %s11 = inlined_call_operand.vmem [shape: f32[1,32], index: 11, kind: input, shape index: {}]
  %s12 = inlined_call_operand.vmem [shape: f32[1,32], index: 12, kind: input, shape index: {}, may-alias: {6,12,14}]
  %s13 = inlined_call_operand.vmem [shape: f32[1,32], index: 13, kind: input, shape index: {}, may-alias: {7,13,15}]
  %s14 = inlined_call_operand.vmem [shape: f32[1,32], index: 14, kind: input, shape index: {}, may-alias: {6,12,14}]
  %s15 = inlined_call_operand.vmem [shape: f32[1,32], index: 15, kind: input, shape index: {}, may-alias: {7,13,15}]
  %s16 = inlined_call_operand.vmem [shape: f32[2,9,32], index: 16, kind: output, shape index: {}]
  %s17 = sld [smem:[#allocation0]]
  $region97: #{_lambda_.11} parent=0
    _
  %s19 = ssub.s32 1, %s17
  %s20 = scalar_select 0, %s19, %s17
  loop: start=0, step=1, limit=4
  $region2: #{_lambda_.11} parent=0 // loop_pre_header
    _
  $region3: #{_lambda_.11} parent=0 // loop_header
    %s22 = sphi 0, %s26
    %p23 = scmp.ge.s32.totalorder %s22, 4
    %s32 = sphi 0, %s34
    %s35 = sphi 0, %s32
    %s36 = sphi 0, %s35
    %s52 = sphi 0, %s36
    %s56 = sphi 0, %s56
    %s58 = sphi 0, %s56
    %s59 = sphi 0, %s58
    %s73 = sphi 0, %s59
    %s77 = sphi 0, %s77
    %s79 = sphi 0, %s77
    %s80 = sphi 0, %s79
    %s94 = sphi 0, %s80
    %s98 = sphi 0, %s98
    %s100 = sphi 0, %s98
    %s101 = sphi 0, %s100
    %s115 = sphi 0, %s101
    %s119 = sphi 0, %s119
    %s121 = sphi 0, %s119
    %s122 = sphi 0, %s121
    %s136 = sphi 0, %s122
    %s140 = sphi 0, %s140
    %s142 = sphi 0, %s140
    %s143 = sphi 0, %s142
    %s157 = sphi 0, %s143
    %s161 = sphi 0, %s161
    %s163 = sphi 0, %s161
    %s164 = sphi 0, %s163
    %s178 = sphi 0, %s164
    %s182 = sphi 0, %s182
    %s184 = sphi 0, %s182
    %s185 = sphi 0, %s184
    %s199 = sphi 0, %s185
    %s203 = sphi 0, %s203
    %s205 = sphi 0, %s203
    %s206 = sphi 0, %s205
    %s220 = sphi 0, %s206
    %s224 = sphi 0, %s224
    %s226 = sphi 0, %s224
    %s227 = sphi 0, %s226
    %s241 = sphi 0, %s227
    %s245 = sphi 0, %s245
    %s247 = sphi 0, %s245
    %s248 = sphi 0, %s247
    %s262 = sphi 0, %s248
    %s266 = sphi 0, %s266
    %s268 = sphi 0, %s266
    %s269 = sphi 0, %s268
    %s283 = sphi 0, %s269
    %s287 = sphi 0, %s287
    %s289 = sphi 0, %s287
    %s290 = sphi 0, %s289
    %s304 = sphi 0, %s290
    %s308 = sphi 0, %s308
    %s310 = sphi 0, %s308
    %s311 = sphi 0, %s310
    %s325 = sphi 0, %s311
    %s329 = sphi 0, %s329
    %s331 = sphi 0, %s329
    %s332 = sphi 0, %s331
    %s346 = sphi 0, %s332
    %s350 = sphi 0, %s350
    %s352 = sphi 0, %s350
    %s353 = sphi 0, %s352
    %s367 = sphi 0, %s353
    %s373 = sphi 0, %s375
    %s376 = sphi 0, %s373
    %s377 = sphi 0, %s376
    %s393 = sphi 0, %s377
  $region4: #{_lambda_.11} parent=0 // loop_header_branch
    %25 = sbr.rel (%p23) target = $region8
  $region5: #{_lambda_.11} parent=0 // loop_body
    %s27 = ssub.s32 %s22, 1
    %s28 = ssub.s32 %s22, 2
    %s29 = sadd.s32 %s22, 1
    %s30 = ssub.s32 %s22, %s29
    %p31 = scmp.eq.s32.totalorder %s30, 0
    %s33 = sadd.s32 %s32, 1
    %s34 = scalar_select %p31, %s32, %s33
    %p37 = pneg %p31
    %p38 = scmp.eq.s32.totalorder %s22, 1
    %p39 = por %p37, %p38
    %p40 = scmp.ne.s32.totalorder %s32, %s35
    %p41 = scmp.eq.s32.totalorder %s22, 0
    %p42 = por %p40, %p41
    %p43 = scmp.ne.s32.totalorder %s32, %s35
    %p44 = scmp.eq.s32.totalorder %s27, 1
    %p45 = por %p43, %p44
    %p46 = scmp.ne.s32.totalorder %s35, %s36
    %p47 = scmp.eq.s32.totalorder %s27, 0
    %p48 = por %p46, %p47
    %p49 = scmp.ne.s32.totalorder %s35, %s36
    %p50 = scmp.eq.s32.totalorder %s28, 1
    %p51 = por %p49, %p50
    %p53 = scmp.ne.s32.totalorder %s36, %s52
    %p54 = scmp.eq.s32.totalorder %s28, 0
    %p55 = por %p53, %p54
    %s57 = sadd.s32 %s56, 1
    %p60 = scmp.eq.s32.totalorder %s22, 1
    %p61 = scmp.ne.s32.totalorder %s56, %s58
    %p62 = scmp.eq.s32.totalorder %s22, 0
    %p63 = por %p61, %p62
    %p64 = scmp.ne.s32.totalorder %s56, %s58
    %p65 = scmp.eq.s32.totalorder %s27, 1
    %p66 = por %p64, %p65
    %p67 = scmp.ne.s32.totalorder %s58, %s59
    %p68 = scmp.eq.s32.totalorder %s27, 0
    %p69 = por %p67, %p68
    %p70 = scmp.ne.s32.totalorder %s58, %s59
    %p71 = scmp.eq.s32.totalorder %s28, 1
    %p72 = por %p70, %p71
    %p74 = scmp.ne.s32.totalorder %s59, %s73
    %p75 = scmp.eq.s32.totalorder %s28, 0
    %p76 = por %p74, %p75
    %s78 = sadd.s32 %s77, 1
    %p81 = scmp.eq.s32.totalorder %s22, 1
    %p82 = scmp.ne.s32.totalorder %s77, %s79
    %p83 = scmp.eq.s32.totalorder %s22, 0
    %p84 = por %p82, %p83
    %p85 = scmp.ne.s32.totalorder %s77, %s79
    %p86 = scmp.eq.s32.totalorder %s27, 1
    %p87 = por %p85, %p86
    %p88 = scmp.ne.s32.totalorder %s79, %s80
    %p89 = scmp.eq.s32.totalorder %s27, 0
    %p90 = por %p88, %p89
    %p91 = scmp.ne.s32.totalorder %s79, %s80
    %p92 = scmp.eq.s32.totalorder %s28, 1
    %p93 = por %p91, %p92
    %p95 = scmp.ne.s32.totalorder %s80, %s94
    %p96 = scmp.eq.s32.totalorder %s28, 0
    %p97 = por %p95, %p96
    %s99 = sadd.s32 %s98, 1
    %p102 = scmp.eq.s32.totalorder %s22, 1
    %p103 = scmp.ne.s32.totalorder %s98, %s100
    %p104 = scmp.eq.s32.totalorder %s22, 0
    %p105 = por %p103, %p104
    %p106 = scmp.ne.s32.totalorder %s98, %s100
    %p107 = scmp.eq.s32.totalorder %s27, 1
    %p108 = por %p106, %p107
    %p109 = scmp.ne.s32.totalorder %s100, %s101
    %p110 = scmp.eq.s32.totalorder %s27, 0
    %p111 = por %p109, %p110
    %p112 = scmp.ne.s32.totalorder %s100, %s101
    %p113 = scmp.eq.s32.totalorder %s28, 1
    %p114 = por %p112, %p113
    %p116 = scmp.ne.s32.totalorder %s101, %s115
    %p117 = scmp.eq.s32.totalorder %s28, 0
    %p118 = por %p116, %p117
    %s120 = sadd.s32 %s119, 1
    %p123 = scmp.eq.s32.totalorder %s22, 1
    %p124 = scmp.ne.s32.totalorder %s119, %s121
    %p125 = scmp.eq.s32.totalorder %s22, 0
    %p126 = por %p124, %p125
    %p127 = scmp.ne.s32.totalorder %s119, %s121
    %p128 = scmp.eq.s32.totalorder %s27, 1
    %p129 = por %p127, %p128
    %p130 = scmp.ne.s32.totalorder %s121, %s122
    %p131 = scmp.eq.s32.totalorder %s27, 0
    %p132 = por %p130, %p131
    %p133 = scmp.ne.s32.totalorder %s121, %s122
    %p134 = scmp.eq.s32.totalorder %s28, 1
    %p135 = por %p133, %p134
    %p137 = scmp.ne.s32.totalorder %s122, %s136
    %p138 = scmp.eq.s32.totalorder %s28, 0
    %p139 = por %p137, %p138
    %s141 = sadd.s32 %s140, 1
    %p144 = scmp.eq.s32.totalorder %s22, 1
    %p145 = scmp.ne.s32.totalorder %s140, %s142
    %p146 = scmp.eq.s32.totalorder %s22, 0
    %p147 = por %p145, %p146
    %p148 = scmp.ne.s32.totalorder %s140, %s142
    %p149 = scmp.eq.s32.totalorder %s27, 1
    %p150 = por %p148, %p149
    %p151 = scmp.ne.s32.totalorder %s142, %s143
    %p152 = scmp.eq.s32.totalorder %s27, 0
    %p153 = por %p151, %p152
    %p154 = scmp.ne.s32.totalorder %s142, %s143
    %p155 = scmp.eq.s32.totalorder %s28, 1
    %p156 = por %p154, %p155
    %p158 = scmp.ne.s32.totalorder %s143, %s157
    %p159 = scmp.eq.s32.totalorder %s28, 0
    %p160 = por %p158, %p159
    %s162 = sadd.s32 %s161, 1
    %p165 = scmp.eq.s32.totalorder %s22, 1
    %p166 = scmp.ne.s32.totalorder %s161, %s163
    %p167 = scmp.eq.s32.totalorder %s22, 0
    %p168 = por %p166, %p167
    %p169 = scmp.ne.s32.totalorder %s161, %s163
    %p170 = scmp.eq.s32.totalorder %s27, 1
    %p171 = por %p169, %p170
    %p172 = scmp.ne.s32.totalorder %s163, %s164
    %p173 = scmp.eq.s32.totalorder %s27, 0
    %p174 = por %p172, %p173
    %p175 = scmp.ne.s32.totalorder %s163, %s164
    %p176 = scmp.eq.s32.totalorder %s28, 1
    %p177 = por %p175, %p176
    %p179 = scmp.ne.s32.totalorder %s164, %s178
    %p180 = scmp.eq.s32.totalorder %s28, 0
    %p181 = por %p179, %p180
    %s183 = sadd.s32 %s182, 1
    %p186 = scmp.eq.s32.totalorder %s22, 1
    %p187 = scmp.ne.s32.totalorder %s182, %s184
    %p188 = scmp.eq.s32.totalorder %s22, 0
    %p189 = por %p187, %p188
    %p190 = scmp.ne.s32.totalorder %s182, %s184
    %p191 = scmp.eq.s32.totalorder %s27, 1
    %p192 = por %p190, %p191
    %p193 = scmp.ne.s32.totalorder %s184, %s185
    %p194 = scmp.eq.s32.totalorder %s27, 0
    %p195 = por %p193, %p194
    %p196 = scmp.ne.s32.totalorder %s184, %s185
    %p197 = scmp.eq.s32.totalorder %s28, 1
    %p198 = por %p196, %p197
    %p200 = scmp.ne.s32.totalorder %s185, %s199
    %p201 = scmp.eq.s32.totalorder %s28, 0
    %p202 = por %p200, %p201
    %s204 = sadd.s32 %s203, 1
    %p207 = scmp.eq.s32.totalorder %s22, 1
    %p208 = scmp.ne.s32.totalorder %s203, %s205
    %p209 = scmp.eq.s32.totalorder %s22, 0
    %p210 = por %p208, %p209
    %p211 = scmp.ne.s32.totalorder %s203, %s205
    %p212 = scmp.eq.s32.totalorder %s27, 1
    %p213 = por %p211, %p212
    %p214 = scmp.ne.s32.totalorder %s205, %s206
    %p215 = scmp.eq.s32.totalorder %s27, 0
    %p216 = por %p214, %p215
    %p217 = scmp.ne.s32.totalorder %s205, %s206
    %p218 = scmp.eq.s32.totalorder %s28, 1
    %p219 = por %p217, %p218
    %p221 = scmp.ne.s32.totalorder %s206, %s220
    %p222 = scmp.eq.s32.totalorder %s28, 0
    %p223 = por %p221, %p222
    %s225 = sadd.s32 %s224, 1
    %p228 = scmp.eq.s32.totalorder %s22, 1
    %p229 = scmp.ne.s32.totalorder %s224, %s226
    %p230 = scmp.eq.s32.totalorder %s22, 0
    %p231 = por %p229, %p230
    %p232 = scmp.ne.s32.totalorder %s224, %s226
    %p233 = scmp.eq.s32.totalorder %s27, 1
    %p234 = por %p232, %p233
    %p235 = scmp.ne.s32.totalorder %s226, %s227
    %p236 = scmp.eq.s32.totalorder %s27, 0
    %p237 = por %p235, %p236
    %p238 = scmp.ne.s32.totalorder %s226, %s227
    %p239 = scmp.eq.s32.totalorder %s28, 1
    %p240 = por %p238, %p239
    %p242 = scmp.ne.s32.totalorder %s227, %s241
    %p243 = scmp.eq.s32.totalorder %s28, 0
    %p244 = por %p242, %p243
    %s246 = sadd.s32 %s245, 1
    %p249 = scmp.eq.s32.totalorder %s22, 1
    %p250 = scmp.ne.s32.totalorder %s245, %s247
    %p251 = scmp.eq.s32.totalorder %s22, 0
    %p252 = por %p250, %p251
    %p253 = scmp.ne.s32.totalorder %s245, %s247
    %p254 = scmp.eq.s32.totalorder %s27, 1
    %p255 = por %p253, %p254
    %p256 = scmp.ne.s32.totalorder %s247, %s248
    %p257 = scmp.eq.s32.totalorder %s27, 0
    %p258 = por %p256, %p257
    %p259 = scmp.ne.s32.totalorder %s247, %s248
    %p260 = scmp.eq.s32.totalorder %s28, 1
    %p261 = por %p259, %p260
    %p263 = scmp.ne.s32.totalorder %s248, %s262
    %p264 = scmp.eq.s32.totalorder %s28, 0
    %p265 = por %p263, %p264
    %s267 = sadd.s32 %s266, 1
    %p270 = scmp.eq.s32.totalorder %s22, 1
    %p271 = scmp.ne.s32.totalorder %s266, %s268
    %p272 = scmp.eq.s32.totalorder %s22, 0
    %p273 = por %p271, %p272
    %p274 = scmp.ne.s32.totalorder %s266, %s268
    %p275 = scmp.eq.s32.totalorder %s27, 1
    %p276 = por %p274, %p275
    %p277 = scmp.ne.s32.totalorder %s268, %s269
    %p278 = scmp.eq.s32.totalorder %s27, 0
    %p279 = por %p277, %p278
    %p280 = scmp.ne.s32.totalorder %s268, %s269
    %p281 = scmp.eq.s32.totalorder %s28, 1
    %p282 = por %p280, %p281
    %p284 = scmp.ne.s32.totalorder %s269, %s283
    %p285 = scmp.eq.s32.totalorder %s28, 0
    %p286 = por %p284, %p285
    %s288 = sadd.s32 %s287, 1
    %p291 = scmp.eq.s32.totalorder %s22, 1
    %p292 = scmp.ne.s32.totalorder %s287, %s289
    %p293 = scmp.eq.s32.totalorder %s22, 0
    %p294 = por %p292, %p293
    %p295 = scmp.ne.s32.totalorder %s287, %s289
    %p296 = scmp.eq.s32.totalorder %s27, 1
    %p297 = por %p295, %p296
    %p298 = scmp.ne.s32.totalorder %s289, %s290
    %p299 = scmp.eq.s32.totalorder %s27, 0
    %p300 = por %p298, %p299
    %p301 = scmp.ne.s32.totalorder %s289, %s290
    %p302 = scmp.eq.s32.totalorder %s28, 1
    %p303 = por %p301, %p302
    %p305 = scmp.ne.s32.totalorder %s290, %s304
    %p306 = scmp.eq.s32.totalorder %s28, 0
    %p307 = por %p305, %p306
    %s309 = sadd.s32 %s308, 1
    %p312 = scmp.eq.s32.totalorder %s22, 1
    %p313 = scmp.ne.s32.totalorder %s308, %s310
    %p314 = scmp.eq.s32.totalorder %s22, 0
    %p315 = por %p313, %p314
    %p316 = scmp.ne.s32.totalorder %s308, %s310
    %p317 = scmp.eq.s32.totalorder %s27, 1
    %p318 = por %p316, %p317
    %p319 = scmp.ne.s32.totalorder %s310, %s311
    %p320 = scmp.eq.s32.totalorder %s27, 0
    %p321 = por %p319, %p320
    %p322 = scmp.ne.s32.totalorder %s310, %s311
    %p323 = scmp.eq.s32.totalorder %s28, 1
    %p324 = por %p322, %p323
    %p326 = scmp.ne.s32.totalorder %s311, %s325
    %p327 = scmp.eq.s32.totalorder %s28, 0
    %p328 = por %p326, %p327
    %s330 = sadd.s32 %s329, 1
    %p333 = scmp.eq.s32.totalorder %s22, 1
    %p334 = scmp.ne.s32.totalorder %s329, %s331
    %p335 = scmp.eq.s32.totalorder %s22, 0
    %p336 = por %p334, %p335
    %p337 = scmp.ne.s32.totalorder %s329, %s331
    %p338 = scmp.eq.s32.totalorder %s27, 1
    %p339 = por %p337, %p338
    %p340 = scmp.ne.s32.totalorder %s331, %s332
    %p341 = scmp.eq.s32.totalorder %s27, 0
    %p342 = por %p340, %p341
    %p343 = scmp.ne.s32.totalorder %s331, %s332
    %p344 = scmp.eq.s32.totalorder %s28, 1
    %p345 = por %p343, %p344
    %p347 = scmp.ne.s32.totalorder %s332, %s346
    %p348 = scmp.eq.s32.totalorder %s28, 0
    %p349 = por %p347, %p348
    %s351 = sadd.s32 %s350, 1
    %p354 = scmp.eq.s32.totalorder %s22, 1
    %p355 = scmp.ne.s32.totalorder %s350, %s352
    %p356 = scmp.eq.s32.totalorder %s22, 0
    %p357 = por %p355, %p356
    %p358 = scmp.ne.s32.totalorder %s350, %s352
    %p359 = scmp.eq.s32.totalorder %s27, 1
    %p360 = por %p358, %p359
    %p361 = scmp.ne.s32.totalorder %s352, %s353
    %p362 = scmp.eq.s32.totalorder %s27, 0
    %p363 = por %p361, %p362
    %p364 = scmp.ne.s32.totalorder %s352, %s353
    %p365 = scmp.eq.s32.totalorder %s28, 1
    %p366 = por %p364, %p365
    %p368 = scmp.ne.s32.totalorder %s353, %s367
    %p369 = scmp.eq.s32.totalorder %s28, 0
    %p370 = por %p368, %p369
    %s371 = ssub.s32 %s22, %s29
    %p372 = scmp.eq.s32.totalorder %s371, 0
    %s374 = sadd.s32 %s373, 1
    %s375 = scalar_select %p372, %s373, %s374
    %p378 = pneg %p372
    %p379 = scmp.eq.s32.totalorder %s22, 1
    %p380 = por %p378, %p379
    %p381 = scmp.ne.s32.totalorder %s373, %s376
    %p382 = scmp.eq.s32.totalorder %s22, 0
    %p383 = por %p381, %p382
    %p384 = scmp.ne.s32.totalorder %s373, %s376
    %p385 = scmp.eq.s32.totalorder %s27, 1
    %p386 = por %p384, %p385
    %p387 = scmp.ne.s32.totalorder %s376, %s377
    %p388 = scmp.eq.s32.totalorder %s27, 0
    %p389 = por %p387, %p388
    %p390 = scmp.ne.s32.totalorder %s376, %s377
    %p391 = scmp.eq.s32.totalorder %s28, 1
    %p392 = por %p390, %p391
    %p394 = scmp.ne.s32.totalorder %s377, %s393
    %p395 = scmp.eq.s32.totalorder %s28, 0
    %p396 = por %p394, %p395
    %p397 = scmp.le.s32.totalorder 1, %s22
    %p398 = scmp.lt.s32.totalorder %s22, 3
    %p399 = pnand %p397, %p398
    %p400 = pneg %p399
    // Predicated region
    $region9: #{_lambda_.11} parent=5 // pred_check
      _
    $region10: #{_lambda_.11} parent=5 // pred_check_branch
      %402 = sbr.rel (%p399) target = $region12
    $region11: #{_lambda_.11} parent=5 // pred_region
      %s403 = ssub.s32 %s22, 1
      // Predicated region
      $region13: #{_lambda_.11} parent=11 // pred_check
        %p404 = pneg %p69
      $region14: #{_lambda_.11} parent=11 // pred_check_branch
        %406 = sbr.rel (%p404) target = $region16
      $region15: #{_lambda_.11} parent=11 // pred_region
        _
      $region16: #{_lambda_.11} parent=11 // pred_fallthru
        _
      // Predicated region
      $region17: #{_lambda_.11} parent=11 // pred_check
        %p407 = pneg %p90
      $region18: #{_lambda_.11} parent=11 // pred_check_branch
        %409 = sbr.rel (%p407) target = $region20
      $region19: #{_lambda_.11} parent=11 // pred_region
        _
      $region20: #{_lambda_.11} parent=11 // pred_fallthru
        _
      // Predicated region
      $region21: #{_lambda_.11} parent=11 // pred_check
        %p410 = pneg %p111
      $region22: #{_lambda_.11} parent=11 // pred_check_branch
        %412 = sbr.rel (%p410) target = $region24
      $region23: #{_lambda_.11} parent=11 // pred_region
        _
      $region24: #{_lambda_.11} parent=11 // pred_fallthru
        _
      // Predicated region
      $region25: #{_lambda_.11} parent=11 // pred_check
        %p413 = pneg %p132
      $region26: #{_lambda_.11} parent=11 // pred_check_branch
        %415 = sbr.rel (%p413) target = $region28
      $region27: #{_lambda_.11} parent=11 // pred_region
        _
      $region28: #{_lambda_.11} parent=11 // pred_fallthru
        _
      // Predicated region
      $region29: #{_lambda_.11} parent=11 // pred_check
        %p416 = pneg %p153
      $region30: #{_lambda_.11} parent=11 // pred_check_branch
        %418 = sbr.rel (%p416) target = $region32
      $region31: #{_lambda_.11} parent=11 // pred_region
        _
      $region32: #{_lambda_.11} parent=11 // pred_fallthru
        _
      // Predicated region
      $region33: #{_lambda_.11} parent=11 // pred_check
        %p419 = pneg %p174
      $region34: #{_lambda_.11} parent=11 // pred_check_branch
        %421 = sbr.rel (%p419) target = $region36
      $region35: #{_lambda_.11} parent=11 // pred_region
        _
      $region36: #{_lambda_.11} parent=11 // pred_fallthru
        _
      // Predicated region
      $region37: #{_lambda_.11} parent=11 // pred_check
        %p422 = pneg %p195
      $region38: #{_lambda_.11} parent=11 // pred_check_branch
        %424 = sbr.rel (%p422) target = $region40
      $region39: #{_lambda_.11} parent=11 // pred_region
        _
      $region40: #{_lambda_.11} parent=11 // pred_fallthru
        _
      // Predicated region
      $region41: #{_lambda_.11} parent=11 // pred_check
        %p425 = pneg %p216
      $region42: #{_lambda_.11} parent=11 // pred_check_branch
        %427 = sbr.rel (%p425) target = $region44
      $region43: #{_lambda_.11} parent=11 // pred_region
        _
      $region44: #{_lambda_.11} parent=11 // pred_fallthru
        _
      // Predicated region
      $region45: #{_lambda_.11} parent=11 // pred_check
        %p428 = pneg %p237
      $region46: #{_lambda_.11} parent=11 // pred_check_branch
        %430 = sbr.rel (%p428) target = $region48
      $region47: #{_lambda_.11} parent=11 // pred_region
        _
      $region48: #{_lambda_.11} parent=11 // pred_fallthru
        _
      // Predicated region
      $region49: #{_lambda_.11} parent=11 // pred_check
        %p431 = pneg %p258
      $region50: #{_lambda_.11} parent=11 // pred_check_branch
        %433 = sbr.rel (%p431) target = $region52
      $region51: #{_lambda_.11} parent=11 // pred_region
        _
      $region52: #{_lambda_.11} parent=11 // pred_fallthru
        _
      // Predicated region
      $region53: #{_lambda_.11} parent=11 // pred_check
        %p434 = pneg %p279
      $region54: #{_lambda_.11} parent=11 // pred_check_branch
        %436 = sbr.rel (%p434) target = $region56
      $region55: #{_lambda_.11} parent=11 // pred_region
        _
      $region56: #{_lambda_.11} parent=11 // pred_fallthru
        _
      // Predicated region
      $region57: #{_lambda_.11} parent=11 // pred_check
        %p437 = pneg %p300
      $region58: #{_lambda_.11} parent=11 // pred_check_branch
        %439 = sbr.rel (%p437) target = $region60
      $region59: #{_lambda_.11} parent=11 // pred_region
        _
      $region60: #{_lambda_.11} parent=11 // pred_fallthru
        _
      // Predicated region
      $region61: #{_lambda_.11} parent=11 // pred_check
        %p440 = pneg %p321
      $region62: #{_lambda_.11} parent=11 // pred_check_branch
        %442 = sbr.rel (%p440) target = $region64
      $region63: #{_lambda_.11} parent=11 // pred_region
        _
      $region64: #{_lambda_.11} parent=11 // pred_fallthru
        _
      // Predicated region
      $region65: #{_lambda_.11} parent=11 // pred_check
        %p443 = pneg %p342
      $region66: #{_lambda_.11} parent=11 // pred_check_branch
        %445 = sbr.rel (%p443) target = $region68
      $region67: #{_lambda_.11} parent=11 // pred_region
        _
      $region68: #{_lambda_.11} parent=11 // pred_fallthru
        _
      // Predicated region
      $region69: #{_lambda_.11} parent=11 // pred_check
        %p446 = pneg %p363
      $region70: #{_lambda_.11} parent=11 // pred_check_branch
        %448 = sbr.rel (%p446) target = $region72
      $region71: #{_lambda_.11} parent=11 // pred_region
        _
      $region72: #{_lambda_.11} parent=11 // pred_fallthru
        _
    $region12: #{_lambda_.11} parent=5 // pred_fallthru
      _
    %p449 = scmp.lt.s32.totalorder %s22, 2
    // Predicated region
    $region73: #{_lambda_.11} parent=5 // pred_check
      %p450 = pneg %p449
    $region74: #{_lambda_.11} parent=5 // pred_check_branch
      %452 = sbr.rel (%p450) target = $region76
    $region75: #{_lambda_.11} parent=5 // pred_region
      // Predicated region
      $region77: #{_lambda_.11} parent=75 // pred_check
        %p453 = pneg %p42
      $region78: #{_lambda_.11} parent=75 // pred_check_branch
        %455 = sbr.rel (%p453) target = $region80
      $region79: #{_lambda_.11} parent=75 // pred_region
        %p456 = scmp.lt.s32.totalorder %s22, 1
        %s457 = scalar_select %p456, %s22, 1
        %s458 = smul.addr %s457, 2
        %s459 = smul.addr %s458, 8
        %s460 = scalar_lea.vmem %s0, %s459
      $region80: #{_lambda_.11} parent=75 // pred_fallthru
        _
    $region76: #{_lambda_.11} parent=5 // pred_fallthru
      _
    %p461 = scmp.le.s32.totalorder 1, %s22
    %p462 = scmp.lt.s32.totalorder %s22, 3
    %p463 = pnand %p461, %p462
    %p464 = pneg %p463
    // Predicated region
    $region81: #{_lambda_.11} parent=5 // pred_check
      _
    $region82: #{_lambda_.11} parent=5 // pred_check_branch
      %466 = sbr.rel (%p463) target = $region84
    $region83: #{_lambda_.11} parent=5 // pred_region
      %s467 = ssub.s32 %s22, 1
      %p468 = scmp.lt.s32.totalorder %s27, 1
      %s469 = scalar_select %p468, %s27, 1
      %s470 = smul.addr %s469, 2
      %s471 = smul.addr %s470, 8
      %s472 = scalar_lea.vmem %s0, %s471
      %p473 = pneg %p48
      %p474 = pneg %p45
      %p475 = pneg %p69
      %p476 = pneg %p66
      %p477 = pneg %p90
      %p478 = pneg %p87
      %p479 = pneg %p111
      %p480 = pneg %p108
      %p481 = pneg %p132
      %p482 = pneg %p129
      %p483 = pneg %p153
      %p484 = pneg %p150
      %p485 = pneg %p174
      %p486 = pneg %p171
      %p487 = pneg %p195
      %p488 = pneg %p192
      %p489 = pneg %p216
      %p490 = pneg %p213
      %p491 = pneg %p237
      %p492 = pneg %p234
      %p493 = pneg %p258
      %p494 = pneg %p255
      %p495 = pneg %p279
      %p496 = pneg %p276
      %p497 = pneg %p300
      %p498 = pneg %p297
      %p499 = pneg %p321
      %p500 = pneg %p318
      %p501 = pneg %p342
      %p502 = pneg %p339
      %p503 = pneg %p363
      %p504 = pneg %p360
      %p505 = pneg %p389
      %p506 = pneg %p386
      %p507 = scmp.lt.s32.totalorder %s27, 1
      %s508 = scalar_select %p507, %s27, 1
      %s509 = smul.addr %s508, 2
      %s510 = smul.addr %s509, 8
      %s511 = scalar_lea.vmem %s16, %s510
      %p512 = scmp.lt.s32.totalorder %s27, 1
      %s513 = scalar_select %p512, %s27, 1
      %s514 = smul.addr %s513, 2
      %s515 = smul.addr %s514, 8
      %s516 = scalar_lea.vmem %s0, %s515
      %p517 = scmp.lt.s32.totalorder %s27, 1
      %s518 = scalar_select %p517, %s27, 1
      %s519 = smul.addr %s518, 2
      %s520 = smul.addr %s519, 8
      %s521 = scalar_lea.vmem %s16, %s520
      %v523 = vld [vmem:[%s516] sm:$0xff]
      %v524 = vld [vmem:[%s516 + $0x8] sm:$0x1]
      %v525 = vld [vmem:[%s2] sm:$0xf]
      %v526 = vld [vmem:[%s2 + $0x4] sm:$0xf]
      %v527 = vld [vmem:[%s2 + $0x8] sm:$0xf]
      %v528 = vld [vmem:[%s2 + $0xc] sm:$0xf]
      %v529 = vld [vmem:[%s3] sm:$0x1]
      %v530 = vld [vmem:[%s4] sm:$0xf]
      %v531 = vld [vmem:[%s4 + $0x4] sm:$0xf]
      %v532 = vld [vmem:[%s4 + $0x8] sm:$0xf]
      %v533 = vld [vmem:[%s4 + $0xc] sm:$0xf]
      %v534 = vld [vmem:[%s5] sm:$0x1]
      %v535 = vpack.c.bf16 %v524, %v523
      %v537 = vlaneseq
      %v538 = vshrl.u32 %v537, 7
      %v539 = vsub.s32 0, %v538
      %v540 = vrot.slane %v529, %v539
      %v546 = vunpack.c.l.b16 %v525
      %v547 = vunpack.c.l.b16 %v526
      %v548 = vunpack.c.l.b16 %v527
      %v549 = vunpack.c.l.b16 %v528
      %v550 = vpack.c.b16 %v547, %v546
      %v551 = vpack.c.b16 %v549, %v548
      %vm554 = vcmask 261120
      %v556 = vsel %vm554, %v535, 0
      %558 = vmatprep.subr.bf16.mxu0 0
      %559 = vmatpush1.bf16.msra.mxu0 0
      %560 = vmatprep.subr.bf16.mxu0 0
      %561 = vmatpush1.bf16.msra.mxu0 0
      %562 = vmatprep.subr.bf16.mxu0 0
      %563 = vmatpush1.bf16.msra.mxu0 0
      %564 = vmatprep.subr.bf16.mxu0 0
      %565 = vmatpush1.bf16.msra.mxu0 0
      %566 = vmatprep.subr.bf16.mxu0 0
      %567 = vmatpush1.bf16.msra.mxu0 0
      %568 = vmatprep.subr.bf16.mxu0 0
      %569 = vmatpush1.bf16.msra.mxu0 0
      %570 = vmatprep.subr.bf16.mxu0 0
      %571 = vmatpush1.bf16.msra.mxu0 %v551
      %572 = vmatprep.subr.bf16.mxu0 0
      %573 = vmatpush1.bf16.msra.mxu0 %v550
      %574 = vmatprep.subr.bf16.mxu0 0
      %575 = vmatpush2.bf16.msra.mxu0 0
      %576 = vmatprep.subr.bf16.mxu0 0
      %577 = vmatpush2.bf16.msra.mxu0 0
      %578 = vmatprep.subr.bf16.mxu0 0
      %579 = vmatpush2.bf16.msra.mxu0 0
      %580 = vmatprep.subr.bf16.mxu0 0
      %581 = vmatpush2.bf16.msra.mxu0 0
      %582 = vmatprep.subr.bf16.mxu0 0
      %583 = vmatpush2.bf16.msra.mxu0 0
      %584 = vmatprep.subr.bf16.mxu0 0
      %585 = vmatpush2.bf16.msra.mxu0 0
      %586 = vmatprep.subr.bf16.mxu0 0
      %587 = vmatpush2.bf16.msra.mxu0 0
      %588 = vmatprep.subr.bf16.mxu0 0
      %589 = vmatpush2.bf16.msra.mxu0 0
      %590 = vmatprep.mubr.bf16.mxu0 0
      %591 = vmatmul.mubr.bf16.gmra.mxu0 %v556
      %v592 = vpop.f32.mrf.mxu0
      %v593 = vadd.f32 %v540, %v592
      %v594 = vpop.f32.mrf.mxu0
      %v595 = vpop.f32.mrf.mxu0
      %v596 = vadd.f32 %v540, %v595
      %v597 = vpop.f32.mrf.mxu0
      %598 = vdwg.mxu0
      %v599 = vpack.c.bf16 %v596, %v593
      %601 = vrot.lane.b32.xlu0 %v599, 96
      %v602 = vpop.permute.xlu0 %601
      %vm603 = vcmask 64512
      %v605 = vsel %vm603, %v599, 0
      %v608 = vsel %vm603, %v602, 0
      %610 = vmatprep.subr.bf16.mxu0 0
      %611 = vmatpush1.bf16.xpose.msra.mxu0 0
      %612 = vmatprep.subr.bf16.mxu0 0
      %613 = vmatpush1.bf16.xpose.msra.mxu0 0
      %614 = vmatprep.subr.bf16.mxu0 0
      %615 = vmatpush1.bf16.xpose.msra.mxu0 0
      %616 = vmatprep.subr.bf16.mxu0 0
      %617 = vmatpush1.bf16.xpose.msra.mxu0 0
      %618 = vmatprep.subr.bf16.mxu0 0
      %619 = vmatpush1.bf16.xpose.msra.mxu0 0
      %620 = vmatprep.subr.bf16.mxu0 0
      %621 = vmatpush1.bf16.xpose.msra.mxu0 0
      %622 = vmatprep.subr.bf16.mxu0 0
      %623 = vmatpush1.bf16.xpose.msra.mxu0 0
      %624 = vmatprep.subr.bf16.mxu0 0
      %625 = vmatpush1.bf16.xpose.msra.mxu0 %v608
      %626 = vmatprep.subr.bf16.mxu0 0
      %627 = vmatpush2.bf16.xpose.msra.mxu0 0
      %628 = vmatprep.subr.bf16.mxu0 0
      %629 = vmatpush2.bf16.xpose.msra.mxu0 0
      %630 = vmatprep.subr.bf16.mxu0 0
      %631 = vmatpush2.bf16.xpose.msra.mxu0 0
      %632 = vmatprep.subr.bf16.mxu0 0
      %633 = vmatpush2.bf16.xpose.msra.mxu0 0
      %634 = vmatprep.subr.bf16.mxu0 0
      %635 = vmatpush2.bf16.xpose.msra.mxu0 0
      %636 = vmatprep.subr.bf16.mxu0 0
      %637 = vmatpush2.bf16.xpose.msra.mxu0 0
      %638 = vmatprep.subr.bf16.mxu0 0
      %639 = vmatpush2.bf16.xpose.msra.mxu0 0
      %640 = vmatprep.subr.bf16.mxu0 0
      %641 = vmatpush2.bf16.xpose.msra.mxu0 0
      %642 = vmatprep.mubr.bf16.mxu0 0
      %643 = vmatmul.mubr.bf16.gmra.mxu0 %v605
      %v644 = vpop.f32.mrf.mxu0
      %v645 = vadd.f32 0.0, %v644
      %v646 = vpop.f32.mrf.mxu0
      %v647 = vpop.f32.mrf.mxu0
      %v648 = vadd.f32 0.0, %v647
      %v649 = vpop.f32.mrf.mxu0
      %650 = vdwg.mxu0
      %v651 = vmul.f32 %v645, 0.35355338
      %v652 = vmul.f32 %v648, 0.35355338
      %vm653 = vcmask 72704
      %v654 = vsel %vm653, %v651, -inf
      %655 = vmax.xlane.f32.xlu0 %v654
      %v656 = vpop.xlane.xlu0 %655
      %vm657 = vcmask 65536
      %v658 = vsel %vm657, %v652, -inf
      %659 = vmax.xlane.f32.xlu0 %v658
      %v660 = vpop.xlane.xlu0 %659
      %v661 = vsub.f32 %v651, %v656
      %v662 = vsub.f32 %v652, %v660
      %v663 = vmul.f32 %v661, 1.442695
      %v664 = vpow.pop %v663
      %v665 = vmul.f32 %v662, 1.442695
      %v666 = vpow.pop %v665
      %v667 = vsel %vm653, %v664, 0.0
      %668 = vadd.xlane.f32.xlu0 %v667
      %v669 = vpop.xlane.xlu0 %668
      %v670 = vsel %vm657, %v666, 0.0
      %671 = vadd.xlane.f32.xlu0 %v670
      %v672 = vpop.xlane.xlu0 %671
      %v673 = vrcp.pop %v669
      %v674 = vrcp.pop %v672
      %v675 = vmul.f32 %v664, %v673
      %v676 = vmul.f32 %v666, %v674
      %v677 = vpack.c.bf16 %v676, %v675
      %678 = vrot.lane.b32.xlu0 %v599, 64
      %v679 = vpop.permute.xlu0 %678
      %v681 = vsel %vm653, %v677, 0
      %vm683 = vcmask 1043456
      %vm684 = vcmask 1044480
      %v685 = vsel %vm683, 4294967295, 65535
      %v686 = vsel %vm684, %v685, 0
      %v688 = vand.u32 %v679, %v686
      %690 = vmatprep.subr.bf16.mxu0 0
      %691 = vmatpush1.bf16.msra.mxu0 0
      %692 = vmatprep.subr.bf16.mxu0 0
      %693 = vmatpush1.bf16.msra.mxu0 0
      %694 = vmatprep.subr.bf16.mxu0 0
      %695 = vmatpush1.bf16.msra.mxu0 0
      %696 = vmatprep.subr.bf16.mxu0 0
      %697 = vmatpush1.bf16.msra.mxu0 0
      %698 = vmatprep.subr.bf16.mxu0 0
      %699 = vmatpush1.bf16.msra.mxu0 0
      %700 = vmatprep.subr.bf16.mxu0 0
      %701 = vmatpush1.bf16.msra.mxu0 0
      %702 = vmatprep.subr.bf16.mxu0 0
      %703 = vmatpush1.bf16.msra.mxu0 0
      %704 = vmatprep.subr.bf16.mxu0 0
      %705 = vmatpush1.bf16.msra.mxu0 %v688
      %706 = vmatprep.subr.bf16.mxu0 0
      %707 = vmatpush2.bf16.msra.mxu0 0
      %708 = vmatprep.subr.bf16.mxu0 0
      %709 = vmatpush2.bf16.msra.mxu0 0
      %710 = vmatprep.subr.bf16.mxu0 0
      %711 = vmatpush2.bf16.msra.mxu0 0
      %712 = vmatprep.subr.bf16.mxu0 0
      %713 = vmatpush2.bf16.msra.mxu0 0
      %714 = vmatprep.subr.bf16.mxu0 0
      %715 = vmatpush2.bf16.msra.mxu0 0
      %716 = vmatprep.subr.bf16.mxu0 0
      %717 = vmatpush2.bf16.msra.mxu0 0
      %718 = vmatprep.subr.bf16.mxu0 0
      %719 = vmatpush2.bf16.msra.mxu0 0
      %720 = vmatprep.subr.bf16.mxu0 0
      %721 = vmatpush2.bf16.msra.mxu0 0
      %722 = vmatprep.mubr.bf16.mxu0 0
      %723 = vmatmul.mubr.bf16.gmra.mxu0 %v681
      %v724 = vpop.f32.mrf.mxu0
      %v725 = vadd.f32 0.0, %v724
      %v726 = vpop.f32.mrf.mxu0
      %v727 = vpop.f32.mrf.mxu0
      %v728 = vadd.f32 0.0, %v727
      %v729 = vpop.f32.mrf.mxu0
      %730 = vdwg.mxu0
      %731 = vrot.lane.b32.xlu0 %v599, 120
      %v732 = vpop.permute.xlu0 %731
      %733 = vrot.lane.b32.xlu0 %v599, 88
      %v734 = vpop.permute.xlu0 %733
      %v736 = vsel %vm603, %v732, 0
      %v739 = vsel %vm603, %v734, 0
      %741 = vmatprep.subr.bf16.mxu0 0
      %742 = vmatpush1.bf16.xpose.msra.mxu0 0
      %743 = vmatprep.subr.bf16.mxu0 0
      %744 = vmatpush1.bf16.xpose.msra.mxu0 0
      %745 = vmatprep.subr.bf16.mxu0 0
      %746 = vmatpush1.bf16.xpose.msra.mxu0 0
      %747 = vmatprep.subr.bf16.mxu0 0
      %748 = vmatpush1.bf16.xpose.msra.mxu0 0
      %749 = vmatprep.subr.bf16.mxu0 0
      %750 = vmatpush1.bf16.xpose.msra.mxu0 0
      %751 = vmatprep.subr.bf16.mxu0 0
      %752 = vmatpush1.bf16.xpose.msra.mxu0 0
      %753 = vmatprep.subr.bf16.mxu0 0
      %754 = vmatpush1.bf16.xpose.msra.mxu0 0
      %755 = vmatprep.subr.bf16.mxu0 0
      %756 = vmatpush1.bf16.xpose.msra.mxu0 %v739
      %757 = vmatprep.subr.bf16.mxu0 0
      %758 = vmatpush2.bf16.xpose.msra.mxu0 0
      %759 = vmatprep.subr.bf16.mxu0 0
      %760 = vmatpush2.bf16.xpose.msra.mxu0 0
      %761 = vmatprep.subr.bf16.mxu0 0
      %762 = vmatpush2.bf16.xpose.msra.mxu0 0
      %763 = vmatprep.subr.bf16.mxu0 0
      %764 = vmatpush2.bf16.xpose.msra.mxu0 0
      %765 = vmatprep.subr.bf16.mxu0 0
      %766 = vmatpush2.bf16.xpose.msra.mxu0 0
      %767 = vmatprep.subr.bf16.mxu0 0
      %768 = vmatpush2.bf16.xpose.msra.mxu0 0
      %769 = vmatprep.subr.bf16.mxu0 0
      %770 = vmatpush2.bf16.xpose.msra.mxu0 0
      %771 = vmatprep.subr.bf16.mxu0 0
      %772 = vmatpush2.bf16.xpose.msra.mxu0 0
      %773 = vmatprep.mubr.bf16.mxu0 0
      %774 = vmatmul.mubr.bf16.gmra.mxu0 %v736
      %v775 = vpop.f32.mrf.mxu0
      %v776 = vadd.f32 0.0, %v775
      %v777 = vpop.f32.mrf.mxu0
      %v778 = vpop.f32.mrf.mxu0
      %v779 = vadd.f32 0.0, %v778
      %v780 = vpop.f32.mrf.mxu0
      %781 = vdwg.mxu0
      %v782 = vmul.f32 %v776, 0.35355338
      %v783 = vmul.f32 %v779, 0.35355338
      %v784 = vsel %vm653, %v782, -inf
      %785 = vmax.xlane.f32.xlu0 %v784
      %v786 = vpop.xlane.xlu0 %785
      %v787 = vsel %vm657, %v783, -inf
      %788 = vmax.xlane.f32.xlu0 %v787
      %v789 = vpop.xlane.xlu0 %788
      %v790 = vsub.f32 %v782, %v786
      %v791 = vsub.f32 %v783, %v789
      %v792 = vmul.f32 %v790, 1.442695
      %v793 = vpow.pop %v792
      %v794 = vmul.f32 %v791, 1.442695
      %v795 = vpow.pop %v794
      %v796 = vsel %vm653, %v793, 0.0
      %797 = vadd.xlane.f32.xlu0 %v796
      %v798 = vpop.xlane.xlu0 %797
      %v799 = vsel %vm657, %v795, 0.0
      %800 = vadd.xlane.f32.xlu0 %v799
      %v801 = vpop.xlane.xlu0 %800
      %v802 = vrcp.pop %v798
      %v803 = vrcp.pop %v801
      %v804 = vmul.f32 %v793, %v802
      %v805 = vmul.f32 %v795, %v803
      %v806 = vpack.c.bf16 %v805, %v804
      %807 = vrot.lane.b32.xlu0 %v599, 56
      %v808 = vpop.permute.xlu0 %807
      %v810 = vsel %vm653, %v806, 0
      %v813 = vand.u32 %v808, %v686
      %815 = vmatprep.subr.bf16.mxu0 0
      %816 = vmatpush1.bf16.msra.mxu0 0
      %817 = vmatprep.subr.bf16.mxu0 0
      %818 = vmatpush1.bf16.msra.mxu0 0
      %819 = vmatprep.subr.bf16.mxu0 0
      %820 = vmatpush1.bf16.msra.mxu0 0
      %821 = vmatprep.subr.bf16.mxu0 0
      %822 = vmatpush1.bf16.msra.mxu0 0
      %823 = vmatprep.subr.bf16.mxu0 0
      %824 = vmatpush1.bf16.msra.mxu0 0
      %825 = vmatprep.subr.bf16.mxu0 0
      %826 = vmatpush1.bf16.msra.mxu0 0
      %827 = vmatprep.subr.bf16.mxu0 0
      %828 = vmatpush1.bf16.msra.mxu0 0
      %829 = vmatprep.subr.bf16.mxu0 0
      %830 = vmatpush1.bf16.msra.mxu0 %v813
      %831 = vmatprep.subr.bf16.mxu0 0
      %832 = vmatpush2.bf16.msra.mxu0 0
      %833 = vmatprep.subr.bf16.mxu0 0
      %834 = vmatpush2.bf16.msra.mxu0 0
      %835 = vmatprep.subr.bf16.mxu0 0
      %836 = vmatpush2.bf16.msra.mxu0 0
      %837 = vmatprep.subr.bf16.mxu0 0
      %838 = vmatpush2.bf16.msra.mxu0 0
      %839 = vmatprep.subr.bf16.mxu0 0
      %840 = vmatpush2.bf16.msra.mxu0 0
      %841 = vmatprep.subr.bf16.mxu0 0
      %842 = vmatpush2.bf16.msra.mxu0 0
      %843 = vmatprep.subr.bf16.mxu0 0
      %844 = vmatpush2.bf16.msra.mxu0 0
      %845 = vmatprep.subr.bf16.mxu0 0
      %846 = vmatpush2.bf16.msra.mxu0 0
      %847 = vmatprep.mubr.bf16.mxu0 0
      %848 = vmatmul.mubr.bf16.gmra.mxu0 %v810
      %v849 = vpop.f32.mrf.mxu0
      %v850 = vadd.f32 0.0, %v849
      %v851 = vpop.f32.mrf.mxu0
      %v852 = vpop.f32.mrf.mxu0
      %v853 = vadd.f32 0.0, %v852
      %v854 = vpop.f32.mrf.mxu0
      %855 = vdwg.mxu0
      %856 = vrot.lane.b32.xlu0 %v599, 112
      %v857 = vpop.permute.xlu0 %856
      %858 = vrot.lane.b32.xlu0 %v599, 80
      %v859 = vpop.permute.xlu0 %858
      %v861 = vsel %vm603, %v857, 0
      %v864 = vsel %vm603, %v859, 0
      %866 = vmatprep.subr.bf16.mxu0 0
      %867 = vmatpush1.bf16.xpose.msra.mxu0 0
      %868 = vmatprep.subr.bf16.mxu0 0
      %869 = vmatpush1.bf16.xpose.msra.mxu0 0
      %870 = vmatprep.subr.bf16.mxu0 0
      %871 = vmatpush1.bf16.xpose.msra.mxu0 0
      %872 = vmatprep.subr.bf16.mxu0 0
      %873 = vmatpush1.bf16.xpose.msra.mxu0 0
      %874 = vmatprep.subr.bf16.mxu0 0
      %875 = vmatpush1.bf16.xpose.msra.mxu0 0
      %876 = vmatprep.subr.bf16.mxu0 0
      %877 = vmatpush1.bf16.xpose.msra.mxu0 0
      %878 = vmatprep.subr.bf16.mxu0 0
      %879 = vmatpush1.bf16.xpose.msra.mxu0 0
      %880 = vmatprep.subr.bf16.mxu0 0
      %881 = vmatpush1.bf16.xpose.msra.mxu0 %v864
      %882 = vmatprep.subr.bf16.mxu0 0
      %883 = vmatpush2.bf16.xpose.msra.mxu0 0
      %884 = vmatprep.subr.bf16.mxu0 0
      %885 = vmatpush2.bf16.xpose.msra.mxu0 0
      %886 = vmatprep.subr.bf16.mxu0 0
      %887 = vmatpush2.bf16.xpose.msra.mxu0 0
      %888 = vmatprep.subr.bf16.mxu0 0
      %889 = vmatpush2.bf16.xpose.msra.mxu0 0
      %890 = vmatprep.subr.bf16.mxu0 0
      %891 = vmatpush2.bf16.xpose.msra.mxu0 0
      %892 = vmatprep.subr.bf16.mxu0 0
      %893 = vmatpush2.bf16.xpose.msra.mxu0 0
      %894 = vmatprep.subr.bf16.mxu0 0
      %895 = vmatpush2.bf16.xpose.msra.mxu0 0
      %896 = vmatprep.subr.bf16.mxu0 0
      %897 = vmatpush2.bf16.xpose.msra.mxu0 0
      %898 = vmatprep.mubr.bf16.mxu0 0
      %899 = vmatmul.mubr.bf16.gmra.mxu0 %v861
      %v900 = vpop.f32.mrf.mxu0
      %v901 = vadd.f32 0.0, %v900
      %v902 = vpop.f32.mrf.mxu0
      %v903 = vpop.f32.mrf.mxu0
      %v904 = vadd.f32 0.0, %v903
      %v905 = vpop.f32.mrf.mxu0
      %906 = vdwg.mxu0
      %v907 = vmul.f32 %v901, 0.35355338
      %v908 = vmul.f32 %v904, 0.35355338
      %v909 = vsel %vm653, %v907, -inf
      %910 = vmax.xlane.f32.xlu0 %v909
      %v911 = vpop.xlane.xlu0 %910
      %v912 = vsel %vm657, %v908, -inf
      %913 = vmax.xlane.f32.xlu0 %v912
      %v914 = vpop.xlane.xlu0 %913
      %v915 = vsub.f32 %v907, %v911
      %v916 = vsub.f32 %v908, %v914
      %v917 = vmul.f32 %v915, 1.442695
      %v918 = vpow.pop %v917
      %v919 = vmul.f32 %v916, 1.442695
      %v920 = vpow.pop %v919
      %v921 = vsel %vm653, %v918, 0.0
      %922 = vadd.xlane.f32.xlu0 %v921
      %v923 = vpop.xlane.xlu0 %922
      %v924 = vsel %vm657, %v920, 0.0
      %925 = vadd.xlane.f32.xlu0 %v924
      %v926 = vpop.xlane.xlu0 %925
      %v927 = vrcp.pop %v923
      %v928 = vrcp.pop %v926
      %v929 = vmul.f32 %v918, %v927
      %v930 = vmul.f32 %v920, %v928
      %v931 = vpack.c.bf16 %v930, %v929
      %932 = vrot.lane.b32.xlu0 %v599, 48
      %v933 = vpop.permute.xlu0 %932
      %v935 = vsel %vm653, %v931, 0
      %v938 = vand.u32 %v933, %v686
      %940 = vmatprep.subr.bf16.mxu0 0
      %941 = vmatpush1.bf16.msra.mxu0 0
      %942 = vmatprep.subr.bf16.mxu0 0
      %943 = vmatpush1.bf16.msra.mxu0 0
      %944 = vmatprep.subr.bf16.mxu0 0
      %945 = vmatpush1.bf16.msra.mxu0 0
      %946 = vmatprep.subr.bf16.mxu0 0
      %947 = vmatpush1.bf16.msra.mxu0 0
      %948 = vmatprep.subr.bf16.mxu0 0
      %949 = vmatpush1.bf16.msra.mxu0 0
      %950 = vmatprep.subr.bf16.mxu0 0
      %951 = vmatpush1.bf16.msra.mxu0 0
      %952 = vmatprep.subr.bf16.mxu0 0
      %953 = vmatpush1.bf16.msra.mxu0 0
      %954 = vmatprep.subr.bf16.mxu0 0
      %955 = vmatpush1.bf16.msra.mxu0 %v938
      %956 = vmatprep.subr.bf16.mxu0 0
      %957 = vmatpush2.bf16.msra.mxu0 0
      %958 = vmatprep.subr.bf16.mxu0 0
      %959 = vmatpush2.bf16.msra.mxu0 0
      %960 = vmatprep.subr.bf16.mxu0 0
      %961 = vmatpush2.bf16.msra.mxu0 0
      %962 = vmatprep.subr.bf16.mxu0 0
      %963 = vmatpush2.bf16.msra.mxu0 0
      %964 = vmatprep.subr.bf16.mxu0 0
      %965 = vmatpush2.bf16.msra.mxu0 0
      %966 = vmatprep.subr.bf16.mxu0 0
      %967 = vmatpush2.bf16.msra.mxu0 0
      %968 = vmatprep.subr.bf16.mxu0 0
      %969 = vmatpush2.bf16.msra.mxu0 0
      %970 = vmatprep.subr.bf16.mxu0 0
      %971 = vmatpush2.bf16.msra.mxu0 0
      %972 = vmatprep.mubr.bf16.mxu0 0
      %973 = vmatmul.mubr.bf16.gmra.mxu0 %v935
      %v974 = vpop.f32.mrf.mxu0
      %v975 = vadd.f32 0.0, %v974
      %v976 = vpop.f32.mrf.mxu0
      %v977 = vpop.f32.mrf.mxu0
      %v978 = vadd.f32 0.0, %v977
      %v979 = vpop.f32.mrf.mxu0
      %980 = vdwg.mxu0
      %981 = vrot.lane.b32.xlu0 %v599, 104
      %v982 = vpop.permute.xlu0 %981
      %983 = vrot.lane.b32.xlu0 %v599, 72
      %v984 = vpop.permute.xlu0 %983
      %v986 = vsel %vm603, %v982, 0
      %v989 = vsel %vm603, %v984, 0
      %991 = vmatprep.subr.bf16.mxu0 0
      %992 = vmatpush1.bf16.xpose.msra.mxu0 0
      %993 = vmatprep.subr.bf16.mxu0 0
      %994 = vmatpush1.bf16.xpose.msra.mxu0 0
      %995 = vmatprep.subr.bf16.mxu0 0
      %996 = vmatpush1.bf16.xpose.msra.mxu0 0
      %997 = vmatprep.subr.bf16.mxu0 0
      %998 = vmatpush1.bf16.xpose.msra.mxu0 0
      %999 = vmatprep.subr.bf16.mxu0 0
      %1000 = vmatpush1.bf16.xpose.msra.mxu0 0
      %1001 = vmatprep.subr.bf16.mxu0 0
      %1002 = vmatpush1.bf16.xpose.msra.mxu0 0
      %1003 = vmatprep.subr.bf16.mxu0 0
      %1004 = vmatpush1.bf16.xpose.msra.mxu0 0
      %1005 = vmatprep.subr.bf16.mxu0 0
      %1006 = vmatpush1.bf16.xpose.msra.mxu0 %v989
      %1007 = vmatprep.subr.bf16.mxu0 0
      %1008 = vmatpush2.bf16.xpose.msra.mxu0 0
      %1009 = vmatprep.subr.bf16.mxu0 0
      %1010 = vmatpush2.bf16.xpose.msra.mxu0 0
      %1011 = vmatprep.subr.bf16.mxu0 0
      %1012 = vmatpush2.bf16.xpose.msra.mxu0 0
      %1013 = vmatprep.subr.bf16.mxu0 0
      %1014 = vmatpush2.bf16.xpose.msra.mxu0 0
      %1015 = vmatprep.subr.bf16.mxu0 0
      %1016 = vmatpush2.bf16.xpose.msra.mxu0 0
      %1017 = vmatprep.subr.bf16.mxu0 0
      %1018 = vmatpush2.bf16.xpose.msra.mxu0 0
      %1019 = vmatprep.subr.bf16.mxu0 0
      %1020 = vmatpush2.bf16.xpose.msra.mxu0 0
      %1021 = vmatprep.subr.bf16.mxu0 0
      %1022 = vmatpush2.bf16.xpose.msra.mxu0 0
      %1023 = vmatprep.mubr.bf16.mxu0 0
      %1024 = vmatmul.mubr.bf16.gmra.mxu0 %v986
      %v1025 = vpop.f32.mrf.mxu0
      %v1026 = vadd.f32 0.0, %v1025
      %v1027 = vpop.f32.mrf.mxu0
      %v1028 = vpop.f32.mrf.mxu0
      %v1029 = vadd.f32 0.0, %v1028
      %v1030 = vpop.f32.mrf.mxu0
      %1031 = vdwg.mxu0
      %v1032 = vmul.f32 %v1026, 0.35355338
      %v1033 = vmul.f32 %v1029, 0.35355338
      %v1034 = vsel %vm653, %v1032, -inf
      %1035 = vmax.xlane.f32.xlu0 %v1034
      %v1036 = vpop.xlane.xlu0 %1035
      %v1037 = vsel %vm657, %v1033, -inf
      %1038 = vmax.xlane.f32.xlu0 %v1037
      %v1039 = vpop.xlane.xlu0 %1038
      %v1040 = vsub.f32 %v1032, %v1036
      %v1041 = vsub.f32 %v1033, %v1039
      %v1042 = vmul.f32 %v1040, 1.442695
      %v1043 = vpow.pop %v1042
      %v1044 = vmul.f32 %v1041, 1.442695
      %v1045 = vpow.pop %v1044
      %v1046 = vsel %vm653, %v1043, 0.0
      %1047 = vadd.xlane.f32.xlu0 %v1046
      %v1048 = vpop.xlane.xlu0 %1047
      %v1049 = vsel %vm657, %v1045, 0.0
      %1050 = vadd.xlane.f32.xlu0 %v1049
      %v1051 = vpop.xlane.xlu0 %1050
      %v1052 = vrcp.pop %v1048
      %v1053 = vrcp.pop %v1051
      %v1054 = vmul.f32 %v1043, %v1052
      %v1055 = vmul.f32 %v1045, %v1053
      %v1056 = vpack.c.bf16 %v1055, %v1054
      %1057 = vrot.lane.b32.xlu0 %v599, 40
      %v1058 = vpop.permute.xlu0 %1057
      %v1060 = vsel %vm653, %v1056, 0
      %v1063 = vand.u32 %v1058, %v686
      %1065 = vmatprep.subr.bf16.mxu0 0
      %1066 = vmatpush1.bf16.msra.mxu0 0
      %1067 = vmatprep.subr.bf16.mxu0 0
      %1068 = vmatpush1.bf16.msra.mxu0 0
      %1069 = vmatprep.subr.bf16.mxu0 0
      %1070 = vmatpush1.bf16.msra.mxu0 0
      %1071 = vmatprep.subr.bf16.mxu0 0
      %1072 = vmatpush1.bf16.msra.mxu0 0
      %1073 = vmatprep.subr.bf16.mxu0 0
      %1074 = vmatpush1.bf16.msra.mxu0 0
      %1075 = vmatprep.subr.bf16.mxu0 0
      %1076 = vmatpush1.bf16.msra.mxu0 0
      %1077 = vmatprep.subr.bf16.mxu0 0
      %1078 = vmatpush1.bf16.msra.mxu0 0
      %1079 = vmatprep.subr.bf16.mxu0 0
      %1080 = vmatpush1.bf16.msra.mxu0 %v1063
      %1081 = vmatprep.subr.bf16.mxu0 0
      %1082 = vmatpush2.bf16.msra.mxu0 0
      %1083 = vmatprep.subr.bf16.mxu0 0
      %1084 = vmatpush2.bf16.msra.mxu0 0
      %1085 = vmatprep.subr.bf16.mxu0 0
      %1086 = vmatpush2.bf16.msra.mxu0 0
      %1087 = vmatprep.subr.bf16.mxu0 0
      %1088 = vmatpush2.bf16.msra.mxu0 0
      %1089 = vmatprep.subr.bf16.mxu0 0
      %1090 = vmatpush2.bf16.msra.mxu0 0
      %1091 = vmatprep.subr.bf16.mxu0 0
      %1092 = vmatpush2.bf16.msra.mxu0 0
      %1093 = vmatprep.subr.bf16.mxu0 0
      %1094 = vmatpush2.bf16.msra.mxu0 0
      %1095 = vmatprep.subr.bf16.mxu0 0
      %1096 = vmatpush2.bf16.msra.mxu0 0
      %1097 = vmatprep.mubr.bf16.mxu0 0
      %1098 = vmatmul.mubr.bf16.gmra.mxu0 %v1060
      %v1099 = vpop.f32.mrf.mxu0
      %v1100 = vadd.f32 0.0, %v1099
      %v1101 = vpop.f32.mrf.mxu0
      %v1102 = vpop.f32.mrf.mxu0
      %v1103 = vadd.f32 0.0, %v1102
      %v1104 = vpop.f32.mrf.mxu0
      %1105 = vdwg.mxu0
      %1108 = vrot.lane.b32.xlu0 %v850, 8
      %v1109 = vpop.permute.xlu0 %1108
      %1110 = vrot.lane.b32.xlu0 %v853, 8
      %v1111 = vpop.permute.xlu0 %1110
      %1116 = vrot.lane.b32.xlu0 %v975, 16
      %v1117 = vpop.permute.xlu0 %1116
      %1118 = vrot.lane.b32.xlu0 %v978, 16
      %v1119 = vpop.permute.xlu0 %1118
      %1124 = vrot.lane.b32.xlu0 %v1100, 24
      %v1125 = vpop.permute.xlu0 %1124
      %1126 = vrot.lane.b32.xlu0 %v1103, 24
      %v1127 = vpop.permute.xlu0 %1126
      %v1130 = vsel %vm603, %v725, %v1109
      %v1131 = vsel %vm603, %v728, %v1111
      %vm1132 = vcmask 130048
      %v1133 = vsel %vm1132, %v1130, %v1117
      %v1134 = vsel %vm1132, %v1131, %v1119
      %vm1135 = vcmask 195584
      %v1136 = vsel %vm1135, %v1133, %v1125
      %v1137 = vsel %vm1135, %v1134, %v1127
      %v1138 = vpack.c.bf16 %v1137, %v1136
      %v1140 = vlaneseq
      %v1141 = vshrl.u32 %v1140, 7
      %v1142 = vsub.s32 0, %v1141
      %v1143 = vrot.slane %v534, %v1142
      %v1149 = vunpack.c.l.b16 %v530
      %v1150 = vunpack.c.l.b16 %v531
      %v1151 = vunpack.c.l.b16 %v532
      %v1152 = vunpack.c.l.b16 %v533
      %v1153 = vpack.c.b16 %v1150, %v1149
      %v1154 = vpack.c.b16 %v1152, %v1151
      %v1158 = vsel %vm554, %v1138, 0
      %1160 = vmatprep.subr.bf16.mxu0 0
      %1161 = vmatpush1.bf16.msra.mxu0 0
      %1162 = vmatprep.subr.bf16.mxu0 0
      %1163 = vmatpush1.bf16.msra.mxu0 0
      %1164 = vmatprep.subr.bf16.mxu0 0
      %1165 = vmatpush1.bf16.msra.mxu0 0
      %1166 = vmatprep.subr.bf16.mxu0 0
      %1167 = vmatpush1.bf16.msra.mxu0 0
      %1168 = vmatprep.subr.bf16.mxu0 0
      %1169 = vmatpush1.bf16.msra.mxu0 0
      %1170 = vmatprep.subr.bf16.mxu0 0
      %1171 = vmatpush1.bf16.msra.mxu0 0
      %1172 = vmatprep.subr.bf16.mxu0 0
      %1173 = vmatpush1.bf16.msra.mxu0 %v1154
      %1174 = vmatprep.subr.bf16.mxu0 0
      %1175 = vmatpush1.bf16.msra.mxu0 %v1153
      %1176 = vmatprep.subr.bf16.mxu0 0
      %1177 = vmatpush2.bf16.msra.mxu0 0
      %1178 = vmatprep.subr.bf16.mxu0 0
      %1179 = vmatpush2.bf16.msra.mxu0 0
      %1180 = vmatprep.subr.bf16.mxu0 0
      %1181 = vmatpush2.bf16.msra.mxu0 0
      %1182 = vmatprep.subr.bf16.mxu0 0
      %1183 = vmatpush2.bf16.msra.mxu0 0
      %1184 = vmatprep.subr.bf16.mxu0 0
      %1185 = vmatpush2.bf16.msra.mxu0 0
      %1186 = vmatprep.subr.bf16.mxu0 0
      %1187 = vmatpush2.bf16.msra.mxu0 0
      %1188 = vmatprep.subr.bf16.mxu0 0
      %1189 = vmatpush2.bf16.msra.mxu0 0
      %1190 = vmatprep.subr.bf16.mxu0 0
      %1191 = vmatpush2.bf16.msra.mxu0 0
      %1192 = vmatprep.mubr.bf16.mxu0 0
      %1193 = vmatmul.mubr.bf16.gmra.mxu0 %v1158
      %v1194 = vpop.f32.mrf.mxu0
      %v1195 = vadd.f32 %v1143, %v1194
      %v1196 = vpop.f32.mrf.mxu0
      %v1197 = vpop.f32.mrf.mxu0
      %v1198 = vadd.f32 %v1143, %v1197
      %v1199 = vpop.f32.mrf.mxu0
      %1200 = vdwg.mxu0
      %v1201 = vadd.f32 %v523, %v1195
      %v1202 = vadd.f32 %v524, %v1198
      %v1203 = vld [vmem:[%s6] sm:$0x1]
      %v1204 = vld [vmem:[%s7] sm:$0x1]
      %v1205 = vsel %vm554, %v1201, 0.0
      %1206 = vadd.xlane.f32.xlu0 %v1205
      %v1207 = vpop.xlane.xlu0 %1206
      %vm1208 = vcmask 253952
      %v1209 = vsel %vm1208, %v1202, 0.0
      %1210 = vadd.xlane.f32.xlu0 %v1209
      %v1211 = vpop.xlane.xlu0 %1210
      %v1212 = vrcp.pop 32.0
      %v1213 = vmul.f32 %v1207, %v1212
      %v1214 = vmul.f32 %v1211, %v1212
      %v1215 = vsub.f32 %v1201, %v1213
      %v1216 = vsub.f32 %v1202, %v1214
      %v1217 = vmul.f32 %v1215, %v1215
      %v1218 = vmul.f32 %v1216, %v1216
      %v1219 = vsel %vm554, %v1217, 0.0
      %1220 = vadd.xlane.f32.xlu0 %v1219
      %v1221 = vpop.xlane.xlu0 %1220
      %v1222 = vsel %vm1208, %v1218, 0.0
      %1223 = vadd.xlane.f32.xlu0 %v1222
      %v1224 = vpop.xlane.xlu0 %1223
      %v1225 = vmul.f32 %v1221, %v1212
      %v1226 = vmul.f32 %v1224, %v1212
      %v1227 = vadd.f32 %v1225, 1e-05
      %v1228 = vadd.f32 %v1226, 1e-05
      %v1229 = vrsqrt.pop %v1227
      %v1230 = vrsqrt.pop %v1228
      %v1231 = vmul.f32 %v1215, %v1229
      %v1232 = vmul.f32 %v1216, %v1230
      %v1234 = vlaneseq
      %v1235 = vshrl.u32 %v1234, 7
      %v1236 = vsub.s32 0, %v1235
      %v1237 = vrot.slane %v1203, %v1236
      %v1239 = vmul.f32 %v1231, %v1237
      %v1240 = vmul.f32 %v1232, %v1237
      %v1242 = vlaneseq
      %v1243 = vshrl.u32 %v1242, 7
      %v1244 = vsub.s32 0, %v1243
      %v1245 = vrot.slane %v1204, %v1244
      %v1247 = vadd.f32 %v1239, %v1245
      %v1248 = vadd.f32 %v1240, %v1245
      %v1249 = vld [vmem:[%s8] sm:$0xf]
      %v1250 = vld [vmem:[%s8 + $0x4] sm:$0xf]
      %v1251 = vld [vmem:[%s8 + $0x8] sm:$0xf]
      %v1252 = vld [vmem:[%s8 + $0xc] sm:$0xf]
      %v1253 = vld [vmem:[%s9] sm:$0x1]
      %v1254 = vld [vmem:[%s10] sm:$0xf]
      %v1255 = vld [vmem:[%s10 + $0x4] sm:$0xf]
      %v1256 = vld [vmem:[%s10 + $0x8] sm:$0xf]
      %v1257 = vld [vmem:[%s10 + $0xc] sm:$0xf]
      %v1258 = vld [vmem:[%s10 + $0x10] sm:$0xf]
      %v1259 = vld [vmem:[%s10 + $0x14] sm:$0xf]
      %v1260 = vld [vmem:[%s10 + $0x18] sm:$0xf]
      %v1261 = vld [vmem:[%s10 + $0x1c] sm:$0xf]
      %v1262 = vld [vmem:[%s11] sm:$0x1]
      %v1263 = vpack.c.bf16 %v1248, %v1247
      %v1265 = vlaneseq
      %v1266 = vshrl.u32 %v1265, 7
      %v1267 = vsub.s32 0, %v1266
      %v1268 = vrot.slane %v1253, %v1267
      %v1274 = vunpack.c.l.b16 %v1249
      %v1275 = vunpack.c.l.b16 %v1250
      %v1276 = vunpack.c.l.b16 %v1251
      %v1277 = vunpack.c.l.b16 %v1252
      %v1278 = vpack.c.b16 %v1275, %v1274
      %v1279 = vpack.c.b16 %v1277, %v1276
      %v1283 = vsel %vm554, %v1263, 0
      %1285 = vmatprep.subr.bf16.mxu0 0
      %1286 = vmatpush1.bf16.msra.mxu0 0
      %1287 = vmatprep.subr.bf16.mxu0 0
      %1288 = vmatpush1.bf16.msra.mxu0 0
      %1289 = vmatprep.subr.bf16.mxu0 0
      %1290 = vmatpush1.bf16.msra.mxu0 0
      %1291 = vmatprep.subr.bf16.mxu0 0
      %1292 = vmatpush1.bf16.msra.mxu0 0
      %1293 = vmatprep.subr.bf16.mxu0 0
      %1294 = vmatpush1.bf16.msra.mxu0 0
      %1295 = vmatprep.subr.bf16.mxu0 0
      %1296 = vmatpush1.bf16.msra.mxu0 0
      %1297 = vmatprep.subr.bf16.mxu0 0
      %1298 = vmatpush1.bf16.msra.mxu0 %v1279
      %1299 = vmatprep.subr.bf16.mxu0 0
      %1300 = vmatpush1.bf16.msra.mxu0 %v1278
      %1301 = vmatprep.subr.bf16.mxu0 0
      %1302 = vmatpush2.bf16.msra.mxu0 0
      %1303 = vmatprep.subr.bf16.mxu0 0
      %1304 = vmatpush2.bf16.msra.mxu0 0
      %1305 = vmatprep.subr.bf16.mxu0 0
      %1306 = vmatpush2.bf16.msra.mxu0 0
      %1307 = vmatprep.subr.bf16.mxu0 0
      %1308 = vmatpush2.bf16.msra.mxu0 0
      %1309 = vmatprep.subr.bf16.mxu0 0
      %1310 = vmatpush2.bf16.msra.mxu0 0
      %1311 = vmatprep.subr.bf16.mxu0 0
      %1312 = vmatpush2.bf16.msra.mxu0 0
      %1313 = vmatprep.subr.bf16.mxu0 0
      %1314 = vmatpush2.bf16.msra.mxu0 0
      %1315 = vmatprep.subr.bf16.mxu0 0
      %1316 = vmatpush2.bf16.msra.mxu0 0
      %1317 = vmatprep.mubr.bf16.mxu0 0
      %1318 = vmatmul.mubr.bf16.gmra.mxu0 %v1283
      %v1319 = vpop.f32.mrf.mxu0
      %v1320 = vadd.f32 %v1268, %v1319
      %v1321 = vpop.f32.mrf.mxu0
      %v1322 = vpop.f32.mrf.mxu0
      %v1323 = vadd.f32 %v1268, %v1322
      %v1324 = vpop.f32.mrf.mxu0
      %1325 = vdwg.mxu0
      %v1326 = vmax.f32 %v1320, 0.0
      %v1327 = vmax.f32 %v1323, 0.0
      %v1328 = vpack.c.bf16 %v1327, %v1326
      %v1330 = vlaneseq
      %v1331 = vshrl.u32 %v1330, 7
      %v1332 = vsub.s32 0, %v1331
      %v1333 = vrot.slane %v1262, %v1332
      %v1343 = vunpack.c.l.b16 %v1254
      %v1344 = vunpack.c.l.b16 %v1255
      %v1345 = vunpack.c.l.b16 %v1256
      %v1346 = vunpack.c.l.b16 %v1257
      %v1347 = vunpack.c.l.b16 %v1258
      %v1348 = vunpack.c.l.b16 %v1259
      %v1349 = vunpack.c.l.b16 %v1260
      %v1350 = vunpack.c.l.b16 %v1261
      %v1351 = vpack.c.b16 %v1344, %v1343
      %v1352 = vpack.c.b16 %v1346, %v1345
      %v1353 = vpack.c.b16 %v1348, %v1347
      %v1354 = vpack.c.b16 %v1350, %v1349
      %vm1359 = vcmask 523264
      %v1361 = vsel %vm1359, %v1328, 0
      %1363 = vmatprep.subr.bf16.mxu0 0
      %1364 = vmatpush1.bf16.msra.mxu0 0
      %1365 = vmatprep.subr.bf16.mxu0 0
      %1366 = vmatpush1.bf16.msra.mxu0 0
      %1367 = vmatprep.subr.bf16.mxu0 0
      %1368 = vmatpush1.bf16.msra.mxu0 0
      %1369 = vmatprep.subr.bf16.mxu0 0
      %1370 = vmatpush1.bf16.msra.mxu0 0
      %1371 = vmatprep.subr.bf16.mxu0 0
      %1372 = vmatpush1.bf16.msra.mxu0 %v1354
      %1373 = vmatprep.subr.bf16.mxu0 0
      %1374 = vmatpush1.bf16.msra.mxu0 %v1353
      %1375 = vmatprep.subr.bf16.mxu0 0
      %1376 = vmatpush1.bf16.msra.mxu0 %v1352
      %1377 = vmatprep.subr.bf16.mxu0 0
      %1378 = vmatpush1.bf16.msra.mxu0 %v1351
      %1379 = vmatprep.subr.bf16.mxu0 0
      %1380 = vmatpush2.bf16.msra.mxu0 0
      %1381 = vmatprep.subr.bf16.mxu0 0
      %1382 = vmatpush2.bf16.msra.mxu0 0
      %1383 = vmatprep.subr.bf16.mxu0 0
      %1384 = vmatpush2.bf16.msra.mxu0 0
      %1385 = vmatprep.subr.bf16.mxu0 0
      %1386 = vmatpush2.bf16.msra.mxu0 0
      %1387 = vmatprep.subr.bf16.mxu0 0
      %1388 = vmatpush2.bf16.msra.mxu0 0
      %1389 = vmatprep.subr.bf16.mxu0 0
      %1390 = vmatpush2.bf16.msra.mxu0 0
      %1391 = vmatprep.subr.bf16.mxu0 0
      %1392 = vmatpush2.bf16.msra.mxu0 0
      %1393 = vmatprep.subr.bf16.mxu0 0
      %1394 = vmatpush2.bf16.msra.mxu0 0
      %1395 = vmatprep.mubr.bf16.mxu0 0
      %1396 = vmatmul.mubr.bf16.gmra.mxu0 %v1361
      %v1397 = vpop.f32.mrf.mxu0
      %v1398 = vadd.f32 %v1333, %v1397
      %v1399 = vpop.f32.mrf.mxu0
      %v1400 = vpop.f32.mrf.mxu0
      %v1401 = vadd.f32 %v1333, %v1400
      %v1402 = vpop.f32.mrf.mxu0
      %1403 = vdwg.mxu0
      %v1404 = vadd.f32 %v1247, %v1398
      %v1405 = vadd.f32 %v1248, %v1401
      %v1406 = vld [vmem:[%s12] sm:$0x1]
      %v1407 = vld [vmem:[%s13] sm:$0x1]
      %v1408 = vsel %vm554, %v1404, 0.0
      %1409 = vadd.xlane.f32.xlu0 %v1408
      %v1410 = vpop.xlane.xlu0 %1409
      %v1411 = vsel %vm1208, %v1405, 0.0
      %1412 = vadd.xlane.f32.xlu0 %v1411
      %v1413 = vpop.xlane.xlu0 %1412
      %v1414 = vmul.f32 %v1410, %v1212
      %v1415 = vmul.f32 %v1413, %v1212
      %v1416 = vsub.f32 %v1404, %v1414
      %v1417 = vsub.f32 %v1405, %v1415
      %v1418 = vmul.f32 %v1416, %v1416
      %v1419 = vmul.f32 %v1417, %v1417
      %v1420 = vsel %vm554, %v1418, 0.0
      %1421 = vadd.xlane.f32.xlu0 %v1420
      %v1422 = vpop.xlane.xlu0 %1421
      %v1423 = vsel %vm1208, %v1419, 0.0
      %1424 = vadd.xlane.f32.xlu0 %v1423
      %v1425 = vpop.xlane.xlu0 %1424
      %v1426 = vmul.f32 %v1422, %v1212
      %v1427 = vmul.f32 %v1425, %v1212
      %v1428 = vadd.f32 %v1426, 1e-05
      %v1429 = vadd.f32 %v1427, 1e-05
      %v1430 = vrsqrt.pop %v1428
      %v1431 = vrsqrt.pop %v1429
      %v1432 = vmul.f32 %v1416, %v1430
      %v1433 = vmul.f32 %v1417, %v1431
      %v1435 = vlaneseq
      %v1436 = vshrl.u32 %v1435, 7
      %v1437 = vsub.s32 0, %v1436
      %v1438 = vrot.slane %v1406, %v1437
      %v1440 = vmul.f32 %v1432, %v1438
      %v1441 = vmul.f32 %v1433, %v1438
      %v1443 = vlaneseq
      %v1444 = vshrl.u32 %v1443, 7
      %v1445 = vsub.s32 0, %v1444
      %v1446 = vrot.slane %v1407, %v1445
      %v1448 = vadd.f32 %v1440, %v1446
      %v1449 = vadd.f32 %v1441, %v1446
      %v1450 = vld [vmem:[%s14] sm:$0x1]
      %v1451 = vld [vmem:[%s15] sm:$0x1]
      %v1452 = vsel %vm554, %v1448, 0.0
      %1453 = vadd.xlane.f32.xlu0 %v1452
      %v1454 = vpop.xlane.xlu0 %1453
      %v1455 = vsel %vm1208, %v1449, 0.0
      %1456 = vadd.xlane.f32.xlu0 %v1455
      %v1457 = vpop.xlane.xlu0 %1456
      %v1458 = vmul.f32 %v1454, %v1212
      %v1459 = vmul.f32 %v1457, %v1212
      %v1460 = vsub.f32 %v1448, %v1458
      %v1461 = vsub.f32 %v1449, %v1459
      %v1462 = vmul.f32 %v1460, %v1460
      %v1463 = vmul.f32 %v1461, %v1461
      %v1464 = vsel %vm554, %v1462, 0.0
      %1465 = vadd.xlane.f32.xlu0 %v1464
      %v1466 = vpop.xlane.xlu0 %1465
      %v1467 = vsel %vm1208, %v1463, 0.0
      %1468 = vadd.xlane.f32.xlu0 %v1467
      %v1469 = vpop.xlane.xlu0 %1468
      %v1470 = vmul.f32 %v1466, %v1212
      %v1471 = vmul.f32 %v1469, %v1212
      %v1472 = vadd.f32 %v1470, 1e-05
      %v1473 = vadd.f32 %v1471, 1e-05
      %v1474 = vrsqrt.pop %v1472
      %v1475 = vrsqrt.pop %v1473
      %v1476 = vmul.f32 %v1460, %v1474
      %v1477 = vmul.f32 %v1461, %v1475
      %v1479 = vlaneseq
      %v1480 = vshrl.u32 %v1479, 7
      %v1481 = vsub.s32 0, %v1480
      %v1482 = vrot.slane %v1450, %v1481
      %v1484 = vmul.f32 %v1476, %v1482
      %v1485 = vmul.f32 %v1477, %v1482
      %v1487 = vlaneseq
      %v1488 = vshrl.u32 %v1487, 7
      %v1489 = vsub.s32 0, %v1488
      %v1490 = vrot.slane %v1451, %v1489
      %v1492 = vadd.f32 %v1484, %v1490
      %v1493 = vadd.f32 %v1485, %v1490
      %1494 = vst.msk [vmem:[%s521] sm:$0xff] %vm554, %v1492
      %1495 = vst.msk [vmem:[%s521 + $0x8] sm:$0x1] %vm1208, %v1493
      %p1496 = scmp.lt.s32.totalorder %s27, 1
      %s1497 = scalar_select %p1496, %s27, 1
      %s1498 = smul.addr %s1497, 2
      %s1499 = smul.addr %s1498, 8
      %s1500 = scalar_lea.vmem %s16, %s1499
      // Predicated region
      $region85: #{_lambda_.11} parent=83 // pred_check
        %p1501 = pneg %p386
      $region86: #{_lambda_.11} parent=83 // pred_check_branch
        %1503 = sbr.rel (%p1501) target = $region88
      $region87: #{_lambda_.11} parent=83 // pred_region
        _
      $region88: #{_lambda_.11} parent=83 // pred_fallthru
        _
    $region84: #{_lambda_.11} parent=5 // pred_fallthru
      _
    %p1504 = scmp.le.s32.totalorder 2, %s22
    // Predicated region
    $region89: #{_lambda_.11} parent=5 // pred_check
      %p1505 = pneg %p1504
    $region90: #{_lambda_.11} parent=5 // pred_check_branch
      %1507 = sbr.rel (%p1505) target = $region92
    $region91: #{_lambda_.11} parent=5 // pred_region
      %s1508 = ssub.s32 %s22, 2
      // Predicated region
      $region93: #{_lambda_.11} parent=91 // pred_check
        %p1509 = pneg %p392
      $region94: #{_lambda_.11} parent=91 // pred_check_branch
        %1511 = sbr.rel (%p1509) target = $region96
      $region95: #{_lambda_.11} parent=91 // pred_region
        %p1512 = scmp.lt.s32.totalorder %s28, 1
        %s1513 = scalar_select %p1512, %s28, 1
        %s1514 = smul.addr %s1513, 2
        %s1515 = smul.addr %s1514, 8
        %s1516 = scalar_lea.vmem %s16, %s1515
      $region96: #{_lambda_.11} parent=91 // pred_fallthru
        _
    $region92: #{_lambda_.11} parent=5 // pred_fallthru
      _
  $region6: #{_lambda_.11} parent=0 // loop_footer
    %s26 = sadd.s32 1, %s22
  $region7: #{_lambda_.11} parent=0 // loop_footer_branch
    %21 = sbr.rel target = $region3
  $region8: #{_lambda_.11} parent=0 // loop_exit
    _

// kernel: _lambda_.9
$region0: #{_lambda_.9}
  #allocation0 [shape = 'u32[]', space=smem, size = 0x4, offset = 0x4, fixed_abs, tag = 'smem constant byte address 0x4 - core index']
  #allocation1 [shape = 'u32[144,128]{1,0:T(1,128)}', space=vmem, size = 0x12000, scoped, tag = 'internal scratch']
  %s0 = inlined_call_operand.vmem [shape: f32[2,16,32], index: 0, kind: input, shape index: {}]
  %s1 = inlined_call_operand.vmem [shape: f32[16,16], index: 1, kind: input, shape index: {}]
  %s2 = inlined_call_operand.vmem [shape: bf16[32,96], index: 2, kind: input, shape index: {}]
  %s3 = inlined_call_operand.vmem [shape: f32[1,96], index: 3, kind: input, shape index: {}]
  %s4 = inlined_call_operand.vmem [shape: bf16[32,32], index: 4, kind: input, shape index: {}]
  %s5 = inlined_call_operand.vmem [shape: f32[1,32], index: 5, kind: input, shape index: {}]
  %s6 = inlined_call_operand.vmem [shape: f32[1,32], index: 6, kind: input, shape index: {}, may-alias: {6,12,14}]
  %s7 = inlined_call_operand.vmem [shape: f32[1,32], index: 7, kind: input, shape index: {}, may-alias: {7,13,15}]
  %s8 = inlined_call_operand.vmem [shape: bf16[32,64], index: 8, kind: input, shape index: {}]
  %s9 = inlined_call_operand.vmem [shape: f32[1,64], index: 9, kind: input, shape index: {}]
  %s10 = inlined_call_operand.vmem [shape: bf16[64,32], index: 10, kind: input, shape index: {}]
  %s11 = inlined_call_operand.vmem [shape: f32[1,32], index: 11, kind: input, shape index: {}]
  %s12 = inlined_call_operand.vmem [shape: f32[1,32], index: 12, kind: input, shape index: {}, may-alias: {6,12,14}]
  %s13 = inlined_call_operand.vmem [shape: f32[1,32], index: 13, kind: input, shape index: {}, may-alias: {7,13,15}]
  %s14 = inlined_call_operand.vmem [shape: f32[1,32], index: 14, kind: input, shape index: {}, may-alias: {6,12,14}]
  %s15 = inlined_call_operand.vmem [shape: f32[1,32], index: 15, kind: input, shape index: {}, may-alias: {7,13,15}]
  %s16 = inlined_call_operand.vmem [shape: f32[2,16,32], index: 16, kind: output, shape index: {}]
  %s17 = sld [smem:[#allocation0]]
  $region97: #{_lambda_.9} parent=0
    _
  %s19 = ssub.s32 1, %s17
  %s20 = scalar_select 0, %s19, %s17
  loop: start=0, step=1, limit=4
  $region2: #{_lambda_.9} parent=0 // loop_pre_header
    _
  $region3: #{_lambda_.9} parent=0 // loop_header
    %s22 = sphi 0, %s26
    %p23 = scmp.ge.s32.totalorder %s22, 4
    %s32 = sphi 0, %s34
    %s35 = sphi 0, %s32
    %s36 = sphi 0, %s35
    %s52 = sphi 0, %s36
    %s56 = sphi 0, %s56
    %s58 = sphi 0, %s56
    %s59 = sphi 0, %s58
    %s73 = sphi 0, %s59
    %s77 = sphi 0, %s77
    %s79 = sphi 0, %s77
    %s80 = sphi 0, %s79
    %s94 = sphi 0, %s80
    %s98 = sphi 0, %s98
    %s100 = sphi 0, %s98
    %s101 = sphi 0, %s100
    %s115 = sphi 0, %s101
    %s119 = sphi 0, %s119
    %s121 = sphi 0, %s119
    %s122 = sphi 0, %s121
    %s136 = sphi 0, %s122
    %s140 = sphi 0, %s140
    %s142 = sphi 0, %s140
    %s143 = sphi 0, %s142
    %s157 = sphi 0, %s143
    %s161 = sphi 0, %s161
    %s163 = sphi 0, %s161
    %s164 = sphi 0, %s163
    %s178 = sphi 0, %s164
    %s182 = sphi 0, %s182
    %s184 = sphi 0, %s182
    %s185 = sphi 0, %s184
    %s199 = sphi 0, %s185
    %s203 = sphi 0, %s203
    %s205 = sphi 0, %s203
    %s206 = sphi 0, %s205
    %s220 = sphi 0, %s206
    %s224 = sphi 0, %s224
    %s226 = sphi 0, %s224
    %s227 = sphi 0, %s226
    %s241 = sphi 0, %s227
    %s245 = sphi 0, %s245
    %s247 = sphi 0, %s245
    %s248 = sphi 0, %s247
    %s262 = sphi 0, %s248
    %s266 = sphi 0, %s266
    %s268 = sphi 0, %s266
    %s269 = sphi 0, %s268
    %s283 = sphi 0, %s269
    %s287 = sphi 0, %s287
    %s289 = sphi 0, %s287
    %s290 = sphi 0, %s289
    %s304 = sphi 0, %s290
    %s308 = sphi 0, %s308
    %s310 = sphi 0, %s308
    %s311 = sphi 0, %s310
    %s325 = sphi 0, %s311
    %s329 = sphi 0, %s329
    %s331 = sphi 0, %s329
    %s332 = sphi 0, %s331
    %s346 = sphi 0, %s332
    %s350 = sphi 0, %s350
    %s352 = sphi 0, %s350
    %s353 = sphi 0, %s352
    %s367 = sphi 0, %s353
    %s373 = sphi 0, %s375
    %s376 = sphi 0, %s373
    %s377 = sphi 0, %s376
    %s393 = sphi 0, %s377
  $region4: #{_lambda_.9} parent=0 // loop_header_branch
    %25 = sbr.rel (%p23) target = $region8
  $region5: #{_lambda_.9} parent=0 // loop_body
    %s27 = ssub.s32 %s22, 1
    %s28 = ssub.s32 %s22, 2
    %s29 = sadd.s32 %s22, 1
    %s30 = ssub.s32 %s22, %s29
    %p31 = scmp.eq.s32.totalorder %s30, 0
    %s33 = sadd.s32 %s32, 1
    %s34 = scalar_select %p31, %s32, %s33
    %p37 = pneg %p31
    %p38 = scmp.eq.s32.totalorder %s22, 1
    %p39 = por %p37, %p38
    %p40 = scmp.ne.s32.totalorder %s32, %s35
    %p41 = scmp.eq.s32.totalorder %s22, 0
    %p42 = por %p40, %p41
    %p43 = scmp.ne.s32.totalorder %s32, %s35
    %p44 = scmp.eq.s32.totalorder %s27, 1
    %p45 = por %p43, %p44
    %p46 = scmp.ne.s32.totalorder %s35, %s36
    %p47 = scmp.eq.s32.totalorder %s27, 0
    %p48 = por %p46, %p47
    %p49 = scmp.ne.s32.totalorder %s35, %s36
    %p50 = scmp.eq.s32.totalorder %s28, 1
    %p51 = por %p49, %p50
    %p53 = scmp.ne.s32.totalorder %s36, %s52
    %p54 = scmp.eq.s32.totalorder %s28, 0
    %p55 = por %p53, %p54
    %s57 = sadd.s32 %s56, 1
    %p60 = scmp.eq.s32.totalorder %s22, 1
    %p61 = scmp.ne.s32.totalorder %s56, %s58
    %p62 = scmp.eq.s32.totalorder %s22, 0
    %p63 = por %p61, %p62
    %p64 = scmp.ne.s32.totalorder %s56, %s58
    %p65 = scmp.eq.s32.totalorder %s27, 1
    %p66 = por %p64, %p65
    %p67 = scmp.ne.s32.totalorder %s58, %s59
    %p68 = scmp.eq.s32.totalorder %s27, 0
    %p69 = por %p67, %p68
    %p70 = scmp.ne.s32.totalorder %s58, %s59
    %p71 = scmp.eq.s32.totalorder %s28, 1
    %p72 = por %p70, %p71
    %p74 = scmp.ne.s32.totalorder %s59, %s73
    %p75 = scmp.eq.s32.totalorder %s28, 0
    %p76 = por %p74, %p75
    %s78 = sadd.s32 %s77, 1
    %p81 = scmp.eq.s32.totalorder %s22, 1
    %p82 = scmp.ne.s32.totalorder %s77, %s79
    %p83 = scmp.eq.s32.totalorder %s22, 0
    %p84 = por %p82, %p83
    %p85 = scmp.ne.s32.totalorder %s77, %s79
    %p86 = scmp.eq.s32.totalorder %s27, 1
    %p87 = por %p85, %p86
    %p88 = scmp.ne.s32.totalorder %s79, %s80
    %p89 = scmp.eq.s32.totalorder %s27, 0
    %p90 = por %p88, %p89
    %p91 = scmp.ne.s32.totalorder %s79, %s80
    %p92 = scmp.eq.s32.totalorder %s28, 1
    %p93 = por %p91, %p92
    %p95 = scmp.ne.s32.totalorder %s80, %s94
    %p96 = scmp.eq.s32.totalorder %s28, 0
    %p97 = por %p95, %p96
    %s99 = sadd.s32 %s98, 1
    %p102 = scmp.eq.s32.totalorder %s22, 1
    %p103 = scmp.ne.s32.totalorder %s98, %s100
    %p104 = scmp.eq.s32.totalorder %s22, 0
    %p105 = por %p103, %p104
    %p106 = scmp.ne.s32.totalorder %s98, %s100
    %p107 = scmp.eq.s32.totalorder %s27, 1
    %p108 = por %p106, %p107
    %p109 = scmp.ne.s32.totalorder %s100, %s101
    %p110 = scmp.eq.s32.totalorder %s27, 0
    %p111 = por %p109, %p110
    %p112 = scmp.ne.s32.totalorder %s100, %s101
    %p113 = scmp.eq.s32.totalorder %s28, 1
    %p114 = por %p112, %p113
    %p116 = scmp.ne.s32.totalorder %s101, %s115
    %p117 = scmp.eq.s32.totalorder %s28, 0
    %p118 = por %p116, %p117
    %s120 = sadd.s32 %s119, 1
    %p123 = scmp.eq.s32.totalorder %s22, 1
    %p124 = scmp.ne.s32.totalorder %s119, %s121
    %p125 = scmp.eq.s32.totalorder %s22, 0
    %p126 = por %p124, %p125
    %p127 = scmp.ne.s32.totalorder %s119, %s121
    %p128 = scmp.eq.s32.totalorder %s27, 1
    %p129 = por %p127, %p128
    %p130 = scmp.ne.s32.totalorder %s121, %s122
    %p131 = scmp.eq.s32.totalorder %s27, 0
    %p132 = por %p130, %p131
    %p133 = scmp.ne.s32.totalorder %s121, %s122
    %p134 = scmp.eq.s32.totalorder %s28, 1
    %p135 = por %p133, %p134
    %p137 = scmp.ne.s32.totalorder %s122, %s136
    %p138 = scmp.eq.s32.totalorder %s28, 0
    %p139 = por %p137, %p138
    %s141 = sadd.s32 %s140, 1
    %p144 = scmp.eq.s32.totalorder %s22, 1
    %p145 = scmp.ne.s32.totalorder %s140, %s142
    %p146 = scmp.eq.s32.totalorder %s22, 0
    %p147 = por %p145, %p146
    %p148 = scmp.ne.s32.totalorder %s140, %s142
    %p149 = scmp.eq.s32.totalorder %s27, 1
    %p150 = por %p148, %p149
    %p151 = scmp.ne.s32.totalorder %s142, %s143
    %p152 = scmp.eq.s32.totalorder %s27, 0
    %p153 = por %p151, %p152
    %p154 = scmp.ne.s32.totalorder %s142, %s143
    %p155 = scmp.eq.s32.totalorder %s28, 1
    %p156 = por %p154, %p155
    %p158 = scmp.ne.s32.totalorder %s143, %s157
    %p159 = scmp.eq.s32.totalorder %s28, 0
    %p160 = por %p158, %p159
    %s162 = sadd.s32 %s161, 1
    %p165 = scmp.eq.s32.totalorder %s22, 1
    %p166 = scmp.ne.s32.totalorder %s161, %s163
    %p167 = scmp.eq.s32.totalorder %s22, 0
    %p168 = por %p166, %p167
    %p169 = scmp.ne.s32.totalorder %s161, %s163
    %p170 = scmp.eq.s32.totalorder %s27, 1
    %p171 = por %p169, %p170
    %p172 = scmp.ne.s32.totalorder %s163, %s164
    %p173 = scmp.eq.s32.totalorder %s27, 0
    %p174 = por %p172, %p173
    %p175 = scmp.ne.s32.totalorder %s163, %s164
    %p176 = scmp.eq.s32.totalorder %s28, 1
    %p177 = por %p175, %p176
    %p179 = scmp.ne.s32.totalorder %s164, %s178
    %p180 = scmp.eq.s32.totalorder %s28, 0
    %p181 = por %p179, %p180
    %s183 = sadd.s32 %s182, 1
    %p186 = scmp.eq.s32.totalorder %s22, 1
    %p187 = scmp.ne.s32.totalorder %s182, %s184
    %p188 = scmp.eq.s32.totalorder %s22, 0
    %p189 = por %p187, %p188
    %p190 = scmp.ne.s32.totalorder %s182, %s184
    %p191 = scmp.eq.s32.totalorder %s27, 1
    %p192 = por %p190, %p191
    %p193 = scmp.ne.s32.totalorder %s184, %s185
    %p194 = scmp.eq.s32.totalorder %s27, 0
    %p195 = por %p193, %p194
    %p196 = scmp.ne.s32.totalorder %s184, %s185
    %p197 = scmp.eq.s32.totalorder %s28, 1
    %p198 = por %p196, %p197
    %p200 = scmp.ne.s32.totalorder %s185, %s199
    %p201 = scmp.eq.s32.totalorder %s28, 0
    %p202 = por %p200, %p201
    %s204 = sadd.s32 %s203, 1
    %p207 = scmp.eq.s32.totalorder %s22, 1
    %p208 = scmp.ne.s32.totalorder %s203, %s205
    %p209 = scmp.eq.s32.totalorder %s22, 0
    %p210 = por %p208, %p209
    %p211 = scmp.ne.s32.totalorder %s203, %s205
    %p212 = scmp.eq.s32.totalorder %s27, 1
    %p213 = por %p211, %p212
    %p214 = scmp.ne.s32.totalorder %s205, %s206
    %p215 = scmp.eq.s32.totalorder %s27, 0
    %p216 = por %p214, %p215
    %p217 = scmp.ne.s32.totalorder %s205, %s206
    %p218 = scmp.eq.s32.totalorder %s28, 1
    %p219 = por %p217, %p218
    %p221 = scmp.ne.s32.totalorder %s206, %s220
    %p222 = scmp.eq.s32.totalorder %s28, 0
    %p223 = por %p221, %p222
    %s225 = sadd.s32 %s224, 1
    %p228 = scmp.eq.s32.totalorder %s22, 1
    %p229 = scmp.ne.s32.totalorder %s224, %s226
    %p230 = scmp.eq.s32.totalorder %s22, 0
    %p231 = por %p229, %p230
    %p232 = scmp.ne.s32.totalorder %s224, %s226
    %p233 = scmp.eq.s32.totalorder %s27, 1
    %p234 = por %p232, %p233
    %p235 = scmp.ne.s32.totalorder %s226, %s227
    %p236 = scmp.eq.s32.totalorder %s27, 0
    %p237 = por %p235, %p236
    %p238 = scmp.ne.s32.totalorder %s226, %s227
    %p239 = scmp.eq.s32.totalorder %s28, 1
    %p240 = por %p238, %p239
    %p242 = scmp.ne.s32.totalorder %s227, %s241
    %p243 = scmp.eq.s32.totalorder %s28, 0
    %p244 = por %p242, %p243
    %s246 = sadd.s32 %s245, 1
    %p249 = scmp.eq.s32.totalorder %s22, 1
    %p250 = scmp.ne.s32.totalorder %s245, %s247
    %p251 = scmp.eq.s32.totalorder %s22, 0
    %p252 = por %p250, %p251
    %p253 = scmp.ne.s32.totalorder %s245, %s247
    %p254 = scmp.eq.s32.totalorder %s27, 1
    %p255 = por %p253, %p254
    %p256 = scmp.ne.s32.totalorder %s247, %s248
    %p257 = scmp.eq.s32.totalorder %s27, 0
    %p258 = por %p256, %p257
    %p259 = scmp.ne.s32.totalorder %s247, %s248
    %p260 = scmp.eq.s32.totalorder %s28, 1
    %p261 = por %p259, %p260
    %p263 = scmp.ne.s32.totalorder %s248, %s262
    %p264 = scmp.eq.s32.totalorder %s28, 0
    %p265 = por %p263, %p264
    %s267 = sadd.s32 %s266, 1
    %p270 = scmp.eq.s32.totalorder %s22, 1
    %p271 = scmp.ne.s32.totalorder %s266, %s268
    %p272 = scmp.eq.s32.totalorder %s22, 0
    %p273 = por %p271, %p272
    %p274 = scmp.ne.s32.totalorder %s266, %s268
    %p275 = scmp.eq.s32.totalorder %s27, 1
    %p276 = por %p274, %p275
    %p277 = scmp.ne.s32.totalorder %s268, %s269
    %p278 = scmp.eq.s32.totalorder %s27, 0
    %p279 = por %p277, %p278
    %p280 = scmp.ne.s32.totalorder %s268, %s269
    %p281 = scmp.eq.s32.totalorder %s28, 1
    %p282 = por %p280, %p281
    %p284 = scmp.ne.s32.totalorder %s269, %s283
    %p285 = scmp.eq.s32.totalorder %s28, 0
    %p286 = por %p284, %p285
    %s288 = sadd.s32 %s287, 1
    %p291 = scmp.eq.s32.totalorder %s22, 1
    %p292 = scmp.ne.s32.totalorder %s287, %s289
    %p293 = scmp.eq.s32.totalorder %s22, 0
    %p294 = por %p292, %p293
    %p295 = scmp.ne.s32.totalorder %s287, %s289
    %p296 = scmp.eq.s32.totalorder %s27, 1
    %p297 = por %p295, %p296
    %p298 = scmp.ne.s32.totalorder %s289, %s290
    %p299 = scmp.eq.s32.totalorder %s27, 0
    %p300 = por %p298, %p299
    %p301 = scmp.ne.s32.totalorder %s289, %s290
    %p302 = scmp.eq.s32.totalorder %s28, 1
    %p303 = por %p301, %p302
    %p305 = scmp.ne.s32.totalorder %s290, %s304
    %p306 = scmp.eq.s32.totalorder %s28, 0
    %p307 = por %p305, %p306
    %s309 = sadd.s32 %s308, 1
    %p312 = scmp.eq.s32.totalorder %s22, 1
    %p313 = scmp.ne.s32.totalorder %s308, %s310
    %p314 = scmp.eq.s32.totalorder %s22, 0
    %p315 = por %p313, %p314
    %p316 = scmp.ne.s32.totalorder %s308, %s310
    %p317 = scmp.eq.s32.totalorder %s27, 1
    %p318 = por %p316, %p317
    %p319 = scmp.ne.s32.totalorder %s310, %s311
    %p320 = scmp.eq.s32.totalorder %s27, 0
    %p321 = por %p319, %p320
    %p322 = scmp.ne.s32.totalorder %s310, %s311
    %p323 = scmp.eq.s32.totalorder %s28, 1
    %p324 = por %p322, %p323
    %p326 = scmp.ne.s32.totalorder %s311, %s325
    %p327 = scmp.eq.s32.totalorder %s28, 0
    %p328 = por %p326, %p327
    %s330 = sadd.s32 %s329, 1
    %p333 = scmp.eq.s32.totalorder %s22, 1
    %p334 = scmp.ne.s32.totalorder %s329, %s331
    %p335 = scmp.eq.s32.totalorder %s22, 0
    %p336 = por %p334, %p335
    %p337 = scmp.ne.s32.totalorder %s329, %s331
    %p338 = scmp.eq.s32.totalorder %s27, 1
    %p339 = por %p337, %p338
    %p340 = scmp.ne.s32.totalorder %s331, %s332
    %p341 = scmp.eq.s32.totalorder %s27, 0
    %p342 = por %p340, %p341
    %p343 = scmp.ne.s32.totalorder %s331, %s332
    %p344 = scmp.eq.s32.totalorder %s28, 1
    %p345 = por %p343, %p344
    %p347 = scmp.ne.s32.totalorder %s332, %s346
    %p348 = scmp.eq.s32.totalorder %s28, 0
    %p349 = por %p347, %p348
    %s351 = sadd.s32 %s350, 1
    %p354 = scmp.eq.s32.totalorder %s22, 1
    %p355 = scmp.ne.s32.totalorder %s350, %s352
    %p356 = scmp.eq.s32.totalorder %s22, 0
    %p357 = por %p355, %p356
    %p358 = scmp.ne.s32.totalorder %s350, %s352
    %p359 = scmp.eq.s32.totalorder %s27, 1
    %p360 = por %p358, %p359
    %p361 = scmp.ne.s32.totalorder %s352, %s353
    %p362 = scmp.eq.s32.totalorder %s27, 0
    %p363 = por %p361, %p362
    %p364 = scmp.ne.s32.totalorder %s352, %s353
    %p365 = scmp.eq.s32.totalorder %s28, 1
    %p366 = por %p364, %p365
    %p368 = scmp.ne.s32.totalorder %s353, %s367
    %p369 = scmp.eq.s32.totalorder %s28, 0
    %p370 = por %p368, %p369
    %s371 = ssub.s32 %s22, %s29
    %p372 = scmp.eq.s32.totalorder %s371, 0
    %s374 = sadd.s32 %s373, 1
    %s375 = scalar_select %p372, %s373, %s374
    %p378 = pneg %p372
    %p379 = scmp.eq.s32.totalorder %s22, 1
    %p380 = por %p378, %p379
    %p381 = scmp.ne.s32.totalorder %s373, %s376
    %p382 = scmp.eq.s32.totalorder %s22, 0
    %p383 = por %p381, %p382
    %p384 = scmp.ne.s32.totalorder %s373, %s376
    %p385 = scmp.eq.s32.totalorder %s27, 1
    %p386 = por %p384, %p385
    %p387 = scmp.ne.s32.totalorder %s376, %s377
    %p388 = scmp.eq.s32.totalorder %s27, 0
    %p389 = por %p387, %p388
    %p390 = scmp.ne.s32.totalorder %s376, %s377
    %p391 = scmp.eq.s32.totalorder %s28, 1
    %p392 = por %p390, %p391
    %p394 = scmp.ne.s32.totalorder %s377, %s393
    %p395 = scmp.eq.s32.totalorder %s28, 0
    %p396 = por %p394, %p395
    %p397 = scmp.le.s32.totalorder 1, %s22
    %p398 = scmp.lt.s32.totalorder %s22, 3
    %p399 = pnand %p397, %p398
    %p400 = pneg %p399
    // Predicated region
    $region9: #{_lambda_.9} parent=5 // pred_check
      _
    $region10: #{_lambda_.9} parent=5 // pred_check_branch
      %402 = sbr.rel (%p399) target = $region12
    $region11: #{_lambda_.9} parent=5 // pred_region
      %s403 = ssub.s32 %s22, 1
      // Predicated region
      $region13: #{_lambda_.9} parent=11 // pred_check
        %p404 = pneg %p69
      $region14: #{_lambda_.9} parent=11 // pred_check_branch
        %406 = sbr.rel (%p404) target = $region16
      $region15: #{_lambda_.9} parent=11 // pred_region
        _
      $region16: #{_lambda_.9} parent=11 // pred_fallthru
        _
      // Predicated region
      $region17: #{_lambda_.9} parent=11 // pred_check
        %p407 = pneg %p90
      $region18: #{_lambda_.9} parent=11 // pred_check_branch
        %409 = sbr.rel (%p407) target = $region20
      $region19: #{_lambda_.9} parent=11 // pred_region
        _
      $region20: #{_lambda_.9} parent=11 // pred_fallthru
        _
      // Predicated region
      $region21: #{_lambda_.9} parent=11 // pred_check
        %p410 = pneg %p111
      $region22: #{_lambda_.9} parent=11 // pred_check_branch
        %412 = sbr.rel (%p410) target = $region24
      $region23: #{_lambda_.9} parent=11 // pred_region
        _
      $region24: #{_lambda_.9} parent=11 // pred_fallthru
        _
      // Predicated region
      $region25: #{_lambda_.9} parent=11 // pred_check
        %p413 = pneg %p132
      $region26: #{_lambda_.9} parent=11 // pred_check_branch
        %415 = sbr.rel (%p413) target = $region28
      $region27: #{_lambda_.9} parent=11 // pred_region
        _
      $region28: #{_lambda_.9} parent=11 // pred_fallthru
        _
      // Predicated region
      $region29: #{_lambda_.9} parent=11 // pred_check
        %p416 = pneg %p153
      $region30: #{_lambda_.9} parent=11 // pred_check_branch
        %418 = sbr.rel (%p416) target = $region32
      $region31: #{_lambda_.9} parent=11 // pred_region
        _
      $region32: #{_lambda_.9} parent=11 // pred_fallthru
        _
      // Predicated region
      $region33: #{_lambda_.9} parent=11 // pred_check
        %p419 = pneg %p174
      $region34: #{_lambda_.9} parent=11 // pred_check_branch
        %421 = sbr.rel (%p419) target = $region36
      $region35: #{_lambda_.9} parent=11 // pred_region
        _
      $region36: #{_lambda_.9} parent=11 // pred_fallthru
        _
      // Predicated region
      $region37: #{_lambda_.9} parent=11 // pred_check
        %p422 = pneg %p195
      $region38: #{_lambda_.9} parent=11 // pred_check_branch
        %424 = sbr.rel (%p422) target = $region40
      $region39: #{_lambda_.9} parent=11 // pred_region
        _
      $region40: #{_lambda_.9} parent=11 // pred_fallthru
        _
      // Predicated region
      $region41: #{_lambda_.9} parent=11 // pred_check
        %p425 = pneg %p216
      $region42: #{_lambda_.9} parent=11 // pred_check_branch
        %427 = sbr.rel (%p425) target = $region44
      $region43: #{_lambda_.9} parent=11 // pred_region
        _
      $region44: #{_lambda_.9} parent=11 // pred_fallthru
        _
      // Predicated region
      $region45: #{_lambda_.9} parent=11 // pred_check
        %p428 = pneg %p237
      $region46: #{_lambda_.9} parent=11 // pred_check_branch
        %430 = sbr.rel (%p428) target = $region48
      $region47: #{_lambda_.9} parent=11 // pred_region
        _
      $region48: #{_lambda_.9} parent=11 // pred_fallthru
        _
      // Predicated region
      $region49: #{_lambda_.9} parent=11 // pred_check
        %p431 = pneg %p258
      $region50: #{_lambda_.9} parent=11 // pred_check_branch
        %433 = sbr.rel (%p431) target = $region52
      $region51: #{_lambda_.9} parent=11 // pred_region
        _
      $region52: #{_lambda_.9} parent=11 // pred_fallthru
        _
      // Predicated region
      $region53: #{_lambda_.9} parent=11 // pred_check
        %p434 = pneg %p279
      $region54: #{_lambda_.9} parent=11 // pred_check_branch
        %436 = sbr.rel (%p434) target = $region56
      $region55: #{_lambda_.9} parent=11 // pred_region
        _
      $region56: #{_lambda_.9} parent=11 // pred_fallthru
        _
      // Predicated region
      $region57: #{_lambda_.9} parent=11 // pred_check
        %p437 = pneg %p300
      $region58: #{_lambda_.9} parent=11 // pred_check_branch
        %439 = sbr.rel (%p437) target = $region60
      $region59: #{_lambda_.9} parent=11 // pred_region
        _
      $region60: #{_lambda_.9} parent=11 // pred_fallthru
        _
      // Predicated region
      $region61: #{_lambda_.9} parent=11 // pred_check
        %p440 = pneg %p321
      $region62: #{_lambda_.9} parent=11 // pred_check_branch
        %442 = sbr.rel (%p440) target = $region64
      $region63: #{_lambda_.9} parent=11 // pred_region
        _
      $region64: #{_lambda_.9} parent=11 // pred_fallthru
        _
      // Predicated region
      $region65: #{_lambda_.9} parent=11 // pred_check
        %p443 = pneg %p342
      $region66: #{_lambda_.9} parent=11 // pred_check_branch
        %445 = sbr.rel (%p443) target = $region68
      $region67: #{_lambda_.9} parent=11 // pred_region
        _
      $region68: #{_lambda_.9} parent=11 // pred_fallthru
        _
      // Predicated region
      $region69: #{_lambda_.9} parent=11 // pred_check
        %p446 = pneg %p363
      $region70: #{_lambda_.9} parent=11 // pred_check_branch
        %448 = sbr.rel (%p446) target = $region72
      $region71: #{_lambda_.9} parent=11 // pred_region
        _
      $region72: #{_lambda_.9} parent=11 // pred_fallthru
        _
    $region12: #{_lambda_.9} parent=5 // pred_fallthru
      _
    %p449 = scmp.lt.s32.totalorder %s22, 2
    // Predicated region
    $region73: #{_lambda_.9} parent=5 // pred_check
      %p450 = pneg %p449
    $region74: #{_lambda_.9} parent=5 // pred_check_branch
      %452 = sbr.rel (%p450) target = $region76
    $region75: #{_lambda_.9} parent=5 // pred_region
      // Predicated region
      $region77: #{_lambda_.9} parent=75 // pred_check
        %p453 = pneg %p42
      $region78: #{_lambda_.9} parent=75 // pred_check_branch
        %455 = sbr.rel (%p453) target = $region80
      $region79: #{_lambda_.9} parent=75 // pred_region
        %p456 = scmp.lt.s32.totalorder %s22, 1
        %s457 = scalar_select %p456, %s22, 1
        %s458 = smul.addr %s457, 2
        %s459 = smul.addr %s458, 8
        %s460 = scalar_lea.vmem %s0, %s459
      $region80: #{_lambda_.9} parent=75 // pred_fallthru
        _
    $region76: #{_lambda_.9} parent=5 // pred_fallthru
      _
    %p461 = scmp.le.s32.totalorder 1, %s22
    %p462 = scmp.lt.s32.totalorder %s22, 3
    %p463 = pnand %p461, %p462
    %p464 = pneg %p463
    // Predicated region
    $region81: #{_lambda_.9} parent=5 // pred_check
      _
    $region82: #{_lambda_.9} parent=5 // pred_check_branch
      %466 = sbr.rel (%p463) target = $region84
    $region83: #{_lambda_.9} parent=5 // pred_region
      %s467 = ssub.s32 %s22, 1
      %p468 = scmp.lt.s32.totalorder %s27, 1
      %s469 = scalar_select %p468, %s27, 1
      %s470 = smul.addr %s469, 2
      %s471 = smul.addr %s470, 8
      %s472 = scalar_lea.vmem %s0, %s471
      %p473 = pneg %p48
      %p474 = pneg %p45
      %p475 = pneg %p69
      %p476 = pneg %p66
      %p477 = pneg %p90
      %p478 = pneg %p87
      %p479 = pneg %p111
      %p480 = pneg %p108
      %p481 = pneg %p132
      %p482 = pneg %p129
      %p483 = pneg %p153
      %p484 = pneg %p150
      %p485 = pneg %p174
      %p486 = pneg %p171
      %p487 = pneg %p195
      %p488 = pneg %p192
      %p489 = pneg %p216
      %p490 = pneg %p213
      %p491 = pneg %p237
      %p492 = pneg %p234
      %p493 = pneg %p258
      %p494 = pneg %p255
      %p495 = pneg %p279
      %p496 = pneg %p276
      %p497 = pneg %p300
      %p498 = pneg %p297
      %p499 = pneg %p321
      %p500 = pneg %p318
      %p501 = pneg %p342
      %p502 = pneg %p339
      %p503 = pneg %p363
      %p504 = pneg %p360
      %p505 = pneg %p389
      %p506 = pneg %p386
      %p507 = scmp.lt.s32.totalorder %s27, 1
      %s508 = scalar_select %p507, %s27, 1
      %s509 = smul.addr %s508, 2
      %s510 = smul.addr %s509, 8
      %s511 = scalar_lea.vmem %s16, %s510
      %p512 = scmp.lt.s32.totalorder %s27, 1
      %s513 = scalar_select %p512, %s27, 1
      %s514 = smul.addr %s513, 2
      %s515 = smul.addr %s514, 8
      %s516 = scalar_lea.vmem %s0, %s515
      %p517 = scmp.lt.s32.totalorder %s27, 1
      %s518 = scalar_select %p517, %s27, 1
      %s519 = smul.addr %s518, 2
      %s520 = smul.addr %s519, 8
      %s521 = scalar_lea.vmem %s16, %s520
      %v523 = vld [vmem:[%s516] sm:$0xff]
      %v524 = vld [vmem:[%s516 + $0x8] sm:$0xff]
      %v525 = vld [vmem:[%s1] sm:$0xff]
      %v526 = vld [vmem:[%s1 + $0x8] sm:$0xff]
      %v527 = vld [vmem:[%s2] sm:$0xf]
      %v528 = vld [vmem:[%s2 + $0x4] sm:$0xf]
      %v529 = vld [vmem:[%s2 + $0x8] sm:$0xf]
      %v530 = vld [vmem:[%s2 + $0xc] sm:$0xf]
      %v531 = vld [vmem:[%s3] sm:$0x1]
      %v532 = vld [vmem:[%s4] sm:$0xf]
      %v533 = vld [vmem:[%s4 + $0x4] sm:$0xf]
      %v534 = vld [vmem:[%s4 + $0x8] sm:$0xf]
      %v535 = vld [vmem:[%s4 + $0xc] sm:$0xf]
      %v536 = vld [vmem:[%s5] sm:$0x1]
      %v537 = vpack.c.bf16 %v524, %v523
      %v539 = vlaneseq
      %v540 = vshrl.u32 %v539, 7
      %v541 = vsub.s32 0, %v540
      %v542 = vrot.slane %v531, %v541
      %v548 = vunpack.c.l.b16 %v527
      %v549 = vunpack.c.l.b16 %v528
      %v550 = vunpack.c.l.b16 %v529
      %v551 = vunpack.c.l.b16 %v530
      %v552 = vpack.c.b16 %v549, %v548
      %v553 = vpack.c.b16 %v551, %v550
      %vm556 = vcmask 261120
      %v558 = vsel %vm556, %v537, 0
      %560 = vmatprep.subr.bf16.mxu0 0
      %561 = vmatpush1.bf16.msra.mxu0 0
      %562 = vmatprep.subr.bf16.mxu0 0
      %563 = vmatpush1.bf16.msra.mxu0 0
      %564 = vmatprep.subr.bf16.mxu0 0
      %565 = vmatpush1.bf16.msra.mxu0 0
      %566 = vmatprep.subr.bf16.mxu0 0
      %567 = vmatpush1.bf16.msra.mxu0 0
      %568 = vmatprep.subr.bf16.mxu0 0
      %569 = vmatpush1.bf16.msra.mxu0 0
      %570 = vmatprep.subr.bf16.mxu0 0
      %571 = vmatpush1.bf16.msra.mxu0 0
      %572 = vmatprep.subr.bf16.mxu0 0
      %573 = vmatpush1.bf16.msra.mxu0 %v553
      %574 = vmatprep.subr.bf16.mxu0 0
      %575 = vmatpush1.bf16.msra.mxu0 %v552
      %576 = vmatprep.subr.bf16.mxu0 0
      %577 = vmatpush2.bf16.msra.mxu0 0
      %578 = vmatprep.subr.bf16.mxu0 0
      %579 = vmatpush2.bf16.msra.mxu0 0
      %580 = vmatprep.subr.bf16.mxu0 0
      %581 = vmatpush2.bf16.msra.mxu0 0
      %582 = vmatprep.subr.bf16.mxu0 0
      %583 = vmatpush2.bf16.msra.mxu0 0
      %584 = vmatprep.subr.bf16.mxu0 0
      %585 = vmatpush2.bf16.msra.mxu0 0
      %586 = vmatprep.subr.bf16.mxu0 0
      %587 = vmatpush2.bf16.msra.mxu0 0
      %588 = vmatprep.subr.bf16.mxu0 0
      %589 = vmatpush2.bf16.msra.mxu0 0
      %590 = vmatprep.subr.bf16.mxu0 0
      %591 = vmatpush2.bf16.msra.mxu0 0
      %592 = vmatprep.mubr.bf16.mxu0 0
      %593 = vmatmul.mubr.bf16.gmra.mxu0 %v558
      %v594 = vpop.f32.mrf.mxu0
      %v595 = vadd.f32 %v542, %v594
      %v596 = vpop.f32.mrf.mxu0
      %v597 = vpop.f32.mrf.mxu0
      %v598 = vadd.f32 %v542, %v597
      %v599 = vpop.f32.mrf.mxu0
      %600 = vdwg.mxu0
      %v601 = vlaneseq
      %v602 = vshrl.u32 %v601, 7
      %v603 = vadd.s32 %v602, 8
      %v604 = vlaneseq
      %v605 = vand.u32 %v604, 127
      %vm606 = vcmask 785920
      %v607 = vsel %vm606, %v595, 0.0
      %v608 = vsel %vm606, %v598, 0.0
      %v609 = vadd.f32 %v607, %v608
      %v610 = vrot.slane %v609, 4
      %v611 = vadd.f32 %v609, %v610
      %v612 = vrot.slane %v611, 2
      %v613 = vadd.f32 %v611, %v612
      %v614 = vrot.slane %v613, 1
      %v615 = vadd.f32 %v613, %v614
      %v616 = vrcp.pop 16.0
      %v617 = vmul.f32 %v615, %v616
      %v618 = vpack.c.bf16 %v598, %v595
      %620 = vrot.lane.b32.xlu0 %v618, 96
      %v621 = vpop.permute.xlu0 %620
      %vm622 = vcmask 64512
      %v624 = vsel %vm622, %v618, 0
      %v627 = vsel %vm622, %v621, 0
      %629 = vmatprep.subr.bf16.mxu0 0
      %630 = vmatpush1.bf16.xpose.msra.mxu0 0
      %631 = vmatprep.subr.bf16.mxu0 0
      %632 = vmatpush1.bf16.xpose.msra.mxu0 0
      %633 = vmatprep.subr.bf16.mxu0 0
      %634 = vmatpush1.bf16.xpose.msra.mxu0 0
      %635 = vmatprep.subr.bf16.mxu0 0
      %636 = vmatpush1.bf16.xpose.msra.mxu0 0
      %637 = vmatprep.subr.bf16.mxu0 0
      %638 = vmatpush1.bf16.xpose.msra.mxu0 0
      %639 = vmatprep.subr.bf16.mxu0 0
      %640 = vmatpush1.bf16.xpose.msra.mxu0 0
      %641 = vmatprep.subr.bf16.mxu0 0
      %642 = vmatpush1.bf16.xpose.msra.mxu0 0
      %643 = vmatprep.subr.bf16.mxu0 0
      %644 = vmatpush1.bf16.xpose.msra.mxu0 %v627
      %645 = vmatprep.subr.bf16.mxu0 0
      %646 = vmatpush2.bf16.xpose.msra.mxu0 0
      %647 = vmatprep.subr.bf16.mxu0 0
      %648 = vmatpush2.bf16.xpose.msra.mxu0 0
      %649 = vmatprep.subr.bf16.mxu0 0
      %650 = vmatpush2.bf16.xpose.msra.mxu0 0
      %651 = vmatprep.subr.bf16.mxu0 0
      %652 = vmatpush2.bf16.xpose.msra.mxu0 0
      %653 = vmatprep.subr.bf16.mxu0 0
      %654 = vmatpush2.bf16.xpose.msra.mxu0 0
      %655 = vmatprep.subr.bf16.mxu0 0
      %656 = vmatpush2.bf16.xpose.msra.mxu0 0
      %657 = vmatprep.subr.bf16.mxu0 0
      %658 = vmatpush2.bf16.xpose.msra.mxu0 0
      %659 = vmatprep.subr.bf16.mxu0 0
      %660 = vmatpush2.bf16.xpose.msra.mxu0 0
      %661 = vmatprep.mubr.bf16.mxu0 0
      %662 = vmatmul.mubr.bf16.gmra.mxu0 %v624
      %v663 = vpop.f32.mrf.mxu0
      %v664 = vadd.f32 0.0, %v663
      %v665 = vpop.f32.mrf.mxu0
      %v666 = vpop.f32.mrf.mxu0
      %v667 = vadd.f32 0.0, %v666
      %v668 = vpop.f32.mrf.mxu0
      %669 = vdwg.mxu0
      %v670 = vmul.f32 %v664, 0.35355338
      %v671 = vmul.f32 %v667, 0.35355338
      %vm672 = vcmask 130048
      %v673 = vsel %vm672, %v670, -inf
      %674 = vmax.xlane.f32.xlu0 %v673
      %v675 = vpop.xlane.xlu0 %674
      %v676 = vsel %vm672, %v671, -inf
      %677 = vmax.xlane.f32.xlu0 %v676
      %v678 = vpop.xlane.xlu0 %677
      %v679 = vsub.f32 %v670, %v675
      %v680 = vsub.f32 %v671, %v678
      %v681 = vmul.f32 %v679, 1.442695
      %v682 = vpow.pop %v681
      %v683 = vmul.f32 %v680, 1.442695
      %v684 = vpow.pop %v683
      %v685 = vsel %vm672, %v682, 0.0
      %686 = vadd.xlane.f32.xlu0 %v685
      %v687 = vpop.xlane.xlu0 %686
      %v688 = vsel %vm672, %v684, 0.0
      %689 = vadd.xlane.f32.xlu0 %v688
      %v690 = vpop.xlane.xlu0 %689
      %v691 = vrcp.pop %v687
      %v692 = vrcp.pop %v690
      %v693 = vmul.f32 %v682, %v691
      %v694 = vmul.f32 %v684, %v692
      %v695 = vpack.c.bf16 %v694, %v693
      %696 = vrot.lane.b32.xlu0 %v618, 64
      %v697 = vpop.permute.xlu0 %696
      %v700 = vsel %vm672, %v695, 0
      %702 = vmatprep.subr.bf16.mxu0 0
      %703 = vmatpush1.bf16.msra.mxu0 0
      %704 = vmatprep.subr.bf16.mxu0 0
      %705 = vmatpush1.bf16.msra.mxu0 0
      %706 = vmatprep.subr.bf16.mxu0 0
      %707 = vmatpush1.bf16.msra.mxu0 0
      %708 = vmatprep.subr.bf16.mxu0 0
      %709 = vmatpush1.bf16.msra.mxu0 0
      %710 = vmatprep.subr.bf16.mxu0 0
      %711 = vmatpush1.bf16.msra.mxu0 0
      %712 = vmatprep.subr.bf16.mxu0 0
      %713 = vmatpush1.bf16.msra.mxu0 0
      %714 = vmatprep.subr.bf16.mxu0 0
      %715 = vmatpush1.bf16.msra.mxu0 0
      %716 = vmatprep.subr.bf16.mxu0 0
      %717 = vmatpush1.bf16.msra.mxu0 %v697
      %718 = vmatprep.subr.bf16.mxu0 0
      %719 = vmatpush2.bf16.msra.mxu0 0
      %720 = vmatprep.subr.bf16.mxu0 0
      %721 = vmatpush2.bf16.msra.mxu0 0
      %722 = vmatprep.subr.bf16.mxu0 0
      %723 = vmatpush2.bf16.msra.mxu0 0
      %724 = vmatprep.subr.bf16.mxu0 0
      %725 = vmatpush2.bf16.msra.mxu0 0
      %726 = vmatprep.subr.bf16.mxu0 0
      %727 = vmatpush2.bf16.msra.mxu0 0
      %728 = vmatprep.subr.bf16.mxu0 0
      %729 = vmatpush2.bf16.msra.mxu0 0
      %730 = vmatprep.subr.bf16.mxu0 0
      %731 = vmatpush2.bf16.msra.mxu0 0
      %732 = vmatprep.subr.bf16.mxu0 0
      %733 = vmatpush2.bf16.msra.mxu0 0
      %734 = vmatprep.mubr.bf16.mxu0 0
      %735 = vmatmul.mubr.bf16.gmra.mxu0 %v700
      %v736 = vpop.f32.mrf.mxu0
      %v737 = vadd.f32 0.0, %v736
      %v738 = vpop.f32.mrf.mxu0
      %v739 = vpop.f32.mrf.mxu0
      %v740 = vadd.f32 0.0, %v739
      %v741 = vpop.f32.mrf.mxu0
      %742 = vdwg.mxu0
      %vm743 = vcmp.gt.f32.partialorder %v525, 0.0
      %vm744 = vcmp.gt.f32.partialorder %v526, 0.0
      %v745 = vsel %vm743, %v664, -inf
      %v746 = vsel %vm744, %v667, -inf
      %v747 = vsel %vm672, %v745, -inf
      %748 = vmax.xlane.f32.xlu0 %v747
      %v749 = vpop.xlane.xlu0 %748
      %v750 = vsel %vm672, %v746, -inf
      %751 = vmax.xlane.f32.xlu0 %v750
      %v752 = vpop.xlane.xlu0 %751
      %v753 = vmul.f32 %v525, %v664
      %v754 = vmul.f32 %v526, %v667
      %v755 = vsel %vm672, %v753, 0.0
      %756 = vadd.xlane.f32.xlu0 %v755
      %v757 = vpop.xlane.xlu0 %756
      %v758 = vsel %vm672, %v754, 0.0
      %759 = vadd.xlane.f32.xlu0 %v758
      %v760 = vpop.xlane.xlu0 %759
      %v761 = vmul.f32 %v757, 0.0625
      %v762 = vmul.f32 %v760, 0.0625
      %v763 = vsub.f32 %v749, %v761
      %v764 = vsub.f32 %v752, %v762
      %765 = vxpose.xlu0.b32.start [1/16] %v763, 128
      %766 = vxpose.xlu0.b32.cont [2/16] %v764, 128
      %767 = vxpose.xlu0.b32.cont [3/16] 0.0, 128
      %768 = vxpose.xlu0.b32.cont [4/16] 0.0, 128
      %769 = vxpose.xlu0.b32.cont [5/16] 0.0, 128
      %770 = vxpose.xlu0.b32.cont [6/16] 0.0, 128
      %771 = vxpose.xlu0.b32.cont [7/16] 0.0, 128
      %772 = vxpose.xlu0.b32.cont [8/16] 0.0, 128
      %773 = vxpose.xlu0.b32.cont [9/16] 0.0, 128
      %774 = vxpose.xlu0.b32.cont [10/16] 0.0, 128
      %775 = vxpose.xlu0.b32.cont [11/16] 0.0, 128
      %776 = vxpose.xlu0.b32.cont [12/16] 0.0, 128
      %777 = vxpose.xlu0.b32.cont [13/16] 0.0, 128
      %778 = vxpose.xlu0.b32.cont [14/16] 0.0, 128
      %779 = vxpose.xlu0.b32.cont [15/16] 0.0, 128
      %780 = vxpose.xlu0.b32.end [16/16] 0.0, 128
      %v781 = vpop.trf.xlu0
      %v782 = vpop.trf.xlu0
      %v783 = vpop.trf.xlu0
      %v784 = vpop.trf.xlu0
      %v785 = vpop.trf.xlu0
      %v786 = vpop.trf.xlu0
      %v787 = vpop.trf.xlu0
      %v788 = vpop.trf.xlu0
      %v789 = vpop.trf.xlu0
      %v790 = vpop.trf.xlu0
      %v791 = vpop.trf.xlu0
      %v792 = vpop.trf.xlu0
      %v793 = vpop.trf.xlu0
      %v794 = vpop.trf.xlu0
      %v795 = vpop.trf.xlu0
      %v796 = vpop.trf.xlu0
      %vm797 = vcmp.gt.f32.partialorder %v781, %v763
      %vm798 = vcmp.gt.f32.partialorder %v782, %v764
      %vm799 = vcmp.eq.f32.partialorder %v781, %v763
      %vm800 = vcmp.eq.f32.partialorder %v782, %v764
      %vm801 = vcmp.lt.s32.totalorder %v605, %v602
      %vm802 = vcmp.lt.s32.totalorder %v605, %v603
      %vm803 = vmand %vm799, %vm801
      %vm804 = vmand %vm800, %vm802
      %vm805 = vmor %vm797, %vm803
      %vm806 = vmor %vm798, %vm804
      %v807 = vsel %vm805, 1, 0
      %v808 = vsel %vm806, 1, 0
      %v809 = vcvt.s32.f32 %v807
      %v810 = vcvt.s32.f32 %v808
      %v811 = vsel %vm672, %v809, 0.0
      %812 = vadd.xlane.f32.xlu0 %v811
      %v813 = vpop.xlane.xlu0 %812
      %v814 = vsel %vm672, %v810, 0.0
      %815 = vadd.xlane.f32.xlu0 %v814
      %v816 = vpop.xlane.xlu0 %815
      %vm817 = vcmp.lt.f32.partialorder %v813, 15.0
      %vm818 = vcmp.lt.f32.partialorder %v816, 15.0
      %v819 = vsel %vm817, 1, 0
      %v820 = vsel %vm818, 1, 0
      %vm821 = vcmp.eq.s32.totalorder %v819, 1
      %vm822 = vcmp.eq.s32.totalorder %v820, 1
      %824 = vrot.lane.b32.xlu0 %v617, 64
      %v825 = vpop.permute.xlu0 %824
      %v827 = vsel %vm821, %v737, %v825
      %v828 = vsel %vm822, %v740, %v825
      %829 = vrot.lane.b32.xlu0 %v618, 120
      %v830 = vpop.permute.xlu0 %829
      %831 = vrot.lane.b32.xlu0 %v618, 88
      %v832 = vpop.permute.xlu0 %831
      %v834 = vsel %vm622, %v830, 0
      %v837 = vsel %vm622, %v832, 0
      %839 = vmatprep.subr.bf16.mxu0 0
      %840 = vmatpush1.bf16.xpose.msra.mxu0 0
      %841 = vmatprep.subr.bf16.mxu0 0
      %842 = vmatpush1.bf16.xpose.msra.mxu0 0
      %843 = vmatprep.subr.bf16.mxu0 0
      %844 = vmatpush1.bf16.xpose.msra.mxu0 0
      %845 = vmatprep.subr.bf16.mxu0 0
      %846 = vmatpush1.bf16.xpose.msra.mxu0 0
      %847 = vmatprep.subr.bf16.mxu0 0
      %848 = vmatpush1.bf16.xpose.msra.mxu0 0
      %849 = vmatprep.subr.bf16.mxu0 0
      %850 = vmatpush1.bf16.xpose.msra.mxu0 0
      %851 = vmatprep.subr.bf16.mxu0 0
      %852 = vmatpush1.bf16.xpose.msra.mxu0 0
      %853 = vmatprep.subr.bf16.mxu0 0
      %854 = vmatpush1.bf16.xpose.msra.mxu0 %v837
      %855 = vmatprep.subr.bf16.mxu0 0
      %856 = vmatpush2.bf16.xpose.msra.mxu0 0
      %857 = vmatprep.subr.bf16.mxu0 0
      %858 = vmatpush2.bf16.xpose.msra.mxu0 0
      %859 = vmatprep.subr.bf16.mxu0 0
      %860 = vmatpush2.bf16.xpose.msra.mxu0 0
      %861 = vmatprep.subr.bf16.mxu0 0
      %862 = vmatpush2.bf16.xpose.msra.mxu0 0
      %863 = vmatprep.subr.bf16.mxu0 0
      %864 = vmatpush2.bf16.xpose.msra.mxu0 0
      %865 = vmatprep.subr.bf16.mxu0 0
      %866 = vmatpush2.bf16.xpose.msra.mxu0 0
      %867 = vmatprep.subr.bf16.mxu0 0
      %868 = vmatpush2.bf16.xpose.msra.mxu0 0
      %869 = vmatprep.subr.bf16.mxu0 0
      %870 = vmatpush2.bf16.xpose.msra.mxu0 0
      %871 = vmatprep.mubr.bf16.mxu0 0
      %872 = vmatmul.mubr.bf16.gmra.mxu0 %v834
      %v873 = vpop.f32.mrf.mxu0
      %v874 = vadd.f32 0.0, %v873
      %v875 = vpop.f32.mrf.mxu0
      %v876 = vpop.f32.mrf.mxu0
      %v877 = vadd.f32 0.0, %v876
      %v878 = vpop.f32.mrf.mxu0
      %879 = vdwg.mxu0
      %v880 = vmul.f32 %v874, 0.35355338
      %v881 = vmul.f32 %v877, 0.35355338
      %v882 = vsel %vm672, %v880, -inf
      %883 = vmax.xlane.f32.xlu0 %v882
      %v884 = vpop.xlane.xlu0 %883
      %v885 = vsel %vm672, %v881, -inf
      %886 = vmax.xlane.f32.xlu0 %v885
      %v887 = vpop.xlane.xlu0 %886
      %v888 = vsub.f32 %v880, %v884
      %v889 = vsub.f32 %v881, %v887
      %v890 = vmul.f32 %v888, 1.442695
      %v891 = vpow.pop %v890
      %v892 = vmul.f32 %v889, 1.442695
      %v893 = vpow.pop %v892
      %v894 = vsel %vm672, %v891, 0.0
      %895 = vadd.xlane.f32.xlu0 %v894
      %v896 = vpop.xlane.xlu0 %895
      %v897 = vsel %vm672, %v893, 0.0
      %898 = vadd.xlane.f32.xlu0 %v897
      %v899 = vpop.xlane.xlu0 %898
      %v900 = vrcp.pop %v896
      %v901 = vrcp.pop %v899
      %v902 = vmul.f32 %v891, %v900
      %v903 = vmul.f32 %v893, %v901
      %v904 = vpack.c.bf16 %v903, %v902
      %905 = vrot.lane.b32.xlu0 %v618, 56
      %v906 = vpop.permute.xlu0 %905
      %v909 = vsel %vm672, %v904, 0
      %911 = vmatprep.subr.bf16.mxu0 0
      %912 = vmatpush1.bf16.msra.mxu0 0
      %913 = vmatprep.subr.bf16.mxu0 0
      %914 = vmatpush1.bf16.msra.mxu0 0
      %915 = vmatprep.subr.bf16.mxu0 0
      %916 = vmatpush1.bf16.msra.mxu0 0
      %917 = vmatprep.subr.bf16.mxu0 0
      %918 = vmatpush1.bf16.msra.mxu0 0
      %919 = vmatprep.subr.bf16.mxu0 0
      %920 = vmatpush1.bf16.msra.mxu0 0
      %921 = vmatprep.subr.bf16.mxu0 0
      %922 = vmatpush1.bf16.msra.mxu0 0
      %923 = vmatprep.subr.bf16.mxu0 0
      %924 = vmatpush1.bf16.msra.mxu0 0
      %925 = vmatprep.subr.bf16.mxu0 0
      %926 = vmatpush1.bf16.msra.mxu0 %v906
      %927 = vmatprep.subr.bf16.mxu0 0
      %928 = vmatpush2.bf16.msra.mxu0 0
      %929 = vmatprep.subr.bf16.mxu0 0
      %930 = vmatpush2.bf16.msra.mxu0 0
      %931 = vmatprep.subr.bf16.mxu0 0
      %932 = vmatpush2.bf16.msra.mxu0 0
      %933 = vmatprep.subr.bf16.mxu0 0
      %934 = vmatpush2.bf16.msra.mxu0 0
      %935 = vmatprep.subr.bf16.mxu0 0
      %936 = vmatpush2.bf16.msra.mxu0 0
      %937 = vmatprep.subr.bf16.mxu0 0
      %938 = vmatpush2.bf16.msra.mxu0 0
      %939 = vmatprep.subr.bf16.mxu0 0
      %940 = vmatpush2.bf16.msra.mxu0 0
      %941 = vmatprep.subr.bf16.mxu0 0
      %942 = vmatpush2.bf16.msra.mxu0 0
      %943 = vmatprep.mubr.bf16.mxu0 0
      %944 = vmatmul.mubr.bf16.gmra.mxu0 %v909
      %v945 = vpop.f32.mrf.mxu0
      %v946 = vadd.f32 0.0, %v945
      %v947 = vpop.f32.mrf.mxu0
      %v948 = vpop.f32.mrf.mxu0
      %v949 = vadd.f32 0.0, %v948
      %v950 = vpop.f32.mrf.mxu0
      %951 = vdwg.mxu0
      %v952 = vsel %vm743, %v874, -inf
      %v953 = vsel %vm744, %v877, -inf
      %v954 = vsel %vm672, %v952, -inf
      %955 = vmax.xlane.f32.xlu0 %v954
      %v956 = vpop.xlane.xlu0 %955
      %v957 = vsel %vm672, %v953, -inf
      %958 = vmax.xlane.f32.xlu0 %v957
      %v959 = vpop.xlane.xlu0 %958
      %v960 = vmul.f32 %v525, %v874
      %v961 = vmul.f32 %v526, %v877
      %v962 = vsel %vm672, %v960, 0.0
      %963 = vadd.xlane.f32.xlu0 %v962
      %v964 = vpop.xlane.xlu0 %963
      %v965 = vsel %vm672, %v961, 0.0
      %966 = vadd.xlane.f32.xlu0 %v965
      %v967 = vpop.xlane.xlu0 %966
      %v968 = vmul.f32 %v964, 0.0625
      %v969 = vmul.f32 %v967, 0.0625
      %v970 = vsub.f32 %v956, %v968
      %v971 = vsub.f32 %v959, %v969
      %972 = vxpose.xlu0.b32.start [1/16] %v970, 128
      %973 = vxpose.xlu0.b32.cont [2/16] %v971, 128
      %974 = vxpose.xlu0.b32.cont [3/16] 0.0, 128
      %975 = vxpose.xlu0.b32.cont [4/16] 0.0, 128
      %976 = vxpose.xlu0.b32.cont [5/16] 0.0, 128
      %977 = vxpose.xlu0.b32.cont [6/16] 0.0, 128
      %978 = vxpose.xlu0.b32.cont [7/16] 0.0, 128
      %979 = vxpose.xlu0.b32.cont [8/16] 0.0, 128
      %980 = vxpose.xlu0.b32.cont [9/16] 0.0, 128
      %981 = vxpose.xlu0.b32.cont [10/16] 0.0, 128
      %982 = vxpose.xlu0.b32.cont [11/16] 0.0, 128
      %983 = vxpose.xlu0.b32.cont [12/16] 0.0, 128
      %984 = vxpose.xlu0.b32.cont [13/16] 0.0, 128
      %985 = vxpose.xlu0.b32.cont [14/16] 0.0, 128
      %986 = vxpose.xlu0.b32.cont [15/16] 0.0, 128
      %987 = vxpose.xlu0.b32.end [16/16] 0.0, 128
      %v988 = vpop.trf.xlu0
      %v989 = vpop.trf.xlu0
      %v990 = vpop.trf.xlu0
      %v991 = vpop.trf.xlu0
      %v992 = vpop.trf.xlu0
      %v993 = vpop.trf.xlu0
      %v994 = vpop.trf.xlu0
      %v995 = vpop.trf.xlu0
      %v996 = vpop.trf.xlu0
      %v997 = vpop.trf.xlu0
      %v998 = vpop.trf.xlu0
      %v999 = vpop.trf.xlu0
      %v1000 = vpop.trf.xlu0
      %v1001 = vpop.trf.xlu0
      %v1002 = vpop.trf.xlu0
      %v1003 = vpop.trf.xlu0
      %vm1004 = vcmp.gt.f32.partialorder %v988, %v970
      %vm1005 = vcmp.gt.f32.partialorder %v989, %v971
      %vm1006 = vcmp.eq.f32.partialorder %v988, %v970
      %vm1007 = vcmp.eq.f32.partialorder %v989, %v971
      %vm1008 = vmand %vm1006, %vm801
      %vm1009 = vmand %vm1007, %vm802
      %vm1010 = vmor %vm1004, %vm1008
      %vm1011 = vmor %vm1005, %vm1009
      %v1012 = vsel %vm1010, 1, 0
      %v1013 = vsel %vm1011, 1, 0
      %v1014 = vcvt.s32.f32 %v1012
      %v1015 = vcvt.s32.f32 %v1013
      %v1016 = vsel %vm672, %v1014, 0.0
      %1017 = vadd.xlane.f32.xlu0 %v1016
      %v1018 = vpop.xlane.xlu0 %1017
      %v1019 = vsel %vm672, %v1015, 0.0
      %1020 = vadd.xlane.f32.xlu0 %v1019
      %v1021 = vpop.xlane.xlu0 %1020
      %vm1022 = vcmp.lt.f32.partialorder %v1018, 15.0
      %vm1023 = vcmp.lt.f32.partialorder %v1021, 15.0
      %v1024 = vsel %vm1022, 1, 0
      %v1025 = vsel %vm1023, 1, 0
      %vm1026 = vcmp.eq.s32.totalorder %v1024, 1
      %vm1027 = vcmp.eq.s32.totalorder %v1025, 1
      %1028 = vrot.lane.b32.xlu0 %v617, 56
      %v1029 = vpop.permute.xlu0 %1028
      %v1031 = vsel %vm1026, %v946, %v1029
      %v1032 = vsel %vm1027, %v949, %v1029
      %1033 = vrot.lane.b32.xlu0 %v618, 112
      %v1034 = vpop.permute.xlu0 %1033
      %1035 = vrot.lane.b32.xlu0 %v618, 80
      %v1036 = vpop.permute.xlu0 %1035
      %v1038 = vsel %vm622, %v1034, 0
      %v1041 = vsel %vm622, %v1036, 0
      %1043 = vmatprep.subr.bf16.mxu0 0
      %1044 = vmatpush1.bf16.xpose.msra.mxu0 0
      %1045 = vmatprep.subr.bf16.mxu0 0
      %1046 = vmatpush1.bf16.xpose.msra.mxu0 0
      %1047 = vmatprep.subr.bf16.mxu0 0
      %1048 = vmatpush1.bf16.xpose.msra.mxu0 0
      %1049 = vmatprep.subr.bf16.mxu0 0
      %1050 = vmatpush1.bf16.xpose.msra.mxu0 0
      %1051 = vmatprep.subr.bf16.mxu0 0
      %1052 = vmatpush1.bf16.xpose.msra.mxu0 0
      %1053 = vmatprep.subr.bf16.mxu0 0
      %1054 = vmatpush1.bf16.xpose.msra.mxu0 0
      %1055 = vmatprep.subr.bf16.mxu0 0
      %1056 = vmatpush1.bf16.xpose.msra.mxu0 0
      %1057 = vmatprep.subr.bf16.mxu0 0
      %1058 = vmatpush1.bf16.xpose.msra.mxu0 %v1041
      %1059 = vmatprep.subr.bf16.mxu0 0
      %1060 = vmatpush2.bf16.xpose.msra.mxu0 0
      %1061 = vmatprep.subr.bf16.mxu0 0
      %1062 = vmatpush2.bf16.xpose.msra.mxu0 0
      %1063 = vmatprep.subr.bf16.mxu0 0
      %1064 = vmatpush2.bf16.xpose.msra.mxu0 0
      %1065 = vmatprep.subr.bf16.mxu0 0
      %1066 = vmatpush2.bf16.xpose.msra.mxu0 0
      %1067 = vmatprep.subr.bf16.mxu0 0
      %1068 = vmatpush2.bf16.xpose.msra.mxu0 0
      %1069 = vmatprep.subr.bf16.mxu0 0
      %1070 = vmatpush2.bf16.xpose.msra.mxu0 0
      %1071 = vmatprep.subr.bf16.mxu0 0
      %1072 = vmatpush2.bf16.xpose.msra.mxu0 0
      %1073 = vmatprep.subr.bf16.mxu0 0
      %1074 = vmatpush2.bf16.xpose.msra.mxu0 0
      %1075 = vmatprep.mubr.bf16.mxu0 0
      %1076 = vmatmul.mubr.bf16.gmra.mxu0 %v1038
      %v1077 = vpop.f32.mrf.mxu0
      %v1078 = vadd.f32 0.0, %v1077
      %v1079 = vpop.f32.mrf.mxu0
      %v1080 = vpop.f32.mrf.mxu0
      %v1081 = vadd.f32 0.0, %v1080
      %v1082 = vpop.f32.mrf.mxu0
      %1083 = vdwg.mxu0
      %v1084 = vmul.f32 %v1078, 0.35355338
      %v1085 = vmul.f32 %v1081, 0.35355338
      %v1086 = vsel %vm672, %v1084, -inf
      %1087 = vmax.xlane.f32.xlu0 %v1086
      %v1088 = vpop.xlane.xlu0 %1087
      %v1089 = vsel %vm672, %v1085, -inf
      %1090 = vmax.xlane.f32.xlu0 %v1089
      %v1091 = vpop.xlane.xlu0 %1090
      %v1092 = vsub.f32 %v1084, %v1088
      %v1093 = vsub.f32 %v1085, %v1091
      %v1094 = vmul.f32 %v1092, 1.442695
      %v1095 = vpow.pop %v1094
      %v1096 = vmul.f32 %v1093, 1.442695
      %v1097 = vpow.pop %v1096
      %v1098 = vsel %vm672, %v1095, 0.0
      %1099 = vadd.xlane.f32.xlu0 %v1098
      %v1100 = vpop.xlane.xlu0 %1099
      %v1101 = vsel %vm672, %v1097, 0.0
      %1102 = vadd.xlane.f32.xlu0 %v1101
      %v1103 = vpop.xlane.xlu0 %1102
      %v1104 = vrcp.pop %v1100
      %v1105 = vrcp.pop %v1103
      %v1106 = vmul.f32 %v1095, %v1104
      %v1107 = vmul.f32 %v1097, %v1105
      %v1108 = vpack.c.bf16 %v1107, %v1106
      %1109 = vrot.lane.b32.xlu0 %v618, 48
      %v1110 = vpop.permute.xlu0 %1109
      %v1113 = vsel %vm672, %v1108, 0
      %1115 = vmatprep.subr.bf16.mxu0 0
      %1116 = vmatpush1.bf16.msra.mxu0 0
      %1117 = vmatprep.subr.bf16.mxu0 0
      %1118 = vmatpush1.bf16.msra.mxu0 0
      %1119 = vmatprep.subr.bf16.mxu0 0
      %1120 = vmatpush1.bf16.msra.mxu0 0
      %1121 = vmatprep.subr.bf16.mxu0 0
      %1122 = vmatpush1.bf16.msra.mxu0 0
      %1123 = vmatprep.subr.bf16.mxu0 0
      %1124 = vmatpush1.bf16.msra.mxu0 0
      %1125 = vmatprep.subr.bf16.mxu0 0
      %1126 = vmatpush1.bf16.msra.mxu0 0
      %1127 = vmatprep.subr.bf16.mxu0 0
      %1128 = vmatpush1.bf16.msra.mxu0 0
      %1129 = vmatprep.subr.bf16.mxu0 0
      %1130 = vmatpush1.bf16.msra.mxu0 %v1110
      %1131 = vmatprep.subr.bf16.mxu0 0
      %1132 = vmatpush2.bf16.msra.mxu0 0
      %1133 = vmatprep.subr.bf16.mxu0 0
      %1134 = vmatpush2.bf16.msra.mxu0 0
      %1135 = vmatprep.subr.bf16.mxu0 0
      %1136 = vmatpush2.bf16.msra.mxu0 0
      %1137 = vmatprep.subr.bf16.mxu0 0
      %1138 = vmatpush2.bf16.msra.mxu0 0
      %1139 = vmatprep.subr.bf16.mxu0 0
      %1140 = vmatpush2.bf16.msra.mxu0 0
      %1141 = vmatprep.subr.bf16.mxu0 0
      %1142 = vmatpush2.bf16.msra.mxu0 0
      %1143 = vmatprep.subr.bf16.mxu0 0
      %1144 = vmatpush2.bf16.msra.mxu0 0
      %1145 = vmatprep.subr.bf16.mxu0 0
      %1146 = vmatpush2.bf16.msra.mxu0 0
      %1147 = vmatprep.mubr.bf16.mxu0 0
      %1148 = vmatmul.mubr.bf16.gmra.mxu0 %v1113
      %v1149 = vpop.f32.mrf.mxu0
      %v1150 = vadd.f32 0.0, %v1149
      %v1151 = vpop.f32.mrf.mxu0
      %v1152 = vpop.f32.mrf.mxu0
      %v1153 = vadd.f32 0.0, %v1152
      %v1154 = vpop.f32.mrf.mxu0
      %1155 = vdwg.mxu0
      %v1156 = vsel %vm743, %v1078, -inf
      %v1157 = vsel %vm744, %v1081, -inf
      %v1158 = vsel %vm672, %v1156, -inf
      %1159 = vmax.xlane.f32.xlu0 %v1158
      %v1160 = vpop.xlane.xlu0 %1159
      %v1161 = vsel %vm672, %v1157, -inf
      %1162 = vmax.xlane.f32.xlu0 %v1161
      %v1163 = vpop.xlane.xlu0 %1162
      %v1164 = vmul.f32 %v525, %v1078
      %v1165 = vmul.f32 %v526, %v1081
      %v1166 = vsel %vm672, %v1164, 0.0
      %1167 = vadd.xlane.f32.xlu0 %v1166
      %v1168 = vpop.xlane.xlu0 %1167
      %v1169 = vsel %vm672, %v1165, 0.0
      %1170 = vadd.xlane.f32.xlu0 %v1169
      %v1171 = vpop.xlane.xlu0 %1170
      %v1172 = vmul.f32 %v1168, 0.0625
      %v1173 = vmul.f32 %v1171, 0.0625
      %v1174 = vsub.f32 %v1160, %v1172
      %v1175 = vsub.f32 %v1163, %v1173
      %1176 = vxpose.xlu0.b32.start [1/16] %v1174, 128
      %1177 = vxpose.xlu0.b32.cont [2/16] %v1175, 128
      %1178 = vxpose.xlu0.b32.cont [3/16] 0.0, 128
      %1179 = vxpose.xlu0.b32.cont [4/16] 0.0, 128
      %1180 = vxpose.xlu0.b32.cont [5/16] 0.0, 128
      %1181 = vxpose.xlu0.b32.cont [6/16] 0.0, 128
      %1182 = vxpose.xlu0.b32.cont [7/16] 0.0, 128
      %1183 = vxpose.xlu0.b32.cont [8/16] 0.0, 128
      %1184 = vxpose.xlu0.b32.cont [9/16] 0.0, 128
      %1185 = vxpose.xlu0.b32.cont [10/16] 0.0, 128
      %1186 = vxpose.xlu0.b32.cont [11/16] 0.0, 128
      %1187 = vxpose.xlu0.b32.cont [12/16] 0.0, 128
      %1188 = vxpose.xlu0.b32.cont [13/16] 0.0, 128
      %1189 = vxpose.xlu0.b32.cont [14/16] 0.0, 128
      %1190 = vxpose.xlu0.b32.cont [15/16] 0.0, 128
      %1191 = vxpose.xlu0.b32.end [16/16] 0.0, 128
      %v1192 = vpop.trf.xlu0
      %v1193 = vpop.trf.xlu0
      %v1194 = vpop.trf.xlu0
      %v1195 = vpop.trf.xlu0
      %v1196 = vpop.trf.xlu0
      %v1197 = vpop.trf.xlu0
      %v1198 = vpop.trf.xlu0
      %v1199 = vpop.trf.xlu0
      %v1200 = vpop.trf.xlu0
      %v1201 = vpop.trf.xlu0
      %v1202 = vpop.trf.xlu0
      %v1203 = vpop.trf.xlu0
      %v1204 = vpop.trf.xlu0
      %v1205 = vpop.trf.xlu0
      %v1206 = vpop.trf.xlu0
      %v1207 = vpop.trf.xlu0
      %vm1208 = vcmp.gt.f32.partialorder %v1192, %v1174
      %vm1209 = vcmp.gt.f32.partialorder %v1193, %v1175
      %vm1210 = vcmp.eq.f32.partialorder %v1192, %v1174
      %vm1211 = vcmp.eq.f32.partialorder %v1193, %v1175
      %vm1212 = vmand %vm1210, %vm801
      %vm1213 = vmand %vm1211, %vm802
      %vm1214 = vmor %vm1208, %vm1212
      %vm1215 = vmor %vm1209, %vm1213
      %v1216 = vsel %vm1214, 1, 0
      %v1217 = vsel %vm1215, 1, 0
      %v1218 = vcvt.s32.f32 %v1216
      %v1219 = vcvt.s32.f32 %v1217
      %v1220 = vsel %vm672, %v1218, 0.0
      %1221 = vadd.xlane.f32.xlu0 %v1220
      %v1222 = vpop.xlane.xlu0 %1221
      %v1223 = vsel %vm672, %v1219, 0.0
      %1224 = vadd.xlane.f32.xlu0 %v1223
      %v1225 = vpop.xlane.xlu0 %1224
      %vm1226 = vcmp.lt.f32.partialorder %v1222, 15.0
      %vm1227 = vcmp.lt.f32.partialorder %v1225, 15.0
      %v1228 = vsel %vm1226, 1, 0
      %v1229 = vsel %vm1227, 1, 0
      %vm1230 = vcmp.eq.s32.totalorder %v1228, 1
      %vm1231 = vcmp.eq.s32.totalorder %v1229, 1
      %1232 = vrot.lane.b32.xlu0 %v617, 48
      %v1233 = vpop.permute.xlu0 %1232
      %v1235 = vsel %vm1230, %v1150, %v1233
      %v1236 = vsel %vm1231, %v1153, %v1233
      %1237 = vrot.lane.b32.xlu0 %v618, 104
      %v1238 = vpop.permute.xlu0 %1237
      %1239 = vrot.lane.b32.xlu0 %v618, 72
      %v1240 = vpop.permute.xlu0 %1239
      %v1242 = vsel %vm622, %v1238, 0
      %v1245 = vsel %vm622, %v1240, 0
      %1247 = vmatprep.subr.bf16.mxu0 0
      %1248 = vmatpush1.bf16.xpose.msra.mxu0 0
      %1249 = vmatprep.subr.bf16.mxu0 0
      %1250 = vmatpush1.bf16.xpose.msra.mxu0 0
      %1251 = vmatprep.subr.bf16.mxu0 0
      %1252 = vmatpush1.bf16.xpose.msra.mxu0 0
      %1253 = vmatprep.subr.bf16.mxu0 0
      %1254 = vmatpush1.bf16.xpose.msra.mxu0 0
      %1255 = vmatprep.subr.bf16.mxu0 0
      %1256 = vmatpush1.bf16.xpose.msra.mxu0 0
      %1257 = vmatprep.subr.bf16.mxu0 0
      %1258 = vmatpush1.bf16.xpose.msra.mxu0 0
      %1259 = vmatprep.subr.bf16.mxu0 0
      %1260 = vmatpush1.bf16.xpose.msra.mxu0 0
      %1261 = vmatprep.subr.bf16.mxu0 0
      %1262 = vmatpush1.bf16.xpose.msra.mxu0 %v1245
      %1263 = vmatprep.subr.bf16.mxu0 0
      %1264 = vmatpush2.bf16.xpose.msra.mxu0 0
      %1265 = vmatprep.subr.bf16.mxu0 0
      %1266 = vmatpush2.bf16.xpose.msra.mxu0 0
      %1267 = vmatprep.subr.bf16.mxu0 0
      %1268 = vmatpush2.bf16.xpose.msra.mxu0 0
      %1269 = vmatprep.subr.bf16.mxu0 0
      %1270 = vmatpush2.bf16.xpose.msra.mxu0 0
      %1271 = vmatprep.subr.bf16.mxu0 0
      %1272 = vmatpush2.bf16.xpose.msra.mxu0 0
      %1273 = vmatprep.subr.bf16.mxu0 0
      %1274 = vmatpush2.bf16.xpose.msra.mxu0 0
      %1275 = vmatprep.subr.bf16.mxu0 0
      %1276 = vmatpush2.bf16.xpose.msra.mxu0 0
      %1277 = vmatprep.subr.bf16.mxu0 0
      %1278 = vmatpush2.bf16.xpose.msra.mxu0 0
      %1279 = vmatprep.mubr.bf16.mxu0 0
      %1280 = vmatmul.mubr.bf16.gmra.mxu0 %v1242
      %v1281 = vpop.f32.mrf.mxu0
      %v1282 = vadd.f32 0.0, %v1281
      %v1283 = vpop.f32.mrf.mxu0
      %v1284 = vpop.f32.mrf.mxu0
      %v1285 = vadd.f32 0.0, %v1284
      %v1286 = vpop.f32.mrf.mxu0
      %1287 = vdwg.mxu0
      %v1288 = vmul.f32 %v1282, 0.35355338
      %v1289 = vmul.f32 %v1285, 0.35355338
      %v1290 = vsel %vm672, %v1288, -inf
      %1291 = vmax.xlane.f32.xlu0 %v1290
      %v1292 = vpop.xlane.xlu0 %1291
      %v1293 = vsel %vm672, %v1289, -inf
      %1294 = vmax.xlane.f32.xlu0 %v1293
      %v1295 = vpop.xlane.xlu0 %1294
      %v1296 = vsub.f32 %v1288, %v1292
      %v1297 = vsub.f32 %v1289, %v1295
      %v1298 = vmul.f32 %v1296, 1.442695
      %v1299 = vpow.pop %v1298
      %v1300 = vmul.f32 %v1297, 1.442695
      %v1301 = vpow.pop %v1300
      %v1302 = vsel %vm672, %v1299, 0.0
      %1303 = vadd.xlane.f32.xlu0 %v1302
      %v1304 = vpop.xlane.xlu0 %1303
      %v1305 = vsel %vm672, %v1301, 0.0
      %1306 = vadd.xlane.f32.xlu0 %v1305
      %v1307 = vpop.xlane.xlu0 %1306
      %v1308 = vrcp.pop %v1304
      %v1309 = vrcp.pop %v1307
      %v1310 = vmul.f32 %v1299, %v1308
      %v1311 = vmul.f32 %v1301, %v1309
      %v1312 = vpack.c.bf16 %v1311, %v1310
      %1313 = vrot.lane.b32.xlu0 %v618, 40
      %v1314 = vpop.permute.xlu0 %1313
      %v1317 = vsel %vm672, %v1312, 0
      %1319 = vmatprep.subr.bf16.mxu0 0
      %1320 = vmatpush1.bf16.msra.mxu0 0
      %1321 = vmatprep.subr.bf16.mxu0 0
      %1322 = vmatpush1.bf16.msra.mxu0 0
      %1323 = vmatprep.subr.bf16.mxu0 0
      %1324 = vmatpush1.bf16.msra.mxu0 0
      %1325 = vmatprep.subr.bf16.mxu0 0
      %1326 = vmatpush1.bf16.msra.mxu0 0
      %1327 = vmatprep.subr.bf16.mxu0 0
      %1328 = vmatpush1.bf16.msra.mxu0 0
      %1329 = vmatprep.subr.bf16.mxu0 0
      %1330 = vmatpush1.bf16.msra.mxu0 0
      %1331 = vmatprep.subr.bf16.mxu0 0
      %1332 = vmatpush1.bf16.msra.mxu0 0
      %1333 = vmatprep.subr.bf16.mxu0 0
      %1334 = vmatpush1.bf16.msra.mxu0 %v1314
      %1335 = vmatprep.subr.bf16.mxu0 0
      %1336 = vmatpush2.bf16.msra.mxu0 0
      %1337 = vmatprep.subr.bf16.mxu0 0
      %1338 = vmatpush2.bf16.msra.mxu0 0
      %1339 = vmatprep.subr.bf16.mxu0 0
      %1340 = vmatpush2.bf16.msra.mxu0 0
      %1341 = vmatprep.subr.bf16.mxu0 0
      %1342 = vmatpush2.bf16.msra.mxu0 0
      %1343 = vmatprep.subr.bf16.mxu0 0
      %1344 = vmatpush2.bf16.msra.mxu0 0
      %1345 = vmatprep.subr.bf16.mxu0 0
      %1346 = vmatpush2.bf16.msra.mxu0 0
      %1347 = vmatprep.subr.bf16.mxu0 0
      %1348 = vmatpush2.bf16.msra.mxu0 0
      %1349 = vmatprep.subr.bf16.mxu0 0
      %1350 = vmatpush2.bf16.msra.mxu0 0
      %1351 = vmatprep.mubr.bf16.mxu0 0
      %1352 = vmatmul.mubr.bf16.gmra.mxu0 %v1317
      %v1353 = vpop.f32.mrf.mxu0
      %v1354 = vadd.f32 0.0, %v1353
      %v1355 = vpop.f32.mrf.mxu0
      %v1356 = vpop.f32.mrf.mxu0
      %v1357 = vadd.f32 0.0, %v1356
      %v1358 = vpop.f32.mrf.mxu0
      %1359 = vdwg.mxu0
      %v1360 = vsel %vm743, %v1282, -inf
      %v1361 = vsel %vm744, %v1285, -inf
      %v1362 = vsel %vm672, %v1360, -inf
      %1363 = vmax.xlane.f32.xlu0 %v1362
      %v1364 = vpop.xlane.xlu0 %1363
      %v1365 = vsel %vm672, %v1361, -inf
      %1366 = vmax.xlane.f32.xlu0 %v1365
      %v1367 = vpop.xlane.xlu0 %1366
      %v1368 = vmul.f32 %v525, %v1282
      %v1369 = vmul.f32 %v526, %v1285
      %v1370 = vsel %vm672, %v1368, 0.0
      %1371 = vadd.xlane.f32.xlu0 %v1370
      %v1372 = vpop.xlane.xlu0 %1371
      %v1373 = vsel %vm672, %v1369, 0.0
      %1374 = vadd.xlane.f32.xlu0 %v1373
      %v1375 = vpop.xlane.xlu0 %1374
      %v1376 = vmul.f32 %v1372, 0.0625
      %v1377 = vmul.f32 %v1375, 0.0625
      %v1378 = vsub.f32 %v1364, %v1376
      %v1379 = vsub.f32 %v1367, %v1377
      %1380 = vxpose.xlu0.b32.start [1/16] %v1378, 128
      %1381 = vxpose.xlu0.b32.cont [2/16] %v1379, 128
      %1382 = vxpose.xlu0.b32.cont [3/16] 0.0, 128
      %1383 = vxpose.xlu0.b32.cont [4/16] 0.0, 128
      %1384 = vxpose.xlu0.b32.cont [5/16] 0.0, 128
      %1385 = vxpose.xlu0.b32.cont [6/16] 0.0, 128
      %1386 = vxpose.xlu0.b32.cont [7/16] 0.0, 128
      %1387 = vxpose.xlu0.b32.cont [8/16] 0.0, 128
      %1388 = vxpose.xlu0.b32.cont [9/16] 0.0, 128
      %1389 = vxpose.xlu0.b32.cont [10/16] 0.0, 128
      %1390 = vxpose.xlu0.b32.cont [11/16] 0.0, 128
      %1391 = vxpose.xlu0.b32.cont [12/16] 0.0, 128
      %1392 = vxpose.xlu0.b32.cont [13/16] 0.0, 128
      %1393 = vxpose.xlu0.b32.cont [14/16] 0.0, 128
      %1394 = vxpose.xlu0.b32.cont [15/16] 0.0, 128
      %1395 = vxpose.xlu0.b32.end [16/16] 0.0, 128
      %v1396 = vpop.trf.xlu0
      %v1397 = vpop.trf.xlu0
      %v1398 = vpop.trf.xlu0
      %v1399 = vpop.trf.xlu0
      %v1400 = vpop.trf.xlu0
      %v1401 = vpop.trf.xlu0
      %v1402 = vpop.trf.xlu0
      %v1403 = vpop.trf.xlu0
      %v1404 = vpop.trf.xlu0
      %v1405 = vpop.trf.xlu0
      %v1406 = vpop.trf.xlu0
      %v1407 = vpop.trf.xlu0
      %v1408 = vpop.trf.xlu0
      %v1409 = vpop.trf.xlu0
      %v1410 = vpop.trf.xlu0
      %v1411 = vpop.trf.xlu0
      %vm1412 = vcmp.gt.f32.partialorder %v1396, %v1378
      %vm1413 = vcmp.gt.f32.partialorder %v1397, %v1379
      %vm1414 = vcmp.eq.f32.partialorder %v1396, %v1378
      %vm1415 = vcmp.eq.f32.partialorder %v1397, %v1379
      %vm1416 = vmand %vm1414, %vm801
      %vm1417 = vmand %vm1415, %vm802
      %vm1418 = vmor %vm1412, %vm1416
      %vm1419 = vmor %vm1413, %vm1417
      %v1420 = vsel %vm1418, 1, 0
      %v1421 = vsel %vm1419, 1, 0
      %v1422 = vcvt.s32.f32 %v1420
      %v1423 = vcvt.s32.f32 %v1421
      %v1424 = vsel %vm672, %v1422, 0.0
      %1425 = vadd.xlane.f32.xlu0 %v1424
      %v1426 = vpop.xlane.xlu0 %1425
      %v1427 = vsel %vm672, %v1423, 0.0
      %1428 = vadd.xlane.f32.xlu0 %v1427
      %v1429 = vpop.xlane.xlu0 %1428
      %vm1430 = vcmp.lt.f32.partialorder %v1426, 15.0
      %vm1431 = vcmp.lt.f32.partialorder %v1429, 15.0
      %v1432 = vsel %vm1430, 1, 0
      %v1433 = vsel %vm1431, 1, 0
      %vm1434 = vcmp.eq.s32.totalorder %v1432, 1
      %vm1435 = vcmp.eq.s32.totalorder %v1433, 1
      %1436 = vrot.lane.b32.xlu0 %v617, 40
      %v1437 = vpop.permute.xlu0 %1436
      %v1439 = vsel %vm1434, %v1354, %v1437
      %v1440 = vsel %vm1435, %v1357, %v1437
      %1443 = vrot.lane.b32.xlu0 %v1031, 8
      %v1444 = vpop.permute.xlu0 %1443
      %1445 = vrot.lane.b32.xlu0 %v1032, 8
      %v1446 = vpop.permute.xlu0 %1445
      %1451 = vrot.lane.b32.xlu0 %v1235, 16
      %v1452 = vpop.permute.xlu0 %1451
      %1453 = vrot.lane.b32.xlu0 %v1236, 16
      %v1454 = vpop.permute.xlu0 %1453
      %1459 = vrot.lane.b32.xlu0 %v1439, 24
      %v1460 = vpop.permute.xlu0 %1459
      %1461 = vrot.lane.b32.xlu0 %v1440, 24
      %v1462 = vpop.permute.xlu0 %1461
      %v1465 = vsel %vm622, %v827, %v1444
      %v1466 = vsel %vm622, %v828, %v1446
      %v1467 = vsel %vm672, %v1465, %v1452
      %v1468 = vsel %vm672, %v1466, %v1454
      %vm1469 = vcmask 195584
      %v1470 = vsel %vm1469, %v1467, %v1460
      %v1471 = vsel %vm1469, %v1468, %v1462
      %v1472 = vpack.c.bf16 %v1471, %v1470
      %v1474 = vlaneseq
      %v1475 = vshrl.u32 %v1474, 7
      %v1476 = vsub.s32 0, %v1475
      %v1477 = vrot.slane %v536, %v1476
      %v1483 = vunpack.c.l.b16 %v532
      %v1484 = vunpack.c.l.b16 %v533
      %v1485 = vunpack.c.l.b16 %v534
      %v1486 = vunpack.c.l.b16 %v535
      %v1487 = vpack.c.b16 %v1484, %v1483
      %v1488 = vpack.c.b16 %v1486, %v1485
      %v1492 = vsel %vm556, %v1472, 0
      %1494 = vmatprep.subr.bf16.mxu0 0
      %1495 = vmatpush1.bf16.msra.mxu0 0
      %1496 = vmatprep.subr.bf16.mxu0 0
      %1497 = vmatpush1.bf16.msra.mxu0 0
      %1498 = vmatprep.subr.bf16.mxu0 0
      %1499 = vmatpush1.bf16.msra.mxu0 0
      %1500 = vmatprep.subr.bf16.mxu0 0
      %1501 = vmatpush1.bf16.msra.mxu0 0
      %1502 = vmatprep.subr.bf16.mxu0 0
      %1503 = vmatpush1.bf16.msra.mxu0 0
      %1504 = vmatprep.subr.bf16.mxu0 0
      %1505 = vmatpush1.bf16.msra.mxu0 0
      %1506 = vmatprep.subr.bf16.mxu0 0
      %1507 = vmatpush1.bf16.msra.mxu0 %v1488
      %1508 = vmatprep.subr.bf16.mxu0 0
      %1509 = vmatpush1.bf16.msra.mxu0 %v1487
      %1510 = vmatprep.subr.bf16.mxu0 0
      %1511 = vmatpush2.bf16.msra.mxu0 0
      %1512 = vmatprep.subr.bf16.mxu0 0
      %1513 = vmatpush2.bf16.msra.mxu0 0
      %1514 = vmatprep.subr.bf16.mxu0 0
      %1515 = vmatpush2.bf16.msra.mxu0 0
      %1516 = vmatprep.subr.bf16.mxu0 0
      %1517 = vmatpush2.bf16.msra.mxu0 0
      %1518 = vmatprep.subr.bf16.mxu0 0
      %1519 = vmatpush2.bf16.msra.mxu0 0
      %1520 = vmatprep.subr.bf16.mxu0 0
      %1521 = vmatpush2.bf16.msra.mxu0 0
      %1522 = vmatprep.subr.bf16.mxu0 0
      %1523 = vmatpush2.bf16.msra.mxu0 0
      %1524 = vmatprep.subr.bf16.mxu0 0
      %1525 = vmatpush2.bf16.msra.mxu0 0
      %1526 = vmatprep.mubr.bf16.mxu0 0
      %1527 = vmatmul.mubr.bf16.gmra.mxu0 %v1492
      %v1528 = vpop.f32.mrf.mxu0
      %v1529 = vadd.f32 %v1477, %v1528
      %v1530 = vpop.f32.mrf.mxu0
      %v1531 = vpop.f32.mrf.mxu0
      %v1532 = vadd.f32 %v1477, %v1531
      %v1533 = vpop.f32.mrf.mxu0
      %1534 = vdwg.mxu0
      %v1535 = vadd.f32 %v523, %v1529
      %v1536 = vadd.f32 %v524, %v1532
      %v1537 = vld [vmem:[%s6] sm:$0x1]
      %v1538 = vld [vmem:[%s7] sm:$0x1]
      %v1539 = vsel %vm556, %v1535, 0.0
      %1540 = vadd.xlane.f32.xlu0 %v1539
      %v1541 = vpop.xlane.xlu0 %1540
      %v1542 = vsel %vm556, %v1536, 0.0
      %1543 = vadd.xlane.f32.xlu0 %v1542
      %v1544 = vpop.xlane.xlu0 %1543
      %v1545 = vrcp.pop 32.0
      %v1546 = vmul.f32 %v1541, %v1545
      %v1547 = vmul.f32 %v1544, %v1545
      %v1548 = vsub.f32 %v1535, %v1546
      %v1549 = vsub.f32 %v1536, %v1547
      %v1550 = vmul.f32 %v1548, %v1548
      %v1551 = vmul.f32 %v1549, %v1549
      %v1552 = vsel %vm556, %v1550, 0.0
      %1553 = vadd.xlane.f32.xlu0 %v1552
      %v1554 = vpop.xlane.xlu0 %1553
      %v1555 = vsel %vm556, %v1551, 0.0
      %1556 = vadd.xlane.f32.xlu0 %v1555
      %v1557 = vpop.xlane.xlu0 %1556
      %v1558 = vmul.f32 %v1554, %v1545
      %v1559 = vmul.f32 %v1557, %v1545
      %v1560 = vadd.f32 %v1558, 1e-05
      %v1561 = vadd.f32 %v1559, 1e-05
      %v1562 = vrsqrt.pop %v1560
      %v1563 = vrsqrt.pop %v1561
      %v1564 = vmul.f32 %v1548, %v1562
      %v1565 = vmul.f32 %v1549, %v1563
      %v1567 = vlaneseq
      %v1568 = vshrl.u32 %v1567, 7
      %v1569 = vsub.s32 0, %v1568
      %v1570 = vrot.slane %v1537, %v1569
      %v1572 = vmul.f32 %v1564, %v1570
      %v1573 = vmul.f32 %v1565, %v1570
      %v1575 = vlaneseq
      %v1576 = vshrl.u32 %v1575, 7
      %v1577 = vsub.s32 0, %v1576
      %v1578 = vrot.slane %v1538, %v1577
      %v1580 = vadd.f32 %v1572, %v1578
      %v1581 = vadd.f32 %v1573, %v1578
      %v1582 = vld [vmem:[%s8] sm:$0xf]
      %v1583 = vld [vmem:[%s8 + $0x4] sm:$0xf]
      %v1584 = vld [vmem:[%s8 + $0x8] sm:$0xf]
      %v1585 = vld [vmem:[%s8 + $0xc] sm:$0xf]
      %v1586 = vld [vmem:[%s9] sm:$0x1]
      %v1587 = vld [vmem:[%s10] sm:$0xf]
      %v1588 = vld [vmem:[%s10 + $0x4] sm:$0xf]
      %v1589 = vld [vmem:[%s10 + $0x8] sm:$0xf]
      %v1590 = vld [vmem:[%s10 + $0xc] sm:$0xf]
      %v1591 = vld [vmem:[%s10 + $0x10] sm:$0xf]
      %v1592 = vld [vmem:[%s10 + $0x14] sm:$0xf]
      %v1593 = vld [vmem:[%s10 + $0x18] sm:$0xf]
      %v1594 = vld [vmem:[%s10 + $0x1c] sm:$0xf]
      %v1595 = vld [vmem:[%s11] sm:$0x1]
      %v1596 = vpack.c.bf16 %v1581, %v1580
      %v1598 = vlaneseq
      %v1599 = vshrl.u32 %v1598, 7
      %v1600 = vsub.s32 0, %v1599
      %v1601 = vrot.slane %v1586, %v1600
      %v1607 = vunpack.c.l.b16 %v1582
      %v1608 = vunpack.c.l.b16 %v1583
      %v1609 = vunpack.c.l.b16 %v1584
      %v1610 = vunpack.c.l.b16 %v1585
      %v1611 = vpack.c.b16 %v1608, %v1607
      %v1612 = vpack.c.b16 %v1610, %v1609
      %v1616 = vsel %vm556, %v1596, 0
      %1618 = vmatprep.subr.bf16.mxu0 0
      %1619 = vmatpush1.bf16.msra.mxu0 0
      %1620 = vmatprep.subr.bf16.mxu0 0
      %1621 = vmatpush1.bf16.msra.mxu0 0
      %1622 = vmatprep.subr.bf16.mxu0 0
      %1623 = vmatpush1.bf16.msra.mxu0 0
      %1624 = vmatprep.subr.bf16.mxu0 0
      %1625 = vmatpush1.bf16.msra.mxu0 0
      %1626 = vmatprep.subr.bf16.mxu0 0
      %1627 = vmatpush1.bf16.msra.mxu0 0
      %1628 = vmatprep.subr.bf16.mxu0 0
      %1629 = vmatpush1.bf16.msra.mxu0 0
      %1630 = vmatprep.subr.bf16.mxu0 0
      %1631 = vmatpush1.bf16.msra.mxu0 %v1612
      %1632 = vmatprep.subr.bf16.mxu0 0
      %1633 = vmatpush1.bf16.msra.mxu0 %v1611
      %1634 = vmatprep.subr.bf16.mxu0 0
      %1635 = vmatpush2.bf16.msra.mxu0 0
      %1636 = vmatprep.subr.bf16.mxu0 0
      %1637 = vmatpush2.bf16.msra.mxu0 0
      %1638 = vmatprep.subr.bf16.mxu0 0
      %1639 = vmatpush2.bf16.msra.mxu0 0
      %1640 = vmatprep.subr.bf16.mxu0 0
      %1641 = vmatpush2.bf16.msra.mxu0 0
      %1642 = vmatprep.subr.bf16.mxu0 0
      %1643 = vmatpush2.bf16.msra.mxu0 0
      %1644 = vmatprep.subr.bf16.mxu0 0
      %1645 = vmatpush2.bf16.msra.mxu0 0
      %1646 = vmatprep.subr.bf16.mxu0 0
      %1647 = vmatpush2.bf16.msra.mxu0 0
      %1648 = vmatprep.subr.bf16.mxu0 0
      %1649 = vmatpush2.bf16.msra.mxu0 0
      %1650 = vmatprep.mubr.bf16.mxu0 0
      %1651 = vmatmul.mubr.bf16.gmra.mxu0 %v1616
      %v1652 = vpop.f32.mrf.mxu0
      %v1653 = vadd.f32 %v1601, %v1652
      %v1654 = vpop.f32.mrf.mxu0
      %v1655 = vpop.f32.mrf.mxu0
      %v1656 = vadd.f32 %v1601, %v1655
      %v1657 = vpop.f32.mrf.mxu0
      %1658 = vdwg.mxu0
      %v1659 = vmax.f32 %v1653, 0.0
      %v1660 = vmax.f32 %v1656, 0.0
      %v1661 = vpack.c.bf16 %v1660, %v1659
      %v1663 = vlaneseq
      %v1664 = vshrl.u32 %v1663, 7
      %v1665 = vsub.s32 0, %v1664
      %v1666 = vrot.slane %v1595, %v1665
      %v1676 = vunpack.c.l.b16 %v1587
      %v1677 = vunpack.c.l.b16 %v1588
      %v1678 = vunpack.c.l.b16 %v1589
      %v1679 = vunpack.c.l.b16 %v1590
      %v1680 = vunpack.c.l.b16 %v1591
      %v1681 = vunpack.c.l.b16 %v1592
      %v1682 = vunpack.c.l.b16 %v1593
      %v1683 = vunpack.c.l.b16 %v1594
      %v1684 = vpack.c.b16 %v1677, %v1676
      %v1685 = vpack.c.b16 %v1679, %v1678
      %v1686 = vpack.c.b16 %v1681, %v1680
      %v1687 = vpack.c.b16 %v1683, %v1682
      %vm1692 = vcmask 523264
      %v1694 = vsel %vm1692, %v1661, 0
      %1696 = vmatprep.subr.bf16.mxu0 0
      %1697 = vmatpush1.bf16.msra.mxu0 0
      %1698 = vmatprep.subr.bf16.mxu0 0
      %1699 = vmatpush1.bf16.msra.mxu0 0
      %1700 = vmatprep.subr.bf16.mxu0 0
      %1701 = vmatpush1.bf16.msra.mxu0 0
      %1702 = vmatprep.subr.bf16.mxu0 0
      %1703 = vmatpush1.bf16.msra.mxu0 0
      %1704 = vmatprep.subr.bf16.mxu0 0
      %1705 = vmatpush1.bf16.msra.mxu0 %v1687
      %1706 = vmatprep.subr.bf16.mxu0 0
      %1707 = vmatpush1.bf16.msra.mxu0 %v1686
      %1708 = vmatprep.subr.bf16.mxu0 0
      %1709 = vmatpush1.bf16.msra.mxu0 %v1685
      %1710 = vmatprep.subr.bf16.mxu0 0
      %1711 = vmatpush1.bf16.msra.mxu0 %v1684
      %1712 = vmatprep.subr.bf16.mxu0 0
      %1713 = vmatpush2.bf16.msra.mxu0 0
      %1714 = vmatprep.subr.bf16.mxu0 0
      %1715 = vmatpush2.bf16.msra.mxu0 0
      %1716 = vmatprep.subr.bf16.mxu0 0
      %1717 = vmatpush2.bf16.msra.mxu0 0
      %1718 = vmatprep.subr.bf16.mxu0 0
      %1719 = vmatpush2.bf16.msra.mxu0 0
      %1720 = vmatprep.subr.bf16.mxu0 0
      %1721 = vmatpush2.bf16.msra.mxu0 0
      %1722 = vmatprep.subr.bf16.mxu0 0
      %1723 = vmatpush2.bf16.msra.mxu0 0
      %1724 = vmatprep.subr.bf16.mxu0 0
      %1725 = vmatpush2.bf16.msra.mxu0 0
      %1726 = vmatprep.subr.bf16.mxu0 0
      %1727 = vmatpush2.bf16.msra.mxu0 0
      %1728 = vmatprep.mubr.bf16.mxu0 0
      %1729 = vmatmul.mubr.bf16.gmra.mxu0 %v1694
      %v1730 = vpop.f32.mrf.mxu0
      %v1731 = vadd.f32 %v1666, %v1730
      %v1732 = vpop.f32.mrf.mxu0
      %v1733 = vpop.f32.mrf.mxu0
      %v1734 = vadd.f32 %v1666, %v1733
      %v1735 = vpop.f32.mrf.mxu0
      %1736 = vdwg.mxu0
      %v1737 = vadd.f32 %v1580, %v1731
      %v1738 = vadd.f32 %v1581, %v1734
      %v1739 = vld [vmem:[%s12] sm:$0x1]
      %v1740 = vld [vmem:[%s13] sm:$0x1]
      %v1741 = vsel %vm556, %v1737, 0.0
      %1742 = vadd.xlane.f32.xlu0 %v1741
      %v1743 = vpop.xlane.xlu0 %1742
      %v1744 = vsel %vm556, %v1738, 0.0
      %1745 = vadd.xlane.f32.xlu0 %v1744
      %v1746 = vpop.xlane.xlu0 %1745
      %v1747 = vmul.f32 %v1743, %v1545
      %v1748 = vmul.f32 %v1746, %v1545
      %v1749 = vsub.f32 %v1737, %v1747
      %v1750 = vsub.f32 %v1738, %v1748
      %v1751 = vmul.f32 %v1749, %v1749
      %v1752 = vmul.f32 %v1750, %v1750
      %v1753 = vsel %vm556, %v1751, 0.0
      %1754 = vadd.xlane.f32.xlu0 %v1753
      %v1755 = vpop.xlane.xlu0 %1754
      %v1756 = vsel %vm556, %v1752, 0.0
      %1757 = vadd.xlane.f32.xlu0 %v1756
      %v1758 = vpop.xlane.xlu0 %1757
      %v1759 = vmul.f32 %v1755, %v1545
      %v1760 = vmul.f32 %v1758, %v1545
      %v1761 = vadd.f32 %v1759, 1e-05
      %v1762 = vadd.f32 %v1760, 1e-05
      %v1763 = vrsqrt.pop %v1761
      %v1764 = vrsqrt.pop %v1762
      %v1765 = vmul.f32 %v1749, %v1763
      %v1766 = vmul.f32 %v1750, %v1764
      %v1768 = vlaneseq
      %v1769 = vshrl.u32 %v1768, 7
      %v1770 = vsub.s32 0, %v1769
      %v1771 = vrot.slane %v1739, %v1770
      %v1773 = vmul.f32 %v1765, %v1771
      %v1774 = vmul.f32 %v1766, %v1771
      %v1776 = vlaneseq
      %v1777 = vshrl.u32 %v1776, 7
      %v1778 = vsub.s32 0, %v1777
      %v1779 = vrot.slane %v1740, %v1778
      %v1781 = vadd.f32 %v1773, %v1779
      %v1782 = vadd.f32 %v1774, %v1779
      %1783 = vst.msk [vmem:[%s521] sm:$0xff] %vm556, %v1781
      %1784 = vst.msk [vmem:[%s521 + $0x8] sm:$0xff] %vm556, %v1782
      %p1785 = scmp.lt.s32.totalorder %s27, 1
      %s1786 = scalar_select %p1785, %s27, 1
      %s1787 = smul.addr %s1786, 2
      %s1788 = smul.addr %s1787, 8
      %s1789 = scalar_lea.vmem %s16, %s1788
      // Predicated region
      $region85: #{_lambda_.9} parent=83 // pred_check
        %p1790 = pneg %p386
      $region86: #{_lambda_.9} parent=83 // pred_check_branch
        %1792 = sbr.rel (%p1790) target = $region88
      $region87: #{_lambda_.9} parent=83 // pred_region
        _
      $region88: #{_lambda_.9} parent=83 // pred_fallthru
        _
    $region84: #{_lambda_.9} parent=5 // pred_fallthru
      _
    %p1793 = scmp.le.s32.totalorder 2, %s22
    // Predicated region
    $region89: #{_lambda_.9} parent=5 // pred_check
      %p1794 = pneg %p1793
    $region90: #{_lambda_.9} parent=5 // pred_check_branch
      %1796 = sbr.rel (%p1794) target = $region92
    $region91: #{_lambda_.9} parent=5 // pred_region
      %s1797 = ssub.s32 %s22, 2
      // Predicated region
      $region93: #{_lambda_.9} parent=91 // pred_check
        %p1798 = pneg %p392
      $region94: #{_lambda_.9} parent=91 // pred_check_branch
        %1800 = sbr.rel (%p1798) target = $region96
      $region95: #{_lambda_.9} parent=91 // pred_region
        %p1801 = scmp.lt.s32.totalorder %s28, 1
        %s1802 = scalar_select %p1801, %s28, 1
        %s1803 = smul.addr %s1802, 2
        %s1804 = smul.addr %s1803, 8
        %s1805 = scalar_lea.vmem %s16, %s1804
      $region96: #{_lambda_.9} parent=91 // pred_fallthru
        _
    $region92: #{_lambda_.9} parent=5 // pred_fallthru
      _
  $region6: #{_lambda_.9} parent=0 // loop_footer
    %s26 = sadd.s32 1, %s22
  $region7: #{_lambda_.9} parent=0 // loop_footer_branch
    %21 = sbr.rel target = $region3
  $region8: #{_lambda_.9} parent=0 // loop_exit
    _

// kernel: _lambda_.13
$region0: #{_lambda_.13}
  #allocation0 [shape = 'u32[]', space=smem, size = 0x4, offset = 0x4, fixed_abs, tag = 'smem constant byte address 0x4 - core index']
  #allocation1 [shape = 'u32[144,128]{1,0:T(1,128)}', space=vmem, size = 0x12000, scoped, tag = 'internal scratch']
  %s0 = inlined_call_operand.vmem [shape: f32[2,16,32], index: 0, kind: input, shape index: {}]
  %s1 = inlined_call_operand.vmem [shape: f32[1,32], index: 1, kind: input, shape index: {}]
  %s2 = inlined_call_operand.vmem [shape: f32[1,32], index: 2, kind: input, shape index: {}]
  %s3 = inlined_call_operand.vmem [shape: bf16[32,4], index: 3, kind: input, shape index: {}]
  %s4 = inlined_call_operand.vmem [shape: f32[1,4], index: 4, kind: input, shape index: {}]
  %s5 = inlined_call_operand.vmem [shape: f32[2,16,4], index: 5, kind: output, shape index: {}]
  %s6 = sld [smem:[#allocation0]]
  $region53: #{_lambda_.13} parent=0
    _
  %s8 = ssub.s32 1, %s6
  %s9 = scalar_select 0, %s8, %s6
  loop: start=0, step=1, limit=4
  $region2: #{_lambda_.13} parent=0 // loop_pre_header
    _
  $region3: #{_lambda_.13} parent=0 // loop_header
    %s11 = sphi 0, %s15
    %p12 = scmp.ge.s32.totalorder %s11, 4
    %s21 = sphi 0, %s23
    %s24 = sphi 0, %s21
    %s25 = sphi 0, %s24
    %s41 = sphi 0, %s25
    %s45 = sphi 0, %s45
    %s47 = sphi 0, %s45
    %s48 = sphi 0, %s47
    %s62 = sphi 0, %s48
    %s66 = sphi 0, %s66
    %s68 = sphi 0, %s66
    %s69 = sphi 0, %s68
    %s83 = sphi 0, %s69
    %s87 = sphi 0, %s87
    %s89 = sphi 0, %s87
    %s90 = sphi 0, %s89
    %s104 = sphi 0, %s90
    %s108 = sphi 0, %s108
    %s110 = sphi 0, %s108
    %s111 = sphi 0, %s110
    %s125 = sphi 0, %s111
    %s131 = sphi 0, %s133
    %s134 = sphi 0, %s131
    %s135 = sphi 0, %s134
    %s151 = sphi 0, %s135
  $region4: #{_lambda_.13} parent=0 // loop_header_branch
    %14 = sbr.rel (%p12) target = $region8
  $region5: #{_lambda_.13} parent=0 // loop_body
    %s16 = ssub.s32 %s11, 1
    %s17 = ssub.s32 %s11, 2
    %s18 = sadd.s32 %s11, 1
    %s19 = ssub.s32 %s11, %s18
    %p20 = scmp.eq.s32.totalorder %s19, 0
    %s22 = sadd.s32 %s21, 1
    %s23 = scalar_select %p20, %s21, %s22
    %p26 = pneg %p20
    %p27 = scmp.eq.s32.totalorder %s11, 1
    %p28 = por %p26, %p27
    %p29 = scmp.ne.s32.totalorder %s21, %s24
    %p30 = scmp.eq.s32.totalorder %s11, 0
    %p31 = por %p29, %p30
    %p32 = scmp.ne.s32.totalorder %s21, %s24
    %p33 = scmp.eq.s32.totalorder %s16, 1
    %p34 = por %p32, %p33
    %p35 = scmp.ne.s32.totalorder %s24, %s25
    %p36 = scmp.eq.s32.totalorder %s16, 0
    %p37 = por %p35, %p36
    %p38 = scmp.ne.s32.totalorder %s24, %s25
    %p39 = scmp.eq.s32.totalorder %s17, 1
    %p40 = por %p38, %p39
    %p42 = scmp.ne.s32.totalorder %s25, %s41
    %p43 = scmp.eq.s32.totalorder %s17, 0
    %p44 = por %p42, %p43
    %s46 = sadd.s32 %s45, 1
    %p49 = scmp.eq.s32.totalorder %s11, 1
    %p50 = scmp.ne.s32.totalorder %s45, %s47
    %p51 = scmp.eq.s32.totalorder %s11, 0
    %p52 = por %p50, %p51
    %p53 = scmp.ne.s32.totalorder %s45, %s47
    %p54 = scmp.eq.s32.totalorder %s16, 1
    %p55 = por %p53, %p54
    %p56 = scmp.ne.s32.totalorder %s47, %s48
    %p57 = scmp.eq.s32.totalorder %s16, 0
    %p58 = por %p56, %p57
    %p59 = scmp.ne.s32.totalorder %s47, %s48
    %p60 = scmp.eq.s32.totalorder %s17, 1
    %p61 = por %p59, %p60
    %p63 = scmp.ne.s32.totalorder %s48, %s62
    %p64 = scmp.eq.s32.totalorder %s17, 0
    %p65 = por %p63, %p64
    %s67 = sadd.s32 %s66, 1
    %p70 = scmp.eq.s32.totalorder %s11, 1
    %p71 = scmp.ne.s32.totalorder %s66, %s68
    %p72 = scmp.eq.s32.totalorder %s11, 0
    %p73 = por %p71, %p72
    %p74 = scmp.ne.s32.totalorder %s66, %s68
    %p75 = scmp.eq.s32.totalorder %s16, 1
    %p76 = por %p74, %p75
    %p77 = scmp.ne.s32.totalorder %s68, %s69
    %p78 = scmp.eq.s32.totalorder %s16, 0
    %p79 = por %p77, %p78
    %p80 = scmp.ne.s32.totalorder %s68, %s69
    %p81 = scmp.eq.s32.totalorder %s17, 1
    %p82 = por %p80, %p81
    %p84 = scmp.ne.s32.totalorder %s69, %s83
    %p85 = scmp.eq.s32.totalorder %s17, 0
    %p86 = por %p84, %p85
    %s88 = sadd.s32 %s87, 1
    %p91 = scmp.eq.s32.totalorder %s11, 1
    %p92 = scmp.ne.s32.totalorder %s87, %s89
    %p93 = scmp.eq.s32.totalorder %s11, 0
    %p94 = por %p92, %p93
    %p95 = scmp.ne.s32.totalorder %s87, %s89
    %p96 = scmp.eq.s32.totalorder %s16, 1
    %p97 = por %p95, %p96
    %p98 = scmp.ne.s32.totalorder %s89, %s90
    %p99 = scmp.eq.s32.totalorder %s16, 0
    %p100 = por %p98, %p99
    %p101 = scmp.ne.s32.totalorder %s89, %s90
    %p102 = scmp.eq.s32.totalorder %s17, 1
    %p103 = por %p101, %p102
    %p105 = scmp.ne.s32.totalorder %s90, %s104
    %p106 = scmp.eq.s32.totalorder %s17, 0
    %p107 = por %p105, %p106
    %s109 = sadd.s32 %s108, 1
    %p112 = scmp.eq.s32.totalorder %s11, 1
    %p113 = scmp.ne.s32.totalorder %s108, %s110
    %p114 = scmp.eq.s32.totalorder %s11, 0
    %p115 = por %p113, %p114
    %p116 = scmp.ne.s32.totalorder %s108, %s110
    %p117 = scmp.eq.s32.totalorder %s16, 1
    %p118 = por %p116, %p117
    %p119 = scmp.ne.s32.totalorder %s110, %s111
    %p120 = scmp.eq.s32.totalorder %s16, 0
    %p121 = por %p119, %p120
    %p122 = scmp.ne.s32.totalorder %s110, %s111
    %p123 = scmp.eq.s32.totalorder %s17, 1
    %p124 = por %p122, %p123
    %p126 = scmp.ne.s32.totalorder %s111, %s125
    %p127 = scmp.eq.s32.totalorder %s17, 0
    %p128 = por %p126, %p127
    %s129 = ssub.s32 %s11, %s18
    %p130 = scmp.eq.s32.totalorder %s129, 0
    %s132 = sadd.s32 %s131, 1
    %s133 = scalar_select %p130, %s131, %s132
    %p136 = pneg %p130
    %p137 = scmp.eq.s32.totalorder %s11, 1
    %p138 = por %p136, %p137
    %p139 = scmp.ne.s32.totalorder %s131, %s134
    %p140 = scmp.eq.s32.totalorder %s11, 0
    %p141 = por %p139, %p140
    %p142 = scmp.ne.s32.totalorder %s131, %s134
    %p143 = scmp.eq.s32.totalorder %s16, 1
    %p144 = por %p142, %p143
    %p145 = scmp.ne.s32.totalorder %s134, %s135
    %p146 = scmp.eq.s32.totalorder %s16, 0
    %p147 = por %p145, %p146
    %p148 = scmp.ne.s32.totalorder %s134, %s135
    %p149 = scmp.eq.s32.totalorder %s17, 1
    %p150 = por %p148, %p149
    %p152 = scmp.ne.s32.totalorder %s135, %s151
    %p153 = scmp.eq.s32.totalorder %s17, 0
    %p154 = por %p152, %p153
    %p155 = scmp.le.s32.totalorder 1, %s11
    %p156 = scmp.lt.s32.totalorder %s11, 3
    %p157 = pnand %p155, %p156
    %p158 = pneg %p157
    // Predicated region
    $region9: #{_lambda_.13} parent=5 // pred_check
      _
    $region10: #{_lambda_.13} parent=5 // pred_check_branch
      %160 = sbr.rel (%p157) target = $region12
    $region11: #{_lambda_.13} parent=5 // pred_region
      %s161 = ssub.s32 %s11, 1
      // Predicated region
      $region13: #{_lambda_.13} parent=11 // pred_check
        %p162 = pneg %p58
      $region14: #{_lambda_.13} parent=11 // pred_check_branch
        %164 = sbr.rel (%p162) target = $region16
      $region15: #{_lambda_.13} parent=11 // pred_region
        _
      $region16: #{_lambda_.13} parent=11 // pred_fallthru
        _
      // Predicated region
      $region17: #{_lambda_.13} parent=11 // pred_check
        %p165 = pneg %p79
      $region18: #{_lambda_.13} parent=11 // pred_check_branch
        %167 = sbr.rel (%p165) target = $region20
      $region19: #{_lambda_.13} parent=11 // pred_region
        _
      $region20: #{_lambda_.13} parent=11 // pred_fallthru
        _
      // Predicated region
      $region21: #{_lambda_.13} parent=11 // pred_check
        %p168 = pneg %p100
      $region22: #{_lambda_.13} parent=11 // pred_check_branch
        %170 = sbr.rel (%p168) target = $region24
      $region23: #{_lambda_.13} parent=11 // pred_region
        _
      $region24: #{_lambda_.13} parent=11 // pred_fallthru
        _
      // Predicated region
      $region25: #{_lambda_.13} parent=11 // pred_check
        %p171 = pneg %p121
      $region26: #{_lambda_.13} parent=11 // pred_check_branch
        %173 = sbr.rel (%p171) target = $region28
      $region27: #{_lambda_.13} parent=11 // pred_region
        _
      $region28: #{_lambda_.13} parent=11 // pred_fallthru
        _
    $region12: #{_lambda_.13} parent=5 // pred_fallthru
      _
    %p174 = scmp.lt.s32.totalorder %s11, 2
    // Predicated region
    $region29: #{_lambda_.13} parent=5 // pred_check
      %p175 = pneg %p174
    $region30: #{_lambda_.13} parent=5 // pred_check_branch
      %177 = sbr.rel (%p175) target = $region32
    $region31: #{_lambda_.13} parent=5 // pred_region
      // Predicated region
      $region33: #{_lambda_.13} parent=31 // pred_check
        %p178 = pneg %p31
      $region34: #{_lambda_.13} parent=31 // pred_check_branch
        %180 = sbr.rel (%p178) target = $region36
      $region35: #{_lambda_.13} parent=31 // pred_region
        %p181 = scmp.lt.s32.totalorder %s11, 1
        %s182 = scalar_select %p181, %s11, 1
        %s183 = smul.addr %s182, 2
        %s184 = smul.addr %s183, 8
        %s185 = scalar_lea.vmem %s0, %s184
      $region36: #{_lambda_.13} parent=31 // pred_fallthru
        _
    $region32: #{_lambda_.13} parent=5 // pred_fallthru
      _
    %p186 = scmp.le.s32.totalorder 1, %s11
    %p187 = scmp.lt.s32.totalorder %s11, 3
    %p188 = pnand %p186, %p187
    %p189 = pneg %p188
    // Predicated region
    $region37: #{_lambda_.13} parent=5 // pred_check
      _
    $region38: #{_lambda_.13} parent=5 // pred_check_branch
      %191 = sbr.rel (%p188) target = $region40
    $region39: #{_lambda_.13} parent=5 // pred_region
      %s192 = ssub.s32 %s11, 1
      %p193 = scmp.lt.s32.totalorder %s16, 1
      %s194 = scalar_select %p193, %s16, 1
      %s195 = smul.addr %s194, 2
      %s196 = smul.addr %s195, 8
      %s197 = scalar_lea.vmem %s0, %s196
      %p198 = pneg %p37
      %p199 = pneg %p34
      %p200 = pneg %p58
      %p201 = pneg %p55
      %p202 = pneg %p79
      %p203 = pneg %p76
      %p204 = pneg %p100
      %p205 = pneg %p97
      %p206 = pneg %p121
      %p207 = pneg %p118
      %p208 = pneg %p147
      %p209 = pneg %p144
      %p210 = scmp.lt.s32.totalorder %s16, 1
      %s211 = scalar_select %p210, %s16, 1
      %s212 = smul.addr %s211, 2
      %s213 = smul.addr %s212, 8
      %s214 = scalar_lea.vmem %s5, %s213
      %p215 = scmp.lt.s32.totalorder %s16, 1
      %s216 = scalar_select %p215, %s16, 1
      %s217 = smul.addr %s216, 2
      %s218 = smul.addr %s217, 8
      %s219 = scalar_lea.vmem %s0, %s218
      %p220 = scmp.lt.s32.totalorder %s16, 1
      %s221 = scalar_select %p220, %s16, 1
      %s222 = smul.addr %s221, 2
      %s223 = smul.addr %s222, 8
      %s224 = scalar_lea.vmem %s5, %s223
      %v226 = vld [vmem:[%s219] sm:$0xff]
      %v227 = vld [vmem:[%s219 + $0x8] sm:$0xff]
      %v228 = vld [vmem:[%s1] sm:$0x1]
      %v229 = vld [vmem:[%s2] sm:$0x1]
      %vm230 = vcmask 261120
      %v231 = vsel %vm230, %v226, 0.0
      %232 = vadd.xlane.f32.xlu0 %v231
      %v233 = vpop.xlane.xlu0 %232
      %v234 = vsel %vm230, %v227, 0.0
      %235 = vadd.xlane.f32.xlu0 %v234
      %v236 = vpop.xlane.xlu0 %235
      %v237 = vrcp.pop 32.0
      %v238 = vmul.f32 %v233, %v237
      %v239 = vmul.f32 %v236, %v237
      %v240 = vsub.f32 %v226, %v238
      %v241 = vsub.f32 %v227, %v239
      %v242 = vmul.f32 %v240, %v240
      %v243 = vmul.f32 %v241, %v241
      %v244 = vsel %vm230, %v242, 0.0
      %245 = vadd.xlane.f32.xlu0 %v244
      %v246 = vpop.xlane.xlu0 %245
      %v247 = vsel %vm230, %v243, 0.0
      %248 = vadd.xlane.f32.xlu0 %v247
      %v249 = vpop.xlane.xlu0 %248
      %v250 = vmul.f32 %v246, %v237
      %v251 = vmul.f32 %v249, %v237
      %v252 = vadd.f32 %v250, 1e-05
      %v253 = vadd.f32 %v251, 1e-05
      %v254 = vrsqrt.pop %v252
      %v255 = vrsqrt.pop %v253
      %v256 = vmul.f32 %v240, %v254
      %v257 = vmul.f32 %v241, %v255
      %v259 = vlaneseq
      %v260 = vshrl.u32 %v259, 7
      %v261 = vsub.s32 0, %v260
      %v262 = vrot.slane %v228, %v261
      %v264 = vmul.f32 %v256, %v262
      %v265 = vmul.f32 %v257, %v262
      %v267 = vlaneseq
      %v268 = vshrl.u32 %v267, 7
      %v269 = vsub.s32 0, %v268
      %v270 = vrot.slane %v229, %v269
      %v272 = vadd.f32 %v264, %v270
      %v273 = vadd.f32 %v265, %v270
      %v274 = vld [vmem:[%s3] sm:$0xf]
      %v275 = vld [vmem:[%s3 + $0x4] sm:$0xf]
      %v276 = vld [vmem:[%s3 + $0x8] sm:$0xf]
      %v277 = vld [vmem:[%s3 + $0xc] sm:$0xf]
      %v278 = vpack.c.bf16 %v273, %v272
      %v279 = vld [vmem:[%s4] sm:$0x1]
      %v281 = vlaneseq
      %v282 = vshrl.u32 %v281, 7
      %v283 = vsub.s32 0, %v282
      %v284 = vrot.slane %v279, %v283
      %v290 = vunpack.c.l.b16 %v274
      %v291 = vunpack.c.l.b16 %v275
      %v292 = vunpack.c.l.b16 %v276
      %v293 = vunpack.c.l.b16 %v277
      %v294 = vpack.c.b16 %v291, %v290
      %v295 = vpack.c.b16 %v293, %v292
      %v299 = vsel %vm230, %v278, 0
      %301 = vmatprep.subr.bf16.mxu0 0
      %302 = vmatpush1.bf16.msra.mxu0 0
      %303 = vmatprep.subr.bf16.mxu0 0
      %304 = vmatpush1.bf16.msra.mxu0 0
      %305 = vmatprep.subr.bf16.mxu0 0
      %306 = vmatpush1.bf16.msra.mxu0 0
      %307 = vmatprep.subr.bf16.mxu0 0
      %308 = vmatpush1.bf16.msra.mxu0 0
      %309 = vmatprep.subr.bf16.mxu0 0
      %310 = vmatpush1.bf16.msra.mxu0 0
      %311 = vmatprep.subr.bf16.mxu0 0
      %312 = vmatpush1.bf16.msra.mxu0 0
      %313 = vmatprep.subr.bf16.mxu0 0
      %314 = vmatpush1.bf16.msra.mxu0 %v295
      %315 = vmatprep.subr.bf16.mxu0 0
      %316 = vmatpush1.bf16.msra.mxu0 %v294
      %317 = vmatprep.subr.bf16.mxu0 0
      %318 = vmatpush2.bf16.msra.mxu0 0
      %319 = vmatprep.subr.bf16.mxu0 0
      %320 = vmatpush2.bf16.msra.mxu0 0
      %321 = vmatprep.subr.bf16.mxu0 0
      %322 = vmatpush2.bf16.msra.mxu0 0
      %323 = vmatprep.subr.bf16.mxu0 0
      %324 = vmatpush2.bf16.msra.mxu0 0
      %325 = vmatprep.subr.bf16.mxu0 0
      %326 = vmatpush2.bf16.msra.mxu0 0
      %327 = vmatprep.subr.bf16.mxu0 0
      %328 = vmatpush2.bf16.msra.mxu0 0
      %329 = vmatprep.subr.bf16.mxu0 0
      %330 = vmatpush2.bf16.msra.mxu0 0
      %331 = vmatprep.subr.bf16.mxu0 0
      %332 = vmatpush2.bf16.msra.mxu0 0
      %333 = vmatprep.mubr.bf16.mxu0 0
      %334 = vmatmul.mubr.bf16.gmra.mxu0 %v299
      %v335 = vpop.f32.mrf.mxu0
      %v336 = vadd.f32 %v284, %v335
      %v337 = vpop.f32.mrf.mxu0
      %v338 = vpop.f32.mrf.mxu0
      %v339 = vadd.f32 %v284, %v338
      %v340 = vpop.f32.mrf.mxu0
      %341 = vdwg.mxu0
      %vm342 = vcmask 31744
      %343 = vst.msk [vmem:[%s224] sm:$0xff] %vm342, %v336
      %344 = vst.msk [vmem:[%s224 + $0x8] sm:$0xff] %vm342, %v339
      %p345 = scmp.lt.s32.totalorder %s16, 1
      %s346 = scalar_select %p345, %s16, 1
      %s347 = smul.addr %s346, 2
      %s348 = smul.addr %s347, 8
      %s349 = scalar_lea.vmem %s5, %s348
      // Predicated region
      $region41: #{_lambda_.13} parent=39 // pred_check
        %p350 = pneg %p144
      $region42: #{_lambda_.13} parent=39 // pred_check_branch
        %352 = sbr.rel (%p350) target = $region44
      $region43: #{_lambda_.13} parent=39 // pred_region
        _
      $region44: #{_lambda_.13} parent=39 // pred_fallthru
        _
    $region40: #{_lambda_.13} parent=5 // pred_fallthru
      _
    %p353 = scmp.le.s32.totalorder 2, %s11
    // Predicated region
    $region45: #{_lambda_.13} parent=5 // pred_check
      %p354 = pneg %p353
    $region46: #{_lambda_.13} parent=5 // pred_check_branch
      %356 = sbr.rel (%p354) target = $region48
    $region47: #{_lambda_.13} parent=5 // pred_region
      %s357 = ssub.s32 %s11, 2
      // Predicated region
      $region49: #{_lambda_.13} parent=47 // pred_check
        %p358 = pneg %p150
      $region50: #{_lambda_.13} parent=47 // pred_check_branch
        %360 = sbr.rel (%p358) target = $region52
      $region51: #{_lambda_.13} parent=47 // pred_region
        %p361 = scmp.lt.s32.totalorder %s17, 1
        %s362 = scalar_select %p361, %s17, 1
        %s363 = smul.addr %s362, 2
        %s364 = smul.addr %s363, 8
        %s365 = scalar_lea.vmem %s5, %s364
      $region52: #{_lambda_.13} parent=47 // pred_fallthru
        _
    $region48: #{_lambda_.13} parent=5 // pred_fallthru
      _
  $region6: #{_lambda_.13} parent=0 // loop_footer
    %s15 = sadd.s32 1, %s11
  $region7: #{_lambda_.13} parent=0 // loop_footer_branch
    %10 = sbr.rel target = $region3
  $region8: #{_lambda_.13} parent=0 // loop_exit
    _

// kernel: _lambda_.12
$region0: #{_lambda_.12}
  #allocation0 [shape = 'u32[]', space=smem, size = 0x4, offset = 0x4, fixed_abs, tag = 'smem constant byte address 0x4 - core index']
  #allocation1 [shape = 'u32[144,128]{1,0:T(1,128)}', space=vmem, size = 0x12000, scoped, tag = 'internal scratch']
  %s0 = inlined_call_operand.vmem [shape: f32[2,16,32], index: 0, kind: input, shape index: {}]
  %s1 = inlined_call_operand.vmem [shape: f32[2,9,32], index: 1, kind: input, shape index: {}]
  %s2 = inlined_call_operand.vmem [shape: f32[16,16], index: 2, kind: input, shape index: {}]
  %s3 = inlined_call_operand.vmem [shape: bf16[32,96], index: 3, kind: input, shape index: {}]
  %s4 = inlined_call_operand.vmem [shape: f32[1,96], index: 4, kind: input, shape index: {}]
  %s5 = inlined_call_operand.vmem [shape: bf16[32,32], index: 5, kind: input, shape index: {}]
  %s6 = inlined_call_operand.vmem [shape: f32[1,32], index: 6, kind: input, shape index: {}]
  %s7 = inlined_call_operand.vmem [shape: f32[1,32], index: 7, kind: input, shape index: {}, may-alias: {7,15,21}]
  %s8 = inlined_call_operand.vmem [shape: f32[1,32], index: 8, kind: input, shape index: {}, may-alias: {8,16,22}]
  %s9 = inlined_call_operand.vmem [shape: bf16[32,32], index: 9, kind: input, shape index: {}]
  %s10 = inlined_call_operand.vmem [shape: f32[1,32], index: 10, kind: input, shape index: {}]
  %s11 = inlined_call_operand.vmem [shape: bf16[32,64], index: 11, kind: input, shape index: {}]
  %s12 = inlined_call_operand.vmem [shape: f32[1,64], index: 12, kind: input, shape index: {}]
  %s13 = inlined_call_operand.vmem [shape: bf16[32,32], index: 13, kind: input, shape index: {}]
  %s14 = inlined_call_operand.vmem [shape: f32[1,32], index: 14, kind: input, shape index: {}]
  %s15 = inlined_call_operand.vmem [shape: f32[1,32], index: 15, kind: input, shape index: {}, may-alias: {7,15,21}]
  %s16 = inlined_call_operand.vmem [shape: f32[1,32], index: 16, kind: input, shape index: {}, may-alias: {8,16,22}]
  %s17 = inlined_call_operand.vmem [shape: bf16[32,64], index: 17, kind: input, shape index: {}]
  %s18 = inlined_call_operand.vmem [shape: f32[1,64], index: 18, kind: input, shape index: {}]
  %s19 = inlined_call_operand.vmem [shape: bf16[64,32], index: 19, kind: input, shape index: {}]
  %s20 = inlined_call_operand.vmem [shape: f32[1,32], index: 20, kind: input, shape index: {}]
  %s21 = inlined_call_operand.vmem [shape: f32[1,32], index: 21, kind: input, shape index: {}, may-alias: {7,15,21}]
  %s22 = inlined_call_operand.vmem [shape: f32[1,32], index: 22, kind: input, shape index: {}, may-alias: {8,16,22}]
  %s23 = inlined_call_operand.vmem [shape: f32[2,16,32], index: 23, kind: output, shape index: {}]
  %s24 = sld [smem:[#allocation0]]
  $region125: #{_lambda_.12} parent=0
    _
  %s26 = ssub.s32 1, %s24
  %s27 = scalar_select 0, %s26, %s24
  loop: start=0, step=1, limit=4
  $region2: #{_lambda_.12} parent=0 // loop_pre_header
    _
  $region3: #{_lambda_.12} parent=0 // loop_header
    %s29 = sphi 0, %s33
    %p30 = scmp.ge.s32.totalorder %s29, 4
    %s39 = sphi 0, %s41
    %s42 = sphi 0, %s39
    %s43 = sphi 0, %s42
    %s59 = sphi 0, %s43
    %s65 = sphi 0, %s67
    %s68 = sphi 0, %s65
    %s69 = sphi 0, %s68
    %s85 = sphi 0, %s69
    %s89 = sphi 0, %s89
    %s91 = sphi 0, %s89
    %s92 = sphi 0, %s91
    %s106 = sphi 0, %s92
    %s110 = sphi 0, %s110
    %s112 = sphi 0, %s110
    %s113 = sphi 0, %s112
    %s127 = sphi 0, %s113
    %s131 = sphi 0, %s131
    %s133 = sphi 0, %s131
    %s134 = sphi 0, %s133
    %s148 = sphi 0, %s134
    %s152 = sphi 0, %s152
    %s154 = sphi 0, %s152
    %s155 = sphi 0, %s154
    %s169 = sphi 0, %s155
    %s173 = sphi 0, %s173
    %s175 = sphi 0, %s173
    %s176 = sphi 0, %s175
    %s190 = sphi 0, %s176
    %s194 = sphi 0, %s194
    %s196 = sphi 0, %s194
    %s197 = sphi 0, %s196
    %s211 = sphi 0, %s197
    %s215 = sphi 0, %s215
    %s217 = sphi 0, %s215
    %s218 = sphi 0, %s217
    %s232 = sphi 0, %s218
    %s236 = sphi 0, %s236
    %s238 = sphi 0, %s236
    %s239 = sphi 0, %s238
    %s253 = sphi 0, %s239
    %s257 = sphi 0, %s257
    %s259 = sphi 0, %s257
    %s260 = sphi 0, %s259
    %s274 = sphi 0, %s260
    %s278 = sphi 0, %s278
    %s280 = sphi 0, %s278
    %s281 = sphi 0, %s280
    %s295 = sphi 0, %s281
    %s299 = sphi 0, %s299
    %s301 = sphi 0, %s299
    %s302 = sphi 0, %s301
    %s316 = sphi 0, %s302
    %s320 = sphi 0, %s320
    %s322 = sphi 0, %s320
    %s323 = sphi 0, %s322
    %s337 = sphi 0, %s323
    %s341 = sphi 0, %s341
    %s343 = sphi 0, %s341
    %s344 = sphi 0, %s343
    %s358 = sphi 0, %s344
    %s362 = sphi 0, %s362
    %s364 = sphi 0, %s362
    %s365 = sphi 0, %s364
    %s379 = sphi 0, %s365
    %s383 = sphi 0, %s383
    %s385 = sphi 0, %s383
    %s386 = sphi 0, %s385
    %s400 = sphi 0, %s386
    %s404 = sphi 0, %s404
    %s406 = sphi 0, %s404
    %s407 = sphi 0, %s406
    %s421 = sphi 0, %s407
    %s425 = sphi 0, %s425
    %s427 = sphi 0, %s425
    %s428 = sphi 0, %s427
    %s442 = sphi 0, %s428
    %s446 = sphi 0, %s446
    %s448 = sphi 0, %s446
    %s449 = sphi 0, %s448
    %s463 = sphi 0, %s449
    %s467 = sphi 0, %s467
    %s469 = sphi 0, %s467
    %s470 = sphi 0, %s469
    %s484 = sphi 0, %s470
    %s488 = sphi 0, %s488
    %s490 = sphi 0, %s488
    %s491 = sphi 0, %s490
    %s505 = sphi 0, %s491
    %s509 = sphi 0, %s509
    %s511 = sphi 0, %s509
    %s512 = sphi 0, %s511
    %s526 = sphi 0, %s512
    %s532 = sphi 0, %s534
    %s535 = sphi 0, %s532
    %s536 = sphi 0, %s535
    %s552 = sphi 0, %s536
  $region4: #{_lambda_.12} parent=0 // loop_header_branch
    %32 = sbr.rel (%p30) target = $region8
  $region5: #{_lambda_.12} parent=0 // loop_body
    %s34 = ssub.s32 %s29, 1
    %s35 = ssub.s32 %s29, 2
    %s36 = sadd.s32 %s29, 1
    %s37 = ssub.s32 %s29, %s36
    %p38 = scmp.eq.s32.totalorder %s37, 0
    %s40 = sadd.s32 %s39, 1
    %s41 = scalar_select %p38, %s39, %s40
    %p44 = pneg %p38
    %p45 = scmp.eq.s32.totalorder %s29, 1
    %p46 = por %p44, %p45
    %p47 = scmp.ne.s32.totalorder %s39, %s42
    %p48 = scmp.eq.s32.totalorder %s29, 0
    %p49 = por %p47, %p48
    %p50 = scmp.ne.s32.totalorder %s39, %s42
    %p51 = scmp.eq.s32.totalorder %s34, 1
    %p52 = por %p50, %p51
    %p53 = scmp.ne.s32.totalorder %s42, %s43
    %p54 = scmp.eq.s32.totalorder %s34, 0
    %p55 = por %p53, %p54
    %p56 = scmp.ne.s32.totalorder %s42, %s43
    %p57 = scmp.eq.s32.totalorder %s35, 1
    %p58 = por %p56, %p57
    %p60 = scmp.ne.s32.totalorder %s43, %s59
    %p61 = scmp.eq.s32.totalorder %s35, 0
    %p62 = por %p60, %p61
    %s63 = ssub.s32 %s29, %s36
    %p64 = scmp.eq.s32.totalorder %s63, 0
    %s66 = sadd.s32 %s65, 1
    %s67 = scalar_select %p64, %s65, %s66
    %p70 = pneg %p64
    %p71 = scmp.eq.s32.totalorder %s29, 1
    %p72 = por %p70, %p71
    %p73 = scmp.ne.s32.totalorder %s65, %s68
    %p74 = scmp.eq.s32.totalorder %s29, 0
    %p75 = por %p73, %p74
    %p76 = scmp.ne.s32.totalorder %s65, %s68
    %p77 = scmp.eq.s32.totalorder %s34, 1
    %p78 = por %p76, %p77
    %p79 = scmp.ne.s32.totalorder %s68, %s69
    %p80 = scmp.eq.s32.totalorder %s34, 0
    %p81 = por %p79, %p80
    %p82 = scmp.ne.s32.totalorder %s68, %s69
    %p83 = scmp.eq.s32.totalorder %s35, 1
    %p84 = por %p82, %p83
    %p86 = scmp.ne.s32.totalorder %s69, %s85
    %p87 = scmp.eq.s32.totalorder %s35, 0
    %p88 = por %p86, %p87
    %s90 = sadd.s32 %s89, 1
    %p93 = scmp.eq.s32.totalorder %s29, 1
    %p94 = scmp.ne.s32.totalorder %s89, %s91
    %p95 = scmp.eq.s32.totalorder %s29, 0
    %p96 = por %p94, %p95
    %p97 = scmp.ne.s32.totalorder %s89, %s91
    %p98 = scmp.eq.s32.totalorder %s34, 1
    %p99 = por %p97, %p98
    %p100 = scmp.ne.s32.totalorder %s91, %s92
    %p101 = scmp.eq.s32.totalorder %s34, 0
    %p102 = por %p100, %p101
    %p103 = scmp.ne.s32.totalorder %s91, %s92
    %p104 = scmp.eq.s32.totalorder %s35, 1
    %p105 = por %p103, %p104
    %p107 = scmp.ne.s32.totalorder %s92, %s106
    %p108 = scmp.eq.s32.totalorder %s35, 0
    %p109 = por %p107, %p108
    %s111 = sadd.s32 %s110, 1
    %p114 = scmp.eq.s32.totalorder %s29, 1
    %p115 = scmp.ne.s32.totalorder %s110, %s112
    %p116 = scmp.eq.s32.totalorder %s29, 0
    %p117 = por %p115, %p116
    %p118 = scmp.ne.s32.totalorder %s110, %s112
    %p119 = scmp.eq.s32.totalorder %s34, 1
    %p120 = por %p118, %p119
    %p121 = scmp.ne.s32.totalorder %s112, %s113
    %p122 = scmp.eq.s32.totalorder %s34, 0
    %p123 = por %p121, %p122
    %p124 = scmp.ne.s32.totalorder %s112, %s113
    %p125 = scmp.eq.s32.totalorder %s35, 1
    %p126 = por %p124, %p125
    %p128 = scmp.ne.s32.totalorder %s113, %s127
    %p129 = scmp.eq.s32.totalorder %s35, 0
    %p130 = por %p128, %p129
    %s132 = sadd.s32 %s131, 1
    %p135 = scmp.eq.s32.totalorder %s29, 1
    %p136 = scmp.ne.s32.totalorder %s131, %s133
    %p137 = scmp.eq.s32.totalorder %s29, 0
    %p138 = por %p136, %p137
    %p139 = scmp.ne.s32.totalorder %s131, %s133
    %p140 = scmp.eq.s32.totalorder %s34, 1
    %p141 = por %p139, %p140
    %p142 = scmp.ne.s32.totalorder %s133, %s134
    %p143 = scmp.eq.s32.totalorder %s34, 0
    %p144 = por %p142, %p143
    %p145 = scmp.ne.s32.totalorder %s133, %s134
    %p146 = scmp.eq.s32.totalorder %s35, 1
    %p147 = por %p145, %p146
    %p149 = scmp.ne.s32.totalorder %s134, %s148
    %p150 = scmp.eq.s32.totalorder %s35, 0
    %p151 = por %p149, %p150
    %s153 = sadd.s32 %s152, 1
    %p156 = scmp.eq.s32.totalorder %s29, 1
    %p157 = scmp.ne.s32.totalorder %s152, %s154
    %p158 = scmp.eq.s32.totalorder %s29, 0
    %p159 = por %p157, %p158
    %p160 = scmp.ne.s32.totalorder %s152, %s154
    %p161 = scmp.eq.s32.totalorder %s34, 1
    %p162 = por %p160, %p161
    %p163 = scmp.ne.s32.totalorder %s154, %s155
    %p164 = scmp.eq.s32.totalorder %s34, 0
    %p165 = por %p163, %p164
    %p166 = scmp.ne.s32.totalorder %s154, %s155
    %p167 = scmp.eq.s32.totalorder %s35, 1
    %p168 = por %p166, %p167
    %p170 = scmp.ne.s32.totalorder %s155, %s169
    %p171 = scmp.eq.s32.totalorder %s35, 0
    %p172 = por %p170, %p171
    %s174 = sadd.s32 %s173, 1
    %p177 = scmp.eq.s32.totalorder %s29, 1
    %p178 = scmp.ne.s32.totalorder %s173, %s175
    %p179 = scmp.eq.s32.totalorder %s29, 0
    %p180 = por %p178, %p179
    %p181 = scmp.ne.s32.totalorder %s173, %s175
    %p182 = scmp.eq.s32.totalorder %s34, 1
    %p183 = por %p181, %p182
    %p184 = scmp.ne.s32.totalorder %s175, %s176
    %p185 = scmp.eq.s32.totalorder %s34, 0
    %p186 = por %p184, %p185
    %p187 = scmp.ne.s32.totalorder %s175, %s176
    %p188 = scmp.eq.s32.totalorder %s35, 1
    %p189 = por %p187, %p188
    %p191 = scmp.ne.s32.totalorder %s176, %s190
    %p192 = scmp.eq.s32.totalorder %s35, 0
    %p193 = por %p191, %p192
    %s195 = sadd.s32 %s194, 1
    %p198 = scmp.eq.s32.totalorder %s29, 1
    %p199 = scmp.ne.s32.totalorder %s194, %s196
    %p200 = scmp.eq.s32.totalorder %s29, 0
    %p201 = por %p199, %p200
    %p202 = scmp.ne.s32.totalorder %s194, %s196
    %p203 = scmp.eq.s32.totalorder %s34, 1
    %p204 = por %p202, %p203
    %p205 = scmp.ne.s32.totalorder %s196, %s197
    %p206 = scmp.eq.s32.totalorder %s34, 0
    %p207 = por %p205, %p206
    %p208 = scmp.ne.s32.totalorder %s196, %s197
    %p209 = scmp.eq.s32.totalorder %s35, 1
    %p210 = por %p208, %p209
    %p212 = scmp.ne.s32.totalorder %s197, %s211
    %p213 = scmp.eq.s32.totalorder %s35, 0
    %p214 = por %p212, %p213
    %s216 = sadd.s32 %s215, 1
    %p219 = scmp.eq.s32.totalorder %s29, 1
    %p220 = scmp.ne.s32.totalorder %s215, %s217
    %p221 = scmp.eq.s32.totalorder %s29, 0
    %p222 = por %p220, %p221
    %p223 = scmp.ne.s32.totalorder %s215, %s217
    %p224 = scmp.eq.s32.totalorder %s34, 1
    %p225 = por %p223, %p224
    %p226 = scmp.ne.s32.totalorder %s217, %s218
    %p227 = scmp.eq.s32.totalorder %s34, 0
    %p228 = por %p226, %p227
    %p229 = scmp.ne.s32.totalorder %s217, %s218
    %p230 = scmp.eq.s32.totalorder %s35, 1
    %p231 = por %p229, %p230
    %p233 = scmp.ne.s32.totalorder %s218, %s232
    %p234 = scmp.eq.s32.totalorder %s35, 0
    %p235 = por %p233, %p234
    %s237 = sadd.s32 %s236, 1
    %p240 = scmp.eq.s32.totalorder %s29, 1
    %p241 = scmp.ne.s32.totalorder %s236, %s238
    %p242 = scmp.eq.s32.totalorder %s29, 0
    %p243 = por %p241, %p242
    %p244 = scmp.ne.s32.totalorder %s236, %s238
    %p245 = scmp.eq.s32.totalorder %s34, 1
    %p246 = por %p244, %p245
    %p247 = scmp.ne.s32.totalorder %s238, %s239
    %p248 = scmp.eq.s32.totalorder %s34, 0
    %p249 = por %p247, %p248
    %p250 = scmp.ne.s32.totalorder %s238, %s239
    %p251 = scmp.eq.s32.totalorder %s35, 1
    %p252 = por %p250, %p251
    %p254 = scmp.ne.s32.totalorder %s239, %s253
    %p255 = scmp.eq.s32.totalorder %s35, 0
    %p256 = por %p254, %p255
    %s258 = sadd.s32 %s257, 1
    %p261 = scmp.eq.s32.totalorder %s29, 1
    %p262 = scmp.ne.s32.totalorder %s257, %s259
    %p263 = scmp.eq.s32.totalorder %s29, 0
    %p264 = por %p262, %p263
    %p265 = scmp.ne.s32.totalorder %s257, %s259
    %p266 = scmp.eq.s32.totalorder %s34, 1
    %p267 = por %p265, %p266
    %p268 = scmp.ne.s32.totalorder %s259, %s260
    %p269 = scmp.eq.s32.totalorder %s34, 0
    %p270 = por %p268, %p269
    %p271 = scmp.ne.s32.totalorder %s259, %s260
    %p272 = scmp.eq.s32.totalorder %s35, 1
    %p273 = por %p271, %p272
    %p275 = scmp.ne.s32.totalorder %s260, %s274
    %p276 = scmp.eq.s32.totalorder %s35, 0
    %p277 = por %p275, %p276
    %s279 = sadd.s32 %s278, 1
    %p282 = scmp.eq.s32.totalorder %s29, 1
    %p283 = scmp.ne.s32.totalorder %s278, %s280
    %p284 = scmp.eq.s32.totalorder %s29, 0
    %p285 = por %p283, %p284
    %p286 = scmp.ne.s32.totalorder %s278, %s280
    %p287 = scmp.eq.s32.totalorder %s34, 1
    %p288 = por %p286, %p287
    %p289 = scmp.ne.s32.totalorder %s280, %s281
    %p290 = scmp.eq.s32.totalorder %s34, 0
    %p291 = por %p289, %p290
    %p292 = scmp.ne.s32.totalorder %s280, %s281
    %p293 = scmp.eq.s32.totalorder %s35, 1
    %p294 = por %p292, %p293
    %p296 = scmp.ne.s32.totalorder %s281, %s295
    %p297 = scmp.eq.s32.totalorder %s35, 0
    %p298 = por %p296, %p297
    %s300 = sadd.s32 %s299, 1
    %p303 = scmp.eq.s32.totalorder %s29, 1
    %p304 = scmp.ne.s32.totalorder %s299, %s301
    %p305 = scmp.eq.s32.totalorder %s29, 0
    %p306 = por %p304, %p305
    %p307 = scmp.ne.s32.totalorder %s299, %s301
    %p308 = scmp.eq.s32.totalorder %s34, 1
    %p309 = por %p307, %p308
    %p310 = scmp.ne.s32.totalorder %s301, %s302
    %p311 = scmp.eq.s32.totalorder %s34, 0
    %p312 = por %p310, %p311
    %p313 = scmp.ne.s32.totalorder %s301, %s302
    %p314 = scmp.eq.s32.totalorder %s35, 1
    %p315 = por %p313, %p314
    %p317 = scmp.ne.s32.totalorder %s302, %s316
    %p318 = scmp.eq.s32.totalorder %s35, 0
    %p319 = por %p317, %p318
    %s321 = sadd.s32 %s320, 1
    %p324 = scmp.eq.s32.totalorder %s29, 1
    %p325 = scmp.ne.s32.totalorder %s320, %s322
    %p326 = scmp.eq.s32.totalorder %s29, 0
    %p327 = por %p325, %p326
    %p328 = scmp.ne.s32.totalorder %s320, %s322
    %p329 = scmp.eq.s32.totalorder %s34, 1
    %p330 = por %p328, %p329
    %p331 = scmp.ne.s32.totalorder %s322, %s323
    %p332 = scmp.eq.s32.totalorder %s34, 0
    %p333 = por %p331, %p332
    %p334 = scmp.ne.s32.totalorder %s322, %s323
    %p335 = scmp.eq.s32.totalorder %s35, 1
    %p336 = por %p334, %p335
    %p338 = scmp.ne.s32.totalorder %s323, %s337
    %p339 = scmp.eq.s32.totalorder %s35, 0
    %p340 = por %p338, %p339
    %s342 = sadd.s32 %s341, 1
    %p345 = scmp.eq.s32.totalorder %s29, 1
    %p346 = scmp.ne.s32.totalorder %s341, %s343
    %p347 = scmp.eq.s32.totalorder %s29, 0
    %p348 = por %p346, %p347
    %p349 = scmp.ne.s32.totalorder %s341, %s343
    %p350 = scmp.eq.s32.totalorder %s34, 1
    %p351 = por %p349, %p350
    %p352 = scmp.ne.s32.totalorder %s343, %s344
    %p353 = scmp.eq.s32.totalorder %s34, 0
    %p354 = por %p352, %p353
    %p355 = scmp.ne.s32.totalorder %s343, %s344
    %p356 = scmp.eq.s32.totalorder %s35, 1
    %p357 = por %p355, %p356
    %p359 = scmp.ne.s32.totalorder %s344, %s358
    %p360 = scmp.eq.s32.totalorder %s35, 0
    %p361 = por %p359, %p360
    %s363 = sadd.s32 %s362, 1
    %p366 = scmp.eq.s32.totalorder %s29, 1
    %p367 = scmp.ne.s32.totalorder %s362, %s364
    %p368 = scmp.eq.s32.totalorder %s29, 0
    %p369 = por %p367, %p368
    %p370 = scmp.ne.s32.totalorder %s362, %s364
    %p371 = scmp.eq.s32.totalorder %s34, 1
    %p372 = por %p370, %p371
    %p373 = scmp.ne.s32.totalorder %s364, %s365
    %p374 = scmp.eq.s32.totalorder %s34, 0
    %p375 = por %p373, %p374
    %p376 = scmp.ne.s32.totalorder %s364, %s365
    %p377 = scmp.eq.s32.totalorder %s35, 1
    %p378 = por %p376, %p377
    %p380 = scmp.ne.s32.totalorder %s365, %s379
    %p381 = scmp.eq.s32.totalorder %s35, 0
    %p382 = por %p380, %p381
    %s384 = sadd.s32 %s383, 1
    %p387 = scmp.eq.s32.totalorder %s29, 1
    %p388 = scmp.ne.s32.totalorder %s383, %s385
    %p389 = scmp.eq.s32.totalorder %s29, 0
    %p390 = por %p388, %p389
    %p391 = scmp.ne.s32.totalorder %s383, %s385
    %p392 = scmp.eq.s32.totalorder %s34, 1
    %p393 = por %p391, %p392
    %p394 = scmp.ne.s32.totalorder %s385, %s386
    %p395 = scmp.eq.s32.totalorder %s34, 0
    %p396 = por %p394, %p395
    %p397 = scmp.ne.s32.totalorder %s385, %s386
    %p398 = scmp.eq.s32.totalorder %s35, 1
    %p399 = por %p397, %p398
    %p401 = scmp.ne.s32.totalorder %s386, %s400
    %p402 = scmp.eq.s32.totalorder %s35, 0
    %p403 = por %p401, %p402
    %s405 = sadd.s32 %s404, 1
    %p408 = scmp.eq.s32.totalorder %s29, 1
    %p409 = scmp.ne.s32.totalorder %s404, %s406
    %p410 = scmp.eq.s32.totalorder %s29, 0
    %p411 = por %p409, %p410
    %p412 = scmp.ne.s32.totalorder %s404, %s406
    %p413 = scmp.eq.s32.totalorder %s34, 1
    %p414 = por %p412, %p413
    %p415 = scmp.ne.s32.totalorder %s406, %s407
    %p416 = scmp.eq.s32.totalorder %s34, 0
    %p417 = por %p415, %p416
    %p418 = scmp.ne.s32.totalorder %s406, %s407
    %p419 = scmp.eq.s32.totalorder %s35, 1
    %p420 = por %p418, %p419
    %p422 = scmp.ne.s32.totalorder %s407, %s421
    %p423 = scmp.eq.s32.totalorder %s35, 0
    %p424 = por %p422, %p423
    %s426 = sadd.s32 %s425, 1
    %p429 = scmp.eq.s32.totalorder %s29, 1
    %p430 = scmp.ne.s32.totalorder %s425, %s427
    %p431 = scmp.eq.s32.totalorder %s29, 0
    %p432 = por %p430, %p431
    %p433 = scmp.ne.s32.totalorder %s425, %s427
    %p434 = scmp.eq.s32.totalorder %s34, 1
    %p435 = por %p433, %p434
    %p436 = scmp.ne.s32.totalorder %s427, %s428
    %p437 = scmp.eq.s32.totalorder %s34, 0
    %p438 = por %p436, %p437
    %p439 = scmp.ne.s32.totalorder %s427, %s428
    %p440 = scmp.eq.s32.totalorder %s35, 1
    %p441 = por %p439, %p440
    %p443 = scmp.ne.s32.totalorder %s428, %s442
    %p444 = scmp.eq.s32.totalorder %s35, 0
    %p445 = por %p443, %p444
    %s447 = sadd.s32 %s446, 1
    %p450 = scmp.eq.s32.totalorder %s29, 1
    %p451 = scmp.ne.s32.totalorder %s446, %s448
    %p452 = scmp.eq.s32.totalorder %s29, 0
    %p453 = por %p451, %p452
    %p454 = scmp.ne.s32.totalorder %s446, %s448
    %p455 = scmp.eq.s32.totalorder %s34, 1
    %p456 = por %p454, %p455
    %p457 = scmp.ne.s32.totalorder %s448, %s449
    %p458 = scmp.eq.s32.totalorder %s34, 0
    %p459 = por %p457, %p458
    %p460 = scmp.ne.s32.totalorder %s448, %s449
    %p461 = scmp.eq.s32.totalorder %s35, 1
    %p462 = por %p460, %p461
    %p464 = scmp.ne.s32.totalorder %s449, %s463
    %p465 = scmp.eq.s32.totalorder %s35, 0
    %p466 = por %p464, %p465
    %s468 = sadd.s32 %s467, 1
    %p471 = scmp.eq.s32.totalorder %s29, 1
    %p472 = scmp.ne.s32.totalorder %s467, %s469
    %p473 = scmp.eq.s32.totalorder %s29, 0
    %p474 = por %p472, %p473
    %p475 = scmp.ne.s32.totalorder %s467, %s469
    %p476 = scmp.eq.s32.totalorder %s34, 1
    %p477 = por %p475, %p476
    %p478 = scmp.ne.s32.totalorder %s469, %s470
    %p479 = scmp.eq.s32.totalorder %s34, 0
    %p480 = por %p478, %p479
    %p481 = scmp.ne.s32.totalorder %s469, %s470
    %p482 = scmp.eq.s32.totalorder %s35, 1
    %p483 = por %p481, %p482
    %p485 = scmp.ne.s32.totalorder %s470, %s484
    %p486 = scmp.eq.s32.totalorder %s35, 0
    %p487 = por %p485, %p486
    %s489 = sadd.s32 %s488, 1
    %p492 = scmp.eq.s32.totalorder %s29, 1
    %p493 = scmp.ne.s32.totalorder %s488, %s490
    %p494 = scmp.eq.s32.totalorder %s29, 0
    %p495 = por %p493, %p494
    %p496 = scmp.ne.s32.totalorder %s488, %s490
    %p497 = scmp.eq.s32.totalorder %s34, 1
    %p498 = por %p496, %p497
    %p499 = scmp.ne.s32.totalorder %s490, %s491
    %p500 = scmp.eq.s32.totalorder %s34, 0
    %p501 = por %p499, %p500
    %p502 = scmp.ne.s32.totalorder %s490, %s491
    %p503 = scmp.eq.s32.totalorder %s35, 1
    %p504 = por %p502, %p503
    %p506 = scmp.ne.s32.totalorder %s491, %s505
    %p507 = scmp.eq.s32.totalorder %s35, 0
    %p508 = por %p506, %p507
    %s510 = sadd.s32 %s509, 1
    %p513 = scmp.eq.s32.totalorder %s29, 1
    %p514 = scmp.ne.s32.totalorder %s509, %s511
    %p515 = scmp.eq.s32.totalorder %s29, 0
    %p516 = por %p514, %p515
    %p517 = scmp.ne.s32.totalorder %s509, %s511
    %p518 = scmp.eq.s32.totalorder %s34, 1
    %p519 = por %p517, %p518
    %p520 = scmp.ne.s32.totalorder %s511, %s512
    %p521 = scmp.eq.s32.totalorder %s34, 0
    %p522 = por %p520, %p521
    %p523 = scmp.ne.s32.totalorder %s511, %s512
    %p524 = scmp.eq.s32.totalorder %s35, 1
    %p525 = por %p523, %p524
    %p527 = scmp.ne.s32.totalorder %s512, %s526
    %p528 = scmp.eq.s32.totalorder %s35, 0
    %p529 = por %p527, %p528
    %s530 = ssub.s32 %s29, %s36
    %p531 = scmp.eq.s32.totalorder %s530, 0
    %s533 = sadd.s32 %s532, 1
    %s534 = scalar_select %p531, %s532, %s533
    %p537 = pneg %p531
    %p538 = scmp.eq.s32.totalorder %s29, 1
    %p539 = por %p537, %p538
    %p540 = scmp.ne.s32.totalorder %s532, %s535
    %p541 = scmp.eq.s32.totalorder %s29, 0
    %p542 = por %p540, %p541
    %p543 = scmp.ne.s32.totalorder %s532, %s535
    %p544 = scmp.eq.s32.totalorder %s34, 1
    %p545 = por %p543, %p544
    %p546 = scmp.ne.s32.totalorder %s535, %s536
    %p547 = scmp.eq.s32.totalorder %s34, 0
    %p548 = por %p546, %p547
    %p549 = scmp.ne.s32.totalorder %s535, %s536
    %p550 = scmp.eq.s32.totalorder %s35, 1
    %p551 = por %p549, %p550
    %p553 = scmp.ne.s32.totalorder %s536, %s552
    %p554 = scmp.eq.s32.totalorder %s35, 0
    %p555 = por %p553, %p554
    %p556 = scmp.le.s32.totalorder 1, %s29
    %p557 = scmp.lt.s32.totalorder %s29, 3
    %p558 = pnand %p556, %p557
    %p559 = pneg %p558
    // Predicated region
    $region9: #{_lambda_.12} parent=5 // pred_check
      _
    $region10: #{_lambda_.12} parent=5 // pred_check_branch
      %561 = sbr.rel (%p558) target = $region12
    $region11: #{_lambda_.12} parent=5 // pred_region
      %s562 = ssub.s32 %s29, 1
      // Predicated region
      $region13: #{_lambda_.12} parent=11 // pred_check
        %p563 = pneg %p102
      $region14: #{_lambda_.12} parent=11 // pred_check_branch
        %565 = sbr.rel (%p563) target = $region16
      $region15: #{_lambda_.12} parent=11 // pred_region
        _
      $region16: #{_lambda_.12} parent=11 // pred_fallthru
        _
      // Predicated region
      $region17: #{_lambda_.12} parent=11 // pred_check
        %p566 = pneg %p123
      $region18: #{_lambda_.12} parent=11 // pred_check_branch
        %568 = sbr.rel (%p566) target = $region20
      $region19: #{_lambda_.12} parent=11 // pred_region
        _
      $region20: #{_lambda_.12} parent=11 // pred_fallthru
        _
      // Predicated region
      $region21: #{_lambda_.12} parent=11 // pred_check
        %p569 = pneg %p144
      $region22: #{_lambda_.12} parent=11 // pred_check_branch
        %571 = sbr.rel (%p569) target = $region24
      $region23: #{_lambda_.12} parent=11 // pred_region
        _
      $region24: #{_lambda_.12} parent=11 // pred_fallthru
        _
      // Predicated region
      $region25: #{_lambda_.12} parent=11 // pred_check
        %p572 = pneg %p165
      $region26: #{_lambda_.12} parent=11 // pred_check_branch
        %574 = sbr.rel (%p572) target = $region28
      $region27: #{_lambda_.12} parent=11 // pred_region
        _
      $region28: #{_lambda_.12} parent=11 // pred_fallthru
        _
      // Predicated region
      $region29: #{_lambda_.12} parent=11 // pred_check
        %p575 = pneg %p186
      $region30: #{_lambda_.12} parent=11 // pred_check_branch
        %577 = sbr.rel (%p575) target = $region32
      $region31: #{_lambda_.12} parent=11 // pred_region
        _
      $region32: #{_lambda_.12} parent=11 // pred_fallthru
        _
      // Predicated region
      $region33: #{_lambda_.12} parent=11 // pred_check
        %p578 = pneg %p207
      $region34: #{_lambda_.12} parent=11 // pred_check_branch
        %580 = sbr.rel (%p578) target = $region36
      $region35: #{_lambda_.12} parent=11 // pred_region
        _
      $region36: #{_lambda_.12} parent=11 // pred_fallthru
        _
      // Predicated region
      $region37: #{_lambda_.12} parent=11 // pred_check
        %p581 = pneg %p228
      $region38: #{_lambda_.12} parent=11 // pred_check_branch
        %583 = sbr.rel (%p581) target = $region40
      $region39: #{_lambda_.12} parent=11 // pred_region
        _
      $region40: #{_lambda_.12} parent=11 // pred_fallthru
        _
      // Predicated region
      $region41: #{_lambda_.12} parent=11 // pred_check
        %p584 = pneg %p249
      $region42: #{_lambda_.12} parent=11 // pred_check_branch
        %586 = sbr.rel (%p584) target = $region44
      $region43: #{_lambda_.12} parent=11 // pred_region
        _
      $region44: #{_lambda_.12} parent=11 // pred_fallthru
        _
      // Predicated region
      $region45: #{_lambda_.12} parent=11 // pred_check
        %p587 = pneg %p270
      $region46: #{_lambda_.12} parent=11 // pred_check_branch
        %589 = sbr.rel (%p587) target = $region48
      $region47: #{_lambda_.12} parent=11 // pred_region
        _
      $region48: #{_lambda_.12} parent=11 // pred_fallthru
        _
      // Predicated region
      $region49: #{_lambda_.12} parent=11 // pred_check
        %p590 = pneg %p291
      $region50: #{_lambda_.12} parent=11 // pred_check_branch
        %592 = sbr.rel (%p590) target = $region52
      $region51: #{_lambda_.12} parent=11 // pred_region
        _
      $region52: #{_lambda_.12} parent=11 // pred_fallthru
        _
      // Predicated region
      $region53: #{_lambda_.12} parent=11 // pred_check
        %p593 = pneg %p312
      $region54: #{_lambda_.12} parent=11 // pred_check_branch
        %595 = sbr.rel (%p593) target = $region56
      $region55: #{_lambda_.12} parent=11 // pred_region
        _
      $region56: #{_lambda_.12} parent=11 // pred_fallthru
        _
      // Predicated region
      $region57: #{_lambda_.12} parent=11 // pred_check
        %p596 = pneg %p333
      $region58: #{_lambda_.12} parent=11 // pred_check_branch
        %598 = sbr.rel (%p596) target = $region60
      $region59: #{_lambda_.12} parent=11 // pred_region
        _
      $region60: #{_lambda_.12} parent=11 // pred_fallthru
        _
      // Predicated region
      $region61: #{_lambda_.12} parent=11 // pred_check
        %p599 = pneg %p354
      $region62: #{_lambda_.12} parent=11 // pred_check_branch
        %601 = sbr.rel (%p599) target = $region64
      $region63: #{_lambda_.12} parent=11 // pred_region
        _
      $region64: #{_lambda_.12} parent=11 // pred_fallthru
        _
      // Predicated region
      $region65: #{_lambda_.12} parent=11 // pred_check
        %p602 = pneg %p375
      $region66: #{_lambda_.12} parent=11 // pred_check_branch
        %604 = sbr.rel (%p602) target = $region68
      $region67: #{_lambda_.12} parent=11 // pred_region
        _
      $region68: #{_lambda_.12} parent=11 // pred_fallthru
        _
      // Predicated region
      $region69: #{_lambda_.12} parent=11 // pred_check
        %p605 = pneg %p396
      $region70: #{_lambda_.12} parent=11 // pred_check_branch
        %607 = sbr.rel (%p605) target = $region72
      $region71: #{_lambda_.12} parent=11 // pred_region
        _
      $region72: #{_lambda_.12} parent=11 // pred_fallthru
        _
      // Predicated region
      $region73: #{_lambda_.12} parent=11 // pred_check
        %p608 = pneg %p417
      $region74: #{_lambda_.12} parent=11 // pred_check_branch
        %610 = sbr.rel (%p608) target = $region76
      $region75: #{_lambda_.12} parent=11 // pred_region
        _
      $region76: #{_lambda_.12} parent=11 // pred_fallthru
        _
      // Predicated region
      $region77: #{_lambda_.12} parent=11 // pred_check
        %p611 = pneg %p438
      $region78: #{_lambda_.12} parent=11 // pred_check_branch
        %613 = sbr.rel (%p611) target = $region80
      $region79: #{_lambda_.12} parent=11 // pred_region
        _
      $region80: #{_lambda_.12} parent=11 // pred_fallthru
        _
      // Predicated region
      $region81: #{_lambda_.12} parent=11 // pred_check
        %p614 = pneg %p459
      $region82: #{_lambda_.12} parent=11 // pred_check_branch
        %616 = sbr.rel (%p614) target = $region84
      $region83: #{_lambda_.12} parent=11 // pred_region
        _
      $region84: #{_lambda_.12} parent=11 // pred_fallthru
        _
      // Predicated region
      $region85: #{_lambda_.12} parent=11 // pred_check
        %p617 = pneg %p480
      $region86: #{_lambda_.12} parent=11 // pred_check_branch
        %619 = sbr.rel (%p617) target = $region88
      $region87: #{_lambda_.12} parent=11 // pred_region
        _
      $region88: #{_lambda_.12} parent=11 // pred_fallthru
        _
      // Predicated region
      $region89: #{_lambda_.12} parent=11 // pred_check
        %p620 = pneg %p501
      $region90: #{_lambda_.12} parent=11 // pred_check_branch
        %622 = sbr.rel (%p620) target = $region92
      $region91: #{_lambda_.12} parent=11 // pred_region
        _
      $region92: #{_lambda_.12} parent=11 // pred_fallthru
        _
      // Predicated region
      $region93: #{_lambda_.12} parent=11 // pred_check
        %p623 = pneg %p522
      $region94: #{_lambda_.12} parent=11 // pred_check_branch
        %625 = sbr.rel (%p623) target = $region96
      $region95: #{_lambda_.12} parent=11 // pred_region
        _
      $region96: #{_lambda_.12} parent=11 // pred_fallthru
        _
    $region12: #{_lambda_.12} parent=5 // pred_fallthru
      _
    %p626 = scmp.lt.s32.totalorder %s29, 2
    // Predicated region
    $region97: #{_lambda_.12} parent=5 // pred_check
      %p627 = pneg %p626
    $region98: #{_lambda_.12} parent=5 // pred_check_branch
      %629 = sbr.rel (%p627) target = $region100
    $region99: #{_lambda_.12} parent=5 // pred_region
      // Predicated region
      $region101: #{_lambda_.12} parent=99 // pred_check
        %p630 = pneg %p49
      $region102: #{_lambda_.12} parent=99 // pred_check_branch
        %632 = sbr.rel (%p630) target = $region104
      $region103: #{_lambda_.12} parent=99 // pred_region
        %p633 = scmp.lt.s32.totalorder %s29, 1
        %s634 = scalar_select %p633, %s29, 1
        %s635 = smul.addr %s634, 2
        %s636 = smul.addr %s635, 8
        %s637 = scalar_lea.vmem %s0, %s636
      $region104: #{_lambda_.12} parent=99 // pred_fallthru
        _
      // Predicated region
      $region105: #{_lambda_.12} parent=99 // pred_check
        %p638 = pneg %p75
      $region106: #{_lambda_.12} parent=99 // pred_check_branch
        %640 = sbr.rel (%p638) target = $region108
      $region107: #{_lambda_.12} parent=99 // pred_region
        %p641 = scmp.lt.s32.totalorder %s29, 1
        %s642 = scalar_select %p641, %s29, 1
        %s643 = smul.addr %s642, 2
        %s644 = smul.addr %s643, 8
        %s645 = scalar_lea.vmem %s1, %s644
      $region108: #{_lambda_.12} parent=99 // pred_fallthru
        _
    $region100: #{_lambda_.12} parent=5 // pred_fallthru
      _
    %p646 = scmp.le.s32.totalorder 1, %s29
    %p647 = scmp.lt.s32.totalorder %s29, 3
    %p648 = pnand %p646, %p647
    %p649 = pneg %p648
    // Predicated region
    $region109: #{_lambda_.12} parent=5 // pred_check
      _
    $region110: #{_lambda_.12} parent=5 // pred_check_branch
      %651 = sbr.rel (%p648) target = $region112
    $region111: #{_lambda_.12} parent=5 // pred_region
      %s652 = ssub.s32 %s29, 1
      %p653 = scmp.lt.s32.totalorder %s34, 1
      %s654 = scalar_select %p653, %s34, 1
      %s655 = smul.addr %s654, 2
      %s656 = smul.addr %s655, 8
      %s657 = scalar_lea.vmem %s0, %s656
      %p658 = pneg %p55
      %p659 = pneg %p52
      %p660 = scmp.lt.s32.totalorder %s34, 1
      %s661 = scalar_select %p660, %s34, 1
      %s662 = smul.addr %s661, 2
      %s663 = smul.addr %s662, 8
      %s664 = scalar_lea.vmem %s1, %s663
      %p665 = pneg %p81
      %p666 = pneg %p78
      %p667 = pneg %p102
      %p668 = pneg %p99
      %p669 = pneg %p123
      %p670 = pneg %p120
      %p671 = pneg %p144
      %p672 = pneg %p141
      %p673 = pneg %p165
      %p674 = pneg %p162
      %p675 = pneg %p186
      %p676 = pneg %p183
      %p677 = pneg %p207
      %p678 = pneg %p204
      %p679 = pneg %p228
      %p680 = pneg %p225
      %p681 = pneg %p249
      %p682 = pneg %p246
      %p683 = pneg %p270
      %p684 = pneg %p267
      %p685 = pneg %p291
      %p686 = pneg %p288
      %p687 = pneg %p312
      %p688 = pneg %p309
      %p689 = pneg %p333
      %p690 = pneg %p330
      %p691 = pneg %p354
      %p692 = pneg %p351
      %p693 = pneg %p375
      %p694 = pneg %p372
      %p695 = pneg %p396
      %p696 = pneg %p393
      %p697 = pneg %p417
      %p698 = pneg %p414
      %p699 = pneg %p438
      %p700 = pneg %p435
      %p701 = pneg %p459
      %p702 = pneg %p456
      %p703 = pneg %p480
      %p704 = pneg %p477
      %p705 = pneg %p501
      %p706 = pneg %p498
      %p707 = pneg %p522
      %p708 = pneg %p519
      %p709 = pneg %p548
      %p710 = pneg %p545
      %p711 = scmp.lt.s32.totalorder %s34, 1
      %s712 = scalar_select %p711, %s34, 1
      %s713 = smul.addr %s712, 2
      %s714 = smul.addr %s713, 8
      %s715 = scalar_lea.vmem %s23, %s714
      %p716 = scmp.lt.s32.totalorder %s34, 1
      %s717 = scalar_select %p716, %s34, 1
      %s718 = smul.addr %s717, 2
      %s719 = smul.addr %s718, 8
      %s720 = scalar_lea.vmem %s0, %s719
      %p721 = scmp.lt.s32.totalorder %s34, 1
      %s722 = scalar_select %p721, %s34, 1
      %s723 = smul.addr %s722, 2
      %s724 = smul.addr %s723, 8
      %s725 = scalar_lea.vmem %s1, %s724
      %p726 = scmp.lt.s32.totalorder %s34, 1
      %s727 = scalar_select %p726, %s34, 1
      %s728 = smul.addr %s727, 2
      %s729 = smul.addr %s728, 8
      %s730 = scalar_lea.vmem %s23, %s729
      %v732 = vld [vmem:[%s720] sm:$0xff]
      %v733 = vld [vmem:[%s720 + $0x8] sm:$0xff]
      %v734 = vld [vmem:[%s2] sm:$0xff]
      %v735 = vld [vmem:[%s2 + $0x8] sm:$0xff]
      %v736 = vld [vmem:[%s3] sm:$0xf]
      %v737 = vld [vmem:[%s3 + $0x4] sm:$0xf]
      %v738 = vld [vmem:[%s3 + $0x8] sm:$0xf]
      %v739 = vld [vmem:[%s3 + $0xc] sm:$0xf]
      %v740 = vld [vmem:[%s4] sm:$0x1]
      %v741 = vld [vmem:[%s5] sm:$0xf]
      %v742 = vld [vmem:[%s5 + $0x4] sm:$0xf]
      %v743 = vld [vmem:[%s5 + $0x8] sm:$0xf]
      %v744 = vld [vmem:[%s5 + $0xc] sm:$0xf]
      %v745 = vld [vmem:[%s6] sm:$0x1]
      %v746 = vpack.c.bf16 %v733, %v732
      %v748 = vlaneseq
      %v749 = vshrl.u32 %v748, 7
      %v750 = vsub.s32 0, %v749
      %v751 = vrot.slane %v740, %v750
      %v757 = vunpack.c.l.b16 %v736
      %v758 = vunpack.c.l.b16 %v737
      %v759 = vunpack.c.l.b16 %v738
      %v760 = vunpack.c.l.b16 %v739
      %v761 = vpack.c.b16 %v758, %v757
      %v762 = vpack.c.b16 %v760, %v759
      %vm765 = vcmask 261120
      %v767 = vsel %vm765, %v746, 0
      %769 = vmatprep.subr.bf16.mxu0 0
      %770 = vmatpush1.bf16.msra.mxu0 0
      %771 = vmatprep.subr.bf16.mxu0 0
      %772 = vmatpush1.bf16.msra.mxu0 0
      %773 = vmatprep.subr.bf16.mxu0 0
      %774 = vmatpush1.bf16.msra.mxu0 0
      %775 = vmatprep.subr.bf16.mxu0 0
      %776 = vmatpush1.bf16.msra.mxu0 0
      %777 = vmatprep.subr.bf16.mxu0 0
      %778 = vmatpush1.bf16.msra.mxu0 0
      %779 = vmatprep.subr.bf16.mxu0 0
      %780 = vmatpush1.bf16.msra.mxu0 0
      %781 = vmatprep.subr.bf16.mxu0 0
      %782 = vmatpush1.bf16.msra.mxu0 %v762
      %783 = vmatprep.subr.bf16.mxu0 0
      %784 = vmatpush1.bf16.msra.mxu0 %v761
      %785 = vmatprep.subr.bf16.mxu0 0
      %786 = vmatpush2.bf16.msra.mxu0 0
      %787 = vmatprep.subr.bf16.mxu0 0
      %788 = vmatpush2.bf16.msra.mxu0 0
      %789 = vmatprep.subr.bf16.mxu0 0
      %790 = vmatpush2.bf16.msra.mxu0 0
      %791 = vmatprep.subr.bf16.mxu0 0
      %792 = vmatpush2.bf16.msra.mxu0 0
      %793 = vmatprep.subr.bf16.mxu0 0
      %794 = vmatpush2.bf16.msra.mxu0 0
      %795 = vmatprep.subr.bf16.mxu0 0
      %796 = vmatpush2.bf16.msra.mxu0 0
      %797 = vmatprep.subr.bf16.mxu0 0
      %798 = vmatpush2.bf16.msra.mxu0 0
      %799 = vmatprep.subr.bf16.mxu0 0
      %800 = vmatpush2.bf16.msra.mxu0 0
      %801 = vmatprep.mubr.bf16.mxu0 0
      %802 = vmatmul.mubr.bf16.gmra.mxu0 %v767
      %v803 = vpop.f32.mrf.mxu0
      %v804 = vadd.f32 %v751, %v803
      %v805 = vpop.f32.mrf.mxu0
      %v806 = vpop.f32.mrf.mxu0
      %v807 = vadd.f32 %v751, %v806
      %v808 = vpop.f32.mrf.mxu0
      %809 = vdwg.mxu0
      %v810 = vlaneseq
      %v811 = vshrl.u32 %v810, 7
      %v812 = vadd.s32 %v811, 8
      %v813 = vlaneseq
      %v814 = vand.u32 %v813, 127
      %vm815 = vcmp.ge.s32.totalorder %v811, %v814
      %vm816 = vcmp.ge.s32.totalorder %v812, %v814
      %v817 = vsel %vm815, 1, 0
      %v818 = vsel %vm816, 1, 0
      %v819 = vcvt.s32.f32 %v817
      %v820 = vcvt.s32.f32 %v818
      %v821 = vpack.c.bf16 %v820, %v819
      %v822 = vpack.c.bf16 %v807, %v804
      %824 = vrot.lane.b32.xlu0 %v822, 64
      %v825 = vpop.permute.xlu0 %824
      %vm827 = vcmask 130048
      %v829 = vsel %vm827, %v821, 0
      %831 = vmatprep.subr.bf16.mxu0 0
      %832 = vmatpush1.bf16.msra.mxu0 0
      %833 = vmatprep.subr.bf16.mxu0 0
      %834 = vmatpush1.bf16.msra.mxu0 0
      %835 = vmatprep.subr.bf16.mxu0 0
      %836 = vmatpush1.bf16.msra.mxu0 0
      %837 = vmatprep.subr.bf16.mxu0 0
      %838 = vmatpush1.bf16.msra.mxu0 0
      %839 = vmatprep.subr.bf16.mxu0 0
      %840 = vmatpush1.bf16.msra.mxu0 0
      %841 = vmatprep.subr.bf16.mxu0 0
      %842 = vmatpush1.bf16.msra.mxu0 0
      %843 = vmatprep.subr.bf16.mxu0 0
      %844 = vmatpush1.bf16.msra.mxu0 0
      %845 = vmatprep.subr.bf16.mxu0 0
      %846 = vmatpush1.bf16.msra.mxu0 %v825
      %847 = vmatprep.subr.bf16.mxu0 0
      %848 = vmatpush2.bf16.msra.mxu0 0
      %849 = vmatprep.subr.bf16.mxu0 0
      %850 = vmatpush2.bf16.msra.mxu0 0
      %851 = vmatprep.subr.bf16.mxu0 0
      %852 = vmatpush2.bf16.msra.mxu0 0
      %853 = vmatprep.subr.bf16.mxu0 0
      %854 = vmatpush2.bf16.msra.mxu0 0
      %855 = vmatprep.subr.bf16.mxu0 0
      %856 = vmatpush2.bf16.msra.mxu0 0
      %857 = vmatprep.subr.bf16.mxu0 0
      %858 = vmatpush2.bf16.msra.mxu0 0
      %859 = vmatprep.subr.bf16.mxu0 0
      %860 = vmatpush2.bf16.msra.mxu0 0
      %861 = vmatprep.subr.bf16.mxu0 0
      %862 = vmatpush2.bf16.msra.mxu0 0
      %863 = vmatprep.mubr.bf16.mxu0 0
      %864 = vmatmul.mubr.bf16.gmra.mxu0 %v829
      %v865 = vpop.f32.mrf.mxu0
      %v866 = vadd.f32 0.0, %v865
      %v867 = vpop.f32.mrf.mxu0
      %v868 = vpop.f32.mrf.mxu0
      %v869 = vadd.f32 0.0, %v868
      %v870 = vpop.f32.mrf.mxu0
      %871 = vdwg.mxu0
      %872 = vrot.lane.b32.xlu0 %v822, 96
      %v873 = vpop.permute.xlu0 %872
      %vm874 = vcmask 64512
      %v876 = vsel %vm874, %v822, 0
      %v879 = vsel %vm874, %v873, 0
      %881 = vmatprep.subr.bf16.mxu0 0
      %882 = vmatpush1.bf16.xpose.msra.mxu0 0
      %883 = vmatprep.subr.bf16.mxu0 0
      %884 = vmatpush1.bf16.xpose.msra.mxu0 0
      %885 = vmatprep.subr.bf16.mxu0 0
      %886 = vmatpush1.bf16.xpose.msra.mxu0 0
      %887 = vmatprep.subr.bf16.mxu0 0
      %888 = vmatpush1.bf16.xpose.msra.mxu0 0
      %889 = vmatprep.subr.bf16.mxu0 0
      %890 = vmatpush1.bf16.xpose.msra.mxu0 0
      %891 = vmatprep.subr.bf16.mxu0 0
      %892 = vmatpush1.bf16.xpose.msra.mxu0 0
      %893 = vmatprep.subr.bf16.mxu0 0
      %894 = vmatpush1.bf16.xpose.msra.mxu0 0
      %895 = vmatprep.subr.bf16.mxu0 0
      %896 = vmatpush1.bf16.xpose.msra.mxu0 %v879
      %897 = vmatprep.subr.bf16.mxu0 0
      %898 = vmatpush2.bf16.xpose.msra.mxu0 0
      %899 = vmatprep.subr.bf16.mxu0 0
      %900 = vmatpush2.bf16.xpose.msra.mxu0 0
      %901 = vmatprep.subr.bf16.mxu0 0
      %902 = vmatpush2.bf16.xpose.msra.mxu0 0
      %903 = vmatprep.subr.bf16.mxu0 0
      %904 = vmatpush2.bf16.xpose.msra.mxu0 0
      %905 = vmatprep.subr.bf16.mxu0 0
      %906 = vmatpush2.bf16.xpose.msra.mxu0 0
      %907 = vmatprep.subr.bf16.mxu0 0
      %908 = vmatpush2.bf16.xpose.msra.mxu0 0
      %909 = vmatprep.subr.bf16.mxu0 0
      %910 = vmatpush2.bf16.xpose.msra.mxu0 0
      %911 = vmatprep.subr.bf16.mxu0 0
      %912 = vmatpush2.bf16.xpose.msra.mxu0 0
      %913 = vmatprep.mubr.bf16.mxu0 0
      %914 = vmatmul.mubr.bf16.gmra.mxu0 %v876
      %v915 = vpop.f32.mrf.mxu0
      %v916 = vadd.f32 0.0, %v915
      %v917 = vpop.f32.mrf.mxu0
      %v918 = vpop.f32.mrf.mxu0
      %v919 = vadd.f32 0.0, %v918
      %v920 = vpop.f32.mrf.mxu0
      %921 = vdwg.mxu0
      %v922 = vmul.f32 %v916, 0.35355338
      %v923 = vmul.f32 %v919, 0.35355338
      %v924 = vsel %vm815, %v922, -inf
      %v925 = vsel %vm816, %v923, -inf
      %v926 = vsel %vm827, %v924, -inf
      %927 = vmax.xlane.f32.xlu0 %v926
      %v928 = vpop.xlane.xlu0 %927
      %v929 = vsel %vm827, %v925, -inf
      %930 = vmax.xlane.f32.xlu0 %v929
      %v931 = vpop.xlane.xlu0 %930
      %v932 = vsub.f32 %v924, %v928
      %v933 = vsub.f32 %v925, %v931
      %v934 = vmul.f32 %v932, 1.442695
      %v935 = vpow.pop %v934
      %v936 = vmul.f32 %v933, 1.442695
      %v937 = vpow.pop %v936
      %v938 = vsel %vm827, %v935, 0.0
      %939 = vadd.xlane.f32.xlu0 %v938
      %v940 = vpop.xlane.xlu0 %939
      %v941 = vsel %vm827, %v937, 0.0
      %942 = vadd.xlane.f32.xlu0 %v941
      %v943 = vpop.xlane.xlu0 %942
      %v944 = vrcp.pop %v940
      %v945 = vrcp.pop %v943
      %v946 = vmul.f32 %v935, %v944
      %v947 = vmul.f32 %v937, %v945
      %v948 = vpack.c.bf16 %v947, %v946
      %v950 = vsel %vm827, %v948, 0
      %952 = vmatprep.subr.bf16.mxu0 0
      %953 = vmatpush1.bf16.msra.mxu0 0
      %954 = vmatprep.subr.bf16.mxu0 0
      %955 = vmatpush1.bf16.msra.mxu0 0
      %956 = vmatprep.subr.bf16.mxu0 0
      %957 = vmatpush1.bf16.msra.mxu0 0
      %958 = vmatprep.subr.bf16.mxu0 0
      %959 = vmatpush1.bf16.msra.mxu0 0
      %960 = vmatprep.subr.bf16.mxu0 0
      %961 = vmatpush1.bf16.msra.mxu0 0
      %962 = vmatprep.subr.bf16.mxu0 0
      %963 = vmatpush1.bf16.msra.mxu0 0
      %964 = vmatprep.subr.bf16.mxu0 0
      %965 = vmatpush1.bf16.msra.mxu0 0
      %966 = vmatprep.subr.bf16.mxu0 0
      %967 = vmatpush1.bf16.msra.mxu0 %v825
      %968 = vmatprep.subr.bf16.mxu0 0
      %969 = vmatpush2.bf16.msra.mxu0 0
      %970 = vmatprep.subr.bf16.mxu0 0
      %971 = vmatpush2.bf16.msra.mxu0 0
      %972 = vmatprep.subr.bf16.mxu0 0
      %973 = vmatpush2.bf16.msra.mxu0 0
      %974 = vmatprep.subr.bf16.mxu0 0
      %975 = vmatpush2.bf16.msra.mxu0 0
      %976 = vmatprep.subr.bf16.mxu0 0
      %977 = vmatpush2.bf16.msra.mxu0 0
      %978 = vmatprep.subr.bf16.mxu0 0
      %979 = vmatpush2.bf16.msra.mxu0 0
      %980 = vmatprep.subr.bf16.mxu0 0
      %981 = vmatpush2.bf16.msra.mxu0 0
      %982 = vmatprep.subr.bf16.mxu0 0
      %983 = vmatpush2.bf16.msra.mxu0 0
      %984 = vmatprep.mubr.bf16.mxu0 0
      %985 = vmatmul.mubr.bf16.gmra.mxu0 %v950
      %v986 = vpop.f32.mrf.mxu0
      %v987 = vadd.f32 0.0, %v986
      %v988 = vpop.f32.mrf.mxu0
      %v989 = vpop.f32.mrf.mxu0
      %v990 = vadd.f32 0.0, %v989
      %v991 = vpop.f32.mrf.mxu0
      %992 = vdwg.mxu0
      %vm993 = vcmp.gt.f32.partialorder %v734, 0.0
      %vm994 = vcmp.gt.f32.partialorder %v735, 0.0
      %v995 = vsel %vm993, %v916, -inf
      %v996 = vsel %vm994, %v919, -inf
      %v997 = vsel %vm827, %v995, -inf
      %998 = vmax.xlane.f32.xlu0 %v997
      %v999 = vpop.xlane.xlu0 %998
      %v1000 = vsel %vm827, %v996, -inf
      %1001 = vmax.xlane.f32.xlu0 %v1000
      %v1002 = vpop.xlane.xlu0 %1001
      %v1003 = vmul.f32 %v734, %v916
      %v1004 = vmul.f32 %v735, %v919
      %v1005 = vsel %vm827, %v1003, 0.0
      %1006 = vadd.xlane.f32.xlu0 %v1005
      %v1007 = vpop.xlane.xlu0 %1006
      %v1008 = vsel %vm827, %v1004, 0.0
      %1009 = vadd.xlane.f32.xlu0 %v1008
      %v1010 = vpop.xlane.xlu0 %1009
      %v1011 = vmul.f32 %v1007, 0.0625
      %v1012 = vmul.f32 %v1010, 0.0625
      %v1013 = vsub.f32 %v999, %v1011
      %v1014 = vsub.f32 %v1002, %v1012
      %1015 = vxpose.xlu0.b32.start [1/16] %v1013, 128
      %1016 = vxpose.xlu0.b32.cont [2/16] %v1014, 128
      %1017 = vxpose.xlu0.b32.cont [3/16] 0.0, 128
      %1018 = vxpose.xlu0.b32.cont [4/16] 0.0, 128
      %1019 = vxpose.xlu0.b32.cont [5/16] 0.0, 128
      %1020 = vxpose.xlu0.b32.cont [6/16] 0.0, 128
      %1021 = vxpose.xlu0.b32.cont [7/16] 0.0, 128
      %1022 = vxpose.xlu0.b32.cont [8/16] 0.0, 128
      %1023 = vxpose.xlu0.b32.cont [9/16] 0.0, 128
      %1024 = vxpose.xlu0.b32.cont [10/16] 0.0, 128
      %1025 = vxpose.xlu0.b32.cont [11/16] 0.0, 128
      %1026 = vxpose.xlu0.b32.cont [12/16] 0.0, 128
      %1027 = vxpose.xlu0.b32.cont [13/16] 0.0, 128
      %1028 = vxpose.xlu0.b32.cont [14/16] 0.0, 128
      %1029 = vxpose.xlu0.b32.cont [15/16] 0.0, 128
      %1030 = vxpose.xlu0.b32.end [16/16] 0.0, 128
      %v1031 = vpop.trf.xlu0
      %v1032 = vpop.trf.xlu0
      %v1033 = vpop.trf.xlu0
      %v1034 = vpop.trf.xlu0
      %v1035 = vpop.trf.xlu0
      %v1036 = vpop.trf.xlu0
      %v1037 = vpop.trf.xlu0
      %v1038 = vpop.trf.xlu0
      %v1039 = vpop.trf.xlu0
      %v1040 = vpop.trf.xlu0
      %v1041 = vpop.trf.xlu0
      %v1042 = vpop.trf.xlu0
      %v1043 = vpop.trf.xlu0
      %v1044 = vpop.trf.xlu0
      %v1045 = vpop.trf.xlu0
      %v1046 = vpop.trf.xlu0
      %vm1047 = vcmp.gt.f32.partialorder %v1031, %v1013
      %vm1048 = vcmp.gt.f32.partialorder %v1032, %v1014
      %vm1049 = vcmp.eq.f32.partialorder %v1031, %v1013
      %vm1050 = vcmp.eq.f32.partialorder %v1032, %v1014
      %vm1051 = vcmp.lt.s32.totalorder %v814, %v811
      %vm1052 = vcmp.lt.s32.totalorder %v814, %v812
      %vm1053 = vmand %vm1049, %vm1051
      %vm1054 = vmand %vm1050, %vm1052
      %vm1055 = vmor %vm1047, %vm1053
      %vm1056 = vmor %vm1048, %vm1054
      %v1057 = vsel %vm1055, 1, 0
      %v1058 = vsel %vm1056, 1, 0
      %v1059 = vcvt.s32.f32 %v1057
      %v1060 = vcvt.s32.f32 %v1058
      %v1061 = vsel %vm827, %v1059, 0.0
      %1062 = vadd.xlane.f32.xlu0 %v1061
      %v1063 = vpop.xlane.xlu0 %1062
      %v1064 = vsel %vm827, %v1060, 0.0
      %1065 = vadd.xlane.f32.xlu0 %v1064
      %v1066 = vpop.xlane.xlu0 %1065
      %vm1067 = vcmp.lt.f32.partialorder %v1063, 15.0
      %vm1068 = vcmp.lt.f32.partialorder %v1066, 15.0
      %v1069 = vsel %vm1067, 1, 0
      %v1070 = vsel %vm1068, 1, 0
      %vm1071 = vcmp.eq.s32.totalorder %v1069, 1
      %vm1072 = vcmp.eq.s32.totalorder %v1070, 1
      %v1073 = vsel %vm1071, %v987, %v866
      %v1074 = vsel %vm1072, %v990, %v869
      %1075 = vrot.lane.b32.xlu0 %v822, 120
      %v1076 = vpop.permute.xlu0 %1075
      %1077 = vrot.lane.b32.xlu0 %v822, 88
      %v1078 = vpop.permute.xlu0 %1077
      %v1080 = vsel %vm874, %v1076, 0
      %v1083 = vsel %vm874, %v1078, 0
      %1085 = vmatprep.subr.bf16.mxu0 0
      %1086 = vmatpush1.bf16.xpose.msra.mxu0 0
      %1087 = vmatprep.subr.bf16.mxu0 0
      %1088 = vmatpush1.bf16.xpose.msra.mxu0 0
      %1089 = vmatprep.subr.bf16.mxu0 0
      %1090 = vmatpush1.bf16.xpose.msra.mxu0 0
      %1091 = vmatprep.subr.bf16.mxu0 0
      %1092 = vmatpush1.bf16.xpose.msra.mxu0 0
      %1093 = vmatprep.subr.bf16.mxu0 0
      %1094 = vmatpush1.bf16.xpose.msra.mxu0 0
      %1095 = vmatprep.subr.bf16.mxu0 0
      %1096 = vmatpush1.bf16.xpose.msra.mxu0 0
      %1097 = vmatprep.subr.bf16.mxu0 0
      %1098 = vmatpush1.bf16.xpose.msra.mxu0 0
      %1099 = vmatprep.subr.bf16.mxu0 0
      %1100 = vmatpush1.bf16.xpose.msra.mxu0 %v1083
      %1101 = vmatprep.subr.bf16.mxu0 0
      %1102 = vmatpush2.bf16.xpose.msra.mxu0 0
      %1103 = vmatprep.subr.bf16.mxu0 0
      %1104 = vmatpush2.bf16.xpose.msra.mxu0 0
      %1105 = vmatprep.subr.bf16.mxu0 0
      %1106 = vmatpush2.bf16.xpose.msra.mxu0 0
      %1107 = vmatprep.subr.bf16.mxu0 0
      %1108 = vmatpush2.bf16.xpose.msra.mxu0 0
      %1109 = vmatprep.subr.bf16.mxu0 0
      %1110 = vmatpush2.bf16.xpose.msra.mxu0 0
      %1111 = vmatprep.subr.bf16.mxu0 0
      %1112 = vmatpush2.bf16.xpose.msra.mxu0 0
      %1113 = vmatprep.subr.bf16.mxu0 0
      %1114 = vmatpush2.bf16.xpose.msra.mxu0 0
      %1115 = vmatprep.subr.bf16.mxu0 0
      %1116 = vmatpush2.bf16.xpose.msra.mxu0 0
      %1117 = vmatprep.mubr.bf16.mxu0 0
      %1118 = vmatmul.mubr.bf16.gmra.mxu0 %v1080
      %v1119 = vpop.f32.mrf.mxu0
      %v1120 = vadd.f32 0.0, %v1119
      %v1121 = vpop.f32.mrf.mxu0
      %v1122 = vpop.f32.mrf.mxu0
      %v1123 = vadd.f32 0.0, %v1122
      %v1124 = vpop.f32.mrf.mxu0
      %1125 = vdwg.mxu0
      %v1126 = vmul.f32 %v1120, 0.35355338
      %v1127 = vmul.f32 %v1123, 0.35355338
      %v1128 = vsel %vm815, %v1126, -inf
      %v1129 = vsel %vm816, %v1127, -inf
      %v1130 = vsel %vm827, %v1128, -inf
      %1131 = vmax.xlane.f32.xlu0 %v1130
      %v1132 = vpop.xlane.xlu0 %1131
      %v1133 = vsel %vm827, %v1129, -inf
      %1134 = vmax.xlane.f32.xlu0 %v1133
      %v1135 = vpop.xlane.xlu0 %1134
      %v1136 = vsub.f32 %v1128, %v1132
      %v1137 = vsub.f32 %v1129, %v1135
      %v1138 = vmul.f32 %v1136, 1.442695
      %v1139 = vpow.pop %v1138
      %v1140 = vmul.f32 %v1137, 1.442695
      %v1141 = vpow.pop %v1140
      %v1142 = vsel %vm827, %v1139, 0.0
      %1143 = vadd.xlane.f32.xlu0 %v1142
      %v1144 = vpop.xlane.xlu0 %1143
      %v1145 = vsel %vm827, %v1141, 0.0
      %1146 = vadd.xlane.f32.xlu0 %v1145
      %v1147 = vpop.xlane.xlu0 %1146
      %v1148 = vrcp.pop %v1144
      %v1149 = vrcp.pop %v1147
      %v1150 = vmul.f32 %v1139, %v1148
      %v1151 = vmul.f32 %v1141, %v1149
      %v1152 = vpack.c.bf16 %v1151, %v1150
      %1153 = vrot.lane.b32.xlu0 %v822, 56
      %v1154 = vpop.permute.xlu0 %1153
      %v1157 = vsel %vm827, %v1152, 0
      %1159 = vmatprep.subr.bf16.mxu0 0
      %1160 = vmatpush1.bf16.msra.mxu0 0
      %1161 = vmatprep.subr.bf16.mxu0 0
      %1162 = vmatpush1.bf16.msra.mxu0 0
      %1163 = vmatprep.subr.bf16.mxu0 0
      %1164 = vmatpush1.bf16.msra.mxu0 0
      %1165 = vmatprep.subr.bf16.mxu0 0
      %1166 = vmatpush1.bf16.msra.mxu0 0
      %1167 = vmatprep.subr.bf16.mxu0 0
      %1168 = vmatpush1.bf16.msra.mxu0 0
      %1169 = vmatprep.subr.bf16.mxu0 0
      %1170 = vmatpush1.bf16.msra.mxu0 0
      %1171 = vmatprep.subr.bf16.mxu0 0
      %1172 = vmatpush1.bf16.msra.mxu0 0
      %1173 = vmatprep.subr.bf16.mxu0 0
      %1174 = vmatpush1.bf16.msra.mxu0 %v1154
      %1175 = vmatprep.subr.bf16.mxu0 0
      %1176 = vmatpush2.bf16.msra.mxu0 0
      %1177 = vmatprep.subr.bf16.mxu0 0
      %1178 = vmatpush2.bf16.msra.mxu0 0
      %1179 = vmatprep.subr.bf16.mxu0 0
      %1180 = vmatpush2.bf16.msra.mxu0 0
      %1181 = vmatprep.subr.bf16.mxu0 0
      %1182 = vmatpush2.bf16.msra.mxu0 0
      %1183 = vmatprep.subr.bf16.mxu0 0
      %1184 = vmatpush2.bf16.msra.mxu0 0
      %1185 = vmatprep.subr.bf16.mxu0 0
      %1186 = vmatpush2.bf16.msra.mxu0 0
      %1187 = vmatprep.subr.bf16.mxu0 0
      %1188 = vmatpush2.bf16.msra.mxu0 0
      %1189 = vmatprep.subr.bf16.mxu0 0
      %1190 = vmatpush2.bf16.msra.mxu0 0
      %1191 = vmatprep.mubr.bf16.mxu0 0
      %1192 = vmatmul.mubr.bf16.gmra.mxu0 %v1157
      %v1193 = vpop.f32.mrf.mxu0
      %v1194 = vadd.f32 0.0, %v1193
      %v1195 = vpop.f32.mrf.mxu0
      %v1196 = vpop.f32.mrf.mxu0
      %v1197 = vadd.f32 0.0, %v1196
      %v1198 = vpop.f32.mrf.mxu0
      %1199 = vdwg.mxu0
      %v1200 = vsel %vm993, %v1120, -inf
      %v1201 = vsel %vm994, %v1123, -inf
      %v1202 = vsel %vm827, %v1200, -inf
      %1203 = vmax.xlane.f32.xlu0 %v1202
      %v1204 = vpop.xlane.xlu0 %1203
      %v1205 = vsel %vm827, %v1201, -inf
      %1206 = vmax.xlane.f32.xlu0 %v1205
      %v1207 = vpop.xlane.xlu0 %1206
      %v1208 = vmul.f32 %v734, %v1120
      %v1209 = vmul.f32 %v735, %v1123
      %v1210 = vsel %vm827, %v1208, 0.0
      %1211 = vadd.xlane.f32.xlu0 %v1210
      %v1212 = vpop.xlane.xlu0 %1211
      %v1213 = vsel %vm827, %v1209, 0.0
      %1214 = vadd.xlane.f32.xlu0 %v1213
      %v1215 = vpop.xlane.xlu0 %1214
      %v1216 = vmul.f32 %v1212, 0.0625
      %v1217 = vmul.f32 %v1215, 0.0625
      %v1218 = vsub.f32 %v1204, %v1216
      %v1219 = vsub.f32 %v1207, %v1217
      %1220 = vxpose.xlu0.b32.start [1/16] %v1218, 128
      %1221 = vxpose.xlu0.b32.cont [2/16] %v1219, 128
      %1222 = vxpose.xlu0.b32.cont [3/16] 0.0, 128
      %1223 = vxpose.xlu0.b32.cont [4/16] 0.0, 128
      %1224 = vxpose.xlu0.b32.cont [5/16] 0.0, 128
      %1225 = vxpose.xlu0.b32.cont [6/16] 0.0, 128
      %1226 = vxpose.xlu0.b32.cont [7/16] 0.0, 128
      %1227 = vxpose.xlu0.b32.cont [8/16] 0.0, 128
      %1228 = vxpose.xlu0.b32.cont [9/16] 0.0, 128
      %1229 = vxpose.xlu0.b32.cont [10/16] 0.0, 128
      %1230 = vxpose.xlu0.b32.cont [11/16] 0.0, 128
      %1231 = vxpose.xlu0.b32.cont [12/16] 0.0, 128
      %1232 = vxpose.xlu0.b32.cont [13/16] 0.0, 128
      %1233 = vxpose.xlu0.b32.cont [14/16] 0.0, 128
      %1234 = vxpose.xlu0.b32.cont [15/16] 0.0, 128
      %1235 = vxpose.xlu0.b32.end [16/16] 0.0, 128
      %v1236 = vpop.trf.xlu0
      %v1237 = vpop.trf.xlu0
      %v1238 = vpop.trf.xlu0
      %v1239 = vpop.trf.xlu0
      %v1240 = vpop.trf.xlu0
      %v1241 = vpop.trf.xlu0
      %v1242 = vpop.trf.xlu0
      %v1243 = vpop.trf.xlu0
      %v1244 = vpop.trf.xlu0
      %v1245 = vpop.trf.xlu0
      %v1246 = vpop.trf.xlu0
      %v1247 = vpop.trf.xlu0
      %v1248 = vpop.trf.xlu0
      %v1249 = vpop.trf.xlu0
      %v1250 = vpop.trf.xlu0
      %v1251 = vpop.trf.xlu0
      %vm1252 = vcmp.gt.f32.partialorder %v1236, %v1218
      %vm1253 = vcmp.gt.f32.partialorder %v1237, %v1219
      %vm1254 = vcmp.eq.f32.partialorder %v1236, %v1218
      %vm1255 = vcmp.eq.f32.partialorder %v1237, %v1219
      %vm1256 = vmand %vm1254, %vm1051
      %vm1257 = vmand %vm1255, %vm1052
      %vm1258 = vmor %vm1252, %vm1256
      %vm1259 = vmor %vm1253, %vm1257
      %v1260 = vsel %vm1258, 1, 0
      %v1261 = vsel %vm1259, 1, 0
      %v1262 = vcvt.s32.f32 %v1260
      %v1263 = vcvt.s32.f32 %v1261
      %v1264 = vsel %vm827, %v1262, 0.0
      %1265 = vadd.xlane.f32.xlu0 %v1264
      %v1266 = vpop.xlane.xlu0 %1265
      %v1267 = vsel %vm827, %v1263, 0.0
      %1268 = vadd.xlane.f32.xlu0 %v1267
      %v1269 = vpop.xlane.xlu0 %1268
      %vm1270 = vcmp.lt.f32.partialorder %v1266, 15.0
      %vm1271 = vcmp.lt.f32.partialorder %v1269, 15.0
      %v1272 = vsel %vm1270, 1, 0
      %v1273 = vsel %vm1271, 1, 0
      %vm1274 = vcmp.eq.s32.totalorder %v1272, 1
      %vm1275 = vcmp.eq.s32.totalorder %v1273, 1
      %1278 = vrot.lane.b32.xlu0 %v866, 120
      %v1279 = vpop.permute.xlu0 %1278
      %1280 = vrot.lane.b32.xlu0 %v869, 120
      %v1281 = vpop.permute.xlu0 %1280
      %v1284 = vsel %vm1274, %v1194, %v1279
      %v1285 = vsel %vm1275, %v1197, %v1281
      %1286 = vrot.lane.b32.xlu0 %v822, 112
      %v1287 = vpop.permute.xlu0 %1286
      %1288 = vrot.lane.b32.xlu0 %v822, 80
      %v1289 = vpop.permute.xlu0 %1288
      %v1291 = vsel %vm874, %v1287, 0
      %v1294 = vsel %vm874, %v1289, 0
      %1296 = vmatprep.subr.bf16.mxu0 0
      %1297 = vmatpush1.bf16.xpose.msra.mxu0 0
      %1298 = vmatprep.subr.bf16.mxu0 0
      %1299 = vmatpush1.bf16.xpose.msra.mxu0 0
      %1300 = vmatprep.subr.bf16.mxu0 0
      %1301 = vmatpush1.bf16.xpose.msra.mxu0 0
      %1302 = vmatprep.subr.bf16.mxu0 0
      %1303 = vmatpush1.bf16.xpose.msra.mxu0 0
      %1304 = vmatprep.subr.bf16.mxu0 0
      %1305 = vmatpush1.bf16.xpose.msra.mxu0 0
      %1306 = vmatprep.subr.bf16.mxu0 0
      %1307 = vmatpush1.bf16.xpose.msra.mxu0 0
      %1308 = vmatprep.subr.bf16.mxu0 0
      %1309 = vmatpush1.bf16.xpose.msra.mxu0 0
      %1310 = vmatprep.subr.bf16.mxu0 0
      %1311 = vmatpush1.bf16.xpose.msra.mxu0 %v1294
      %1312 = vmatprep.subr.bf16.mxu0 0
      %1313 = vmatpush2.bf16.xpose.msra.mxu0 0
      %1314 = vmatprep.subr.bf16.mxu0 0
      %1315 = vmatpush2.bf16.xpose.msra.mxu0 0
      %1316 = vmatprep.subr.bf16.mxu0 0
      %1317 = vmatpush2.bf16.xpose.msra.mxu0 0
      %1318 = vmatprep.subr.bf16.mxu0 0
      %1319 = vmatpush2.bf16.xpose.msra.mxu0 0
      %1320 = vmatprep.subr.bf16.mxu0 0
      %1321 = vmatpush2.bf16.xpose.msra.mxu0 0
      %1322 = vmatprep.subr.bf16.mxu0 0
      %1323 = vmatpush2.bf16.xpose.msra.mxu0 0
      %1324 = vmatprep.subr.bf16.mxu0 0
      %1325 = vmatpush2.bf16.xpose.msra.mxu0 0
      %1326 = vmatprep.subr.bf16.mxu0 0
      %1327 = vmatpush2.bf16.xpose.msra.mxu0 0
      %1328 = vmatprep.mubr.bf16.mxu0 0
      %1329 = vmatmul.mubr.bf16.gmra.mxu0 %v1291
      %v1330 = vpop.f32.mrf.mxu0
      %v1331 = vadd.f32 0.0, %v1330
      %v1332 = vpop.f32.mrf.mxu0
      %v1333 = vpop.f32.mrf.mxu0
      %v1334 = vadd.f32 0.0, %v1333
      %v1335 = vpop.f32.mrf.mxu0
      %1336 = vdwg.mxu0
      %v1337 = vmul.f32 %v1331, 0.35355338
      %v1338 = vmul.f32 %v1334, 0.35355338
      %v1339 = vsel %vm815, %v1337, -inf
      %v1340 = vsel %vm816, %v1338, -inf
      %v1341 = vsel %vm827, %v1339, -inf
      %1342 = vmax.xlane.f32.xlu0 %v1341
      %v1343 = vpop.xlane.xlu0 %1342
      %v1344 = vsel %vm827, %v1340, -inf
      %1345 = vmax.xlane.f32.xlu0 %v1344
      %v1346 = vpop.xlane.xlu0 %1345
      %v1347 = vsub.f32 %v1339, %v1343
      %v1348 = vsub.f32 %v1340, %v1346
      %v1349 = vmul.f32 %v1347, 1.442695
      %v1350 = vpow.pop %v1349
      %v1351 = vmul.f32 %v1348, 1.442695
      %v1352 = vpow.pop %v1351
      %v1353 = vsel %vm827, %v1350, 0.0
      %1354 = vadd.xlane.f32.xlu0 %v1353
      %v1355 = vpop.xlane.xlu0 %1354
      %v1356 = vsel %vm827, %v1352, 0.0
      %1357 = vadd.xlane.f32.xlu0 %v1356
      %v1358 = vpop.xlane.xlu0 %1357
      %v1359 = vrcp.pop %v1355
      %v1360 = vrcp.pop %v1358
      %v1361 = vmul.f32 %v1350, %v1359
      %v1362 = vmul.f32 %v1352, %v1360
      %v1363 = vpack.c.bf16 %v1362, %v1361
      %1364 = vrot.lane.b32.xlu0 %v822, 48
      %v1365 = vpop.permute.xlu0 %1364
      %v1368 = vsel %vm827, %v1363, 0
      %1370 = vmatprep.subr.bf16.mxu0 0
      %1371 = vmatpush1.bf16.msra.mxu0 0
      %1372 = vmatprep.subr.bf16.mxu0 0
      %1373 = vmatpush1.bf16.msra.mxu0 0
      %1374 = vmatprep.subr.bf16.mxu0 0
      %1375 = vmatpush1.bf16.msra.mxu0 0
      %1376 = vmatprep.subr.bf16.mxu0 0
      %1377 = vmatpush1.bf16.msra.mxu0 0
      %1378 = vmatprep.subr.bf16.mxu0 0
      %1379 = vmatpush1.bf16.msra.mxu0 0
      %1380 = vmatprep.subr.bf16.mxu0 0
      %1381 = vmatpush1.bf16.msra.mxu0 0
      %1382 = vmatprep.subr.bf16.mxu0 0
      %1383 = vmatpush1.bf16.msra.mxu0 0
      %1384 = vmatprep.subr.bf16.mxu0 0
      %1385 = vmatpush1.bf16.msra.mxu0 %v1365
      %1386 = vmatprep.subr.bf16.mxu0 0
      %1387 = vmatpush2.bf16.msra.mxu0 0
      %1388 = vmatprep.subr.bf16.mxu0 0
      %1389 = vmatpush2.bf16.msra.mxu0 0
      %1390 = vmatprep.subr.bf16.mxu0 0
      %1391 = vmatpush2.bf16.msra.mxu0 0
      %1392 = vmatprep.subr.bf16.mxu0 0
      %1393 = vmatpush2.bf16.msra.mxu0 0
      %1394 = vmatprep.subr.bf16.mxu0 0
      %1395 = vmatpush2.bf16.msra.mxu0 0
      %1396 = vmatprep.subr.bf16.mxu0 0
      %1397 = vmatpush2.bf16.msra.mxu0 0
      %1398 = vmatprep.subr.bf16.mxu0 0
      %1399 = vmatpush2.bf16.msra.mxu0 0
      %1400 = vmatprep.subr.bf16.mxu0 0
      %1401 = vmatpush2.bf16.msra.mxu0 0
      %1402 = vmatprep.mubr.bf16.mxu0 0
      %1403 = vmatmul.mubr.bf16.gmra.mxu0 %v1368
      %v1404 = vpop.f32.mrf.mxu0
      %v1405 = vadd.f32 0.0, %v1404
      %v1406 = vpop.f32.mrf.mxu0
      %v1407 = vpop.f32.mrf.mxu0
      %v1408 = vadd.f32 0.0, %v1407
      %v1409 = vpop.f32.mrf.mxu0
      %1410 = vdwg.mxu0
      %v1411 = vsel %vm993, %v1331, -inf
      %v1412 = vsel %vm994, %v1334, -inf
      %v1413 = vsel %vm827, %v1411, -inf
      %1414 = vmax.xlane.f32.xlu0 %v1413
      %v1415 = vpop.xlane.xlu0 %1414
      %v1416 = vsel %vm827, %v1412, -inf
      %1417 = vmax.xlane.f32.xlu0 %v1416
      %v1418 = vpop.xlane.xlu0 %1417
      %v1419 = vmul.f32 %v734, %v1331
      %v1420 = vmul.f32 %v735, %v1334
      %v1421 = vsel %vm827, %v1419, 0.0
      %1422 = vadd.xlane.f32.xlu0 %v1421
      %v1423 = vpop.xlane.xlu0 %1422
      %v1424 = vsel %vm827, %v1420, 0.0
      %1425 = vadd.xlane.f32.xlu0 %v1424
      %v1426 = vpop.xlane.xlu0 %1425
      %v1427 = vmul.f32 %v1423, 0.0625
      %v1428 = vmul.f32 %v1426, 0.0625
      %v1429 = vsub.f32 %v1415, %v1427
      %v1430 = vsub.f32 %v1418, %v1428
      %1431 = vxpose.xlu0.b32.start [1/16] %v1429, 128
      %1432 = vxpose.xlu0.b32.cont [2/16] %v1430, 128
      %1433 = vxpose.xlu0.b32.cont [3/16] 0.0, 128
      %1434 = vxpose.xlu0.b32.cont [4/16] 0.0, 128
      %1435 = vxpose.xlu0.b32.cont [5/16] 0.0, 128
      %1436 = vxpose.xlu0.b32.cont [6/16] 0.0, 128
      %1437 = vxpose.xlu0.b32.cont [7/16] 0.0, 128
      %1438 = vxpose.xlu0.b32.cont [8/16] 0.0, 128
      %1439 = vxpose.xlu0.b32.cont [9/16] 0.0, 128
      %1440 = vxpose.xlu0.b32.cont [10/16] 0.0, 128
      %1441 = vxpose.xlu0.b32.cont [11/16] 0.0, 128
      %1442 = vxpose.xlu0.b32.cont [12/16] 0.0, 128
      %1443 = vxpose.xlu0.b32.cont [13/16] 0.0, 128
      %1444 = vxpose.xlu0.b32.cont [14/16] 0.0, 128
      %1445 = vxpose.xlu0.b32.cont [15/16] 0.0, 128
      %1446 = vxpose.xlu0.b32.end [16/16] 0.0, 128
      %v1447 = vpop.trf.xlu0
      %v1448 = vpop.trf.xlu0
      %v1449 = vpop.trf.xlu0
      %v1450 = vpop.trf.xlu0
      %v1451 = vpop.trf.xlu0
      %v1452 = vpop.trf.xlu0
      %v1453 = vpop.trf.xlu0
      %v1454 = vpop.trf.xlu0
      %v1455 = vpop.trf.xlu0
      %v1456 = vpop.trf.xlu0
      %v1457 = vpop.trf.xlu0
      %v1458 = vpop.trf.xlu0
      %v1459 = vpop.trf.xlu0
      %v1460 = vpop.trf.xlu0
      %v1461 = vpop.trf.xlu0
      %v1462 = vpop.trf.xlu0
      %vm1463 = vcmp.gt.f32.partialorder %v1447, %v1429
      %vm1464 = vcmp.gt.f32.partialorder %v1448, %v1430
      %vm1465 = vcmp.eq.f32.partialorder %v1447, %v1429
      %vm1466 = vcmp.eq.f32.partialorder %v1448, %v1430
      %vm1467 = vmand %vm1465, %vm1051
      %vm1468 = vmand %vm1466, %vm1052
      %vm1469 = vmor %vm1463, %vm1467
      %vm1470 = vmor %vm1464, %vm1468
      %v1471 = vsel %vm1469, 1, 0
      %v1472 = vsel %vm1470, 1, 0
      %v1473 = vcvt.s32.f32 %v1471
      %v1474 = vcvt.s32.f32 %v1472
      %v1475 = vsel %vm827, %v1473, 0.0
      %1476 = vadd.xlane.f32.xlu0 %v1475
      %v1477 = vpop.xlane.xlu0 %1476
      %v1478 = vsel %vm827, %v1474, 0.0
      %1479 = vadd.xlane.f32.xlu0 %v1478
      %v1480 = vpop.xlane.xlu0 %1479
      %vm1481 = vcmp.lt.f32.partialorder %v1477, 15.0
      %vm1482 = vcmp.lt.f32.partialorder %v1480, 15.0
      %v1483 = vsel %vm1481, 1, 0
      %v1484 = vsel %vm1482, 1, 0
      %vm1485 = vcmp.eq.s32.totalorder %v1483, 1
      %vm1486 = vcmp.eq.s32.totalorder %v1484, 1
      %1487 = vrot.lane.b32.xlu0 %v866, 112
      %v1488 = vpop.permute.xlu0 %1487
      %1489 = vrot.lane.b32.xlu0 %v869, 112
      %v1490 = vpop.permute.xlu0 %1489
      %v1493 = vsel %vm1485, %v1405, %v1488
      %v1494 = vsel %vm1486, %v1408, %v1490
      %1495 = vrot.lane.b32.xlu0 %v822, 104
      %v1496 = vpop.permute.xlu0 %1495
      %1497 = vrot.lane.b32.xlu0 %v822, 72
      %v1498 = vpop.permute.xlu0 %1497
      %v1500 = vsel %vm874, %v1496, 0
      %v1503 = vsel %vm874, %v1498, 0
      %1505 = vmatprep.subr.bf16.mxu0 0
      %1506 = vmatpush1.bf16.xpose.msra.mxu0 0
      %1507 = vmatprep.subr.bf16.mxu0 0
      %1508 = vmatpush1.bf16.xpose.msra.mxu0 0
      %1509 = vmatprep.subr.bf16.mxu0 0
      %1510 = vmatpush1.bf16.xpose.msra.mxu0 0
      %1511 = vmatprep.subr.bf16.mxu0 0
      %1512 = vmatpush1.bf16.xpose.msra.mxu0 0
      %1513 = vmatprep.subr.bf16.mxu0 0
      %1514 = vmatpush1.bf16.xpose.msra.mxu0 0
      %1515 = vmatprep.subr.bf16.mxu0 0
      %1516 = vmatpush1.bf16.xpose.msra.mxu0 0
      %1517 = vmatprep.subr.bf16.mxu0 0
      %1518 = vmatpush1.bf16.xpose.msra.mxu0 0
      %1519 = vmatprep.subr.bf16.mxu0 0
      %1520 = vmatpush1.bf16.xpose.msra.mxu0 %v1503
      %1521 = vmatprep.subr.bf16.mxu0 0
      %1522 = vmatpush2.bf16.xpose.msra.mxu0 0
      %1523 = vmatprep.subr.bf16.mxu0 0
      %1524 = vmatpush2.bf16.xpose.msra.mxu0 0
      %1525 = vmatprep.subr.bf16.mxu0 0
      %1526 = vmatpush2.bf16.xpose.msra.mxu0 0
      %1527 = vmatprep.subr.bf16.mxu0 0
      %1528 = vmatpush2.bf16.xpose.msra.mxu0 0
      %1529 = vmatprep.subr.bf16.mxu0 0
      %1530 = vmatpush2.bf16.xpose.msra.mxu0 0
      %1531 = vmatprep.subr.bf16.mxu0 0
      %1532 = vmatpush2.bf16.xpose.msra.mxu0 0
      %1533 = vmatprep.subr.bf16.mxu0 0
      %1534 = vmatpush2.bf16.xpose.msra.mxu0 0
      %1535 = vmatprep.subr.bf16.mxu0 0
      %1536 = vmatpush2.bf16.xpose.msra.mxu0 0
      %1537 = vmatprep.mubr.bf16.mxu0 0
      %1538 = vmatmul.mubr.bf16.gmra.mxu0 %v1500
      %v1539 = vpop.f32.mrf.mxu0
      %v1540 = vadd.f32 0.0, %v1539
      %v1541 = vpop.f32.mrf.mxu0
      %v1542 = vpop.f32.mrf.mxu0
      %v1543 = vadd.f32 0.0, %v1542
      %v1544 = vpop.f32.mrf.mxu0
      %1545 = vdwg.mxu0
      %v1546 = vmul.f32 %v1540, 0.35355338
      %v1547 = vmul.f32 %v1543, 0.35355338
      %v1548 = vsel %vm815, %v1546, -inf
      %v1549 = vsel %vm816, %v1547, -inf
      %v1550 = vsel %vm827, %v1548, -inf
      %1551 = vmax.xlane.f32.xlu0 %v1550
      %v1552 = vpop.xlane.xlu0 %1551
      %v1553 = vsel %vm827, %v1549, -inf
      %1554 = vmax.xlane.f32.xlu0 %v1553
      %v1555 = vpop.xlane.xlu0 %1554
      %v1556 = vsub.f32 %v1548, %v1552
      %v1557 = vsub.f32 %v1549, %v1555
      %v1558 = vmul.f32 %v1556, 1.442695
      %v1559 = vpow.pop %v1558
      %v1560 = vmul.f32 %v1557, 1.442695
      %v1561 = vpow.pop %v1560
      %v1562 = vsel %vm827, %v1559, 0.0
      %1563 = vadd.xlane.f32.xlu0 %v1562
      %v1564 = vpop.xlane.xlu0 %1563
      %v1565 = vsel %vm827, %v1561, 0.0
      %1566 = vadd.xlane.f32.xlu0 %v1565
      %v1567 = vpop.xlane.xlu0 %1566
      %v1568 = vrcp.pop %v1564
      %v1569 = vrcp.pop %v1567
      %v1570 = vmul.f32 %v1559, %v1568
      %v1571 = vmul.f32 %v1561, %v1569
      %v1572 = vpack.c.bf16 %v1571, %v1570
      %1573 = vrot.lane.b32.xlu0 %v822, 40
      %v1574 = vpop.permute.xlu0 %1573
      %v1577 = vsel %vm827, %v1572, 0
      %1579 = vmatprep.subr.bf16.mxu0 0
      %1580 = vmatpush1.bf16.msra.mxu0 0
      %1581 = vmatprep.subr.bf16.mxu0 0
      %1582 = vmatpush1.bf16.msra.mxu0 0
      %1583 = vmatprep.subr.bf16.mxu0 0
      %1584 = vmatpush1.bf16.msra.mxu0 0
      %1585 = vmatprep.subr.bf16.mxu0 0
      %1586 = vmatpush1.bf16.msra.mxu0 0
      %1587 = vmatprep.subr.bf16.mxu0 0
      %1588 = vmatpush1.bf16.msra.mxu0 0
      %1589 = vmatprep.subr.bf16.mxu0 0
      %1590 = vmatpush1.bf16.msra.mxu0 0
      %1591 = vmatprep.subr.bf16.mxu0 0
      %1592 = vmatpush1.bf16.msra.mxu0 0
      %1593 = vmatprep.subr.bf16.mxu0 0
      %1594 = vmatpush1.bf16.msra.mxu0 %v1574
      %1595 = vmatprep.subr.bf16.mxu0 0
      %1596 = vmatpush2.bf16.msra.mxu0 0
      %1597 = vmatprep.subr.bf16.mxu0 0
      %1598 = vmatpush2.bf16.msra.mxu0 0
      %1599 = vmatprep.subr.bf16.mxu0 0
      %1600 = vmatpush2.bf16.msra.mxu0 0
      %1601 = vmatprep.subr.bf16.mxu0 0
      %1602 = vmatpush2.bf16.msra.mxu0 0
      %1603 = vmatprep.subr.bf16.mxu0 0
      %1604 = vmatpush2.bf16.msra.mxu0 0
      %1605 = vmatprep.subr.bf16.mxu0 0
      %1606 = vmatpush2.bf16.msra.mxu0 0
      %1607 = vmatprep.subr.bf16.mxu0 0
      %1608 = vmatpush2.bf16.msra.mxu0 0
      %1609 = vmatprep.subr.bf16.mxu0 0
      %1610 = vmatpush2.bf16.msra.mxu0 0
      %1611 = vmatprep.mubr.bf16.mxu0 0
      %1612 = vmatmul.mubr.bf16.gmra.mxu0 %v1577
      %v1613 = vpop.f32.mrf.mxu0
      %v1614 = vadd.f32 0.0, %v1613
      %v1615 = vpop.f32.mrf.mxu0
      %v1616 = vpop.f32.mrf.mxu0
      %v1617 = vadd.f32 0.0, %v1616
      %v1618 = vpop.f32.mrf.mxu0
      %1619 = vdwg.mxu0
      %v1620 = vsel %vm993, %v1540, -inf
      %v1621 = vsel %vm994, %v1543, -inf
      %v1622 = vsel %vm827, %v1620, -inf
      %1623 = vmax.xlane.f32.xlu0 %v1622
      %v1624 = vpop.xlane.xlu0 %1623
      %v1625 = vsel %vm827, %v1621, -inf
      %1626 = vmax.xlane.f32.xlu0 %v1625
      %v1627 = vpop.xlane.xlu0 %1626
      %v1628 = vmul.f32 %v734, %v1540
      %v1629 = vmul.f32 %v735, %v1543
      %v1630 = vsel %vm827, %v1628, 0.0
      %1631 = vadd.xlane.f32.xlu0 %v1630
      %v1632 = vpop.xlane.xlu0 %1631
      %v1633 = vsel %vm827, %v1629, 0.0
      %1634 = vadd.xlane.f32.xlu0 %v1633
      %v1635 = vpop.xlane.xlu0 %1634
      %v1636 = vmul.f32 %v1632, 0.0625
      %v1637 = vmul.f32 %v1635, 0.0625
      %v1638 = vsub.f32 %v1624, %v1636
      %v1639 = vsub.f32 %v1627, %v1637
      %1640 = vxpose.xlu0.b32.start [1/16] %v1638, 128
      %1641 = vxpose.xlu0.b32.cont [2/16] %v1639, 128
      %1642 = vxpose.xlu0.b32.cont [3/16] 0.0, 128
      %1643 = vxpose.xlu0.b32.cont [4/16] 0.0, 128
      %1644 = vxpose.xlu0.b32.cont [5/16] 0.0, 128
      %1645 = vxpose.xlu0.b32.cont [6/16] 0.0, 128
      %1646 = vxpose.xlu0.b32.cont [7/16] 0.0, 128
      %1647 = vxpose.xlu0.b32.cont [8/16] 0.0, 128
      %1648 = vxpose.xlu0.b32.cont [9/16] 0.0, 128
      %1649 = vxpose.xlu0.b32.cont [10/16] 0.0, 128
      %1650 = vxpose.xlu0.b32.cont [11/16] 0.0, 128
      %1651 = vxpose.xlu0.b32.cont [12/16] 0.0, 128
      %1652 = vxpose.xlu0.b32.cont [13/16] 0.0, 128
      %1653 = vxpose.xlu0.b32.cont [14/16] 0.0, 128
      %1654 = vxpose.xlu0.b32.cont [15/16] 0.0, 128
      %1655 = vxpose.xlu0.b32.end [16/16] 0.0, 128
      %v1656 = vpop.trf.xlu0
      %v1657 = vpop.trf.xlu0
      %v1658 = vpop.trf.xlu0
      %v1659 = vpop.trf.xlu0
      %v1660 = vpop.trf.xlu0
      %v1661 = vpop.trf.xlu0
      %v1662 = vpop.trf.xlu0
      %v1663 = vpop.trf.xlu0
      %v1664 = vpop.trf.xlu0
      %v1665 = vpop.trf.xlu0
      %v1666 = vpop.trf.xlu0
      %v1667 = vpop.trf.xlu0
      %v1668 = vpop.trf.xlu0
      %v1669 = vpop.trf.xlu0
      %v1670 = vpop.trf.xlu0
      %v1671 = vpop.trf.xlu0
      %vm1672 = vcmp.gt.f32.partialorder %v1656, %v1638
      %vm1673 = vcmp.gt.f32.partialorder %v1657, %v1639
      %vm1674 = vcmp.eq.f32.partialorder %v1656, %v1638
      %vm1675 = vcmp.eq.f32.partialorder %v1657, %v1639
      %vm1676 = vmand %vm1674, %vm1051
      %vm1677 = vmand %vm1675, %vm1052
      %vm1678 = vmor %vm1672, %vm1676
      %vm1679 = vmor %vm1673, %vm1677
      %v1680 = vsel %vm1678, 1, 0
      %v1681 = vsel %vm1679, 1, 0
      %v1682 = vcvt.s32.f32 %v1680
      %v1683 = vcvt.s32.f32 %v1681
      %v1684 = vsel %vm827, %v1682, 0.0
      %1685 = vadd.xlane.f32.xlu0 %v1684
      %v1686 = vpop.xlane.xlu0 %1685
      %v1687 = vsel %vm827, %v1683, 0.0
      %1688 = vadd.xlane.f32.xlu0 %v1687
      %v1689 = vpop.xlane.xlu0 %1688
      %vm1690 = vcmp.lt.f32.partialorder %v1686, 15.0
      %vm1691 = vcmp.lt.f32.partialorder %v1689, 15.0
      %v1692 = vsel %vm1690, 1, 0
      %v1693 = vsel %vm1691, 1, 0
      %vm1694 = vcmp.eq.s32.totalorder %v1692, 1
      %vm1695 = vcmp.eq.s32.totalorder %v1693, 1
      %1696 = vrot.lane.b32.xlu0 %v866, 104
      %v1697 = vpop.permute.xlu0 %1696
      %1698 = vrot.lane.b32.xlu0 %v869, 104
      %v1699 = vpop.permute.xlu0 %1698
      %v1702 = vsel %vm1694, %v1614, %v1697
      %v1703 = vsel %vm1695, %v1617, %v1699
      %1706 = vrot.lane.b32.xlu0 %v1284, 8
      %v1707 = vpop.permute.xlu0 %1706
      %1708 = vrot.lane.b32.xlu0 %v1285, 8
      %v1709 = vpop.permute.xlu0 %1708
      %1714 = vrot.lane.b32.xlu0 %v1493, 16
      %v1715 = vpop.permute.xlu0 %1714
      %1716 = vrot.lane.b32.xlu0 %v1494, 16
      %v1717 = vpop.permute.xlu0 %1716
      %1722 = vrot.lane.b32.xlu0 %v1702, 24
      %v1723 = vpop.permute.xlu0 %1722
      %1724 = vrot.lane.b32.xlu0 %v1703, 24
      %v1725 = vpop.permute.xlu0 %1724
      %v1728 = vsel %vm874, %v1073, %v1707
      %v1729 = vsel %vm874, %v1074, %v1709
      %v1730 = vsel %vm827, %v1728, %v1715
      %v1731 = vsel %vm827, %v1729, %v1717
      %vm1732 = vcmask 195584
      %v1733 = vsel %vm1732, %v1730, %v1723
      %v1734 = vsel %vm1732, %v1731, %v1725
      %v1735 = vpack.c.bf16 %v1734, %v1733
      %v1737 = vlaneseq
      %v1738 = vshrl.u32 %v1737, 7
      %v1739 = vsub.s32 0, %v1738
      %v1740 = vrot.slane %v745, %v1739
      %v1746 = vunpack.c.l.b16 %v741
      %v1747 = vunpack.c.l.b16 %v742
      %v1748 = vunpack.c.l.b16 %v743
      %v1749 = vunpack.c.l.b16 %v744
      %v1750 = vpack.c.b16 %v1747, %v1746
      %v1751 = vpack.c.b16 %v1749, %v1748
      %v1755 = vsel %vm765, %v1735, 0
      %1757 = vmatprep.subr.bf16.mxu0 0
      %1758 = vmatpush1.bf16.msra.mxu0 0
      %1759 = vmatprep.subr.bf16.mxu0 0
      %1760 = vmatpush1.bf16.msra.mxu0 0
      %1761 = vmatprep.subr.bf16.mxu0 0
      %1762 = vmatpush1.bf16.msra.mxu0 0
      %1763 = vmatprep.subr.bf16.mxu0 0
      %1764 = vmatpush1.bf16.msra.mxu0 0
      %1765 = vmatprep.subr.bf16.mxu0 0
      %1766 = vmatpush1.bf16.msra.mxu0 0
      %1767 = vmatprep.subr.bf16.mxu0 0
      %1768 = vmatpush1.bf16.msra.mxu0 0
      %1769 = vmatprep.subr.bf16.mxu0 0
      %1770 = vmatpush1.bf16.msra.mxu0 %v1751
      %1771 = vmatprep.subr.bf16.mxu0 0
      %1772 = vmatpush1.bf16.msra.mxu0 %v1750
      %1773 = vmatprep.subr.bf16.mxu0 0
      %1774 = vmatpush2.bf16.msra.mxu0 0
      %1775 = vmatprep.subr.bf16.mxu0 0
      %1776 = vmatpush2.bf16.msra.mxu0 0
      %1777 = vmatprep.subr.bf16.mxu0 0
      %1778 = vmatpush2.bf16.msra.mxu0 0
      %1779 = vmatprep.subr.bf16.mxu0 0
      %1780 = vmatpush2.bf16.msra.mxu0 0
      %1781 = vmatprep.subr.bf16.mxu0 0
      %1782 = vmatpush2.bf16.msra.mxu0 0
      %1783 = vmatprep.subr.bf16.mxu0 0
      %1784 = vmatpush2.bf16.msra.mxu0 0
      %1785 = vmatprep.subr.bf16.mxu0 0
      %1786 = vmatpush2.bf16.msra.mxu0 0
      %1787 = vmatprep.subr.bf16.mxu0 0
      %1788 = vmatpush2.bf16.msra.mxu0 0
      %1789 = vmatprep.mubr.bf16.mxu0 0
      %1790 = vmatmul.mubr.bf16.gmra.mxu0 %v1755
      %v1791 = vpop.f32.mrf.mxu0
      %v1792 = vadd.f32 %v1740, %v1791
      %v1793 = vpop.f32.mrf.mxu0
      %v1794 = vpop.f32.mrf.mxu0
      %v1795 = vadd.f32 %v1740, %v1794
      %v1796 = vpop.f32.mrf.mxu0
      %1797 = vdwg.mxu0
      %v1798 = vadd.f32 %v732, %v1792
      %v1799 = vadd.f32 %v733, %v1795
      %v1800 = vld [vmem:[%s7] sm:$0x1]
      %v1801 = vld [vmem:[%s8] sm:$0x1]
      %v1802 = vsel %vm765, %v1798, 0.0
      %1803 = vadd.xlane.f32.xlu0 %v1802
      %v1804 = vpop.xlane.xlu0 %1803
      %v1805 = vsel %vm765, %v1799, 0.0
      %1806 = vadd.xlane.f32.xlu0 %v1805
      %v1807 = vpop.xlane.xlu0 %1806
      %v1808 = vrcp.pop 32.0
      %v1809 = vmul.f32 %v1804, %v1808
      %v1810 = vmul.f32 %v1807, %v1808
      %v1811 = vsub.f32 %v1798, %v1809
      %v1812 = vsub.f32 %v1799, %v1810
      %v1813 = vmul.f32 %v1811, %v1811
      %v1814 = vmul.f32 %v1812, %v1812
      %v1815 = vsel %vm765, %v1813, 0.0
      %1816 = vadd.xlane.f32.xlu0 %v1815
      %v1817 = vpop.xlane.xlu0 %1816
      %v1818 = vsel %vm765, %v1814, 0.0
      %1819 = vadd.xlane.f32.xlu0 %v1818
      %v1820 = vpop.xlane.xlu0 %1819
      %v1821 = vmul.f32 %v1817, %v1808
      %v1822 = vmul.f32 %v1820, %v1808
      %v1823 = vadd.f32 %v1821, 1e-05
      %v1824 = vadd.f32 %v1822, 1e-05
      %v1825 = vrsqrt.pop %v1823
      %v1826 = vrsqrt.pop %v1824
      %v1827 = vmul.f32 %v1811, %v1825
      %v1828 = vmul.f32 %v1812, %v1826
      %v1830 = vlaneseq
      %v1831 = vshrl.u32 %v1830, 7
      %v1832 = vsub.s32 0, %v1831
      %v1833 = vrot.slane %v1800, %v1832
      %v1835 = vmul.f32 %v1827, %v1833
      %v1836 = vmul.f32 %v1828, %v1833
      %v1838 = vlaneseq
      %v1839 = vshrl.u32 %v1838, 7
      %v1840 = vsub.s32 0, %v1839
      %v1841 = vrot.slane %v1801, %v1840
      %v1843 = vadd.f32 %v1835, %v1841
      %v1844 = vadd.f32 %v1836, %v1841
      %v1845 = vld [vmem:[%s725] sm:$0xff]
      %v1846 = vld [vmem:[%s725 + $0x8] sm:$0x1]
      %v1847 = vld [vmem:[%s9] sm:$0xf]
      %v1848 = vld [vmem:[%s9 + $0x4] sm:$0xf]
      %v1849 = vld [vmem:[%s9 + $0x8] sm:$0xf]
      %v1850 = vld [vmem:[%s9 + $0xc] sm:$0xf]
      %v1851 = vld [vmem:[%s10] sm:$0x1]
      %v1852 = vld [vmem:[%s11] sm:$0xf]
      %v1853 = vld [vmem:[%s11 + $0x4] sm:$0xf]
      %v1854 = vld [vmem:[%s11 + $0x8] sm:$0xf]
      %v1855 = vld [vmem:[%s11 + $0xc] sm:$0xf]
      %v1856 = vld [vmem:[%s12] sm:$0x1]
      %v1857 = vld [vmem:[%s13] sm:$0xf]
      %v1858 = vld [vmem:[%s13 + $0x4] sm:$0xf]
      %v1859 = vld [vmem:[%s13 + $0x8] sm:$0xf]
      %v1860 = vld [vmem:[%s13 + $0xc] sm:$0xf]
      %v1861 = vld [vmem:[%s14] sm:$0x1]
      %v1862 = vpack.c.bf16 %v1844, %v1843
      %v1864 = vlaneseq
      %v1865 = vshrl.u32 %v1864, 7
      %v1866 = vsub.s32 0, %v1865
      %v1867 = vrot.slane %v1851, %v1866
      %v1873 = vunpack.c.l.b16 %v1847
      %v1874 = vunpack.c.l.b16 %v1848
      %v1875 = vunpack.c.l.b16 %v1849
      %v1876 = vunpack.c.l.b16 %v1850
      %v1877 = vpack.c.b16 %v1874, %v1873
      %v1878 = vpack.c.b16 %v1876, %v1875
      %v1882 = vsel %vm765, %v1862, 0
      %1884 = vmatprep.subr.bf16.mxu0 0
      %1885 = vmatpush1.bf16.msra.mxu0 0
      %1886 = vmatprep.subr.bf16.mxu0 0
      %1887 = vmatpush1.bf16.msra.mxu0 0
      %1888 = vmatprep.subr.bf16.mxu0 0
      %1889 = vmatpush1.bf16.msra.mxu0 0
      %1890 = vmatprep.subr.bf16.mxu0 0
      %1891 = vmatpush1.bf16.msra.mxu0 0
      %1892 = vmatprep.subr.bf16.mxu0 0
      %1893 = vmatpush1.bf16.msra.mxu0 0
      %1894 = vmatprep.subr.bf16.mxu0 0
      %1895 = vmatpush1.bf16.msra.mxu0 0
      %1896 = vmatprep.subr.bf16.mxu0 0
      %1897 = vmatpush1.bf16.msra.mxu0 %v1878
      %1898 = vmatprep.subr.bf16.mxu0 0
      %1899 = vmatpush1.bf16.msra.mxu0 %v1877
      %1900 = vmatprep.subr.bf16.mxu0 0
      %1901 = vmatpush2.bf16.msra.mxu0 0
      %1902 = vmatprep.subr.bf16.mxu0 0
      %1903 = vmatpush2.bf16.msra.mxu0 0
      %1904 = vmatprep.subr.bf16.mxu0 0
      %1905 = vmatpush2.bf16.msra.mxu0 0
      %1906 = vmatprep.subr.bf16.mxu0 0
      %1907 = vmatpush2.bf16.msra.mxu0 0
      %1908 = vmatprep.subr.bf16.mxu0 0
      %1909 = vmatpush2.bf16.msra.mxu0 0
      %1910 = vmatprep.subr.bf16.mxu0 0
      %1911 = vmatpush2.bf16.msra.mxu0 0
      %1912 = vmatprep.subr.bf16.mxu0 0
      %1913 = vmatpush2.bf16.msra.mxu0 0
      %1914 = vmatprep.subr.bf16.mxu0 0
      %1915 = vmatpush2.bf16.msra.mxu0 0
      %1916 = vmatprep.mubr.bf16.mxu0 0
      %1917 = vmatmul.mubr.bf16.gmra.mxu0 %v1882
      %v1918 = vpop.f32.mrf.mxu0
      %v1919 = vadd.f32 %v1867, %v1918
      %v1920 = vpop.f32.mrf.mxu0
      %v1921 = vpop.f32.mrf.mxu0
      %v1922 = vadd.f32 %v1867, %v1921
      %v1923 = vpop.f32.mrf.mxu0
      %1924 = vdwg.mxu0
      %v1925 = vpack.c.bf16 %v1846, %v1845
      %v1927 = vlaneseq
      %v1928 = vshrl.u32 %v1927, 7
      %v1929 = vsub.s32 0, %v1928
      %v1930 = vrot.slane %v1856, %v1929
      %v1936 = vunpack.c.l.b16 %v1852
      %v1937 = vunpack.c.l.b16 %v1853
      %v1938 = vunpack.c.l.b16 %v1854
      %v1939 = vunpack.c.l.b16 %v1855
      %v1940 = vpack.c.b16 %v1937, %v1936
      %v1941 = vpack.c.b16 %v1939, %v1938
      %v1945 = vsel %vm765, %v1925, 0
      %1947 = vmatprep.subr.bf16.mxu0 0
      %1948 = vmatpush1.bf16.msra.mxu0 0
      %1949 = vmatprep.subr.bf16.mxu0 0
      %1950 = vmatpush1.bf16.msra.mxu0 0
      %1951 = vmatprep.subr.bf16.mxu0 0
      %1952 = vmatpush1.bf16.msra.mxu0 0
      %1953 = vmatprep.subr.bf16.mxu0 0
      %1954 = vmatpush1.bf16.msra.mxu0 0
      %1955 = vmatprep.subr.bf16.mxu0 0
      %1956 = vmatpush1.bf16.msra.mxu0 0
      %1957 = vmatprep.subr.bf16.mxu0 0
      %1958 = vmatpush1.bf16.msra.mxu0 0
      %1959 = vmatprep.subr.bf16.mxu0 0
      %1960 = vmatpush1.bf16.msra.mxu0 %v1941
      %1961 = vmatprep.subr.bf16.mxu0 0
      %1962 = vmatpush1.bf16.msra.mxu0 %v1940
      %1963 = vmatprep.subr.bf16.mxu0 0
      %1964 = vmatpush2.bf16.msra.mxu0 0
      %1965 = vmatprep.subr.bf16.mxu0 0
      %1966 = vmatpush2.bf16.msra.mxu0 0
      %1967 = vmatprep.subr.bf16.mxu0 0
      %1968 = vmatpush2.bf16.msra.mxu0 0
      %1969 = vmatprep.subr.bf16.mxu0 0
      %1970 = vmatpush2.bf16.msra.mxu0 0
      %1971 = vmatprep.subr.bf16.mxu0 0
      %1972 = vmatpush2.bf16.msra.mxu0 0
      %1973 = vmatprep.subr.bf16.mxu0 0
      %1974 = vmatpush2.bf16.msra.mxu0 0
      %1975 = vmatprep.subr.bf16.mxu0 0
      %1976 = vmatpush2.bf16.msra.mxu0 0
      %1977 = vmatprep.subr.bf16.mxu0 0
      %1978 = vmatpush2.bf16.msra.mxu0 0
      %1979 = vmatprep.mubr.bf16.mxu0 0
      %1980 = vmatmul.mubr.bf16.gmra.mxu0 %v1945
      %v1981 = vpop.f32.mrf.mxu0
      %v1982 = vadd.f32 %v1930, %v1981
      %v1983 = vpop.f32.mrf.mxu0
      %v1984 = vpop.f32.mrf.mxu0
      %v1985 = vadd.f32 %v1930, %v1984
      %v1986 = vpop.f32.mrf.mxu0
      %1987 = vdwg.mxu0
      %v1988 = vpack.c.bf16 %v1922, %v1919
      %v1989 = vpack.c.bf16 %v1985, %v1982
      %v1991 = vsel %vm874, %v1988, 0
      %v1994 = vsel %vm874, %v1989, 0
      %1996 = vmatprep.subr.bf16.mxu0 0
      %1997 = vmatpush1.bf16.xpose.msra.mxu0 0
      %1998 = vmatprep.subr.bf16.mxu0 0
      %1999 = vmatpush1.bf16.xpose.msra.mxu0 0
      %2000 = vmatprep.subr.bf16.mxu0 0
      %2001 = vmatpush1.bf16.xpose.msra.mxu0 0
      %2002 = vmatprep.subr.bf16.mxu0 0
      %2003 = vmatpush1.bf16.xpose.msra.mxu0 0
      %2004 = vmatprep.subr.bf16.mxu0 0
      %2005 = vmatpush1.bf16.xpose.msra.mxu0 0
      %2006 = vmatprep.subr.bf16.mxu0 0
      %2007 = vmatpush1.bf16.xpose.msra.mxu0 0
      %2008 = vmatprep.subr.bf16.mxu0 0
      %2009 = vmatpush1.bf16.xpose.msra.mxu0 0
      %2010 = vmatprep.subr.bf16.mxu0 0
      %2011 = vmatpush1.bf16.xpose.msra.mxu0 %v1994
      %2012 = vmatprep.subr.bf16.mxu0 0
      %2013 = vmatpush2.bf16.xpose.msra.mxu0 0
      %2014 = vmatprep.subr.bf16.mxu0 0
      %2015 = vmatpush2.bf16.xpose.msra.mxu0 0
      %2016 = vmatprep.subr.bf16.mxu0 0
      %2017 = vmatpush2.bf16.xpose.msra.mxu0 0
      %2018 = vmatprep.subr.bf16.mxu0 0
      %2019 = vmatpush2.bf16.xpose.msra.mxu0 0
      %2020 = vmatprep.subr.bf16.mxu0 0
      %2021 = vmatpush2.bf16.xpose.msra.mxu0 0
      %2022 = vmatprep.subr.bf16.mxu0 0
      %2023 = vmatpush2.bf16.xpose.msra.mxu0 0
      %2024 = vmatprep.subr.bf16.mxu0 0
      %2025 = vmatpush2.bf16.xpose.msra.mxu0 0
      %2026 = vmatprep.subr.bf16.mxu0 0
      %2027 = vmatpush2.bf16.xpose.msra.mxu0 0
      %2028 = vmatprep.mubr.bf16.mxu0 0
      %2029 = vmatmul.mubr.bf16.gmra.mxu0 %v1991
      %v2030 = vpop.f32.mrf.mxu0
      %v2031 = vadd.f32 0.0, %v2030
      %v2032 = vpop.f32.mrf.mxu0
      %v2033 = vpop.f32.mrf.mxu0
      %v2034 = vadd.f32 0.0, %v2033
      %v2035 = vpop.f32.mrf.mxu0
      %2036 = vdwg.mxu0
      %v2037 = vmul.f32 %v2031, 0.35355338
      %v2038 = vmul.f32 %v2034, 0.35355338
      %vm2039 = vcmask 72704
      %v2040 = vsel %vm2039, %v2037, -inf
      %2041 = vmax.xlane.f32.xlu0 %v2040
      %v2042 = vpop.xlane.xlu0 %2041
      %v2043 = vsel %vm2039, %v2038, -inf
      %2044 = vmax.xlane.f32.xlu0 %v2043
      %v2045 = vpop.xlane.xlu0 %2044
      %v2046 = vsub.f32 %v2037, %v2042
      %v2047 = vsub.f32 %v2038, %v2045
      %v2048 = vmul.f32 %v2046, 1.442695
      %v2049 = vpow.pop %v2048
      %v2050 = vmul.f32 %v2047, 1.442695
      %v2051 = vpow.pop %v2050
      %v2052 = vsel %vm2039, %v2049, 0.0
      %2053 = vadd.xlane.f32.xlu0 %v2052
      %v2054 = vpop.xlane.xlu0 %2053
      %v2055 = vsel %vm2039, %v2051, 0.0
      %2056 = vadd.xlane.f32.xlu0 %v2055
      %v2057 = vpop.xlane.xlu0 %2056
      %v2058 = vrcp.pop %v2054
      %v2059 = vrcp.pop %v2057
      %v2060 = vmul.f32 %v2049, %v2058
      %v2061 = vmul.f32 %v2051, %v2059
      %v2062 = vpack.c.bf16 %v2061, %v2060
      %2064 = vrot.lane.b32.xlu0 %v1989, 96
      %v2065 = vpop.permute.xlu0 %2064
      %v2067 = vsel %vm2039, %v2062, 0
      %vm2069 = vcmask 1043456
      %vm2070 = vcmask 1044480
      %v2071 = vsel %vm2069, 4294967295, 65535
      %v2072 = vsel %vm2070, %v2071, 0
      %v2074 = vand.u32 %v2065, %v2072
      %2076 = vmatprep.subr.bf16.mxu0 0
      %2077 = vmatpush1.bf16.msra.mxu0 0
      %2078 = vmatprep.subr.bf16.mxu0 0
      %2079 = vmatpush1.bf16.msra.mxu0 0
      %2080 = vmatprep.subr.bf16.mxu0 0
      %2081 = vmatpush1.bf16.msra.mxu0 0
      %2082 = vmatprep.subr.bf16.mxu0 0
      %2083 = vmatpush1.bf16.msra.mxu0 0
      %2084 = vmatprep.subr.bf16.mxu0 0
      %2085 = vmatpush1.bf16.msra.mxu0 0
      %2086 = vmatprep.subr.bf16.mxu0 0
      %2087 = vmatpush1.bf16.msra.mxu0 0
      %2088 = vmatprep.subr.bf16.mxu0 0
      %2089 = vmatpush1.bf16.msra.mxu0 0
      %2090 = vmatprep.subr.bf16.mxu0 0
      %2091 = vmatpush1.bf16.msra.mxu0 %v2074
      %2092 = vmatprep.subr.bf16.mxu0 0
      %2093 = vmatpush2.bf16.msra.mxu0 0
      %2094 = vmatprep.subr.bf16.mxu0 0
      %2095 = vmatpush2.bf16.msra.mxu0 0
      %2096 = vmatprep.subr.bf16.mxu0 0
      %2097 = vmatpush2.bf16.msra.mxu0 0
      %2098 = vmatprep.subr.bf16.mxu0 0
      %2099 = vmatpush2.bf16.msra.mxu0 0
      %2100 = vmatprep.subr.bf16.mxu0 0
      %2101 = vmatpush2.bf16.msra.mxu0 0
      %2102 = vmatprep.subr.bf16.mxu0 0
      %2103 = vmatpush2.bf16.msra.mxu0 0
      %2104 = vmatprep.subr.bf16.mxu0 0
      %2105 = vmatpush2.bf16.msra.mxu0 0
      %2106 = vmatprep.subr.bf16.mxu0 0
      %2107 = vmatpush2.bf16.msra.mxu0 0
      %2108 = vmatprep.mubr.bf16.mxu0 0
      %2109 = vmatmul.mubr.bf16.gmra.mxu0 %v2067
      %v2110 = vpop.f32.mrf.mxu0
      %v2111 = vadd.f32 0.0, %v2110
      %v2112 = vpop.f32.mrf.mxu0
      %v2113 = vpop.f32.mrf.mxu0
      %v2114 = vadd.f32 0.0, %v2113
      %v2115 = vpop.f32.mrf.mxu0
      %2116 = vdwg.mxu0
      %2118 = vrot.lane.b32.xlu0 %v1988, 120
      %v2119 = vpop.permute.xlu0 %2118
      %2120 = vrot.lane.b32.xlu0 %v1989, 120
      %v2121 = vpop.permute.xlu0 %2120
      %v2123 = vsel %vm874, %v2119, 0
      %v2126 = vsel %vm874, %v2121, 0
      %2128 = vmatprep.subr.bf16.mxu0 0
      %2129 = vmatpush1.bf16.xpose.msra.mxu0 0
      %2130 = vmatprep.subr.bf16.mxu0 0
      %2131 = vmatpush1.bf16.xpose.msra.mxu0 0
      %2132 = vmatprep.subr.bf16.mxu0 0
      %2133 = vmatpush1.bf16.xpose.msra.mxu0 0
      %2134 = vmatprep.subr.bf16.mxu0 0
      %2135 = vmatpush1.bf16.xpose.msra.mxu0 0
      %2136 = vmatprep.subr.bf16.mxu0 0
      %2137 = vmatpush1.bf16.xpose.msra.mxu0 0
      %2138 = vmatprep.subr.bf16.mxu0 0
      %2139 = vmatpush1.bf16.xpose.msra.mxu0 0
      %2140 = vmatprep.subr.bf16.mxu0 0
      %2141 = vmatpush1.bf16.xpose.msra.mxu0 0
      %2142 = vmatprep.subr.bf16.mxu0 0
      %2143 = vmatpush1.bf16.xpose.msra.mxu0 %v2126
      %2144 = vmatprep.subr.bf16.mxu0 0
      %2145 = vmatpush2.bf16.xpose.msra.mxu0 0
      %2146 = vmatprep.subr.bf16.mxu0 0
      %2147 = vmatpush2.bf16.xpose.msra.mxu0 0
      %2148 = vmatprep.subr.bf16.mxu0 0
      %2149 = vmatpush2.bf16.xpose.msra.mxu0 0
      %2150 = vmatprep.subr.bf16.mxu0 0
      %2151 = vmatpush2.bf16.xpose.msra.mxu0 0
      %2152 = vmatprep.subr.bf16.mxu0 0
      %2153 = vmatpush2.bf16.xpose.msra.mxu0 0
      %2154 = vmatprep.subr.bf16.mxu0 0
      %2155 = vmatpush2.bf16.xpose.msra.mxu0 0
      %2156 = vmatprep.subr.bf16.mxu0 0
      %2157 = vmatpush2.bf16.xpose.msra.mxu0 0
      %2158 = vmatprep.subr.bf16.mxu0 0
      %2159 = vmatpush2.bf16.xpose.msra.mxu0 0
      %2160 = vmatprep.mubr.bf16.mxu0 0
      %2161 = vmatmul.mubr.bf16.gmra.mxu0 %v2123
      %v2162 = vpop.f32.mrf.mxu0
      %v2163 = vadd.f32 0.0, %v2162
      %v2164 = vpop.f32.mrf.mxu0
      %v2165 = vpop.f32.mrf.mxu0
      %v2166 = vadd.f32 0.0, %v2165
      %v2167 = vpop.f32.mrf.mxu0
      %2168 = vdwg.mxu0
      %v2169 = vmul.f32 %v2163, 0.35355338
      %v2170 = vmul.f32 %v2166, 0.35355338
      %v2171 = vsel %vm2039, %v2169, -inf
      %2172 = vmax.xlane.f32.xlu0 %v2171
      %v2173 = vpop.xlane.xlu0 %2172
      %v2174 = vsel %vm2039, %v2170, -inf
      %2175 = vmax.xlane.f32.xlu0 %v2174
      %v2176 = vpop.xlane.xlu0 %2175
      %v2177 = vsub.f32 %v2169, %v2173
      %v2178 = vsub.f32 %v2170, %v2176
      %v2179 = vmul.f32 %v2177, 1.442695
      %v2180 = vpow.pop %v2179
      %v2181 = vmul.f32 %v2178, 1.442695
      %v2182 = vpow.pop %v2181
      %v2183 = vsel %vm2039, %v2180, 0.0
      %2184 = vadd.xlane.f32.xlu0 %v2183
      %v2185 = vpop.xlane.xlu0 %2184
      %v2186 = vsel %vm2039, %v2182, 0.0
      %2187 = vadd.xlane.f32.xlu0 %v2186
      %v2188 = vpop.xlane.xlu0 %2187
      %v2189 = vrcp.pop %v2185
      %v2190 = vrcp.pop %v2188
      %v2191 = vmul.f32 %v2180, %v2189
      %v2192 = vmul.f32 %v2182, %v2190
      %v2193 = vpack.c.bf16 %v2192, %v2191
      %2194 = vrot.lane.b32.xlu0 %v1989, 88
      %v2195 = vpop.permute.xlu0 %2194
      %v2197 = vsel %vm2039, %v2193, 0
      %v2200 = vand.u32 %v2195, %v2072
      %2202 = vmatprep.subr.bf16.mxu0 0
      %2203 = vmatpush1.bf16.msra.mxu0 0
      %2204 = vmatprep.subr.bf16.mxu0 0
      %2205 = vmatpush1.bf16.msra.mxu0 0
      %2206 = vmatprep.subr.bf16.mxu0 0
      %2207 = vmatpush1.bf16.msra.mxu0 0
      %2208 = vmatprep.subr.bf16.mxu0 0
      %2209 = vmatpush1.bf16.msra.mxu0 0
      %2210 = vmatprep.subr.bf16.mxu0 0
      %2211 = vmatpush1.bf16.msra.mxu0 0
      %2212 = vmatprep.subr.bf16.mxu0 0
      %2213 = vmatpush1.bf16.msra.mxu0 0
      %2214 = vmatprep.subr.bf16.mxu0 0
      %2215 = vmatpush1.bf16.msra.mxu0 0
      %2216 = vmatprep.subr.bf16.mxu0 0
      %2217 = vmatpush1.bf16.msra.mxu0 %v2200
      %2218 = vmatprep.subr.bf16.mxu0 0
      %2219 = vmatpush2.bf16.msra.mxu0 0
      %2220 = vmatprep.subr.bf16.mxu0 0
      %2221 = vmatpush2.bf16.msra.mxu0 0
      %2222 = vmatprep.subr.bf16.mxu0 0
      %2223 = vmatpush2.bf16.msra.mxu0 0
      %2224 = vmatprep.subr.bf16.mxu0 0
      %2225 = vmatpush2.bf16.msra.mxu0 0
      %2226 = vmatprep.subr.bf16.mxu0 0
      %2227 = vmatpush2.bf16.msra.mxu0 0
      %2228 = vmatprep.subr.bf16.mxu0 0
      %2229 = vmatpush2.bf16.msra.mxu0 0
      %2230 = vmatprep.subr.bf16.mxu0 0
      %2231 = vmatpush2.bf16.msra.mxu0 0
      %2232 = vmatprep.subr.bf16.mxu0 0
      %2233 = vmatpush2.bf16.msra.mxu0 0
      %2234 = vmatprep.mubr.bf16.mxu0 0
      %2235 = vmatmul.mubr.bf16.gmra.mxu0 %v2197
      %v2236 = vpop.f32.mrf.mxu0
      %v2237 = vadd.f32 0.0, %v2236
      %v2238 = vpop.f32.mrf.mxu0
      %v2239 = vpop.f32.mrf.mxu0
      %v2240 = vadd.f32 0.0, %v2239
      %v2241 = vpop.f32.mrf.mxu0
      %2242 = vdwg.mxu0
      %2243 = vrot.lane.b32.xlu0 %v1988, 112
      %v2244 = vpop.permute.xlu0 %2243
      %2245 = vrot.lane.b32.xlu0 %v1989, 112
      %v2246 = vpop.permute.xlu0 %2245
      %v2248 = vsel %vm874, %v2244, 0
      %v2251 = vsel %vm874, %v2246, 0
      %2253 = vmatprep.subr.bf16.mxu0 0
      %2254 = vmatpush1.bf16.xpose.msra.mxu0 0
      %2255 = vmatprep.subr.bf16.mxu0 0
      %2256 = vmatpush1.bf16.xpose.msra.mxu0 0
      %2257 = vmatprep.subr.bf16.mxu0 0
      %2258 = vmatpush1.bf16.xpose.msra.mxu0 0
      %2259 = vmatprep.subr.bf16.mxu0 0
      %2260 = vmatpush1.bf16.xpose.msra.mxu0 0
      %2261 = vmatprep.subr.bf16.mxu0 0
      %2262 = vmatpush1.bf16.xpose.msra.mxu0 0
      %2263 = vmatprep.subr.bf16.mxu0 0
      %2264 = vmatpush1.bf16.xpose.msra.mxu0 0
      %2265 = vmatprep.subr.bf16.mxu0 0
      %2266 = vmatpush1.bf16.xpose.msra.mxu0 0
      %2267 = vmatprep.subr.bf16.mxu0 0
      %2268 = vmatpush1.bf16.xpose.msra.mxu0 %v2251
      %2269 = vmatprep.subr.bf16.mxu0 0
      %2270 = vmatpush2.bf16.xpose.msra.mxu0 0
      %2271 = vmatprep.subr.bf16.mxu0 0
      %2272 = vmatpush2.bf16.xpose.msra.mxu0 0
      %2273 = vmatprep.subr.bf16.mxu0 0
      %2274 = vmatpush2.bf16.xpose.msra.mxu0 0
      %2275 = vmatprep.subr.bf16.mxu0 0
      %2276 = vmatpush2.bf16.xpose.msra.mxu0 0
      %2277 = vmatprep.subr.bf16.mxu0 0
      %2278 = vmatpush2.bf16.xpose.msra.mxu0 0
      %2279 = vmatprep.subr.bf16.mxu0 0
      %2280 = vmatpush2.bf16.xpose.msra.mxu0 0
      %2281 = vmatprep.subr.bf16.mxu0 0
      %2282 = vmatpush2.bf16.xpose.msra.mxu0 0
      %2283 = vmatprep.subr.bf16.mxu0 0
      %2284 = vmatpush2.bf16.xpose.msra.mxu0 0
      %2285 = vmatprep.mubr.bf16.mxu0 0
      %2286 = vmatmul.mubr.bf16.gmra.mxu0 %v2248
      %v2287 = vpop.f32.mrf.mxu0
      %v2288 = vadd.f32 0.0, %v2287
      %v2289 = vpop.f32.mrf.mxu0
      %v2290 = vpop.f32.mrf.mxu0
      %v2291 = vadd.f32 0.0, %v2290
      %v2292 = vpop.f32.mrf.mxu0
      %2293 = vdwg.mxu0
      %v2294 = vmul.f32 %v2288, 0.35355338
      %v2295 = vmul.f32 %v2291, 0.35355338
      %v2296 = vsel %vm2039, %v2294, -inf
      %2297 = vmax.xlane.f32.xlu0 %v2296
      %v2298 = vpop.xlane.xlu0 %2297
      %v2299 = vsel %vm2039, %v2295, -inf
      %2300 = vmax.xlane.f32.xlu0 %v2299
      %v2301 = vpop.xlane.xlu0 %2300
      %v2302 = vsub.f32 %v2294, %v2298
      %v2303 = vsub.f32 %v2295, %v2301
      %v2304 = vmul.f32 %v2302, 1.442695
      %v2305 = vpow.pop %v2304
      %v2306 = vmul.f32 %v2303, 1.442695
      %v2307 = vpow.pop %v2306
      %v2308 = vsel %vm2039, %v2305, 0.0
      %2309 = vadd.xlane.f32.xlu0 %v2308
      %v2310 = vpop.xlane.xlu0 %2309
      %v2311 = vsel %vm2039, %v2307, 0.0
      %2312 = vadd.xlane.f32.xlu0 %v2311
      %v2313 = vpop.xlane.xlu0 %2312
      %v2314 = vrcp.pop %v2310
      %v2315 = vrcp.pop %v2313
      %v2316 = vmul.f32 %v2305, %v2314
      %v2317 = vmul.f32 %v2307, %v2315
      %v2318 = vpack.c.bf16 %v2317, %v2316
      %2319 = vrot.lane.b32.xlu0 %v1989, 80
      %v2320 = vpop.permute.xlu0 %2319
      %v2322 = vsel %vm2039, %v2318, 0
      %v2325 = vand.u32 %v2320, %v2072
      %2327 = vmatprep.subr.bf16.mxu0 0
      %2328 = vmatpush1.bf16.msra.mxu0 0
      %2329 = vmatprep.subr.bf16.mxu0 0
      %2330 = vmatpush1.bf16.msra.mxu0 0
      %2331 = vmatprep.subr.bf16.mxu0 0
      %2332 = vmatpush1.bf16.msra.mxu0 0
      %2333 = vmatprep.subr.bf16.mxu0 0
      %2334 = vmatpush1.bf16.msra.mxu0 0
      %2335 = vmatprep.subr.bf16.mxu0 0
      %2336 = vmatpush1.bf16.msra.mxu0 0
      %2337 = vmatprep.subr.bf16.mxu0 0
      %2338 = vmatpush1.bf16.msra.mxu0 0
      %2339 = vmatprep.subr.bf16.mxu0 0
      %2340 = vmatpush1.bf16.msra.mxu0 0
      %2341 = vmatprep.subr.bf16.mxu0 0
      %2342 = vmatpush1.bf16.msra.mxu0 %v2325
      %2343 = vmatprep.subr.bf16.mxu0 0
      %2344 = vmatpush2.bf16.msra.mxu0 0
      %2345 = vmatprep.subr.bf16.mxu0 0
      %2346 = vmatpush2.bf16.msra.mxu0 0
      %2347 = vmatprep.subr.bf16.mxu0 0
      %2348 = vmatpush2.bf16.msra.mxu0 0
      %2349 = vmatprep.subr.bf16.mxu0 0
      %2350 = vmatpush2.bf16.msra.mxu0 0
      %2351 = vmatprep.subr.bf16.mxu0 0
      %2352 = vmatpush2.bf16.msra.mxu0 0
      %2353 = vmatprep.subr.bf16.mxu0 0
      %2354 = vmatpush2.bf16.msra.mxu0 0
      %2355 = vmatprep.subr.bf16.mxu0 0
      %2356 = vmatpush2.bf16.msra.mxu0 0
      %2357 = vmatprep.subr.bf16.mxu0 0
      %2358 = vmatpush2.bf16.msra.mxu0 0
      %2359 = vmatprep.mubr.bf16.mxu0 0
      %2360 = vmatmul.mubr.bf16.gmra.mxu0 %v2322
      %v2361 = vpop.f32.mrf.mxu0
      %v2362 = vadd.f32 0.0, %v2361
      %v2363 = vpop.f32.mrf.mxu0
      %v2364 = vpop.f32.mrf.mxu0
      %v2365 = vadd.f32 0.0, %v2364
      %v2366 = vpop.f32.mrf.mxu0
      %2367 = vdwg.mxu0
      %2368 = vrot.lane.b32.xlu0 %v1988, 104
      %v2369 = vpop.permute.xlu0 %2368
      %2370 = vrot.lane.b32.xlu0 %v1989, 104
      %v2371 = vpop.permute.xlu0 %2370
      %v2373 = vsel %vm874, %v2369, 0
      %v2376 = vsel %vm874, %v2371, 0
      %2378 = vmatprep.subr.bf16.mxu0 0
      %2379 = vmatpush1.bf16.xpose.msra.mxu0 0
      %2380 = vmatprep.subr.bf16.mxu0 0
      %2381 = vmatpush1.bf16.xpose.msra.mxu0 0
      %2382 = vmatprep.subr.bf16.mxu0 0
      %2383 = vmatpush1.bf16.xpose.msra.mxu0 0
      %2384 = vmatprep.subr.bf16.mxu0 0
      %2385 = vmatpush1.bf16.xpose.msra.mxu0 0
      %2386 = vmatprep.subr.bf16.mxu0 0
      %2387 = vmatpush1.bf16.xpose.msra.mxu0 0
      %2388 = vmatprep.subr.bf16.mxu0 0
      %2389 = vmatpush1.bf16.xpose.msra.mxu0 0
      %2390 = vmatprep.subr.bf16.mxu0 0
      %2391 = vmatpush1.bf16.xpose.msra.mxu0 0
      %2392 = vmatprep.subr.bf16.mxu0 0
      %2393 = vmatpush1.bf16.xpose.msra.mxu0 %v2376
      %2394 = vmatprep.subr.bf16.mxu0 0
      %2395 = vmatpush2.bf16.xpose.msra.mxu0 0
      %2396 = vmatprep.subr.bf16.mxu0 0
      %2397 = vmatpush2.bf16.xpose.msra.mxu0 0
      %2398 = vmatprep.subr.bf16.mxu0 0
      %2399 = vmatpush2.bf16.xpose.msra.mxu0 0
      %2400 = vmatprep.subr.bf16.mxu0 0
      %2401 = vmatpush2.bf16.xpose.msra.mxu0 0
      %2402 = vmatprep.subr.bf16.mxu0 0
      %2403 = vmatpush2.bf16.xpose.msra.mxu0 0
      %2404 = vmatprep.subr.bf16.mxu0 0
      %2405 = vmatpush2.bf16.xpose.msra.mxu0 0
      %2406 = vmatprep.subr.bf16.mxu0 0
      %2407 = vmatpush2.bf16.xpose.msra.mxu0 0
      %2408 = vmatprep.subr.bf16.mxu0 0
      %2409 = vmatpush2.bf16.xpose.msra.mxu0 0
      %2410 = vmatprep.mubr.bf16.mxu0 0
      %2411 = vmatmul.mubr.bf16.gmra.mxu0 %v2373
      %v2412 = vpop.f32.mrf.mxu0
      %v2413 = vadd.f32 0.0, %v2412
      %v2414 = vpop.f32.mrf.mxu0
      %v2415 = vpop.f32.mrf.mxu0
      %v2416 = vadd.f32 0.0, %v2415
      %v2417 = vpop.f32.mrf.mxu0
      %2418 = vdwg.mxu0
      %v2419 = vmul.f32 %v2413, 0.35355338
      %v2420 = vmul.f32 %v2416, 0.35355338
      %v2421 = vsel %vm2039, %v2419, -inf
      %2422 = vmax.xlane.f32.xlu0 %v2421
      %v2423 = vpop.xlane.xlu0 %2422
      %v2424 = vsel %vm2039, %v2420, -inf
      %2425 = vmax.xlane.f32.xlu0 %v2424
      %v2426 = vpop.xlane.xlu0 %2425
      %v2427 = vsub.f32 %v2419, %v2423
      %v2428 = vsub.f32 %v2420, %v2426
      %v2429 = vmul.f32 %v2427, 1.442695
      %v2430 = vpow.pop %v2429
      %v2431 = vmul.f32 %v2428, 1.442695
      %v2432 = vpow.pop %v2431
      %v2433 = vsel %vm2039, %v2430, 0.0
      %2434 = vadd.xlane.f32.xlu0 %v2433
      %v2435 = vpop.xlane.xlu0 %2434
      %v2436 = vsel %vm2039, %v2432, 0.0
      %2437 = vadd.xlane.f32.xlu0 %v2436
      %v2438 = vpop.xlane.xlu0 %2437
      %v2439 = vrcp.pop %v2435
      %v2440 = vrcp.pop %v2438
      %v2441 = vmul.f32 %v2430, %v2439
      %v2442 = vmul.f32 %v2432, %v2440
      %v2443 = vpack.c.bf16 %v2442, %v2441
      %2444 = vrot.lane.b32.xlu0 %v1989, 72
      %v2445 = vpop.permute.xlu0 %2444
      %v2447 = vsel %vm2039, %v2443, 0
      %v2450 = vand.u32 %v2445, %v2072
      %2452 = vmatprep.subr.bf16.mxu0 0
      %2453 = vmatpush1.bf16.msra.mxu0 0
      %2454 = vmatprep.subr.bf16.mxu0 0
      %2455 = vmatpush1.bf16.msra.mxu0 0
      %2456 = vmatprep.subr.bf16.mxu0 0
      %2457 = vmatpush1.bf16.msra.mxu0 0
      %2458 = vmatprep.subr.bf16.mxu0 0
      %2459 = vmatpush1.bf16.msra.mxu0 0
      %2460 = vmatprep.subr.bf16.mxu0 0
      %2461 = vmatpush1.bf16.msra.mxu0 0
      %2462 = vmatprep.subr.bf16.mxu0 0
      %2463 = vmatpush1.bf16.msra.mxu0 0
      %2464 = vmatprep.subr.bf16.mxu0 0
      %2465 = vmatpush1.bf16.msra.mxu0 0
      %2466 = vmatprep.subr.bf16.mxu0 0
      %2467 = vmatpush1.bf16.msra.mxu0 %v2450
      %2468 = vmatprep.subr.bf16.mxu0 0
      %2469 = vmatpush2.bf16.msra.mxu0 0
      %2470 = vmatprep.subr.bf16.mxu0 0
      %2471 = vmatpush2.bf16.msra.mxu0 0
      %2472 = vmatprep.subr.bf16.mxu0 0
      %2473 = vmatpush2.bf16.msra.mxu0 0
      %2474 = vmatprep.subr.bf16.mxu0 0
      %2475 = vmatpush2.bf16.msra.mxu0 0
      %2476 = vmatprep.subr.bf16.mxu0 0
      %2477 = vmatpush2.bf16.msra.mxu0 0
      %2478 = vmatprep.subr.bf16.mxu0 0
      %2479 = vmatpush2.bf16.msra.mxu0 0
      %2480 = vmatprep.subr.bf16.mxu0 0
      %2481 = vmatpush2.bf16.msra.mxu0 0
      %2482 = vmatprep.subr.bf16.mxu0 0
      %2483 = vmatpush2.bf16.msra.mxu0 0
      %2484 = vmatprep.mubr.bf16.mxu0 0
      %2485 = vmatmul.mubr.bf16.gmra.mxu0 %v2447
      %v2486 = vpop.f32.mrf.mxu0
      %v2487 = vadd.f32 0.0, %v2486
      %v2488 = vpop.f32.mrf.mxu0
      %v2489 = vpop.f32.mrf.mxu0
      %v2490 = vadd.f32 0.0, %v2489
      %v2491 = vpop.f32.mrf.mxu0
      %2492 = vdwg.mxu0
      %2495 = vrot.lane.b32.xlu0 %v2237, 8
      %v2496 = vpop.permute.xlu0 %2495
      %2497 = vrot.lane.b32.xlu0 %v2240, 8
      %v2498 = vpop.permute.xlu0 %2497
      %2503 = vrot.lane.b32.xlu0 %v2362, 16
      %v2504 = vpop.permute.xlu0 %2503
      %2505 = vrot.lane.b32.xlu0 %v2365, 16
      %v2506 = vpop.permute.xlu0 %2505
      %2511 = vrot.lane.b32.xlu0 %v2487, 24
      %v2512 = vpop.permute.xlu0 %2511
      %2513 = vrot.lane.b32.xlu0 %v2490, 24
      %v2514 = vpop.permute.xlu0 %2513
      %v2517 = vsel %vm874, %v2111, %v2496
      %v2518 = vsel %vm874, %v2114, %v2498
      %v2519 = vsel %vm827, %v2517, %v2504
      %v2520 = vsel %vm827, %v2518, %v2506
      %v2521 = vsel %vm1732, %v2519, %v2512
      %v2522 = vsel %vm1732, %v2520, %v2514
      %v2523 = vpack.c.bf16 %v2522, %v2521
      %v2525 = vlaneseq
      %v2526 = vshrl.u32 %v2525, 7
      %v2527 = vsub.s32 0, %v2526
      %v2528 = vrot.slane %v1861, %v2527
      %v2534 = vunpack.c.l.b16 %v1857
      %v2535 = vunpack.c.l.b16 %v1858
      %v2536 = vunpack.c.l.b16 %v1859
      %v2537 = vunpack.c.l.b16 %v1860
      %v2538 = vpack.c.b16 %v2535, %v2534
      %v2539 = vpack.c.b16 %v2537, %v2536
      %v2543 = vsel %vm765, %v2523, 0
      %2545 = vmatprep.subr.bf16.mxu0 0
      %2546 = vmatpush1.bf16.msra.mxu0 0
      %2547 = vmatprep.subr.bf16.mxu0 0
      %2548 = vmatpush1.bf16.msra.mxu0 0
      %2549 = vmatprep.subr.bf16.mxu0 0
      %2550 = vmatpush1.bf16.msra.mxu0 0
      %2551 = vmatprep.subr.bf16.mxu0 0
      %2552 = vmatpush1.bf16.msra.mxu0 0
      %2553 = vmatprep.subr.bf16.mxu0 0
      %2554 = vmatpush1.bf16.msra.mxu0 0
      %2555 = vmatprep.subr.bf16.mxu0 0
      %2556 = vmatpush1.bf16.msra.mxu0 0
      %2557 = vmatprep.subr.bf16.mxu0 0
      %2558 = vmatpush1.bf16.msra.mxu0 %v2539
      %2559 = vmatprep.subr.bf16.mxu0 0
      %2560 = vmatpush1.bf16.msra.mxu0 %v2538
      %2561 = vmatprep.subr.bf16.mxu0 0
      %2562 = vmatpush2.bf16.msra.mxu0 0
      %2563 = vmatprep.subr.bf16.mxu0 0
      %2564 = vmatpush2.bf16.msra.mxu0 0
      %2565 = vmatprep.subr.bf16.mxu0 0
      %2566 = vmatpush2.bf16.msra.mxu0 0
      %2567 = vmatprep.subr.bf16.mxu0 0
      %2568 = vmatpush2.bf16.msra.mxu0 0
      %2569 = vmatprep.subr.bf16.mxu0 0
      %2570 = vmatpush2.bf16.msra.mxu0 0
      %2571 = vmatprep.subr.bf16.mxu0 0
      %2572 = vmatpush2.bf16.msra.mxu0 0
      %2573 = vmatprep.subr.bf16.mxu0 0
      %2574 = vmatpush2.bf16.msra.mxu0 0
      %2575 = vmatprep.subr.bf16.mxu0 0
      %2576 = vmatpush2.bf16.msra.mxu0 0
      %2577 = vmatprep.mubr.bf16.mxu0 0
      %2578 = vmatmul.mubr.bf16.gmra.mxu0 %v2543
      %v2579 = vpop.f32.mrf.mxu0
      %v2580 = vadd.f32 %v2528, %v2579
      %v2581 = vpop.f32.mrf.mxu0
      %v2582 = vpop.f32.mrf.mxu0
      %v2583 = vadd.f32 %v2528, %v2582
      %v2584 = vpop.f32.mrf.mxu0
      %2585 = vdwg.mxu0
      %v2586 = vadd.f32 %v1843, %v2580
      %v2587 = vadd.f32 %v1844, %v2583
      %v2588 = vld [vmem:[%s15] sm:$0x1]
      %v2589 = vld [vmem:[%s16] sm:$0x1]
      %v2590 = vsel %vm765, %v2586, 0.0
      %2591 = vadd.xlane.f32.xlu0 %v2590
      %v2592 = vpop.xlane.xlu0 %2591
      %v2593 = vsel %vm765, %v2587, 0.0
      %2594 = vadd.xlane.f32.xlu0 %v2593
      %v2595 = vpop.xlane.xlu0 %2594
      %v2596 = vmul.f32 %v2592, %v1808
      %v2597 = vmul.f32 %v2595, %v1808
      %v2598 = vsub.f32 %v2586, %v2596
      %v2599 = vsub.f32 %v2587, %v2597
      %v2600 = vmul.f32 %v2598, %v2598
      %v2601 = vmul.f32 %v2599, %v2599
      %v2602 = vsel %vm765, %v2600, 0.0
      %2603 = vadd.xlane.f32.xlu0 %v2602
      %v2604 = vpop.xlane.xlu0 %2603
      %v2605 = vsel %vm765, %v2601, 0.0
      %2606 = vadd.xlane.f32.xlu0 %v2605
      %v2607 = vpop.xlane.xlu0 %2606
      %v2608 = vmul.f32 %v2604, %v1808
      %v2609 = vmul.f32 %v2607, %v1808
      %v2610 = vadd.f32 %v2608, 1e-05
      %v2611 = vadd.f32 %v2609, 1e-05
      %v2612 = vrsqrt.pop %v2610
      %v2613 = vrsqrt.pop %v2611
      %v2614 = vmul.f32 %v2598, %v2612
      %v2615 = vmul.f32 %v2599, %v2613
      %v2617 = vlaneseq
      %v2618 = vshrl.u32 %v2617, 7
      %v2619 = vsub.s32 0, %v2618
      %v2620 = vrot.slane %v2588, %v2619
      %v2622 = vmul.f32 %v2614, %v2620
      %v2623 = vmul.f32 %v2615, %v2620
      %v2625 = vlaneseq
      %v2626 = vshrl.u32 %v2625, 7
      %v2627 = vsub.s32 0, %v2626
      %v2628 = vrot.slane %v2589, %v2627
      %v2630 = vadd.f32 %v2622, %v2628
      %v2631 = vadd.f32 %v2623, %v2628
      %v2632 = vld [vmem:[%s17] sm:$0xf]
      %v2633 = vld [vmem:[%s17 + $0x4] sm:$0xf]
      %v2634 = vld [vmem:[%s17 + $0x8] sm:$0xf]
      %v2635 = vld [vmem:[%s17 + $0xc] sm:$0xf]
      %v2636 = vld [vmem:[%s18] sm:$0x1]
      %v2637 = vld [vmem:[%s19] sm:$0xf]
      %v2638 = vld [vmem:[%s19 + $0x4] sm:$0xf]
      %v2639 = vld [vmem:[%s19 + $0x8] sm:$0xf]
      %v2640 = vld [vmem:[%s19 + $0xc] sm:$0xf]
      %v2641 = vld [vmem:[%s19 + $0x10] sm:$0xf]
      %v2642 = vld [vmem:[%s19 + $0x14] sm:$0xf]
      %v2643 = vld [vmem:[%s19 + $0x18] sm:$0xf]
      %v2644 = vld [vmem:[%s19 + $0x1c] sm:$0xf]
      %v2645 = vld [vmem:[%s20] sm:$0x1]
      %v2646 = vpack.c.bf16 %v2631, %v2630
      %v2648 = vlaneseq
      %v2649 = vshrl.u32 %v2648, 7
      %v2650 = vsub.s32 0, %v2649
      %v2651 = vrot.slane %v2636, %v2650
      %v2657 = vunpack.c.l.b16 %v2632
      %v2658 = vunpack.c.l.b16 %v2633
      %v2659 = vunpack.c.l.b16 %v2634
      %v2660 = vunpack.c.l.b16 %v2635
      %v2661 = vpack.c.b16 %v2658, %v2657
      %v2662 = vpack.c.b16 %v2660, %v2659
      %v2666 = vsel %vm765, %v2646, 0
      %2668 = vmatprep.subr.bf16.mxu0 0
      %2669 = vmatpush1.bf16.msra.mxu0 0
      %2670 = vmatprep.subr.bf16.mxu0 0
      %2671 = vmatpush1.bf16.msra.mxu0 0
      %2672 = vmatprep.subr.bf16.mxu0 0
      %2673 = vmatpush1.bf16.msra.mxu0 0
      %2674 = vmatprep.subr.bf16.mxu0 0
      %2675 = vmatpush1.bf16.msra.mxu0 0
      %2676 = vmatprep.subr.bf16.mxu0 0
      %2677 = vmatpush1.bf16.msra.mxu0 0
      %2678 = vmatprep.subr.bf16.mxu0 0
      %2679 = vmatpush1.bf16.msra.mxu0 0
      %2680 = vmatprep.subr.bf16.mxu0 0
      %2681 = vmatpush1.bf16.msra.mxu0 %v2662
      %2682 = vmatprep.subr.bf16.mxu0 0
      %2683 = vmatpush1.bf16.msra.mxu0 %v2661
      %2684 = vmatprep.subr.bf16.mxu0 0
      %2685 = vmatpush2.bf16.msra.mxu0 0
      %2686 = vmatprep.subr.bf16.mxu0 0
      %2687 = vmatpush2.bf16.msra.mxu0 0
      %2688 = vmatprep.subr.bf16.mxu0 0
      %2689 = vmatpush2.bf16.msra.mxu0 0
      %2690 = vmatprep.subr.bf16.mxu0 0
      %2691 = vmatpush2.bf16.msra.mxu0 0
      %2692 = vmatprep.subr.bf16.mxu0 0
      %2693 = vmatpush2.bf16.msra.mxu0 0
      %2694 = vmatprep.subr.bf16.mxu0 0
      %2695 = vmatpush2.bf16.msra.mxu0 0
      %2696 = vmatprep.subr.bf16.mxu0 0
      %2697 = vmatpush2.bf16.msra.mxu0 0
      %2698 = vmatprep.subr.bf16.mxu0 0
      %2699 = vmatpush2.bf16.msra.mxu0 0
      %2700 = vmatprep.mubr.bf16.mxu0 0
      %2701 = vmatmul.mubr.bf16.gmra.mxu0 %v2666
      %v2702 = vpop.f32.mrf.mxu0
      %v2703 = vadd.f32 %v2651, %v2702
      %v2704 = vpop.f32.mrf.mxu0
      %v2705 = vpop.f32.mrf.mxu0
      %v2706 = vadd.f32 %v2651, %v2705
      %v2707 = vpop.f32.mrf.mxu0
      %2708 = vdwg.mxu0
      %v2709 = vmax.f32 %v2703, 0.0
      %v2710 = vmax.f32 %v2706, 0.0
      %v2711 = vpack.c.bf16 %v2710, %v2709
      %v2713 = vlaneseq
      %v2714 = vshrl.u32 %v2713, 7
      %v2715 = vsub.s32 0, %v2714
      %v2716 = vrot.slane %v2645, %v2715
      %v2726 = vunpack.c.l.b16 %v2637
      %v2727 = vunpack.c.l.b16 %v2638
      %v2728 = vunpack.c.l.b16 %v2639
      %v2729 = vunpack.c.l.b16 %v2640
      %v2730 = vunpack.c.l.b16 %v2641
      %v2731 = vunpack.c.l.b16 %v2642
      %v2732 = vunpack.c.l.b16 %v2643
      %v2733 = vunpack.c.l.b16 %v2644
      %v2734 = vpack.c.b16 %v2727, %v2726
      %v2735 = vpack.c.b16 %v2729, %v2728
      %v2736 = vpack.c.b16 %v2731, %v2730
      %v2737 = vpack.c.b16 %v2733, %v2732
      %vm2742 = vcmask 523264
      %v2744 = vsel %vm2742, %v2711, 0
      %2746 = vmatprep.subr.bf16.mxu0 0
      %2747 = vmatpush1.bf16.msra.mxu0 0
      %2748 = vmatprep.subr.bf16.mxu0 0
      %2749 = vmatpush1.bf16.msra.mxu0 0
      %2750 = vmatprep.subr.bf16.mxu0 0
      %2751 = vmatpush1.bf16.msra.mxu0 0
      %2752 = vmatprep.subr.bf16.mxu0 0
      %2753 = vmatpush1.bf16.msra.mxu0 0
      %2754 = vmatprep.subr.bf16.mxu0 0
      %2755 = vmatpush1.bf16.msra.mxu0 %v2737
      %2756 = vmatprep.subr.bf16.mxu0 0
      %2757 = vmatpush1.bf16.msra.mxu0 %v2736
      %2758 = vmatprep.subr.bf16.mxu0 0
      %2759 = vmatpush1.bf16.msra.mxu0 %v2735
      %2760 = vmatprep.subr.bf16.mxu0 0
      %2761 = vmatpush1.bf16.msra.mxu0 %v2734
      %2762 = vmatprep.subr.bf16.mxu0 0
      %2763 = vmatpush2.bf16.msra.mxu0 0
      %2764 = vmatprep.subr.bf16.mxu0 0
      %2765 = vmatpush2.bf16.msra.mxu0 0
      %2766 = vmatprep.subr.bf16.mxu0 0
      %2767 = vmatpush2.bf16.msra.mxu0 0
      %2768 = vmatprep.subr.bf16.mxu0 0
      %2769 = vmatpush2.bf16.msra.mxu0 0
      %2770 = vmatprep.subr.bf16.mxu0 0
      %2771 = vmatpush2.bf16.msra.mxu0 0
      %2772 = vmatprep.subr.bf16.mxu0 0
      %2773 = vmatpush2.bf16.msra.mxu0 0
      %2774 = vmatprep.subr.bf16.mxu0 0
      %2775 = vmatpush2.bf16.msra.mxu0 0
      %2776 = vmatprep.subr.bf16.mxu0 0
      %2777 = vmatpush2.bf16.msra.mxu0 0
      %2778 = vmatprep.mubr.bf16.mxu0 0
      %2779 = vmatmul.mubr.bf16.gmra.mxu0 %v2744
      %v2780 = vpop.f32.mrf.mxu0
      %v2781 = vadd.f32 %v2716, %v2780
      %v2782 = vpop.f32.mrf.mxu0
      %v2783 = vpop.f32.mrf.mxu0
      %v2784 = vadd.f32 %v2716, %v2783
      %v2785 = vpop.f32.mrf.mxu0
      %2786 = vdwg.mxu0
      %v2787 = vadd.f32 %v2630, %v2781
      %v2788 = vadd.f32 %v2631, %v2784
      %v2789 = vld [vmem:[%s21] sm:$0x1]
      %v2790 = vld [vmem:[%s22] sm:$0x1]
      %v2791 = vsel %vm765, %v2787, 0.0
      %2792 = vadd.xlane.f32.xlu0 %v2791
      %v2793 = vpop.xlane.xlu0 %2792
      %v2794 = vsel %vm765, %v2788, 0.0
      %2795 = vadd.xlane.f32.xlu0 %v2794
      %v2796 = vpop.xlane.xlu0 %2795
      %v2797 = vmul.f32 %v2793, %v1808
      %v2798 = vmul.f32 %v2796, %v1808
      %v2799 = vsub.f32 %v2787, %v2797
      %v2800 = vsub.f32 %v2788, %v2798
      %v2801 = vmul.f32 %v2799, %v2799
      %v2802 = vmul.f32 %v2800, %v2800
      %v2803 = vsel %vm765, %v2801, 0.0
      %2804 = vadd.xlane.f32.xlu0 %v2803
      %v2805 = vpop.xlane.xlu0 %2804
      %v2806 = vsel %vm765, %v2802, 0.0
      %2807 = vadd.xlane.f32.xlu0 %v2806
      %v2808 = vpop.xlane.xlu0 %2807
      %v2809 = vmul.f32 %v2805, %v1808
      %v2810 = vmul.f32 %v2808, %v1808
      %v2811 = vadd.f32 %v2809, 1e-05
      %v2812 = vadd.f32 %v2810, 1e-05
      %v2813 = vrsqrt.pop %v2811
      %v2814 = vrsqrt.pop %v2812
      %v2815 = vmul.f32 %v2799, %v2813
      %v2816 = vmul.f32 %v2800, %v2814
      %v2818 = vlaneseq
      %v2819 = vshrl.u32 %v2818, 7
      %v2820 = vsub.s32 0, %v2819
      %v2821 = vrot.slane %v2789, %v2820
      %v2823 = vmul.f32 %v2815, %v2821
      %v2824 = vmul.f32 %v2816, %v2821
      %v2826 = vlaneseq
      %v2827 = vshrl.u32 %v2826, 7
      %v2828 = vsub.s32 0, %v2827
      %v2829 = vrot.slane %v2790, %v2828
      %v2831 = vadd.f32 %v2823, %v2829
      %v2832 = vadd.f32 %v2824, %v2829
      %2833 = vst.msk [vmem:[%s730] sm:$0xff] %vm765, %v2831
      %2834 = vst.msk [vmem:[%s730 + $0x8] sm:$0xff] %vm765, %v2832
      %p2835 = scmp.lt.s32.totalorder %s34, 1
      %s2836 = scalar_select %p2835, %s34, 1
      %s2837 = smul.addr %s2836, 2
      %s2838 = smul.addr %s2837, 8
      %s2839 = scalar_lea.vmem %s23, %s2838
      // Predicated region
      $region113: #{_lambda_.12} parent=111 // pred_check
        %p2840 = pneg %p545
      $region114: #{_lambda_.12} parent=111 // pred_check_branch
        %2842 = sbr.rel (%p2840) target = $region116
      $region115: #{_lambda_.12} parent=111 // pred_region
        _
      $region116: #{_lambda_.12} parent=111 // pred_fallthru
        _
    $region112: #{_lambda_.12} parent=5 // pred_fallthru
      _
    %p2843 = scmp.le.s32.totalorder 2, %s29
    // Predicated region
    $region117: #{_lambda_.12} parent=5 // pred_check
      %p2844 = pneg %p2843
    $region118: #{_lambda_.12} parent=5 // pred_check_branch
      %2846 = sbr.rel (%p2844) target = $region120
    $region119: #{_lambda_.12} parent=5 // pred_region
      %s2847 = ssub.s32 %s29, 2
      // Predicated region
      $region121: #{_lambda_.12} parent=119 // pred_check
        %p2848 = pneg %p551
      $region122: #{_lambda_.12} parent=119 // pred_check_branch
        %2850 = sbr.rel (%p2848) target = $region124
      $region123: #{_lambda_.12} parent=119 // pred_region
        %p2851 = scmp.lt.s32.totalorder %s35, 1
        %s2852 = scalar_select %p2851, %s35, 1
        %s2853 = smul.addr %s2852, 2
        %s2854 = smul.addr %s2853, 8
        %s2855 = scalar_lea.vmem %s23, %s2854
      $region124: #{_lambda_.12} parent=119 // pred_fallthru
        _
    $region120: #{_lambda_.12} parent=5 // pred_fallthru
      _
  $region6: #{_lambda_.12} parent=0 // loop_footer
    %s33 = sadd.s32 1, %s29
  $region7: #{_lambda_.12} parent=0 // loop_footer_branch
    %28 = sbr.rel target = $region3
  $region8: #{_lambda_.12} parent=0 // loop_exit
    _

</llo_original>
